<compile_context>
chip_gen: v6e
topology: v6e:2x2x1
jax: 0.10.0
libtpu: 0.0.40
codegen_flags: <defaults>
</compile_context>

<pallas_src>
import math
import numpy as np
import jax
import jax.numpy as jnp
from jax import lax
from jax.experimental import pallas as pl
from jax.experimental.pallas import tpu as pltpu

T_DIM = 24                      # Spatial_layer(24, 24, ...) "channels"
C_NODES = 8                     # graph nodes (armband electrodes)
F_DIM = 7                       # per-node features; GNN hidden = 24 * 7
D_HID = T_DIM * F_DIM           # 168
FLAT_DIM = T_DIM * C_NODES * F_DIM   # 1344
NUM_HEADS = 4
HEAD_DIM = D_HID // NUM_HEADS   # 42
BN_EPS = 1e-5

# Worst-case (indicator==2, tb=256) in-kernel live set + double-buffered
# weights/activation tiles is ~25 MiB; 48 MiB keeps ~2x headroom and stays
# well under v7x's 64 MiB physical VMEM (v5e/v6e have 128 MiB).
VMEM_LIMIT_BYTES = 48 * 1024 * 1024


# ---------------------------------------------------------------------------
# Flatten permutation: PyTorch does (B,24,8,7) -> transpose(1,3) -> reshape, so
# flat[:, f*192 + c*24 + t] == s3[:, c, t*7 + f]   (s3 is the (B,8,168) GNN out)
# => flat @ W1T == s3.reshape(B,1344) @ W1T[INV_PERM].   Applied ONCE at prep.
# ---------------------------------------------------------------------------
_p = np.arange(FLAT_DIM)
_f = _p // (C_NODES * T_DIM)
_rem = _p % (C_NODES * T_DIM)
_c = _rem // T_DIM
_t = _rem % T_DIM
_PERM = _c * D_HID + _t * F_DIM + _f
INV_PERM = np.argsort(_PERM)


def _round_up(n, m):
    return ((n + m - 1) // m) * m


# ---------------------------------------------------------------------------
# One GNN layer (batch-major (tb, 8, 168)), ReLU fused.  BN scale for the
# second layer is pre-folded into its weights/bias at prep time.
# ---------------------------------------------------------------------------
def _gnn_layer(xb, prm, indicator):
    tb = xb.shape[0]
    x2d = xb.reshape(tb * C_NODES, D_HID)          # layout-preserving merge

    if indicator == 0:
        # adj2 = ones(8,8)/8 -> every node row becomes the per-sample mean.
        w, b = prm
        agg = jnp.mean(xb, axis=1)                                  # (tb,168)
        row = jnp.dot(agg.astype(w.dtype), w,
                      preferred_element_type=jnp.float32) + b
        y = jnp.broadcast_to(row[:, None, :], (tb, C_NODES, D_HID))
    elif indicator == 1:
        # neighbor = total - x  =>  y = x@(W_self - W_nb) + total@W_nb + B
        w_eff, w_nb, b = prm
        total = jnp.sum(xb, axis=1)                                 # (tb,168)
        y = (jnp.dot(x2d.astype(w_eff.dtype), w_eff,
                     preferred_element_type=jnp.float32)
             .reshape(tb, C_NODES, D_HID)
             + jnp.dot(total.astype(w_nb.dtype), w_nb,
                       preferred_element_type=jnp.float32)[:, None, :]
             + b)
    else:
        # MHA attention weights (per-head softmax, averaged), bmm with x, proj.
        w, b, wq, bq, wk, bk = prm
        x16 = x2d.astype(jnp.bfloat16)
        q = (jnp.dot(x16, wq, preferred_element_type=jnp.float32) + bq
             ).reshape(tb, C_NODES, D_HID)
        k = (jnp.dot(x16, wk, preferred_element_type=jnp.float32) + bk
             ).reshape(tb, C_NODES, D_HID)
        inv_sqrt = 1.0 / math.sqrt(HEAD_DIM)
        attn = jnp.zeros((tb, C_NODES, C_NODES), jnp.float32)
        for h in range(NUM_HEADS):                  # static, unrolled
            qh = q[:, :, h * HEAD_DIM:(h + 1) * HEAD_DIM]
            kh = k[:, :, h * HEAD_DIM:(h + 1) * HEAD_DIM]
            sc = lax.dot_general(qh, kh, (((2,), (2,)), ((0,), (0,))),
                                 preferred_element_type=jnp.float32) * inv_sqrt
            m = jnp.max(sc, axis=-1, keepdims=True)
            e = jnp.exp(sc - m)
            attn = attn + e / jnp.sum(e, axis=-1, keepdims=True)
        attn = attn * (1.0 / NUM_HEADS)
        agg = lax.dot_general(attn, xb, (((2,), (1,)), ((0,), (0,))),
                              preferred_element_type=jnp.float32)   # (tb,8,168)
        y = (jnp.dot(agg.reshape(tb * C_NODES, D_HID).astype(jnp.bfloat16), w,
                     preferred_element_type=jnp.float32)
             .reshape(tb, C_NODES, D_HID) + b)
    return jnp.maximum(y, 0.0)


# ---------------------------------------------------------------------------
# Fused kernel: per batch tile -> full GNN block + residual + MLP head.
# ---------------------------------------------------------------------------
def _make_fused_kernel(indicator, n1, n2):
    def kernel(*refs):
        x_ref = refs[0]
        i1 = 1 + n1
        i2 = i1 + n2
        prm1 = [r[...] for r in refs[1:i1]]
        prm2 = [r[...] for r in refs[i1:i2]]
        nm_ref = refs[i2]                                   # (8, 8, 1) one-hots
        w1_ref, b1_ref, w2_ref, b2_ref, w3_ref, b3_ref = refs[i2 + 1:i2 + 7]
        o_ref = refs[-1]

        xb = x_ref[...]                                     # (tb, 8, 168) f32
        tb = xb.shape[0]

        y1 = _gnn_layer(xb, prm1, indicator)
        y2 = _gnn_layer(y1, prm2, indicator)                # BN scale folded in
        s = xb + y2                                         # residual

        # MLP1 decomposed per node: h1 = sum_c s[:,c,:] @ W1r[c].  Node rows are
        # extracted with a masked sublane reduction (same op class as the node
        # mean/sum above) so no (tb,8,168)->(tb,1344) relayout is needed.
        # TODO(synk): a direct value-level slice s[:, c, :] would be cheaper if
        # the Mosaic relayout for it is verified on all target generations.
        h1 = jnp.zeros((tb, w1_ref.shape[-1]), jnp.float32)
        for c in range(C_NODES):                            # static, unrolled
            mask = nm_ref[c]                                # (8, 1) one-hot
            s_c = jnp.sum(s * mask, axis=1)                 # (tb, 168)
            h1 = h1 + jnp.dot(s_c.astype(jnp.bfloat16), w1_ref[c],
                              preferred_element_type=jnp.float32)
        h1 = jnp.maximum(h1 + b1_ref[...], 0.0)

        h2 = jnp.dot(h1.astype(jnp.bfloat16), w2_ref[...],
                     preferred_element_type=jnp.float32) + b2_ref[...]
        h2 = jnp.maximum(h2, 0.0)
        logits = jnp.dot(h2.astype(jnp.bfloat16), w3_ref[...],
                         preferred_element_type=jnp.float32) + b3_ref[...]

        z = logits - jnp.max(logits, axis=-1, keepdims=True)
        o_ref[...] = z - jnp.log(jnp.sum(jnp.exp(z), axis=-1, keepdims=True))

    return kernel


def _fused_forward(xr, prep, indicator, *, tb):
    """xr: (B_pad, 8, 168) f32 with B_pad % tb == 0  ->  (B_pad, num_classes)."""
    b_pad = xr.shape[0]
    p1, p2, mlp = prep["gnn1"], prep["gnn2"], prep["mlp"]
    nc = mlp[4].shape[1]                                    # W3T: (2000, nc)

    args = [xr] + list(p1) + list(p2) + [prep["node_mask"]] + list(mlp)
    x_spec = pl.BlockSpec((tb, C_NODES, D_HID), lambda i: (i, 0, 0))
    # Weights/biases: full-array blocks with constant index_map -> fetched once
    # per kernel launch and kept VMEM-resident across the batch grid.
    w_specs = [pl.BlockSpec(a.shape, (lambda i, nd=a.ndim: (0,) * nd))
               for a in args[1:]]

    return pl.pallas_call(
        _make_fused_kernel(indicator, len(p1), len(p2)),
        out_shape=jax.ShapeDtypeStruct((b_pad, nc), jnp.float32),
        grid=(b_pad // tb,),
        in_specs=[x_spec] + w_specs,
        out_specs=pl.BlockSpec((tb, nc), lambda i: (i, 0)),
        compiler_params=pltpu.CompilerParams(
            dimension_semantics=("parallel",),
            vmem_limit_bytes=VMEM_LIMIT_BYTES),
    )(*args)


# ---------------------------------------------------------------------------
# One-time host-side parameter preparation (outside jit):
#   * fold the PyTorch transpose(1,3)+flatten into a W1 row permutation,
#   * fold eval-mode BatchNorm into gnn2's output weights/bias,
#   * split W_cat into (W_self - W_nb, W_nb),
#   * reshape W1 into per-node (8, 168, 500) chunks,
#   * cast all matmul weights to bf16 (f32 accumulation in-kernel).
# ---------------------------------------------------------------------------
def prepare_params(params, indicator):
    bn_scale = 1.0 / math.sqrt(1.0 + BN_EPS)
    # TODO(synk): with a real trained checkpoint, use the actual BatchNorm2d
    # running stats / affine params here instead of the default-stats scale.

    def gnn_inputs(p, scale):
        if indicator == 0:
            return [(p["W_gnn"] * scale).astype(jnp.bfloat16),
                    (p["B_gnn"] * scale).reshape(1, -1).astype(jnp.float32)]
        if indicator == 1:
            w_self = p["W_cat"][:D_HID, :]          # torch.cat((x, neighbor_x))
            w_nb = p["W_cat"][D_HID:, :]
            return [((w_self - w_nb) * scale).astype(jnp.bfloat16),
                    (w_nb * scale).astype(jnp.bfloat16),
                    (p["B_cat"] * scale).reshape(1, -1).astype(jnp.float32)]
        return [(p["W_gnn"] * scale).astype(jnp.bfloat16),
                (p["B_gnn"] * scale).reshape(1, -1).astype(jnp.float32),
                p["WqT"].astype(jnp.bfloat16),
                p["bq"].reshape(1, -1).astype(jnp.float32),
                p["WkT"].astype(jnp.bfloat16),
                p["bk"].reshape(1, -1).astype(jnp.float32)]

    m = params["mlp"]
    n_hidden1 = m["W1T"].shape[1]
    w1r = (m["W1T"][INV_PERM]
           .reshape(C_NODES, D_HID, n_hidden1).astype(jnp.bfloat16))
    node_mask = jnp.eye(C_NODES, dtype=jnp.float32).reshape(C_NODES, C_NODES, 1)

    return {
        "gnn1": gnn_inputs(params["gnn1"], 1.0),
        "gnn2": gnn_inputs(params["gnn2"], bn_scale),
        "node_mask": node_mask,
        "mlp": [w1r,
                m["b1"].reshape(1, -1).astype(jnp.float32),
                m["W2T"].astype(jnp.bfloat16),
                m["b2"].reshape(1, -1).astype(jnp.float32),
                m["W3T"].astype(jnp.bfloat16),
                m["b3"].reshape(1, -1).astype(jnp.float32)],
    }


# ---------------------------------------------------------------------------
# Full forward.
# ---------------------------------------------------------------------------
def armband_forward(x, prep, indicator):
    B = x.shape[0]
    assert x.shape[1:] == (T_DIM, C_NODES, F_DIM)
    # GNN working layout (B, 8, 168) == x.transpose(1,2).reshape in PyTorch.
    xr = jnp.transpose(x, (0, 2, 1, 3)).reshape(B, C_NODES, D_HID)
    xr = xr.astype(jnp.float32)

    # Tile: 256 samples/step (128 for the attention variant, which has ~2x the
    # in-kernel f32 temporaries).  Grid stays >= 2 steps for batches >= 2*tb,
    # so both v7x TensorCores get work via the "parallel" grid axis.
    tb_target = 128 if indicator == 2 else 256
    tb = tb_target if B >= tb_target else _round_up(B, 8)
    b_pad = _round_up(B, tb)
    if b_pad != B:
        xr = jnp.pad(xr, ((0, b_pad - B), (0, 0), (0, 0)))

    # TODO(synk): Spatial_layer.batch1(x2) only updates running stats during
    # training; its output is discarded by the original code -> no-op here.
    out = _fused_forward(xr, prep, indicator, tb=tb)
    return out[:B]


# ---------------------------------------------------------------------------
# Deterministic synthetic parameters (shapes follow the module __init__).
# Only the Q/K projections of the MultiheadAttention are modeled since the
# module only consumes the averaged attention weights (indicator == 2).
# ---------------------------------------------------------------------------
def xavier_uniform(key, shape):
    fan_in, fan_out = shape
    bound = math.sqrt(6.0 / (fan_in + fan_out))
    return jax.random.uniform(key, shape, jnp.float32, -bound, bound)


def init_gnn_params(key):
    ks = jax.random.split(key, 8)
    return {
        "W_gnn": xavier_uniform(ks[0], (D_HID, D_HID)),
        "B_gnn": jax.random.normal(ks[1], (D_HID,), jnp.float32),
        "W_cat": xavier_uniform(ks[2], (2 * D_HID, D_HID)),
        "B_cat": jax.random.normal(ks[3], (D_HID,), jnp.float32),
        "WqT": xavier_uniform(ks[4], (D_HID, D_HID)),
        "bq": 0.02 * jax.random.normal(ks[5], (D_HID,), jnp.float32),
        "WkT": xavier_uniform(ks[6], (D_HID, D_HID)),
        "bk": 0.02 * jax.random.normal(ks[7], (D_HID,), jnp.float32),
    }


def init_params(key, num_classes):
    k1, k2, k3, k4, k5, k6, k7, k8 = jax.random.split(key, 8)
    return {
        "gnn1": init_gnn_params(k1),
        "gnn2": init_gnn_params(k2),
        "mlp": {
            "W1T": xavier_uniform(k3, (FLAT_DIM, 500)),
            "b1": 0.01 * jax.random.normal(k4, (500,), jnp.float32),
            "W2T": xavier_uniform(k5, (500, 2000)),
            "b2": 0.01 * jax.random.normal(k6, (2000,), jnp.float32),
            "W3T": xavier_uniform(k7, (2000, num_classes)),
            "b3": 0.01 * jax.random.normal(k8, (num_classes,), jnp.float32),
        },
    }


# ---------------------------------------------------------------------------
# Pure-JAX f32 reference mirroring the PyTorch forward (for correctness).
# ---------------------------------------------------------------------------
def reference_forward(x, params, indicator):
    B = x.shape[0]
    xr = jnp.transpose(x, (0, 2, 1, 3)).reshape(B, C_NODES, D_HID)

    def gnn_ref(z, p):
        if indicator == 0:
            agg = jnp.broadcast_to(jnp.mean(z, axis=1, keepdims=True), z.shape)
            return agg @ p["W_gnn"] + p["B_gnn"]
        if indicator == 1:
            nb = jnp.sum(z, axis=1, keepdims=True) - z
            cat = jnp.concatenate([z, nb], axis=-1)
            return cat @ p["W_cat"] + p["B_cat"]
        q = z @ p["WqT"] + p["bq"]
        k = z @ p["WkT"] + p["bk"]
        qh = q.reshape(B, C_NODES, NUM_HEADS, HEAD_DIM)
        kh = k.reshape(B, C_NODES, NUM_HEADS, HEAD_DIM)
        sc = jnp.einsum("bqhd,bkhd->bhqk", qh, kh) / math.sqrt(HEAD_DIM)
        attn = jax.nn.softmax(sc, axis=-1).mean(axis=1)      # (B, 8, 8)
        return jnp.einsum("bqk,bkd->bqd", attn, z) @ p["W_gnn"] + p["B_gnn"]

    bn_scale = 1.0 / math.sqrt(1.0 + BN_EPS)
    y1 = jax.nn.relu(gnn_ref(xr, params["gnn1"]))
    y2 = jax.nn.relu(gnn_ref(y1, params["gnn2"]) * bn_scale)
    s = xr + y2
    s4 = jnp.transpose(s.reshape(B, C_NODES, T_DIM, F_DIM), (0, 2, 1, 3))
    flat = jnp.transpose(s4, (0, 3, 2, 1)).reshape(B, -1)
    m = params["mlp"]
    h = jax.nn.relu(flat @ m["W1T"] + m["b1"])
    h = jax.nn.relu(h @ m["W2T"] + m["b2"])
    logits = h @ m["W3T"] + m["b3"]
    return jax.nn.log_softmax(logits, axis=1)


if __name__ == "__main__":
    key = jax.random.PRNGKey(0)
    kx, kp = jax.random.split(key)
    NUM_CLASSES = 7
    params = init_params(kp, NUM_CLASSES)

    fwd = jax.jit(armband_forward, static_argnums=2)

    # Small batch: correctness for all three GNN variants.
    B = 2
    x = jax.random.normal(kx, (B, T_DIM, C_NODES, F_DIM), jnp.float32)
    for indicator in (0, 1, 2):
        prep = prepare_params(params, indicator)      # one-time, outside jit
        out = jax.block_until_ready(fwd(x, prep, indicator))
        ref = jax.block_until_ready(reference_forward(x, params, indicator))
        assert out.shape == (B, NUM_CLASSES)
        # bf16 MXU operands vs. the f32 reference -> slightly looser tolerance.
        np.testing.assert_allclose(np.asarray(out), np.asarray(ref),
                                   rtol=3e-2, atol=3e-2)

    # Larger batch: exercises the multi-step (tiled) grid and padding path.
    B2 = 300
    x2 = jax.random.normal(jax.random.PRNGKey(1),
                           (B2, T_DIM, C_NODES, F_DIM), jnp.float32)
    prep2 = prepare_params(params, 2)
    out2 = jax.block_until_ready(fwd(x2, prep2, 2))
    ref2 = jax.block_until_ready(reference_forward(x2, params, 2))
    assert out2.shape == (B2, NUM_CLASSES)
    np.testing.assert_allclose(np.asarray(out2), np.asarray(ref2),
                               rtol=3e-2, atol=3e-2)

    print("KERNEL_OK")
</pallas_src>

<mosaic_0001>
module attributes {stable_mosaic.version = 11 : i64} {
  func.func @kernel(%arg0: i32, %arg1: memref<8x8x168xf32, #tpu.memory_space<vmem>>, %arg2: memref<168x168xbf16, #tpu.memory_space<vmem>>, %arg3: memref<1x168xf32, #tpu.memory_space<vmem>>, %arg4: memref<168x168xbf16, #tpu.memory_space<vmem>>, %arg5: memref<1x168xf32, #tpu.memory_space<vmem>>, %arg6: memref<8x8x1xf32, #tpu.memory_space<vmem>>, %arg7: memref<8x168x500xbf16, #tpu.memory_space<vmem>>, %arg8: memref<1x500xf32, #tpu.memory_space<vmem>>, %arg9: memref<500x2000xbf16, #tpu.memory_space<vmem>>, %arg10: memref<1x2000xf32, #tpu.memory_space<vmem>>, %arg11: memref<2000x7xbf16, #tpu.memory_space<vmem>>, %arg12: memref<1x7xf32, #tpu.memory_space<vmem>>, %arg13: memref<8x7xf32, #tpu.memory_space<vmem>>) attributes {dimension_semantics = [#tpu.dimension_semantics<parallel>], iteration_bounds = array<i64: 1>, scalar_prefetch = 0 : i64, scratch_operands = 0 : i64, tpu.core_type = #tpu.core_type<tc>, window_params = [{transform_indices = @transform_0, window_bounds = array<i64: 8, 8, 168>}, {pipeline_mode = #tpu.pipeline_mode<synchronous>, transform_indices = @transform_1, window_bounds = array<i64: 168, 168>}, {pipeline_mode = #tpu.pipeline_mode<synchronous>, transform_indices = @transform_2, window_bounds = array<i64: 1, 168>}, {pipeline_mode = #tpu.pipeline_mode<synchronous>, transform_indices = @transform_3, window_bounds = array<i64: 168, 168>}, {pipeline_mode = #tpu.pipeline_mode<synchronous>, transform_indices = @transform_4, window_bounds = array<i64: 1, 168>}, {pipeline_mode = #tpu.pipeline_mode<synchronous>, transform_indices = @transform_5, window_bounds = array<i64: 8, 8, 1>}, {pipeline_mode = #tpu.pipeline_mode<synchronous>, transform_indices = @transform_6, window_bounds = array<i64: 8, 168, 500>}, {pipeline_mode = #tpu.pipeline_mode<synchronous>, transform_indices = @transform_7, window_bounds = array<i64: 1, 500>}, {pipeline_mode = #tpu.pipeline_mode<synchronous>, transform_indices = @transform_8, window_bounds = array<i64: 500, 2000>}, {pipeline_mode = #tpu.pipeline_mode<synchronous>, transform_indices = @transform_9, window_bounds = array<i64: 1, 2000>}, {pipeline_mode = #tpu.pipeline_mode<synchronous>, transform_indices = @transform_10, window_bounds = array<i64: 2000, 7>}, {pipeline_mode = #tpu.pipeline_mode<synchronous>, transform_indices = @transform_11, window_bounds = array<i64: 1, 7>}, {transform_indices = @transform_12, window_bounds = array<i64: 8, 7>}]} {
    %c0 = arith.constant 0 : index
    %c0_0 = arith.constant 0 : index
    %0 = vector.load %arg2[%c0, %c0_0] : memref<168x168xbf16, #tpu.memory_space<vmem>>, vector<168x168xbf16>
    %c0_1 = arith.constant 0 : index
    %c0_2 = arith.constant 0 : index
    %1 = vector.load %arg3[%c0_1, %c0_2] : memref<1x168xf32, #tpu.memory_space<vmem>>, vector<1x168xf32>
    %c0_3 = arith.constant 0 : index
    %c0_4 = arith.constant 0 : index
    %2 = vector.load %arg4[%c0_3, %c0_4] : memref<168x168xbf16, #tpu.memory_space<vmem>>, vector<168x168xbf16>
    %c0_5 = arith.constant 0 : index
    %c0_6 = arith.constant 0 : index
    %3 = vector.load %arg5[%c0_5, %c0_6] : memref<1x168xf32, #tpu.memory_space<vmem>>, vector<1x168xf32>
    %c0_7 = arith.constant 0 : index
    %c0_8 = arith.constant 0 : index
    %c0_9 = arith.constant 0 : index
    %4 = vector.load %arg1[%c0_7, %c0_8, %c0_9] : memref<8x8x168xf32, #tpu.memory_space<vmem>>, vector<8x8x168xf32>
    %cst = arith.constant dense<0.000000e+00> : vector<8x168xf32>
    %5 = vector.multi_reduction <add>, %4, %cst [1] : vector<8x8x168xf32> to vector<8x168xf32>
    %cst_10 = arith.constant 8.000000e+00 : f32
    %6 = vector.broadcast %cst_10 : f32 to vector<8x168xf32>
    %7 = arith.divf %5, %6 : vector<8x168xf32>
    %8 = arith.truncf %7 : vector<8x168xf32> to vector<8x168xbf16>
    %cst_11 = arith.constant dense<0.000000e+00> : vector<8x168xf32>
    %9 = tpu.matmul %8, %0, %cst_11 {dimension_numbers = #tpu.dot_dimension_numbers<[1], [0], [0], [1], [0, 0, 1, 1], [], []>} : vector<8x168xbf16>, vector<168x168xbf16>, vector<8x168xf32> -> vector<8x168xf32>
    %10 = vector.broadcast %1 : vector<1x168xf32> to vector<8x168xf32>
    %11 = arith.addf %9, %10 : vector<8x168xf32>
    %12 = vector.shape_cast %11 : vector<8x168xf32> to vector<8x1x168xf32>
    %13 = vector.shape_cast %12 : vector<8x1x168xf32> to vector<8x1x168xf32>
    %14 = vector.broadcast %13 : vector<8x1x168xf32> to vector<8x8x168xf32>
    %cst_12 = arith.constant 0.000000e+00 : f32
    %15 = vector.broadcast %cst_12 : f32 to vector<8x8x168xf32>
    %16 = arith.maximumf %14, %15 : vector<8x8x168xf32>
    %cst_13 = arith.constant dense<0.000000e+00> : vector<8x168xf32>
    %17 = vector.multi_reduction <add>, %16, %cst_13 [1] : vector<8x8x168xf32> to vector<8x168xf32>
    %cst_14 = arith.constant 8.000000e+00 : f32
    %18 = vector.broadcast %cst_14 : f32 to vector<8x168xf32>
    %19 = arith.divf %17, %18 : vector<8x168xf32>
    %20 = arith.truncf %19 : vector<8x168xf32> to vector<8x168xbf16>
    %cst_15 = arith.constant dense<0.000000e+00> : vector<8x168xf32>
    %21 = tpu.matmul %20, %2, %cst_15 {dimension_numbers = #tpu.dot_dimension_numbers<[1], [0], [0], [1], [0, 0, 1, 1], [], []>} : vector<8x168xbf16>, vector<168x168xbf16>, vector<8x168xf32> -> vector<8x168xf32>
    %22 = vector.broadcast %3 : vector<1x168xf32> to vector<8x168xf32>
    %23 = arith.addf %21, %22 : vector<8x168xf32>
    %24 = vector.shape_cast %23 : vector<8x168xf32> to vector<8x1x168xf32>
    %25 = vector.shape_cast %24 : vector<8x1x168xf32> to vector<8x1x168xf32>
    %26 = vector.broadcast %25 : vector<8x1x168xf32> to vector<8x8x168xf32>
    %cst_16 = arith.constant 0.000000e+00 : f32
    %27 = vector.broadcast %cst_16 : f32 to vector<8x8x168xf32>
    %28 = arith.maximumf %26, %27 : vector<8x8x168xf32>
    %29 = arith.addf %4, %28 : vector<8x8x168xf32>
    %cst_17 = arith.constant 0.000000e+00 : f32
    %30 = vector.broadcast %cst_17 : f32 to vector<8x500xf32>
    %c0_18 = arith.constant 0 : index
    %c0_19 = arith.constant 0 : index
    %c0_20 = arith.constant 0 : index
    %31 = vector.load %arg6[%c0_18, %c0_19, %c0_20] : memref<8x8x1xf32, #tpu.memory_space<vmem>>, vector<1x8x1xf32>
    %32 = vector.shape_cast %31 : vector<1x8x1xf32> to vector<8x1xf32>
    %33 = vector.shape_cast %32 : vector<8x1xf32> to vector<1x8x1xf32>
    %34 = vector.broadcast %33 : vector<1x8x1xf32> to vector<8x8x168xf32>
    %35 = arith.mulf %29, %34 : vector<8x8x168xf32>
    %cst_21 = arith.constant dense<0.000000e+00> : vector<8x168xf32>
    %36 = vector.multi_reduction <add>, %35, %cst_21 [1] : vector<8x8x168xf32> to vector<8x168xf32>
    %37 = arith.truncf %36 : vector<8x168xf32> to vector<8x168xbf16>
    %c0_22 = arith.constant 0 : index
    %c0_23 = arith.constant 0 : index
    %c0_24 = arith.constant 0 : index
    %38 = vector.load %arg7[%c0_22, %c0_23, %c0_24] : memref<8x168x500xbf16, #tpu.memory_space<vmem>>, vector<1x168x500xbf16>
    %39 = vector.shape_cast %38 : vector<1x168x500xbf16> to vector<168x500xbf16>
    %cst_25 = arith.constant dense<0.000000e+00> : vector<8x500xf32>
    %40 = tpu.matmul %37, %39, %cst_25 {dimension_numbers = #tpu.dot_dimension_numbers<[1], [0], [0], [1], [0, 0, 1, 1], [], []>} : vector<8x168xbf16>, vector<168x500xbf16>, vector<8x500xf32> -> vector<8x500xf32>
    %41 = arith.addf %30, %40 : vector<8x500xf32>
    %c1 = arith.constant 1 : index
    %c0_26 = arith.constant 0 : index
    %c0_27 = arith.constant 0 : index
    %42 = vector.load %arg6[%c1, %c0_26, %c0_27] : memref<8x8x1xf32, #tpu.memory_space<vmem>>, vector<1x8x1xf32>
    %43 = vector.shape_cast %42 : vector<1x8x1xf32> to vector<8x1xf32>
    %44 = vector.shape_cast %43 : vector<8x1xf32> to vector<1x8x1xf32>
    %45 = vector.broadcast %44 : vector<1x8x1xf32> to vector<8x8x168xf32>
    %46 = arith.mulf %29, %45 : vector<8x8x168xf32>
    %cst_28 = arith.constant dense<0.000000e+00> : vector<8x168xf32>
    %47 = vector.multi_reduction <add>, %46, %cst_28 [1] : vector<8x8x168xf32> to vector<8x168xf32>
    %48 = arith.truncf %47 : vector<8x168xf32> to vector<8x168xbf16>
    %c1_29 = arith.constant 1 : index
    %c0_30 = arith.constant 0 : index
    %c0_31 = arith.constant 0 : index
    %49 = vector.load %arg7[%c1_29, %c0_30, %c0_31] : memref<8x168x500xbf16, #tpu.memory_space<vmem>>, vector<1x168x500xbf16>
    %50 = vector.shape_cast %49 : vector<1x168x500xbf16> to vector<168x500xbf16>
    %cst_32 = arith.constant dense<0.000000e+00> : vector<8x500xf32>
    %51 = tpu.matmul %48, %50, %cst_32 {dimension_numbers = #tpu.dot_dimension_numbers<[1], [0], [0], [1], [0, 0, 1, 1], [], []>} : vector<8x168xbf16>, vector<168x500xbf16>, vector<8x500xf32> -> vector<8x500xf32>
    %52 = arith.addf %41, %51 : vector<8x500xf32>
    %c2 = arith.constant 2 : index
    %c0_33 = arith.constant 0 : index
    %c0_34 = arith.constant 0 : index
    %53 = vector.load %arg6[%c2, %c0_33, %c0_34] : memref<8x8x1xf32, #tpu.memory_space<vmem>>, vector<1x8x1xf32>
    %54 = vector.shape_cast %53 : vector<1x8x1xf32> to vector<8x1xf32>
    %55 = vector.shape_cast %54 : vector<8x1xf32> to vector<1x8x1xf32>
    %56 = vector.broadcast %55 : vector<1x8x1xf32> to vector<8x8x168xf32>
    %57 = arith.mulf %29, %56 : vector<8x8x168xf32>
    %cst_35 = arith.constant dense<0.000000e+00> : vector<8x168xf32>
    %58 = vector.multi_reduction <add>, %57, %cst_35 [1] : vector<8x8x168xf32> to vector<8x168xf32>
    %59 = arith.truncf %58 : vector<8x168xf32> to vector<8x168xbf16>
    %c2_36 = arith.constant 2 : index
    %c0_37 = arith.constant 0 : index
    %c0_38 = arith.constant 0 : index
    %60 = vector.load %arg7[%c2_36, %c0_37, %c0_38] : memref<8x168x500xbf16, #tpu.memory_space<vmem>>, vector<1x168x500xbf16>
    %61 = vector.shape_cast %60 : vector<1x168x500xbf16> to vector<168x500xbf16>
    %cst_39 = arith.constant dense<0.000000e+00> : vector<8x500xf32>
    %62 = tpu.matmul %59, %61, %cst_39 {dimension_numbers = #tpu.dot_dimension_numbers<[1], [0], [0], [1], [0, 0, 1, 1], [], []>} : vector<8x168xbf16>, vector<168x500xbf16>, vector<8x500xf32> -> vector<8x500xf32>
    %63 = arith.addf %52, %62 : vector<8x500xf32>
    %c3 = arith.constant 3 : index
    %c0_40 = arith.constant 0 : index
    %c0_41 = arith.constant 0 : index
    %64 = vector.load %arg6[%c3, %c0_40, %c0_41] : memref<8x8x1xf32, #tpu.memory_space<vmem>>, vector<1x8x1xf32>
    %65 = vector.shape_cast %64 : vector<1x8x1xf32> to vector<8x1xf32>
    %66 = vector.shape_cast %65 : vector<8x1xf32> to vector<1x8x1xf32>
    %67 = vector.broadcast %66 : vector<1x8x1xf32> to vector<8x8x168xf32>
    %68 = arith.mulf %29, %67 : vector<8x8x168xf32>
    %cst_42 = arith.constant dense<0.000000e+00> : vector<8x168xf32>
    %69 = vector.multi_reduction <add>, %68, %cst_42 [1] : vector<8x8x168xf32> to vector<8x168xf32>
    %70 = arith.truncf %69 : vector<8x168xf32> to vector<8x168xbf16>
    %c3_43 = arith.constant 3 : index
    %c0_44 = arith.constant 0 : index
    %c0_45 = arith.constant 0 : index
    %71 = vector.load %arg7[%c3_43, %c0_44, %c0_45] : memref<8x168x500xbf16, #tpu.memory_space<vmem>>, vector<1x168x500xbf16>
    %72 = vector.shape_cast %71 : vector<1x168x500xbf16> to vector<168x500xbf16>
    %cst_46 = arith.constant dense<0.000000e+00> : vector<8x500xf32>
    %73 = tpu.matmul %70, %72, %cst_46 {dimension_numbers = #tpu.dot_dimension_numbers<[1], [0], [0], [1], [0, 0, 1, 1], [], []>} : vector<8x168xbf16>, vector<168x500xbf16>, vector<8x500xf32> -> vector<8x500xf32>
    %74 = arith.addf %63, %73 : vector<8x500xf32>
    %c4 = arith.constant 4 : index
    %c0_47 = arith.constant 0 : index
    %c0_48 = arith.constant 0 : index
    %75 = vector.load %arg6[%c4, %c0_47, %c0_48] : memref<8x8x1xf32, #tpu.memory_space<vmem>>, vector<1x8x1xf32>
    %76 = vector.shape_cast %75 : vector<1x8x1xf32> to vector<8x1xf32>
    %77 = vector.shape_cast %76 : vector<8x1xf32> to vector<1x8x1xf32>
    %78 = vector.broadcast %77 : vector<1x8x1xf32> to vector<8x8x168xf32>
    %79 = arith.mulf %29, %78 : vector<8x8x168xf32>
    %cst_49 = arith.constant dense<0.000000e+00> : vector<8x168xf32>
    %80 = vector.multi_reduction <add>, %79, %cst_49 [1] : vector<8x8x168xf32> to vector<8x168xf32>
    %81 = arith.truncf %80 : vector<8x168xf32> to vector<8x168xbf16>
    %c4_50 = arith.constant 4 : index
    %c0_51 = arith.constant 0 : index
    %c0_52 = arith.constant 0 : index
    %82 = vector.load %arg7[%c4_50, %c0_51, %c0_52] : memref<8x168x500xbf16, #tpu.memory_space<vmem>>, vector<1x168x500xbf16>
    %83 = vector.shape_cast %82 : vector<1x168x500xbf16> to vector<168x500xbf16>
    %cst_53 = arith.constant dense<0.000000e+00> : vector<8x500xf32>
    %84 = tpu.matmul %81, %83, %cst_53 {dimension_numbers = #tpu.dot_dimension_numbers<[1], [0], [0], [1], [0, 0, 1, 1], [], []>} : vector<8x168xbf16>, vector<168x500xbf16>, vector<8x500xf32> -> vector<8x500xf32>
    %85 = arith.addf %74, %84 : vector<8x500xf32>
    %c5 = arith.constant 5 : index
    %c0_54 = arith.constant 0 : index
    %c0_55 = arith.constant 0 : index
    %86 = vector.load %arg6[%c5, %c0_54, %c0_55] : memref<8x8x1xf32, #tpu.memory_space<vmem>>, vector<1x8x1xf32>
    %87 = vector.shape_cast %86 : vector<1x8x1xf32> to vector<8x1xf32>
    %88 = vector.shape_cast %87 : vector<8x1xf32> to vector<1x8x1xf32>
    %89 = vector.broadcast %88 : vector<1x8x1xf32> to vector<8x8x168xf32>
    %90 = arith.mulf %29, %89 : vector<8x8x168xf32>
    %cst_56 = arith.constant dense<0.000000e+00> : vector<8x168xf32>
    %91 = vector.multi_reduction <add>, %90, %cst_56 [1] : vector<8x8x168xf32> to vector<8x168xf32>
    %92 = arith.truncf %91 : vector<8x168xf32> to vector<8x168xbf16>
    %c5_57 = arith.constant 5 : index
    %c0_58 = arith.constant 0 : index
    %c0_59 = arith.constant 0 : index
    %93 = vector.load %arg7[%c5_57, %c0_58, %c0_59] : memref<8x168x500xbf16, #tpu.memory_space<vmem>>, vector<1x168x500xbf16>
    %94 = vector.shape_cast %93 : vector<1x168x500xbf16> to vector<168x500xbf16>
    %cst_60 = arith.constant dense<0.000000e+00> : vector<8x500xf32>
    %95 = tpu.matmul %92, %94, %cst_60 {dimension_numbers = #tpu.dot_dimension_numbers<[1], [0], [0], [1], [0, 0, 1, 1], [], []>} : vector<8x168xbf16>, vector<168x500xbf16>, vector<8x500xf32> -> vector<8x500xf32>
    %96 = arith.addf %85, %95 : vector<8x500xf32>
    %c6 = arith.constant 6 : index
    %c0_61 = arith.constant 0 : index
    %c0_62 = arith.constant 0 : index
    %97 = vector.load %arg6[%c6, %c0_61, %c0_62] : memref<8x8x1xf32, #tpu.memory_space<vmem>>, vector<1x8x1xf32>
    %98 = vector.shape_cast %97 : vector<1x8x1xf32> to vector<8x1xf32>
    %99 = vector.shape_cast %98 : vector<8x1xf32> to vector<1x8x1xf32>
    %100 = vector.broadcast %99 : vector<1x8x1xf32> to vector<8x8x168xf32>
    %101 = arith.mulf %29, %100 : vector<8x8x168xf32>
    %cst_63 = arith.constant dense<0.000000e+00> : vector<8x168xf32>
    %102 = vector.multi_reduction <add>, %101, %cst_63 [1] : vector<8x8x168xf32> to vector<8x168xf32>
    %103 = arith.truncf %102 : vector<8x168xf32> to vector<8x168xbf16>
    %c6_64 = arith.constant 6 : index
    %c0_65 = arith.constant 0 : index
    %c0_66 = arith.constant 0 : index
    %104 = vector.load %arg7[%c6_64, %c0_65, %c0_66] : memref<8x168x500xbf16, #tpu.memory_space<vmem>>, vector<1x168x500xbf16>
    %105 = vector.shape_cast %104 : vector<1x168x500xbf16> to vector<168x500xbf16>
    %cst_67 = arith.constant dense<0.000000e+00> : vector<8x500xf32>
    %106 = tpu.matmul %103, %105, %cst_67 {dimension_numbers = #tpu.dot_dimension_numbers<[1], [0], [0], [1], [0, 0, 1, 1], [], []>} : vector<8x168xbf16>, vector<168x500xbf16>, vector<8x500xf32> -> vector<8x500xf32>
    %107 = arith.addf %96, %106 : vector<8x500xf32>
    %c7 = arith.constant 7 : index
    %c0_68 = arith.constant 0 : index
    %c0_69 = arith.constant 0 : index
    %108 = vector.load %arg6[%c7, %c0_68, %c0_69] : memref<8x8x1xf32, #tpu.memory_space<vmem>>, vector<1x8x1xf32>
    %109 = vector.shape_cast %108 : vector<1x8x1xf32> to vector<8x1xf32>
    %110 = vector.shape_cast %109 : vector<8x1xf32> to vector<1x8x1xf32>
    %111 = vector.broadcast %110 : vector<1x8x1xf32> to vector<8x8x168xf32>
    %112 = arith.mulf %29, %111 : vector<8x8x168xf32>
    %cst_70 = arith.constant dense<0.000000e+00> : vector<8x168xf32>
    %113 = vector.multi_reduction <add>, %112, %cst_70 [1] : vector<8x8x168xf32> to vector<8x168xf32>
    %114 = arith.truncf %113 : vector<8x168xf32> to vector<8x168xbf16>
    %c7_71 = arith.constant 7 : index
    %c0_72 = arith.constant 0 : index
    %c0_73 = arith.constant 0 : index
    %115 = vector.load %arg7[%c7_71, %c0_72, %c0_73] : memref<8x168x500xbf16, #tpu.memory_space<vmem>>, vector<1x168x500xbf16>
    %116 = vector.shape_cast %115 : vector<1x168x500xbf16> to vector<168x500xbf16>
    %cst_74 = arith.constant dense<0.000000e+00> : vector<8x500xf32>
    %117 = tpu.matmul %114, %116, %cst_74 {dimension_numbers = #tpu.dot_dimension_numbers<[1], [0], [0], [1], [0, 0, 1, 1], [], []>} : vector<8x168xbf16>, vector<168x500xbf16>, vector<8x500xf32> -> vector<8x500xf32>
    %118 = arith.addf %107, %117 : vector<8x500xf32>
    %c0_75 = arith.constant 0 : index
    %c0_76 = arith.constant 0 : index
    %119 = vector.load %arg8[%c0_75, %c0_76] : memref<1x500xf32, #tpu.memory_space<vmem>>, vector<1x500xf32>
    %120 = vector.broadcast %119 : vector<1x500xf32> to vector<8x500xf32>
    %121 = arith.addf %118, %120 : vector<8x500xf32>
    %cst_77 = arith.constant 0.000000e+00 : f32
    %122 = vector.broadcast %cst_77 : f32 to vector<8x500xf32>
    %123 = arith.maximumf %121, %122 : vector<8x500xf32>
    %124 = arith.truncf %123 : vector<8x500xf32> to vector<8x500xbf16>
    %c0_78 = arith.constant 0 : index
    %c0_79 = arith.constant 0 : index
    %125 = vector.load %arg9[%c0_78, %c0_79] : memref<500x2000xbf16, #tpu.memory_space<vmem>>, vector<500x2000xbf16>
    %cst_80 = arith.constant dense<0.000000e+00> : vector<8x2000xf32>
    %126 = tpu.matmul %124, %125, %cst_80 {dimension_numbers = #tpu.dot_dimension_numbers<[1], [0], [0], [1], [0, 0, 1, 1], [], []>} : vector<8x500xbf16>, vector<500x2000xbf16>, vector<8x2000xf32> -> vector<8x2000xf32>
    %c0_81 = arith.constant 0 : index
    %c0_82 = arith.constant 0 : index
    %127 = vector.load %arg10[%c0_81, %c0_82] : memref<1x2000xf32, #tpu.memory_space<vmem>>, vector<1x2000xf32>
    %128 = vector.broadcast %127 : vector<1x2000xf32> to vector<8x2000xf32>
    %129 = arith.addf %126, %128 : vector<8x2000xf32>
    %cst_83 = arith.constant 0.000000e+00 : f32
    %130 = vector.broadcast %cst_83 : f32 to vector<8x2000xf32>
    %131 = arith.maximumf %129, %130 : vector<8x2000xf32>
    %132 = arith.truncf %131 : vector<8x2000xf32> to vector<8x2000xbf16>
    %c0_84 = arith.constant 0 : index
    %c0_85 = arith.constant 0 : index
    %133 = vector.load %arg11[%c0_84, %c0_85] : memref<2000x7xbf16, #tpu.memory_space<vmem>>, vector<2000x7xbf16>
    %cst_86 = arith.constant dense<0.000000e+00> : vector<8x7xf32>
    %134 = tpu.matmul %132, %133, %cst_86 {dimension_numbers = #tpu.dot_dimension_numbers<[1], [0], [0], [1], [0, 0, 1, 1], [], []>} : vector<8x2000xbf16>, vector<2000x7xbf16>, vector<8x7xf32> -> vector<8x7xf32>
    %c0_87 = arith.constant 0 : index
    %c0_88 = arith.constant 0 : index
    %135 = vector.load %arg12[%c0_87, %c0_88] : memref<1x7xf32, #tpu.memory_space<vmem>>, vector<1x7xf32>
    %136 = vector.broadcast %135 : vector<1x7xf32> to vector<8x7xf32>
    %137 = arith.addf %134, %136 : vector<8x7xf32>
    %cst_89 = arith.constant dense<0xFF800000> : vector<8xf32>
    %138 = vector.multi_reduction <maximumf>, %137, %cst_89 [1] : vector<8x7xf32> to vector<8xf32>
    %139 = vector.shape_cast %138 : vector<8xf32> to vector<8x1xf32>
    %140 = vector.broadcast %139 : vector<8x1xf32> to vector<8x7xf32>
    %141 = arith.subf %137, %140 : vector<8x7xf32>
    %142 = math.exp %141 : vector<8x7xf32>
    %cst_90 = arith.constant dense<0.000000e+00> : vector<8xf32>
    %143 = vector.multi_reduction <add>, %142, %cst_90 [1] : vector<8x7xf32> to vector<8xf32>
    %144 = vector.shape_cast %143 : vector<8xf32> to vector<8x1xf32>
    %145 = math.log %144 : vector<8x1xf32>
    %146 = vector.broadcast %145 : vector<8x1xf32> to vector<8x7xf32>
    %147 = arith.subf %141, %146 : vector<8x7xf32>
    %c0_91 = arith.constant 0 : index
    %c0_92 = arith.constant 0 : index
    %148 = vector.load %arg13[%c0_91, %c0_92] : memref<8x7xf32, #tpu.memory_space<vmem>>, vector<8x7xf32>
    tpu.vector_store %arg13[%c0_91, %c0_92], %147 {strides = array<i32>} : memref<8x7xf32, #tpu.memory_space<vmem>>, vector<8x7xf32>,
    return
  }
  func.func @transform_0(%arg0: i32) -> (i32, i32, i32) {
    %c0_i32 = arith.constant 0 : i32
    %c0_i32_0 = arith.constant 0 : i32
    %c0_i32_1 = arith.constant 0 : i32
    return %arg0, %c0_i32, %c0_i32_0 : i32, i32, i32
  }
  func.func @transform_1(%arg0: i32) -> (i32, i32) {
    %c0_i32 = arith.constant 0 : i32
    %c0_i32_0 = arith.constant 0 : i32
    %c0_i32_1 = arith.constant 0 : i32
    return %c0_i32, %c0_i32_0 : i32, i32
  }
  func.func @transform_2(%arg0: i32) -> (i32, i32) {
    %c0_i32 = arith.constant 0 : i32
    %c0_i32_0 = arith.constant 0 : i32
    %c0_i32_1 = arith.constant 0 : i32
    return %c0_i32, %c0_i32_0 : i32, i32
  }
  func.func @transform_3(%arg0: i32) -> (i32, i32) {
    %c0_i32 = arith.constant 0 : i32
    %c0_i32_0 = arith.constant 0 : i32
    %c0_i32_1 = arith.constant 0 : i32
    return %c0_i32, %c0_i32_0 : i32, i32
  }
  func.func @transform_4(%arg0: i32) -> (i32, i32) {
    %c0_i32 = arith.constant 0 : i32
    %c0_i32_0 = arith.constant 0 : i32
    %c0_i32_1 = arith.constant 0 : i32
    return %c0_i32, %c0_i32_0 : i32, i32
  }
  func.func @transform_5(%arg0: i32) -> (i32, i32, i32) {
    %c0_i32 = arith.constant 0 : i32
    %c0_i32_0 = arith.constant 0 : i32
    %c0_i32_1 = arith.constant 0 : i32
    %c0_i32_2 = arith.constant 0 : i32
    return %c0_i32, %c0_i32_0, %c0_i32_1 : i32, i32, i32
  }
  func.func @transform_6(%arg0: i32) -> (i32, i32, i32) {
    %c0_i32 = arith.constant 0 : i32
    %c0_i32_0 = arith.constant 0 : i32
    %c0_i32_1 = arith.constant 0 : i32
    %c0_i32_2 = arith.constant 0 : i32
    return %c0_i32, %c0_i32_0, %c0_i32_1 : i32, i32, i32
  }
  func.func @transform_7(%arg0: i32) -> (i32, i32) {
    %c0_i32 = arith.constant 0 : i32
    %c0_i32_0 = arith.constant 0 : i32
    %c0_i32_1 = arith.constant 0 : i32
    return %c0_i32, %c0_i32_0 : i32, i32
  }
  func.func @transform_8(%arg0: i32) -> (i32, i32) {
    %c0_i32 = arith.constant 0 : i32
    %c0_i32_0 = arith.constant 0 : i32
    %c0_i32_1 = arith.constant 0 : i32
    return %c0_i32, %c0_i32_0 : i32, i32
  }
  func.func @transform_9(%arg0: i32) -> (i32, i32) {
    %c0_i32 = arith.constant 0 : i32
    %c0_i32_0 = arith.constant 0 : i32
    %c0_i32_1 = arith.constant 0 : i32
    return %c0_i32, %c0_i32_0 : i32, i32
  }
  func.func @transform_10(%arg0: i32) -> (i32, i32) {
    %c0_i32 = arith.constant 0 : i32
    %c0_i32_0 = arith.constant 0 : i32
    %c0_i32_1 = arith.constant 0 : i32
    return %c0_i32, %c0_i32_0 : i32, i32
  }
  func.func @transform_11(%arg0: i32) -> (i32, i32) {
    %c0_i32 = arith.constant 0 : i32
    %c0_i32_0 = arith.constant 0 : i32
    %c0_i32_1 = arith.constant 0 : i32
    return %c0_i32, %c0_i32_0 : i32, i32
  }
  func.func @transform_12(%arg0: i32) -> (i32, i32) {
    %c0_i32 = arith.constant 0 : i32
    %c0_i32_0 = arith.constant 0 : i32
    return %arg0, %c0_i32 : i32, i32
  }
}

</mosaic_0001>

<llo_original>
// kernel: armband_forward.1
$region0: #{armband_forward.1}
  #allocation0 [shape = 'u32[]', space=smem, size = 0x4, offset = 0x4, fixed_abs, tag = 'smem constant byte address 0x4 - core index']
  #allocation1 [shape = 'u32[144,128]{1,0:T(1,128)}', space=vmem, size = 0x12000, scoped, tag = 'internal scratch']
  %s0 = inlined_call_operand.vmem [shape: f32[8,8,168], index: 0, kind: input, shape index: {}]
  %s1 = inlined_call_operand.vmem [shape: bf16[168,168], index: 1, kind: input, shape index: {}]
  %s2 = inlined_call_operand.vmem [shape: f32[1,168], index: 2, kind: input, shape index: {}]
  %s3 = inlined_call_operand.vmem [shape: bf16[168,168], index: 3, kind: input, shape index: {}]
  %s4 = inlined_call_operand.vmem [shape: f32[1,168], index: 4, kind: input, shape index: {}]
  %s5 = inlined_call_operand.vmem [shape: f32[8,8,1], index: 5, kind: input, shape index: {}]
  %s6 = inlined_call_operand.vmem [shape: bf16[8,168,500], index: 6, kind: input, shape index: {}]
  %s7 = inlined_call_operand.vmem [shape: f32[1,500], index: 7, kind: input, shape index: {}]
  %s8 = inlined_call_operand.vmem [shape: bf16[500,2000], index: 8, kind: input, shape index: {}]
  %s9 = inlined_call_operand.vmem [shape: f32[1,2000], index: 9, kind: input, shape index: {}]
  %s10 = inlined_call_operand.vmem [shape: bf16[2000,7], index: 10, kind: input, shape index: {}]
  %s11 = inlined_call_operand.vmem [shape: f32[1,7], index: 11, kind: input, shape index: {}]
  %s12 = inlined_call_operand.vmem [shape: f32[8,7], index: 12, kind: output, shape index: {}]
  %s13 = sld [smem:[#allocation0]]
  $region58: #{armband_forward.1} parent=0
    _
  %s15 = ssub.s32 1, %s13
  %s16 = scalar_select 0, %s15, %s13
  // Predicated region
  $region2: #{armband_forward.1} parent=0 // pred_check
    _
  $region3: #{armband_forward.1} parent=0 // pred_check_branch
    %18 = sbr.rel (0) target = $region5
  $region4: #{armband_forward.1} parent=0 // pred_region
    _
  $region5: #{armband_forward.1} parent=0 // pred_fallthru
    _
  // Predicated region
  $region6: #{armband_forward.1} parent=0 // pred_check
    _
  $region7: #{armband_forward.1} parent=0 // pred_check_branch
    %20 = sbr.rel (0) target = $region9
  $region8: #{armband_forward.1} parent=0 // pred_region
    _
  $region9: #{armband_forward.1} parent=0 // pred_fallthru
    _
  // Predicated region
  $region10: #{armband_forward.1} parent=0 // pred_check
    _
  $region11: #{armband_forward.1} parent=0 // pred_check_branch
    %22 = sbr.rel (0) target = $region13
  $region12: #{armband_forward.1} parent=0 // pred_region
    _
  $region13: #{armband_forward.1} parent=0 // pred_fallthru
    _
  // Predicated region
  $region14: #{armband_forward.1} parent=0 // pred_check
    _
  $region15: #{armband_forward.1} parent=0 // pred_check_branch
    %24 = sbr.rel (0) target = $region17
  $region16: #{armband_forward.1} parent=0 // pred_region
    _
  $region17: #{armband_forward.1} parent=0 // pred_fallthru
    _
  // Predicated region
  $region18: #{armband_forward.1} parent=0 // pred_check
    _
  $region19: #{armband_forward.1} parent=0 // pred_check_branch
    %26 = sbr.rel (0) target = $region21
  $region20: #{armband_forward.1} parent=0 // pred_region
    _
  $region21: #{armband_forward.1} parent=0 // pred_fallthru
    _
  // Predicated region
  $region22: #{armband_forward.1} parent=0 // pred_check
    _
  $region23: #{armband_forward.1} parent=0 // pred_check_branch
    %28 = sbr.rel (0) target = $region25
  $region24: #{armband_forward.1} parent=0 // pred_region
    _
  $region25: #{armband_forward.1} parent=0 // pred_fallthru
    _
  // Predicated region
  $region26: #{armband_forward.1} parent=0 // pred_check
    _
  $region27: #{armband_forward.1} parent=0 // pred_check_branch
    %30 = sbr.rel (0) target = $region29
  $region28: #{armband_forward.1} parent=0 // pred_region
    _
  $region29: #{armband_forward.1} parent=0 // pred_fallthru
    _
  // Predicated region
  $region30: #{armband_forward.1} parent=0 // pred_check
    _
  $region31: #{armband_forward.1} parent=0 // pred_check_branch
    %32 = sbr.rel (0) target = $region33
  $region32: #{armband_forward.1} parent=0 // pred_region
    _
  $region33: #{armband_forward.1} parent=0 // pred_fallthru
    _
  // Predicated region
  $region34: #{armband_forward.1} parent=0 // pred_check
    _
  $region35: #{armband_forward.1} parent=0 // pred_check_branch
    %34 = sbr.rel (0) target = $region37
  $region36: #{armband_forward.1} parent=0 // pred_region
    _
  $region37: #{armband_forward.1} parent=0 // pred_fallthru
    _
  // Predicated region
  $region38: #{armband_forward.1} parent=0 // pred_check
    _
  $region39: #{armband_forward.1} parent=0 // pred_check_branch
    %36 = sbr.rel (0) target = $region41
  $region40: #{armband_forward.1} parent=0 // pred_region
    _
  $region41: #{armband_forward.1} parent=0 // pred_fallthru
    _
  // Predicated region
  $region42: #{armband_forward.1} parent=0 // pred_check
    _
  $region43: #{armband_forward.1} parent=0 // pred_check_branch
    %38 = sbr.rel (0) target = $region45
  $region44: #{armband_forward.1} parent=0 // pred_region
    _
  $region45: #{armband_forward.1} parent=0 // pred_fallthru
    _
  // Predicated region
  $region46: #{armband_forward.1} parent=0 // pred_check
    _
  $region47: #{armband_forward.1} parent=0 // pred_check_branch
    %40 = sbr.rel (0) target = $region49
  $region48: #{armband_forward.1} parent=0 // pred_region
    _
  $region49: #{armband_forward.1} parent=0 // pred_fallthru
    _
  %v42 = vld [vmem:[%s1] sm:$0xff]
  %v43 = vld [vmem:[%s1 + $0x8] sm:$0xff]
  %v44 = vld [vmem:[%s1 + $0x10] sm:$0xff]
  %v45 = vld [vmem:[%s1 + $0x18] sm:$0xff]
  %v46 = vld [vmem:[%s1 + $0x20] sm:$0xff]
  %v47 = vld [vmem:[%s1 + $0x28] sm:$0xff]
  %v48 = vld [vmem:[%s1 + $0x30] sm:$0xff]
  %v49 = vld [vmem:[%s1 + $0x38] sm:$0xff]
  %v50 = vld [vmem:[%s1 + $0x40] sm:$0xff]
  %v51 = vld [vmem:[%s1 + $0x48] sm:$0xff]
  %v52 = vld [vmem:[%s1 + $0x50] sm:$0xff]
  %v53 = vld [vmem:[%s1 + $0x58] sm:$0xff]
  %v54 = vld [vmem:[%s1 + $0x60] sm:$0xff]
  %v55 = vld [vmem:[%s1 + $0x68] sm:$0xff]
  %v56 = vld [vmem:[%s1 + $0x70] sm:$0xff]
  %v57 = vld [vmem:[%s1 + $0x78] sm:$0xff]
  %v58 = vld [vmem:[%s1 + $0x80] sm:$0xff]
  %v59 = vld [vmem:[%s1 + $0x88] sm:$0xff]
  %v60 = vld [vmem:[%s1 + $0x90] sm:$0xff]
  %v61 = vld [vmem:[%s1 + $0x98] sm:$0xff]
  %v62 = vld [vmem:[%s1 + $0xa0] sm:$0xff]
  %v63 = vld [vmem:[%s2] sm:$0x3]
  %v64 = vld [vmem:[%s3] sm:$0xff]
  %v65 = vld [vmem:[%s3 + $0x8] sm:$0xff]
  %v66 = vld [vmem:[%s3 + $0x10] sm:$0xff]
  %v67 = vld [vmem:[%s3 + $0x18] sm:$0xff]
  %v68 = vld [vmem:[%s3 + $0x20] sm:$0xff]
  %v69 = vld [vmem:[%s3 + $0x28] sm:$0xff]
  %v70 = vld [vmem:[%s3 + $0x30] sm:$0xff]
  %v71 = vld [vmem:[%s3 + $0x38] sm:$0xff]
  %v72 = vld [vmem:[%s3 + $0x40] sm:$0xff]
  %v73 = vld [vmem:[%s3 + $0x48] sm:$0xff]
  %v74 = vld [vmem:[%s3 + $0x50] sm:$0xff]
  %v75 = vld [vmem:[%s3 + $0x58] sm:$0xff]
  %v76 = vld [vmem:[%s3 + $0x60] sm:$0xff]
  %v77 = vld [vmem:[%s3 + $0x68] sm:$0xff]
  %v78 = vld [vmem:[%s3 + $0x70] sm:$0xff]
  %v79 = vld [vmem:[%s3 + $0x78] sm:$0xff]
  %v80 = vld [vmem:[%s3 + $0x80] sm:$0xff]
  %v81 = vld [vmem:[%s3 + $0x88] sm:$0xff]
  %v82 = vld [vmem:[%s3 + $0x90] sm:$0xff]
  %v83 = vld [vmem:[%s3 + $0x98] sm:$0xff]
  %v84 = vld [vmem:[%s3 + $0xa0] sm:$0xff]
  %v85 = vld [vmem:[%s4] sm:$0x3]
  %v86 = vld [vmem:[%s0] sm:$0xff]
  %v87 = vld [vmem:[%s0 + $0x8] sm:$0xff]
  %v88 = vld [vmem:[%s0 + $0x10] sm:$0xff]
  %v89 = vld [vmem:[%s0 + $0x18] sm:$0xff]
  %v90 = vld [vmem:[%s0 + $0x20] sm:$0xff]
  %v91 = vld [vmem:[%s0 + $0x28] sm:$0xff]
  %v92 = vld [vmem:[%s0 + $0x30] sm:$0xff]
  %v93 = vld [vmem:[%s0 + $0x38] sm:$0xff]
  %v94 = vld [vmem:[%s0 + $0x40] sm:$0xff]
  %v95 = vld [vmem:[%s0 + $0x48] sm:$0xff]
  %v96 = vld [vmem:[%s0 + $0x50] sm:$0xff]
  %v97 = vld [vmem:[%s0 + $0x58] sm:$0xff]
  %v98 = vld [vmem:[%s0 + $0x60] sm:$0xff]
  %v99 = vld [vmem:[%s0 + $0x68] sm:$0xff]
  %v100 = vld [vmem:[%s0 + $0x70] sm:$0xff]
  %v101 = vld [vmem:[%s0 + $0x78] sm:$0xff]
  %v102 = vrot.slane %v86, 4
  %v103 = vadd.f32 %v86, %v102
  %v104 = vrot.slane %v103, 2
  %v105 = vadd.f32 %v103, %v104
  %v106 = vrot.slane %v105, 1
  %v107 = vadd.f32 %v105, %v106
  %vm108 = vcmask 326656
  %v109 = vsel %vm108, %v87, 0.0
  %v110 = vrot.slane %v109, 4
  %v111 = vadd.f32 %v109, %v110
  %v112 = vrot.slane %v111, 2
  %v113 = vadd.f32 %v111, %v112
  %v114 = vrot.slane %v113, 1
  %v115 = vadd.f32 %v113, %v114
  %v116 = vrot.slane %v88, 4
  %v117 = vadd.f32 %v88, %v116
  %v118 = vrot.slane %v117, 2
  %v119 = vadd.f32 %v117, %v118
  %v120 = vrot.slane %v119, 1
  %v121 = vadd.f32 %v119, %v120
  %v122 = vsel %vm108, %v89, 0.0
  %v123 = vrot.slane %v122, 4
  %v124 = vadd.f32 %v122, %v123
  %v125 = vrot.slane %v124, 2
  %v126 = vadd.f32 %v124, %v125
  %v127 = vrot.slane %v126, 1
  %v128 = vadd.f32 %v126, %v127
  %v129 = vrot.slane %v90, 4
  %v130 = vadd.f32 %v90, %v129
  %v131 = vrot.slane %v130, 2
  %v132 = vadd.f32 %v130, %v131
  %v133 = vrot.slane %v132, 1
  %v134 = vadd.f32 %v132, %v133
  %v135 = vsel %vm108, %v91, 0.0
  %v136 = vrot.slane %v135, 4
  %v137 = vadd.f32 %v135, %v136
  %v138 = vrot.slane %v137, 2
  %v139 = vadd.f32 %v137, %v138
  %v140 = vrot.slane %v139, 1
  %v141 = vadd.f32 %v139, %v140
  %v142 = vrot.slane %v92, 4
  %v143 = vadd.f32 %v92, %v142
  %v144 = vrot.slane %v143, 2
  %v145 = vadd.f32 %v143, %v144
  %v146 = vrot.slane %v145, 1
  %v147 = vadd.f32 %v145, %v146
  %v148 = vsel %vm108, %v93, 0.0
  %v149 = vrot.slane %v148, 4
  %v150 = vadd.f32 %v148, %v149
  %v151 = vrot.slane %v150, 2
  %v152 = vadd.f32 %v150, %v151
  %v153 = vrot.slane %v152, 1
  %v154 = vadd.f32 %v152, %v153
  %v155 = vrot.slane %v94, 4
  %v156 = vadd.f32 %v94, %v155
  %v157 = vrot.slane %v156, 2
  %v158 = vadd.f32 %v156, %v157
  %v159 = vrot.slane %v158, 1
  %v160 = vadd.f32 %v158, %v159
  %v161 = vsel %vm108, %v95, 0.0
  %v162 = vrot.slane %v161, 4
  %v163 = vadd.f32 %v161, %v162
  %v164 = vrot.slane %v163, 2
  %v165 = vadd.f32 %v163, %v164
  %v166 = vrot.slane %v165, 1
  %v167 = vadd.f32 %v165, %v166
  %v168 = vrot.slane %v96, 4
  %v169 = vadd.f32 %v96, %v168
  %v170 = vrot.slane %v169, 2
  %v171 = vadd.f32 %v169, %v170
  %v172 = vrot.slane %v171, 1
  %v173 = vadd.f32 %v171, %v172
  %v174 = vsel %vm108, %v97, 0.0
  %v175 = vrot.slane %v174, 4
  %v176 = vadd.f32 %v174, %v175
  %v177 = vrot.slane %v176, 2
  %v178 = vadd.f32 %v176, %v177
  %v179 = vrot.slane %v178, 1
  %v180 = vadd.f32 %v178, %v179
  %v181 = vrot.slane %v98, 4
  %v182 = vadd.f32 %v98, %v181
  %v183 = vrot.slane %v182, 2
  %v184 = vadd.f32 %v182, %v183
  %v185 = vrot.slane %v184, 1
  %v186 = vadd.f32 %v184, %v185
  %v187 = vsel %vm108, %v99, 0.0
  %v188 = vrot.slane %v187, 4
  %v189 = vadd.f32 %v187, %v188
  %v190 = vrot.slane %v189, 2
  %v191 = vadd.f32 %v189, %v190
  %v192 = vrot.slane %v191, 1
  %v193 = vadd.f32 %v191, %v192
  %v194 = vrot.slane %v100, 4
  %v195 = vadd.f32 %v100, %v194
  %v196 = vrot.slane %v195, 2
  %v197 = vadd.f32 %v195, %v196
  %v198 = vrot.slane %v197, 1
  %v199 = vadd.f32 %v197, %v198
  %v200 = vsel %vm108, %v101, 0.0
  %v201 = vrot.slane %v200, 4
  %v202 = vadd.f32 %v200, %v201
  %v203 = vrot.slane %v202, 2
  %v204 = vadd.f32 %v202, %v203
  %v205 = vrot.slane %v204, 1
  %v206 = vadd.f32 %v204, %v205
  %v207 = vrcp.pop 8.0
  %v208 = vmul.f32 %v107, %v207
  %v209 = vmul.f32 %v115, %v207
  %v210 = vmul.f32 %v121, %v207
  %v211 = vmul.f32 %v128, %v207
  %v212 = vmul.f32 %v134, %v207
  %v213 = vmul.f32 %v141, %v207
  %v214 = vmul.f32 %v147, %v207
  %v215 = vmul.f32 %v154, %v207
  %v216 = vmul.f32 %v160, %v207
  %v217 = vmul.f32 %v167, %v207
  %v218 = vmul.f32 %v173, %v207
  %v219 = vmul.f32 %v180, %v207
  %v220 = vmul.f32 %v186, %v207
  %v221 = vmul.f32 %v193, %v207
  %v222 = vmul.f32 %v199, %v207
  %v223 = vmul.f32 %v206, %v207
  %v224 = vpack.c.bf16 %v208, %v208
  %v225 = vpack.c.bf16 %v209, %v209
  %v226 = vpack.c.bf16 %v210, %v210
  %v227 = vpack.c.bf16 %v211, %v211
  %v228 = vpack.c.bf16 %v212, %v212
  %v229 = vpack.c.bf16 %v213, %v213
  %v230 = vpack.c.bf16 %v214, %v214
  %v231 = vpack.c.bf16 %v215, %v215
  %v232 = vpack.c.bf16 %v216, %v216
  %v233 = vpack.c.bf16 %v217, %v217
  %v234 = vpack.c.bf16 %v218, %v218
  %v235 = vpack.c.bf16 %v219, %v219
  %v236 = vpack.c.bf16 %v220, %v220
  %v237 = vpack.c.bf16 %v221, %v221
  %v238 = vpack.c.bf16 %v222, %v222
  %v239 = vpack.c.bf16 %v223, %v223
  %v241 = vlaneseq
  %v242 = vshrl.u32 %v241, 7
  %v243 = vsub.s32 0, %v242
  %v244 = vrot.slane %v63, %v243
  %v245 = vlaneseq
  %v246 = vshrl.u32 %v245, 7
  %v247 = vsub.s32 1, %v246
  %v248 = vrot.slane %v63, %v247
  %v267 = vunpack.c.l.b16 %v224
  %v268 = vunpack.c.l.b16 %v225
  %v269 = vunpack.c.l.b16 %v226
  %v270 = vunpack.c.l.b16 %v227
  %v271 = vunpack.c.l.b16 %v228
  %v272 = vunpack.c.l.b16 %v229
  %v273 = vunpack.c.l.b16 %v230
  %v274 = vunpack.c.l.b16 %v231
  %v275 = vunpack.c.l.b16 %v232
  %v276 = vunpack.c.l.b16 %v233
  %v277 = vunpack.c.l.b16 %v234
  %v278 = vunpack.c.l.b16 %v235
  %v279 = vunpack.c.l.b16 %v236
  %v280 = vunpack.c.l.b16 %v237
  %v281 = vunpack.c.l.b16 %v238
  %v282 = vunpack.c.l.b16 %v239
  %vm283 = vcmask 1041409
  %v284 = vsel %vm283, %v269, %v267
  %vm285 = vcmask 1042434
  %v286 = vsel %vm285, %v271, %v284
  %vm287 = vcmask 1043459
  %v288 = vsel %vm287, %v273, %v286
  %vm289 = vcmask 1044484
  %v290 = vsel %vm289, %v275, %v288
  %vm291 = vcmask 1045509
  %v292 = vsel %vm291, %v277, %v290
  %vm293 = vcmask 1046534
  %v294 = vsel %vm293, %v279, %v292
  %vm295 = vcmask 1047559
  %v296 = vsel %vm295, %v281, %v294
  %v297 = vsel %vm283, %v270, %v268
  %v298 = vsel %vm285, %v272, %v297
  %v299 = vsel %vm287, %v274, %v298
  %v300 = vsel %vm289, %v276, %v299
  %v301 = vsel %vm291, %v278, %v300
  %v302 = vsel %vm293, %v280, %v301
  %v303 = vsel %vm295, %v282, %v302
  %v304 = vpack.c.b16 %v296, %v296
  %v305 = vpack.c.b16 %v303, %v303
  %v328 = vunpack.c.l.b16 %v42
  %v329 = vunpack.c.h.b16 %v42
  %v330 = vunpack.c.l.b16 %v43
  %v331 = vunpack.c.h.b16 %v43
  %v332 = vunpack.c.l.b16 %v44
  %v333 = vunpack.c.h.b16 %v44
  %v334 = vunpack.c.l.b16 %v45
  %v335 = vunpack.c.h.b16 %v45
  %v336 = vunpack.c.l.b16 %v46
  %v337 = vunpack.c.h.b16 %v46
  %v338 = vunpack.c.l.b16 %v47
  %v339 = vunpack.c.h.b16 %v47
  %v340 = vunpack.c.l.b16 %v48
  %v341 = vunpack.c.h.b16 %v48
  %v342 = vunpack.c.l.b16 %v49
  %v343 = vunpack.c.h.b16 %v49
  %v344 = vunpack.c.l.b16 %v50
  %v345 = vunpack.c.h.b16 %v50
  %v346 = vunpack.c.l.b16 %v51
  %v347 = vunpack.c.h.b16 %v51
  %v348 = vunpack.c.l.b16 %v52
  %v349 = vunpack.c.h.b16 %v52
  %v350 = vunpack.c.l.b16 %v53
  %v351 = vunpack.c.h.b16 %v53
  %v352 = vunpack.c.l.b16 %v54
  %v353 = vunpack.c.h.b16 %v54
  %v354 = vunpack.c.l.b16 %v55
  %v355 = vunpack.c.h.b16 %v55
  %v356 = vunpack.c.l.b16 %v56
  %v357 = vunpack.c.h.b16 %v56
  %v358 = vunpack.c.l.b16 %v57
  %v359 = vunpack.c.h.b16 %v57
  %v360 = vunpack.c.l.b16 %v58
  %v361 = vunpack.c.h.b16 %v58
  %v362 = vunpack.c.l.b16 %v59
  %v363 = vunpack.c.h.b16 %v59
  %v364 = vunpack.c.l.b16 %v60
  %v365 = vunpack.c.h.b16 %v60
  %v366 = vunpack.c.l.b16 %v61
  %v367 = vunpack.c.h.b16 %v61
  %v368 = vunpack.c.l.b16 %v62
  %v369 = vunpack.c.h.b16 %v62
  %v370 = vpack.c.b16 %v330, %v328
  %v371 = vpack.c.b16 %v331, %v329
  %v372 = vpack.c.b16 %v334, %v332
  %v373 = vpack.c.b16 %v335, %v333
  %v374 = vpack.c.b16 %v338, %v336
  %v375 = vpack.c.b16 %v339, %v337
  %v376 = vpack.c.b16 %v342, %v340
  %v377 = vpack.c.b16 %v343, %v341
  %v378 = vpack.c.b16 %v346, %v344
  %v379 = vpack.c.b16 %v347, %v345
  %v380 = vpack.c.b16 %v350, %v348
  %v381 = vpack.c.b16 %v351, %v349
  %v382 = vpack.c.b16 %v354, %v352
  %v383 = vpack.c.b16 %v355, %v353
  %v384 = vpack.c.b16 %v358, %v356
  %v385 = vpack.c.b16 %v359, %v357
  %v386 = vpack.c.b16 %v362, %v360
  %v387 = vpack.c.b16 %v363, %v361
  %v388 = vpack.c.b16 %v366, %v364
  %v389 = vpack.c.b16 %v367, %v365
  %v390 = vpack.c.b16 %v368, %v368
  %v391 = vpack.c.b16 %v369, %v369
  %v413 = vsel %vm108, %v305, 0
  %vm415 = vcmask 1043456
  %v417 = vsel %vm415, %v390, 0
  %v420 = vsel %vm415, %v391, 0
  %422 = vmatprep.subr.bf16.mxu0 %v385
  %423 = vmatpush1.bf16.msra.mxu0 %v384
  %424 = vmatprep.subr.bf16.mxu0 %v383
  %425 = vmatpush1.bf16.msra.mxu0 %v382
  %426 = vmatprep.subr.bf16.mxu0 %v381
  %427 = vmatpush1.bf16.msra.mxu0 %v380
  %428 = vmatprep.subr.bf16.mxu0 %v379
  %429 = vmatpush1.bf16.msra.mxu0 %v378
  %430 = vmatprep.subr.bf16.mxu0 %v377
  %431 = vmatpush1.bf16.msra.mxu0 %v376
  %432 = vmatprep.subr.bf16.mxu0 %v375
  %433 = vmatpush1.bf16.msra.mxu0 %v374
  %434 = vmatprep.subr.bf16.mxu0 %v373
  %435 = vmatpush1.bf16.msra.mxu0 %v372
  %436 = vmatprep.subr.bf16.mxu0 %v371
  %437 = vmatpush1.bf16.msra.mxu0 %v370
  %438 = vmatprep.subr.bf16.mxu0 0
  %439 = vmatpush2.bf16.msra.mxu0 0
  %440 = vmatprep.subr.bf16.mxu0 0
  %441 = vmatpush2.bf16.msra.mxu0 0
  %442 = vmatprep.subr.bf16.mxu0 0
  %443 = vmatpush2.bf16.msra.mxu0 0
  %444 = vmatprep.subr.bf16.mxu0 0
  %445 = vmatpush2.bf16.msra.mxu0 0
  %446 = vmatprep.subr.bf16.mxu0 0
  %447 = vmatpush2.bf16.msra.mxu0 0
  %448 = vmatprep.subr.bf16.mxu0 %v420
  %449 = vmatpush2.bf16.msra.mxu0 %v417
  %450 = vmatprep.subr.bf16.mxu0 %v389
  %451 = vmatpush2.bf16.msra.mxu0 %v388
  %452 = vmatprep.subr.bf16.mxu0 %v387
  %453 = vmatpush2.bf16.msra.mxu0 %v386
  %454 = vmatprep.mubr.bf16.mxu0 %v413
  %455 = vmatmul.mubr.bf16.gmra.mxu0 %v304
  %v456 = vpop.f32.mrf.mxu0
  %v457 = vadd.f32 %v244, %v456
  %v458 = vpop.f32.mrf.mxu0
  %v459 = vadd.f32 %v248, %v458
  %v460 = vpop.f32.mrf.mxu0
  %v461 = vpop.f32.mrf.mxu0
  %462 = vdwg.mxu0
  %v465 = vcombine.low %v457, %v459
  %v466 = vcombine.high %v457, %v459
  %v468 = vunpack.c.l.s4 1966171168
  %v469 = vunpack.c.0.s8 %v468
  %v470 = vlaneseq
  %v471 = vshrl.u32 %v470, 7
  %v472 = vsub.s32 %v469, %v471
  %v473 = vrot.slane %v465, %v472
  %v475 = vunpack.c.l.s4 1966171168
  %v476 = vunpack.c.0.s8 %v475
  %v477 = vlaneseq
  %v478 = vshrl.u32 %v477, 7
  %v479 = vsub.s32 %v476, %v478
  %v480 = vrot.slane %v466, %v479
  %v481 = vcombine.high %v473, %v473
  %v482 = vcombine.high %v480, %v480
  %v484 = vunpack.c.l.s4 1966171168
  %v485 = vunpack.c.0.s8 %v484
  %v486 = vlaneseq
  %v487 = vshrl.u32 %v486, 7
  %v488 = vsub.s32 %v485, %v487
  %v489 = vrot.slane %v473, %v488
  %v491 = vunpack.c.l.s4 1966171168
  %v492 = vunpack.c.0.s8 %v491
  %v493 = vlaneseq
  %v494 = vshrl.u32 %v493, 7
  %v495 = vsub.s32 %v492, %v494
  %v496 = vrot.slane %v480, %v495
  %v498 = vunpack.c.l.s4 1966171168
  %v499 = vunpack.c.0.s8 %v498
  %v500 = vlaneseq
  %v501 = vshrl.u32 %v500, 7
  %v502 = vsub.s32 %v499, %v501
  %v503 = vrot.slane %v481, %v502
  %v505 = vunpack.c.l.s4 1966171168
  %v506 = vunpack.c.0.s8 %v505
  %v507 = vlaneseq
  %v508 = vshrl.u32 %v507, 7
  %v509 = vsub.s32 %v506, %v508
  %v510 = vrot.slane %v482, %v509
  %v511 = vcombine.high %v489, %v489
  %v512 = vcombine.high %v496, %v496
  %v513 = vcombine.high %v503, %v503
  %v514 = vcombine.high %v510, %v510
  %v515 = vlaneseq
  %v516 = vshrl.u32 %v515, 7
  %v517 = vsub.s32 0, %v516
  %v518 = vrot.slane %v489, %v517
  %v519 = vlaneseq
  %v520 = vshrl.u32 %v519, 7
  %v521 = vsub.s32 1, %v520
  %v522 = vrot.slane %v489, %v521
  %v523 = vlaneseq
  %v524 = vshrl.u32 %v523, 7
  %v525 = vsub.s32 0, %v524
  %v526 = vrot.slane %v503, %v525
  %v527 = vlaneseq
  %v528 = vshrl.u32 %v527, 7
  %v529 = vsub.s32 1, %v528
  %v530 = vrot.slane %v503, %v529
  %v531 = vlaneseq
  %v532 = vshrl.u32 %v531, 7
  %v533 = vsub.s32 0, %v532
  %v534 = vrot.slane %v511, %v533
  %v535 = vlaneseq
  %v536 = vshrl.u32 %v535, 7
  %v537 = vsub.s32 1, %v536
  %v538 = vrot.slane %v511, %v537
  %v539 = vlaneseq
  %v540 = vshrl.u32 %v539, 7
  %v541 = vsub.s32 0, %v540
  %v542 = vrot.slane %v513, %v541
  %v543 = vlaneseq
  %v544 = vshrl.u32 %v543, 7
  %v545 = vsub.s32 1, %v544
  %v546 = vrot.slane %v513, %v545
  %v547 = vlaneseq
  %v548 = vshrl.u32 %v547, 7
  %v549 = vsub.s32 0, %v548
  %v550 = vrot.slane %v496, %v549
  %v551 = vlaneseq
  %v552 = vshrl.u32 %v551, 7
  %v553 = vsub.s32 1, %v552
  %v554 = vrot.slane %v496, %v553
  %v555 = vlaneseq
  %v556 = vshrl.u32 %v555, 7
  %v557 = vsub.s32 0, %v556
  %v558 = vrot.slane %v510, %v557
  %v559 = vlaneseq
  %v560 = vshrl.u32 %v559, 7
  %v561 = vsub.s32 1, %v560
  %v562 = vrot.slane %v510, %v561
  %v563 = vlaneseq
  %v564 = vshrl.u32 %v563, 7
  %v565 = vsub.s32 0, %v564
  %v566 = vrot.slane %v512, %v565
  %v567 = vlaneseq
  %v568 = vshrl.u32 %v567, 7
  %v569 = vsub.s32 1, %v568
  %v570 = vrot.slane %v512, %v569
  %v571 = vlaneseq
  %v572 = vshrl.u32 %v571, 7
  %v573 = vsub.s32 0, %v572
  %v574 = vrot.slane %v514, %v573
  %v575 = vlaneseq
  %v576 = vshrl.u32 %v575, 7
  %v577 = vsub.s32 1, %v576
  %v578 = vrot.slane %v514, %v577
  %v595 = vmax.f32 %v518, 0.0
  %v596 = vmax.f32 %v522, 0.0
  %v597 = vmax.f32 %v526, 0.0
  %v598 = vmax.f32 %v530, 0.0
  %v599 = vmax.f32 %v534, 0.0
  %v600 = vmax.f32 %v538, 0.0
  %v601 = vmax.f32 %v542, 0.0
  %v602 = vmax.f32 %v546, 0.0
  %v603 = vmax.f32 %v550, 0.0
  %v604 = vmax.f32 %v554, 0.0
  %v605 = vmax.f32 %v558, 0.0
  %v606 = vmax.f32 %v562, 0.0
  %v607 = vmax.f32 %v566, 0.0
  %v608 = vmax.f32 %v570, 0.0
  %v609 = vmax.f32 %v574, 0.0
  %v610 = vmax.f32 %v578, 0.0
  %v611 = vrot.slane %v595, 4
  %v612 = vadd.f32 %v595, %v611
  %v613 = vrot.slane %v612, 2
  %v614 = vadd.f32 %v612, %v613
  %v615 = vrot.slane %v614, 1
  %v616 = vadd.f32 %v614, %v615
  %v617 = vsel %vm108, %v596, 0.0
  %v618 = vrot.slane %v617, 4
  %v619 = vadd.f32 %v617, %v618
  %v620 = vrot.slane %v619, 2
  %v621 = vadd.f32 %v619, %v620
  %v622 = vrot.slane %v621, 1
  %v623 = vadd.f32 %v621, %v622
  %v624 = vrot.slane %v597, 4
  %v625 = vadd.f32 %v597, %v624
  %v626 = vrot.slane %v625, 2
  %v627 = vadd.f32 %v625, %v626
  %v628 = vrot.slane %v627, 1
  %v629 = vadd.f32 %v627, %v628
  %v630 = vsel %vm108, %v598, 0.0
  %v631 = vrot.slane %v630, 4
  %v632 = vadd.f32 %v630, %v631
  %v633 = vrot.slane %v632, 2
  %v634 = vadd.f32 %v632, %v633
  %v635 = vrot.slane %v634, 1
  %v636 = vadd.f32 %v634, %v635
  %v637 = vrot.slane %v599, 4
  %v638 = vadd.f32 %v599, %v637
  %v639 = vrot.slane %v638, 2
  %v640 = vadd.f32 %v638, %v639
  %v641 = vrot.slane %v640, 1
  %v642 = vadd.f32 %v640, %v641
  %v643 = vsel %vm108, %v600, 0.0
  %v644 = vrot.slane %v643, 4
  %v645 = vadd.f32 %v643, %v644
  %v646 = vrot.slane %v645, 2
  %v647 = vadd.f32 %v645, %v646
  %v648 = vrot.slane %v647, 1
  %v649 = vadd.f32 %v647, %v648
  %v650 = vrot.slane %v601, 4
  %v651 = vadd.f32 %v601, %v650
  %v652 = vrot.slane %v651, 2
  %v653 = vadd.f32 %v651, %v652
  %v654 = vrot.slane %v653, 1
  %v655 = vadd.f32 %v653, %v654
  %v656 = vsel %vm108, %v602, 0.0
  %v657 = vrot.slane %v656, 4
  %v658 = vadd.f32 %v656, %v657
  %v659 = vrot.slane %v658, 2
  %v660 = vadd.f32 %v658, %v659
  %v661 = vrot.slane %v660, 1
  %v662 = vadd.f32 %v660, %v661
  %v663 = vrot.slane %v603, 4
  %v664 = vadd.f32 %v603, %v663
  %v665 = vrot.slane %v664, 2
  %v666 = vadd.f32 %v664, %v665
  %v667 = vrot.slane %v666, 1
  %v668 = vadd.f32 %v666, %v667
  %v669 = vsel %vm108, %v604, 0.0
  %v670 = vrot.slane %v669, 4
  %v671 = vadd.f32 %v669, %v670
  %v672 = vrot.slane %v671, 2
  %v673 = vadd.f32 %v671, %v672
  %v674 = vrot.slane %v673, 1
  %v675 = vadd.f32 %v673, %v674
  %v676 = vrot.slane %v605, 4
  %v677 = vadd.f32 %v605, %v676
  %v678 = vrot.slane %v677, 2
  %v679 = vadd.f32 %v677, %v678
  %v680 = vrot.slane %v679, 1
  %v681 = vadd.f32 %v679, %v680
  %v682 = vsel %vm108, %v606, 0.0
  %v683 = vrot.slane %v682, 4
  %v684 = vadd.f32 %v682, %v683
  %v685 = vrot.slane %v684, 2
  %v686 = vadd.f32 %v684, %v685
  %v687 = vrot.slane %v686, 1
  %v688 = vadd.f32 %v686, %v687
  %v689 = vrot.slane %v607, 4
  %v690 = vadd.f32 %v607, %v689
  %v691 = vrot.slane %v690, 2
  %v692 = vadd.f32 %v690, %v691
  %v693 = vrot.slane %v692, 1
  %v694 = vadd.f32 %v692, %v693
  %v695 = vsel %vm108, %v608, 0.0
  %v696 = vrot.slane %v695, 4
  %v697 = vadd.f32 %v695, %v696
  %v698 = vrot.slane %v697, 2
  %v699 = vadd.f32 %v697, %v698
  %v700 = vrot.slane %v699, 1
  %v701 = vadd.f32 %v699, %v700
  %v702 = vrot.slane %v609, 4
  %v703 = vadd.f32 %v609, %v702
  %v704 = vrot.slane %v703, 2
  %v705 = vadd.f32 %v703, %v704
  %v706 = vrot.slane %v705, 1
  %v707 = vadd.f32 %v705, %v706
  %v708 = vsel %vm108, %v610, 0.0
  %v709 = vrot.slane %v708, 4
  %v710 = vadd.f32 %v708, %v709
  %v711 = vrot.slane %v710, 2
  %v712 = vadd.f32 %v710, %v711
  %v713 = vrot.slane %v712, 1
  %v714 = vadd.f32 %v712, %v713
  %v715 = vmul.f32 %v616, %v207
  %v716 = vmul.f32 %v623, %v207
  %v717 = vmul.f32 %v629, %v207
  %v718 = vmul.f32 %v636, %v207
  %v719 = vmul.f32 %v642, %v207
  %v720 = vmul.f32 %v649, %v207
  %v721 = vmul.f32 %v655, %v207
  %v722 = vmul.f32 %v662, %v207
  %v723 = vmul.f32 %v668, %v207
  %v724 = vmul.f32 %v675, %v207
  %v725 = vmul.f32 %v681, %v207
  %v726 = vmul.f32 %v688, %v207
  %v727 = vmul.f32 %v694, %v207
  %v728 = vmul.f32 %v701, %v207
  %v729 = vmul.f32 %v707, %v207
  %v730 = vmul.f32 %v714, %v207
  %v731 = vpack.c.bf16 %v715, %v715
  %v732 = vpack.c.bf16 %v716, %v716
  %v733 = vpack.c.bf16 %v717, %v717
  %v734 = vpack.c.bf16 %v718, %v718
  %v735 = vpack.c.bf16 %v719, %v719
  %v736 = vpack.c.bf16 %v720, %v720
  %v737 = vpack.c.bf16 %v721, %v721
  %v738 = vpack.c.bf16 %v722, %v722
  %v739 = vpack.c.bf16 %v723, %v723
  %v740 = vpack.c.bf16 %v724, %v724
  %v741 = vpack.c.bf16 %v725, %v725
  %v742 = vpack.c.bf16 %v726, %v726
  %v743 = vpack.c.bf16 %v727, %v727
  %v744 = vpack.c.bf16 %v728, %v728
  %v745 = vpack.c.bf16 %v729, %v729
  %v746 = vpack.c.bf16 %v730, %v730
  %v748 = vlaneseq
  %v749 = vshrl.u32 %v748, 7
  %v750 = vsub.s32 0, %v749
  %v751 = vrot.slane %v85, %v750
  %v752 = vlaneseq
  %v753 = vshrl.u32 %v752, 7
  %v754 = vsub.s32 1, %v753
  %v755 = vrot.slane %v85, %v754
  %v774 = vunpack.c.l.b16 %v731
  %v775 = vunpack.c.l.b16 %v732
  %v776 = vunpack.c.l.b16 %v733
  %v777 = vunpack.c.l.b16 %v734
  %v778 = vunpack.c.l.b16 %v735
  %v779 = vunpack.c.l.b16 %v736
  %v780 = vunpack.c.l.b16 %v737
  %v781 = vunpack.c.l.b16 %v738
  %v782 = vunpack.c.l.b16 %v739
  %v783 = vunpack.c.l.b16 %v740
  %v784 = vunpack.c.l.b16 %v741
  %v785 = vunpack.c.l.b16 %v742
  %v786 = vunpack.c.l.b16 %v743
  %v787 = vunpack.c.l.b16 %v744
  %v788 = vunpack.c.l.b16 %v745
  %v789 = vunpack.c.l.b16 %v746
  %v790 = vsel %vm283, %v776, %v774
  %v791 = vsel %vm285, %v778, %v790
  %v792 = vsel %vm287, %v780, %v791
  %v793 = vsel %vm289, %v782, %v792
  %v794 = vsel %vm291, %v784, %v793
  %v795 = vsel %vm293, %v786, %v794
  %v796 = vsel %vm295, %v788, %v795
  %v797 = vsel %vm283, %v777, %v775
  %v798 = vsel %vm285, %v779, %v797
  %v799 = vsel %vm287, %v781, %v798
  %v800 = vsel %vm289, %v783, %v799
  %v801 = vsel %vm291, %v785, %v800
  %v802 = vsel %vm293, %v787, %v801
  %v803 = vsel %vm295, %v789, %v802
  %v804 = vpack.c.b16 %v796, %v796
  %v805 = vpack.c.b16 %v803, %v803
  %v828 = vunpack.c.l.b16 %v64
  %v829 = vunpack.c.h.b16 %v64
  %v830 = vunpack.c.l.b16 %v65
  %v831 = vunpack.c.h.b16 %v65
  %v832 = vunpack.c.l.b16 %v66
  %v833 = vunpack.c.h.b16 %v66
  %v834 = vunpack.c.l.b16 %v67
  %v835 = vunpack.c.h.b16 %v67
  %v836 = vunpack.c.l.b16 %v68
  %v837 = vunpack.c.h.b16 %v68
  %v838 = vunpack.c.l.b16 %v69
  %v839 = vunpack.c.h.b16 %v69
  %v840 = vunpack.c.l.b16 %v70
  %v841 = vunpack.c.h.b16 %v70
  %v842 = vunpack.c.l.b16 %v71
  %v843 = vunpack.c.h.b16 %v71
  %v844 = vunpack.c.l.b16 %v72
  %v845 = vunpack.c.h.b16 %v72
  %v846 = vunpack.c.l.b16 %v73
  %v847 = vunpack.c.h.b16 %v73
  %v848 = vunpack.c.l.b16 %v74
  %v849 = vunpack.c.h.b16 %v74
  %v850 = vunpack.c.l.b16 %v75
  %v851 = vunpack.c.h.b16 %v75
  %v852 = vunpack.c.l.b16 %v76
  %v853 = vunpack.c.h.b16 %v76
  %v854 = vunpack.c.l.b16 %v77
  %v855 = vunpack.c.h.b16 %v77
  %v856 = vunpack.c.l.b16 %v78
  %v857 = vunpack.c.h.b16 %v78
  %v858 = vunpack.c.l.b16 %v79
  %v859 = vunpack.c.h.b16 %v79
  %v860 = vunpack.c.l.b16 %v80
  %v861 = vunpack.c.h.b16 %v80
  %v862 = vunpack.c.l.b16 %v81
  %v863 = vunpack.c.h.b16 %v81
  %v864 = vunpack.c.l.b16 %v82
  %v865 = vunpack.c.h.b16 %v82
  %v866 = vunpack.c.l.b16 %v83
  %v867 = vunpack.c.h.b16 %v83
  %v868 = vunpack.c.l.b16 %v84
  %v869 = vunpack.c.h.b16 %v84
  %v870 = vpack.c.b16 %v830, %v828
  %v871 = vpack.c.b16 %v831, %v829
  %v872 = vpack.c.b16 %v834, %v832
  %v873 = vpack.c.b16 %v835, %v833
  %v874 = vpack.c.b16 %v838, %v836
  %v875 = vpack.c.b16 %v839, %v837
  %v876 = vpack.c.b16 %v842, %v840
  %v877 = vpack.c.b16 %v843, %v841
  %v878 = vpack.c.b16 %v846, %v844
  %v879 = vpack.c.b16 %v847, %v845
  %v880 = vpack.c.b16 %v850, %v848
  %v881 = vpack.c.b16 %v851, %v849
  %v882 = vpack.c.b16 %v854, %v852
  %v883 = vpack.c.b16 %v855, %v853
  %v884 = vpack.c.b16 %v858, %v856
  %v885 = vpack.c.b16 %v859, %v857
  %v886 = vpack.c.b16 %v862, %v860
  %v887 = vpack.c.b16 %v863, %v861
  %v888 = vpack.c.b16 %v866, %v864
  %v889 = vpack.c.b16 %v867, %v865
  %v890 = vpack.c.b16 %v868, %v868
  %v891 = vpack.c.b16 %v869, %v869
  %v913 = vsel %vm108, %v805, 0
  %v916 = vsel %vm415, %v890, 0
  %v919 = vsel %vm415, %v891, 0
  %921 = vmatprep.subr.bf16.mxu0 %v885
  %922 = vmatpush1.bf16.msra.mxu0 %v884
  %923 = vmatprep.subr.bf16.mxu0 %v883
  %924 = vmatpush1.bf16.msra.mxu0 %v882
  %925 = vmatprep.subr.bf16.mxu0 %v881
  %926 = vmatpush1.bf16.msra.mxu0 %v880
  %927 = vmatprep.subr.bf16.mxu0 %v879
  %928 = vmatpush1.bf16.msra.mxu0 %v878
  %929 = vmatprep.subr.bf16.mxu0 %v877
  %930 = vmatpush1.bf16.msra.mxu0 %v876
  %931 = vmatprep.subr.bf16.mxu0 %v875
  %932 = vmatpush1.bf16.msra.mxu0 %v874
  %933 = vmatprep.subr.bf16.mxu0 %v873
  %934 = vmatpush1.bf16.msra.mxu0 %v872
  %935 = vmatprep.subr.bf16.mxu0 %v871
  %936 = vmatpush1.bf16.msra.mxu0 %v870
  %937 = vmatprep.subr.bf16.mxu0 0
  %938 = vmatpush2.bf16.msra.mxu0 0
  %939 = vmatprep.subr.bf16.mxu0 0
  %940 = vmatpush2.bf16.msra.mxu0 0
  %941 = vmatprep.subr.bf16.mxu0 0
  %942 = vmatpush2.bf16.msra.mxu0 0
  %943 = vmatprep.subr.bf16.mxu0 0
  %944 = vmatpush2.bf16.msra.mxu0 0
  %945 = vmatprep.subr.bf16.mxu0 0
  %946 = vmatpush2.bf16.msra.mxu0 0
  %947 = vmatprep.subr.bf16.mxu0 %v919
  %948 = vmatpush2.bf16.msra.mxu0 %v916
  %949 = vmatprep.subr.bf16.mxu0 %v889
  %950 = vmatpush2.bf16.msra.mxu0 %v888
  %951 = vmatprep.subr.bf16.mxu0 %v887
  %952 = vmatpush2.bf16.msra.mxu0 %v886
  %953 = vmatprep.mubr.bf16.mxu0 %v913
  %954 = vmatmul.mubr.bf16.gmra.mxu0 %v804
  %v955 = vpop.f32.mrf.mxu0
  %v956 = vadd.f32 %v751, %v955
  %v957 = vpop.f32.mrf.mxu0
  %v958 = vadd.f32 %v755, %v957
  %v959 = vpop.f32.mrf.mxu0
  %v960 = vpop.f32.mrf.mxu0
  %961 = vdwg.mxu0
  %v964 = vcombine.low %v956, %v958
  %v965 = vcombine.high %v956, %v958
  %v967 = vunpack.c.l.s4 1966171168
  %v968 = vunpack.c.0.s8 %v967
  %v969 = vlaneseq
  %v970 = vshrl.u32 %v969, 7
  %v971 = vsub.s32 %v968, %v970
  %v972 = vrot.slane %v964, %v971
  %v974 = vunpack.c.l.s4 1966171168
  %v975 = vunpack.c.0.s8 %v974
  %v976 = vlaneseq
  %v977 = vshrl.u32 %v976, 7
  %v978 = vsub.s32 %v975, %v977
  %v979 = vrot.slane %v965, %v978
  %v980 = vcombine.high %v972, %v972
  %v981 = vcombine.high %v979, %v979
  %v983 = vunpack.c.l.s4 1966171168
  %v984 = vunpack.c.0.s8 %v983
  %v985 = vlaneseq
  %v986 = vshrl.u32 %v985, 7
  %v987 = vsub.s32 %v984, %v986
  %v988 = vrot.slane %v972, %v987
  %v990 = vunpack.c.l.s4 1966171168
  %v991 = vunpack.c.0.s8 %v990
  %v992 = vlaneseq
  %v993 = vshrl.u32 %v992, 7
  %v994 = vsub.s32 %v991, %v993
  %v995 = vrot.slane %v979, %v994
  %v997 = vunpack.c.l.s4 1966171168
  %v998 = vunpack.c.0.s8 %v997
  %v999 = vlaneseq
  %v1000 = vshrl.u32 %v999, 7
  %v1001 = vsub.s32 %v998, %v1000
  %v1002 = vrot.slane %v980, %v1001
  %v1004 = vunpack.c.l.s4 1966171168
  %v1005 = vunpack.c.0.s8 %v1004
  %v1006 = vlaneseq
  %v1007 = vshrl.u32 %v1006, 7
  %v1008 = vsub.s32 %v1005, %v1007
  %v1009 = vrot.slane %v981, %v1008
  %v1010 = vcombine.high %v988, %v988
  %v1011 = vcombine.high %v995, %v995
  %v1012 = vcombine.high %v1002, %v1002
  %v1013 = vcombine.high %v1009, %v1009
  %v1014 = vlaneseq
  %v1015 = vshrl.u32 %v1014, 7
  %v1016 = vsub.s32 0, %v1015
  %v1017 = vrot.slane %v988, %v1016
  %v1018 = vlaneseq
  %v1019 = vshrl.u32 %v1018, 7
  %v1020 = vsub.s32 1, %v1019
  %v1021 = vrot.slane %v988, %v1020
  %v1022 = vlaneseq
  %v1023 = vshrl.u32 %v1022, 7
  %v1024 = vsub.s32 0, %v1023
  %v1025 = vrot.slane %v1002, %v1024
  %v1026 = vlaneseq
  %v1027 = vshrl.u32 %v1026, 7
  %v1028 = vsub.s32 1, %v1027
  %v1029 = vrot.slane %v1002, %v1028
  %v1030 = vlaneseq
  %v1031 = vshrl.u32 %v1030, 7
  %v1032 = vsub.s32 0, %v1031
  %v1033 = vrot.slane %v1010, %v1032
  %v1034 = vlaneseq
  %v1035 = vshrl.u32 %v1034, 7
  %v1036 = vsub.s32 1, %v1035
  %v1037 = vrot.slane %v1010, %v1036
  %v1038 = vlaneseq
  %v1039 = vshrl.u32 %v1038, 7
  %v1040 = vsub.s32 0, %v1039
  %v1041 = vrot.slane %v1012, %v1040
  %v1042 = vlaneseq
  %v1043 = vshrl.u32 %v1042, 7
  %v1044 = vsub.s32 1, %v1043
  %v1045 = vrot.slane %v1012, %v1044
  %v1046 = vlaneseq
  %v1047 = vshrl.u32 %v1046, 7
  %v1048 = vsub.s32 0, %v1047
  %v1049 = vrot.slane %v995, %v1048
  %v1050 = vlaneseq
  %v1051 = vshrl.u32 %v1050, 7
  %v1052 = vsub.s32 1, %v1051
  %v1053 = vrot.slane %v995, %v1052
  %v1054 = vlaneseq
  %v1055 = vshrl.u32 %v1054, 7
  %v1056 = vsub.s32 0, %v1055
  %v1057 = vrot.slane %v1009, %v1056
  %v1058 = vlaneseq
  %v1059 = vshrl.u32 %v1058, 7
  %v1060 = vsub.s32 1, %v1059
  %v1061 = vrot.slane %v1009, %v1060
  %v1062 = vlaneseq
  %v1063 = vshrl.u32 %v1062, 7
  %v1064 = vsub.s32 0, %v1063
  %v1065 = vrot.slane %v1011, %v1064
  %v1066 = vlaneseq
  %v1067 = vshrl.u32 %v1066, 7
  %v1068 = vsub.s32 1, %v1067
  %v1069 = vrot.slane %v1011, %v1068
  %v1070 = vlaneseq
  %v1071 = vshrl.u32 %v1070, 7
  %v1072 = vsub.s32 0, %v1071
  %v1073 = vrot.slane %v1013, %v1072
  %v1074 = vlaneseq
  %v1075 = vshrl.u32 %v1074, 7
  %v1076 = vsub.s32 1, %v1075
  %v1077 = vrot.slane %v1013, %v1076
  %v1094 = vmax.f32 %v1017, 0.0
  %v1095 = vmax.f32 %v1021, 0.0
  %v1096 = vmax.f32 %v1025, 0.0
  %v1097 = vmax.f32 %v1029, 0.0
  %v1098 = vmax.f32 %v1033, 0.0
  %v1099 = vmax.f32 %v1037, 0.0
  %v1100 = vmax.f32 %v1041, 0.0
  %v1101 = vmax.f32 %v1045, 0.0
  %v1102 = vmax.f32 %v1049, 0.0
  %v1103 = vmax.f32 %v1053, 0.0
  %v1104 = vmax.f32 %v1057, 0.0
  %v1105 = vmax.f32 %v1061, 0.0
  %v1106 = vmax.f32 %v1065, 0.0
  %v1107 = vmax.f32 %v1069, 0.0
  %v1108 = vmax.f32 %v1073, 0.0
  %v1109 = vmax.f32 %v1077, 0.0
  %v1110 = vadd.f32 %v86, %v1094
  %v1111 = vadd.f32 %v87, %v1095
  %v1112 = vadd.f32 %v88, %v1096
  %v1113 = vadd.f32 %v89, %v1097
  %v1114 = vadd.f32 %v90, %v1098
  %v1115 = vadd.f32 %v91, %v1099
  %v1116 = vadd.f32 %v92, %v1100
  %v1117 = vadd.f32 %v93, %v1101
  %v1118 = vadd.f32 %v94, %v1102
  %v1119 = vadd.f32 %v95, %v1103
  %v1120 = vadd.f32 %v96, %v1104
  %v1121 = vadd.f32 %v97, %v1105
  %v1122 = vadd.f32 %v98, %v1106
  %v1123 = vadd.f32 %v99, %v1107
  %v1124 = vadd.f32 %v100, %v1108
  %v1125 = vadd.f32 %v101, %v1109
  %v1126 = vld [vmem:[%s5] sm:$0xff]
  %1128 = vset.pattern.permute.xlu0 0
  %1129 = vperm.xlu0 %1128, %v1126
  %v1130 = vpop.permute.xlu0 %1129
  %v1132 = vmul.f32 %v1110, %v1130
  %v1133 = vmul.f32 %v1111, %v1130
  %v1134 = vmul.f32 %v1112, %v1130
  %v1135 = vmul.f32 %v1113, %v1130
  %v1136 = vmul.f32 %v1114, %v1130
  %v1137 = vmul.f32 %v1115, %v1130
  %v1138 = vmul.f32 %v1116, %v1130
  %v1139 = vmul.f32 %v1117, %v1130
  %v1140 = vmul.f32 %v1118, %v1130
  %v1141 = vmul.f32 %v1119, %v1130
  %v1142 = vmul.f32 %v1120, %v1130
  %v1143 = vmul.f32 %v1121, %v1130
  %v1144 = vmul.f32 %v1122, %v1130
  %v1145 = vmul.f32 %v1123, %v1130
  %v1146 = vmul.f32 %v1124, %v1130
  %v1147 = vmul.f32 %v1125, %v1130
  %v1148 = vrot.slane %v1132, 4
  %v1149 = vadd.f32 %v1132, %v1148
  %v1150 = vrot.slane %v1149, 2
  %v1151 = vadd.f32 %v1149, %v1150
  %v1152 = vrot.slane %v1151, 1
  %v1153 = vadd.f32 %v1151, %v1152
  %v1154 = vsel %vm108, %v1133, 0.0
  %v1155 = vrot.slane %v1154, 4
  %v1156 = vadd.f32 %v1154, %v1155
  %v1157 = vrot.slane %v1156, 2
  %v1158 = vadd.f32 %v1156, %v1157
  %v1159 = vrot.slane %v1158, 1
  %v1160 = vadd.f32 %v1158, %v1159
  %v1161 = vrot.slane %v1134, 4
  %v1162 = vadd.f32 %v1134, %v1161
  %v1163 = vrot.slane %v1162, 2
  %v1164 = vadd.f32 %v1162, %v1163
  %v1165 = vrot.slane %v1164, 1
  %v1166 = vadd.f32 %v1164, %v1165
  %v1167 = vsel %vm108, %v1135, 0.0
  %v1168 = vrot.slane %v1167, 4
  %v1169 = vadd.f32 %v1167, %v1168
  %v1170 = vrot.slane %v1169, 2
  %v1171 = vadd.f32 %v1169, %v1170
  %v1172 = vrot.slane %v1171, 1
  %v1173 = vadd.f32 %v1171, %v1172
  %v1174 = vrot.slane %v1136, 4
  %v1175 = vadd.f32 %v1136, %v1174
  %v1176 = vrot.slane %v1175, 2
  %v1177 = vadd.f32 %v1175, %v1176
  %v1178 = vrot.slane %v1177, 1
  %v1179 = vadd.f32 %v1177, %v1178
  %v1180 = vsel %vm108, %v1137, 0.0
  %v1181 = vrot.slane %v1180, 4
  %v1182 = vadd.f32 %v1180, %v1181
  %v1183 = vrot.slane %v1182, 2
  %v1184 = vadd.f32 %v1182, %v1183
  %v1185 = vrot.slane %v1184, 1
  %v1186 = vadd.f32 %v1184, %v1185
  %v1187 = vrot.slane %v1138, 4
  %v1188 = vadd.f32 %v1138, %v1187
  %v1189 = vrot.slane %v1188, 2
  %v1190 = vadd.f32 %v1188, %v1189
  %v1191 = vrot.slane %v1190, 1
  %v1192 = vadd.f32 %v1190, %v1191
  %v1193 = vsel %vm108, %v1139, 0.0
  %v1194 = vrot.slane %v1193, 4
  %v1195 = vadd.f32 %v1193, %v1194
  %v1196 = vrot.slane %v1195, 2
  %v1197 = vadd.f32 %v1195, %v1196
  %v1198 = vrot.slane %v1197, 1
  %v1199 = vadd.f32 %v1197, %v1198
  %v1200 = vrot.slane %v1140, 4
  %v1201 = vadd.f32 %v1140, %v1200
  %v1202 = vrot.slane %v1201, 2
  %v1203 = vadd.f32 %v1201, %v1202
  %v1204 = vrot.slane %v1203, 1
  %v1205 = vadd.f32 %v1203, %v1204
  %v1206 = vsel %vm108, %v1141, 0.0
  %v1207 = vrot.slane %v1206, 4
  %v1208 = vadd.f32 %v1206, %v1207
  %v1209 = vrot.slane %v1208, 2
  %v1210 = vadd.f32 %v1208, %v1209
  %v1211 = vrot.slane %v1210, 1
  %v1212 = vadd.f32 %v1210, %v1211
  %v1213 = vrot.slane %v1142, 4
  %v1214 = vadd.f32 %v1142, %v1213
  %v1215 = vrot.slane %v1214, 2
  %v1216 = vadd.f32 %v1214, %v1215
  %v1217 = vrot.slane %v1216, 1
  %v1218 = vadd.f32 %v1216, %v1217
  %v1219 = vsel %vm108, %v1143, 0.0
  %v1220 = vrot.slane %v1219, 4
  %v1221 = vadd.f32 %v1219, %v1220
  %v1222 = vrot.slane %v1221, 2
  %v1223 = vadd.f32 %v1221, %v1222
  %v1224 = vrot.slane %v1223, 1
  %v1225 = vadd.f32 %v1223, %v1224
  %v1226 = vrot.slane %v1144, 4
  %v1227 = vadd.f32 %v1144, %v1226
  %v1228 = vrot.slane %v1227, 2
  %v1229 = vadd.f32 %v1227, %v1228
  %v1230 = vrot.slane %v1229, 1
  %v1231 = vadd.f32 %v1229, %v1230
  %v1232 = vsel %vm108, %v1145, 0.0
  %v1233 = vrot.slane %v1232, 4
  %v1234 = vadd.f32 %v1232, %v1233
  %v1235 = vrot.slane %v1234, 2
  %v1236 = vadd.f32 %v1234, %v1235
  %v1237 = vrot.slane %v1236, 1
  %v1238 = vadd.f32 %v1236, %v1237
  %v1239 = vrot.slane %v1146, 4
  %v1240 = vadd.f32 %v1146, %v1239
  %v1241 = vrot.slane %v1240, 2
  %v1242 = vadd.f32 %v1240, %v1241
  %v1243 = vrot.slane %v1242, 1
  %v1244 = vadd.f32 %v1242, %v1243
  %v1245 = vsel %vm108, %v1147, 0.0
  %v1246 = vrot.slane %v1245, 4
  %v1247 = vadd.f32 %v1245, %v1246
  %v1248 = vrot.slane %v1247, 2
  %v1249 = vadd.f32 %v1247, %v1248
  %v1250 = vrot.slane %v1249, 1
  %v1251 = vadd.f32 %v1249, %v1250
  %v1252 = vpack.c.bf16 %v1153, %v1153
  %v1253 = vpack.c.bf16 %v1160, %v1160
  %v1254 = vpack.c.bf16 %v1166, %v1166
  %v1255 = vpack.c.bf16 %v1173, %v1173
  %v1256 = vpack.c.bf16 %v1179, %v1179
  %v1257 = vpack.c.bf16 %v1186, %v1186
  %v1258 = vpack.c.bf16 %v1192, %v1192
  %v1259 = vpack.c.bf16 %v1199, %v1199
  %v1260 = vpack.c.bf16 %v1205, %v1205
  %v1261 = vpack.c.bf16 %v1212, %v1212
  %v1262 = vpack.c.bf16 %v1218, %v1218
  %v1263 = vpack.c.bf16 %v1225, %v1225
  %v1264 = vpack.c.bf16 %v1231, %v1231
  %v1265 = vpack.c.bf16 %v1238, %v1238
  %v1266 = vpack.c.bf16 %v1244, %v1244
  %v1267 = vpack.c.bf16 %v1251, %v1251
  %v1268 = vld [vmem:[%s6] sm:$0xff]
  %v1269 = vld [vmem:[%s6 + $0x8] sm:$0xff]
  %v1270 = vld [vmem:[%s6 + $0x10] sm:$0xff]
  %v1271 = vld [vmem:[%s6 + $0x18] sm:$0xff]
  %v1272 = vld [vmem:[%s6 + $0x20] sm:$0xff]
  %v1273 = vld [vmem:[%s6 + $0x28] sm:$0xff]
  %v1274 = vld [vmem:[%s6 + $0x30] sm:$0xff]
  %v1275 = vld [vmem:[%s6 + $0x38] sm:$0xff]
  %v1276 = vld [vmem:[%s6 + $0x40] sm:$0xff]
  %v1277 = vld [vmem:[%s6 + $0x48] sm:$0xff]
  %v1278 = vld [vmem:[%s6 + $0x50] sm:$0xff]
  %v1279 = vld [vmem:[%s6 + $0x58] sm:$0xff]
  %v1280 = vld [vmem:[%s6 + $0x60] sm:$0xff]
  %v1281 = vld [vmem:[%s6 + $0x68] sm:$0xff]
  %v1282 = vld [vmem:[%s6 + $0x70] sm:$0xff]
  %v1283 = vld [vmem:[%s6 + $0x78] sm:$0xff]
  %v1284 = vld [vmem:[%s6 + $0x80] sm:$0xff]
  %v1285 = vld [vmem:[%s6 + $0x88] sm:$0xff]
  %v1286 = vld [vmem:[%s6 + $0x90] sm:$0xff]
  %v1287 = vld [vmem:[%s6 + $0x98] sm:$0xff]
  %v1288 = vld [vmem:[%s6 + $0xa0] sm:$0xff]
  %v1289 = vld [vmem:[%s6 + $0xa8] sm:$0xff]
  %v1290 = vld [vmem:[%s6 + $0xb0] sm:$0xff]
  %v1291 = vld [vmem:[%s6 + $0xb8] sm:$0xff]
  %v1292 = vld [vmem:[%s6 + $0xc0] sm:$0xff]
  %v1293 = vld [vmem:[%s6 + $0xc8] sm:$0xff]
  %v1294 = vld [vmem:[%s6 + $0xd0] sm:$0xff]
  %v1295 = vld [vmem:[%s6 + $0xd8] sm:$0xff]
  %v1296 = vld [vmem:[%s6 + $0xe0] sm:$0xff]
  %v1297 = vld [vmem:[%s6 + $0xe8] sm:$0xff]
  %v1298 = vld [vmem:[%s6 + $0xf0] sm:$0xff]
  %v1299 = vld [vmem:[%s6 + $0xf8] sm:$0xff]
  %v1300 = vld [vmem:[%s6 + $0x100] sm:$0xff]
  %v1301 = vld [vmem:[%s6 + $0x108] sm:$0xff]
  %v1302 = vld [vmem:[%s6 + $0x110] sm:$0xff]
  %v1303 = vld [vmem:[%s6 + $0x118] sm:$0xff]
  %v1304 = vld [vmem:[%s6 + $0x120] sm:$0xff]
  %v1305 = vld [vmem:[%s6 + $0x128] sm:$0xff]
  %v1306 = vld [vmem:[%s6 + $0x130] sm:$0xff]
  %v1307 = vld [vmem:[%s6 + $0x138] sm:$0xff]
  %v1308 = vld [vmem:[%s6 + $0x140] sm:$0xff]
  %v1309 = vld [vmem:[%s6 + $0x148] sm:$0xff]
  %s1310 = scalar_lea.vmem %s5, 8
  %v1311 = vld [vmem:[%s1310] sm:$0xff]
  %1313 = vset.pattern.permute.xlu0 0
  %1314 = vperm.xlu0 %1313, %v1311
  %v1315 = vpop.permute.xlu0 %1314
  %v1317 = vmul.f32 %v1110, %v1315
  %v1318 = vmul.f32 %v1111, %v1315
  %v1319 = vmul.f32 %v1112, %v1315
  %v1320 = vmul.f32 %v1113, %v1315
  %v1321 = vmul.f32 %v1114, %v1315
  %v1322 = vmul.f32 %v1115, %v1315
  %v1323 = vmul.f32 %v1116, %v1315
  %v1324 = vmul.f32 %v1117, %v1315
  %v1325 = vmul.f32 %v1118, %v1315
  %v1326 = vmul.f32 %v1119, %v1315
  %v1327 = vmul.f32 %v1120, %v1315
  %v1328 = vmul.f32 %v1121, %v1315
  %v1329 = vmul.f32 %v1122, %v1315
  %v1330 = vmul.f32 %v1123, %v1315
  %v1331 = vmul.f32 %v1124, %v1315
  %v1332 = vmul.f32 %v1125, %v1315
  %v1333 = vrot.slane %v1317, 4
  %v1334 = vadd.f32 %v1317, %v1333
  %v1335 = vrot.slane %v1334, 2
  %v1336 = vadd.f32 %v1334, %v1335
  %v1337 = vrot.slane %v1336, 1
  %v1338 = vadd.f32 %v1336, %v1337
  %v1339 = vsel %vm108, %v1318, 0.0
  %v1340 = vrot.slane %v1339, 4
  %v1341 = vadd.f32 %v1339, %v1340
  %v1342 = vrot.slane %v1341, 2
  %v1343 = vadd.f32 %v1341, %v1342
  %v1344 = vrot.slane %v1343, 1
  %v1345 = vadd.f32 %v1343, %v1344
  %v1346 = vrot.slane %v1319, 4
  %v1347 = vadd.f32 %v1319, %v1346
  %v1348 = vrot.slane %v1347, 2
  %v1349 = vadd.f32 %v1347, %v1348
  %v1350 = vrot.slane %v1349, 1
  %v1351 = vadd.f32 %v1349, %v1350
  %v1352 = vsel %vm108, %v1320, 0.0
  %v1353 = vrot.slane %v1352, 4
  %v1354 = vadd.f32 %v1352, %v1353
  %v1355 = vrot.slane %v1354, 2
  %v1356 = vadd.f32 %v1354, %v1355
  %v1357 = vrot.slane %v1356, 1
  %v1358 = vadd.f32 %v1356, %v1357
  %v1359 = vrot.slane %v1321, 4
  %v1360 = vadd.f32 %v1321, %v1359
  %v1361 = vrot.slane %v1360, 2
  %v1362 = vadd.f32 %v1360, %v1361
  %v1363 = vrot.slane %v1362, 1
  %v1364 = vadd.f32 %v1362, %v1363
  %v1365 = vsel %vm108, %v1322, 0.0
  %v1366 = vrot.slane %v1365, 4
  %v1367 = vadd.f32 %v1365, %v1366
  %v1368 = vrot.slane %v1367, 2
  %v1369 = vadd.f32 %v1367, %v1368
  %v1370 = vrot.slane %v1369, 1
  %v1371 = vadd.f32 %v1369, %v1370
  %v1372 = vrot.slane %v1323, 4
  %v1373 = vadd.f32 %v1323, %v1372
  %v1374 = vrot.slane %v1373, 2
  %v1375 = vadd.f32 %v1373, %v1374
  %v1376 = vrot.slane %v1375, 1
  %v1377 = vadd.f32 %v1375, %v1376
  %v1378 = vsel %vm108, %v1324, 0.0
  %v1379 = vrot.slane %v1378, 4
  %v1380 = vadd.f32 %v1378, %v1379
  %v1381 = vrot.slane %v1380, 2
  %v1382 = vadd.f32 %v1380, %v1381
  %v1383 = vrot.slane %v1382, 1
  %v1384 = vadd.f32 %v1382, %v1383
  %v1385 = vrot.slane %v1325, 4
  %v1386 = vadd.f32 %v1325, %v1385
  %v1387 = vrot.slane %v1386, 2
  %v1388 = vadd.f32 %v1386, %v1387
  %v1389 = vrot.slane %v1388, 1
  %v1390 = vadd.f32 %v1388, %v1389
  %v1391 = vsel %vm108, %v1326, 0.0
  %v1392 = vrot.slane %v1391, 4
  %v1393 = vadd.f32 %v1391, %v1392
  %v1394 = vrot.slane %v1393, 2
  %v1395 = vadd.f32 %v1393, %v1394
  %v1396 = vrot.slane %v1395, 1
  %v1397 = vadd.f32 %v1395, %v1396
  %v1398 = vrot.slane %v1327, 4
  %v1399 = vadd.f32 %v1327, %v1398
  %v1400 = vrot.slane %v1399, 2
  %v1401 = vadd.f32 %v1399, %v1400
  %v1402 = vrot.slane %v1401, 1
  %v1403 = vadd.f32 %v1401, %v1402
  %v1404 = vsel %vm108, %v1328, 0.0
  %v1405 = vrot.slane %v1404, 4
  %v1406 = vadd.f32 %v1404, %v1405
  %v1407 = vrot.slane %v1406, 2
  %v1408 = vadd.f32 %v1406, %v1407
  %v1409 = vrot.slane %v1408, 1
  %v1410 = vadd.f32 %v1408, %v1409
  %v1411 = vrot.slane %v1329, 4
  %v1412 = vadd.f32 %v1329, %v1411
  %v1413 = vrot.slane %v1412, 2
  %v1414 = vadd.f32 %v1412, %v1413
  %v1415 = vrot.slane %v1414, 1
  %v1416 = vadd.f32 %v1414, %v1415
  %v1417 = vsel %vm108, %v1330, 0.0
  %v1418 = vrot.slane %v1417, 4
  %v1419 = vadd.f32 %v1417, %v1418
  %v1420 = vrot.slane %v1419, 2
  %v1421 = vadd.f32 %v1419, %v1420
  %v1422 = vrot.slane %v1421, 1
  %v1423 = vadd.f32 %v1421, %v1422
  %v1424 = vrot.slane %v1331, 4
  %v1425 = vadd.f32 %v1331, %v1424
  %v1426 = vrot.slane %v1425, 2
  %v1427 = vadd.f32 %v1425, %v1426
  %v1428 = vrot.slane %v1427, 1
  %v1429 = vadd.f32 %v1427, %v1428
  %v1430 = vsel %vm108, %v1332, 0.0
  %v1431 = vrot.slane %v1430, 4
  %v1432 = vadd.f32 %v1430, %v1431
  %v1433 = vrot.slane %v1432, 2
  %v1434 = vadd.f32 %v1432, %v1433
  %v1435 = vrot.slane %v1434, 1
  %v1436 = vadd.f32 %v1434, %v1435
  %v1437 = vpack.c.bf16 %v1338, %v1338
  %v1438 = vpack.c.bf16 %v1345, %v1345
  %v1439 = vpack.c.bf16 %v1351, %v1351
  %v1440 = vpack.c.bf16 %v1358, %v1358
  %v1441 = vpack.c.bf16 %v1364, %v1364
  %v1442 = vpack.c.bf16 %v1371, %v1371
  %v1443 = vpack.c.bf16 %v1377, %v1377
  %v1444 = vpack.c.bf16 %v1384, %v1384
  %v1445 = vpack.c.bf16 %v1390, %v1390
  %v1446 = vpack.c.bf16 %v1397, %v1397
  %v1447 = vpack.c.bf16 %v1403, %v1403
  %v1448 = vpack.c.bf16 %v1410, %v1410
  %v1449 = vpack.c.bf16 %v1416, %v1416
  %v1450 = vpack.c.bf16 %v1423, %v1423
  %v1451 = vpack.c.bf16 %v1429, %v1429
  %v1452 = vpack.c.bf16 %v1436, %v1436
  %s1453 = scalar_lea.vmem %s6, 336
  %v1454 = vld [vmem:[%s1453] sm:$0xff]
  %v1455 = vld [vmem:[%s1453 + $0x8] sm:$0xff]
  %v1456 = vld [vmem:[%s1453 + $0x10] sm:$0xff]
  %v1457 = vld [vmem:[%s1453 + $0x18] sm:$0xff]
  %v1458 = vld [vmem:[%s1453 + $0x20] sm:$0xff]
  %v1459 = vld [vmem:[%s1453 + $0x28] sm:$0xff]
  %v1460 = vld [vmem:[%s1453 + $0x30] sm:$0xff]
  %v1461 = vld [vmem:[%s1453 + $0x38] sm:$0xff]
  %v1462 = vld [vmem:[%s1453 + $0x40] sm:$0xff]
  %v1463 = vld [vmem:[%s1453 + $0x48] sm:$0xff]
  %v1464 = vld [vmem:[%s1453 + $0x50] sm:$0xff]
  %v1465 = vld [vmem:[%s1453 + $0x58] sm:$0xff]
  %v1466 = vld [vmem:[%s1453 + $0x60] sm:$0xff]
  %v1467 = vld [vmem:[%s1453 + $0x68] sm:$0xff]
  %v1468 = vld [vmem:[%s1453 + $0x70] sm:$0xff]
  %v1469 = vld [vmem:[%s1453 + $0x78] sm:$0xff]
  %v1470 = vld [vmem:[%s1453 + $0x80] sm:$0xff]
  %v1471 = vld [vmem:[%s1453 + $0x88] sm:$0xff]
  %v1472 = vld [vmem:[%s1453 + $0x90] sm:$0xff]
  %v1473 = vld [vmem:[%s1453 + $0x98] sm:$0xff]
  %v1474 = vld [vmem:[%s1453 + $0xa0] sm:$0xff]
  %v1475 = vld [vmem:[%s1453 + $0xa8] sm:$0xff]
  %v1476 = vld [vmem:[%s1453 + $0xb0] sm:$0xff]
  %v1477 = vld [vmem:[%s1453 + $0xb8] sm:$0xff]
  %v1478 = vld [vmem:[%s1453 + $0xc0] sm:$0xff]
  %v1479 = vld [vmem:[%s1453 + $0xc8] sm:$0xff]
  %v1480 = vld [vmem:[%s1453 + $0xd0] sm:$0xff]
  %v1481 = vld [vmem:[%s1453 + $0xd8] sm:$0xff]
  %v1482 = vld [vmem:[%s1453 + $0xe0] sm:$0xff]
  %v1483 = vld [vmem:[%s1453 + $0xe8] sm:$0xff]
  %v1484 = vld [vmem:[%s1453 + $0xf0] sm:$0xff]
  %v1485 = vld [vmem:[%s1453 + $0xf8] sm:$0xff]
  %v1486 = vld [vmem:[%s1453 + $0x100] sm:$0xff]
  %v1487 = vld [vmem:[%s1453 + $0x108] sm:$0xff]
  %v1488 = vld [vmem:[%s1453 + $0x110] sm:$0xff]
  %v1489 = vld [vmem:[%s1453 + $0x118] sm:$0xff]
  %v1490 = vld [vmem:[%s1453 + $0x120] sm:$0xff]
  %v1491 = vld [vmem:[%s1453 + $0x128] sm:$0xff]
  %v1492 = vld [vmem:[%s1453 + $0x130] sm:$0xff]
  %v1493 = vld [vmem:[%s1453 + $0x138] sm:$0xff]
  %v1494 = vld [vmem:[%s1453 + $0x140] sm:$0xff]
  %v1495 = vld [vmem:[%s1453 + $0x148] sm:$0xff]
  %v1512 = vunpack.c.l.b16 %v1437
  %v1513 = vunpack.c.l.b16 %v1438
  %v1514 = vunpack.c.l.b16 %v1439
  %v1515 = vunpack.c.l.b16 %v1440
  %v1516 = vunpack.c.l.b16 %v1441
  %v1517 = vunpack.c.l.b16 %v1442
  %v1518 = vunpack.c.l.b16 %v1443
  %v1519 = vunpack.c.l.b16 %v1444
  %v1520 = vunpack.c.l.b16 %v1445
  %v1521 = vunpack.c.l.b16 %v1446
  %v1522 = vunpack.c.l.b16 %v1447
  %v1523 = vunpack.c.l.b16 %v1448
  %v1524 = vunpack.c.l.b16 %v1449
  %v1525 = vunpack.c.l.b16 %v1450
  %v1526 = vunpack.c.l.b16 %v1451
  %v1527 = vunpack.c.l.b16 %v1452
  %v1528 = vsel %vm283, %v1514, %v1512
  %v1529 = vsel %vm285, %v1516, %v1528
  %v1530 = vsel %vm287, %v1518, %v1529
  %v1531 = vsel %vm289, %v1520, %v1530
  %v1532 = vsel %vm291, %v1522, %v1531
  %v1533 = vsel %vm293, %v1524, %v1532
  %v1534 = vsel %vm295, %v1526, %v1533
  %v1535 = vsel %vm283, %v1515, %v1513
  %v1536 = vsel %vm285, %v1517, %v1535
  %v1537 = vsel %vm287, %v1519, %v1536
  %v1538 = vsel %vm289, %v1521, %v1537
  %v1539 = vsel %vm291, %v1523, %v1538
  %v1540 = vsel %vm293, %v1525, %v1539
  %v1541 = vsel %vm295, %v1527, %v1540
  %v1542 = vpack.c.b16 %v1534, %v1534
  %v1543 = vpack.c.b16 %v1541, %v1541
  %v1587 = vunpack.c.l.b16 %v1454
  %v1588 = vunpack.c.h.b16 %v1454
  %v1589 = vunpack.c.l.b16 %v1455
  %v1590 = vunpack.c.h.b16 %v1455
  %v1591 = vunpack.c.l.b16 %v1456
  %v1592 = vunpack.c.h.b16 %v1456
  %v1593 = vunpack.c.l.b16 %v1457
  %v1594 = vunpack.c.h.b16 %v1457
  %v1595 = vunpack.c.l.b16 %v1458
  %v1596 = vunpack.c.h.b16 %v1458
  %v1597 = vunpack.c.l.b16 %v1459
  %v1598 = vunpack.c.h.b16 %v1459
  %v1599 = vunpack.c.l.b16 %v1460
  %v1600 = vunpack.c.h.b16 %v1460
  %v1601 = vunpack.c.l.b16 %v1461
  %v1602 = vunpack.c.h.b16 %v1461
  %v1603 = vunpack.c.l.b16 %v1462
  %v1604 = vunpack.c.h.b16 %v1462
  %v1605 = vunpack.c.l.b16 %v1463
  %v1606 = vunpack.c.h.b16 %v1463
  %v1607 = vunpack.c.l.b16 %v1464
  %v1608 = vunpack.c.h.b16 %v1464
  %v1609 = vunpack.c.l.b16 %v1465
  %v1610 = vunpack.c.h.b16 %v1465
  %v1611 = vunpack.c.l.b16 %v1466
  %v1612 = vunpack.c.h.b16 %v1466
  %v1613 = vunpack.c.l.b16 %v1467
  %v1614 = vunpack.c.h.b16 %v1467
  %v1615 = vunpack.c.l.b16 %v1468
  %v1616 = vunpack.c.h.b16 %v1468
  %v1617 = vunpack.c.l.b16 %v1469
  %v1618 = vunpack.c.h.b16 %v1469
  %v1619 = vunpack.c.l.b16 %v1470
  %v1620 = vunpack.c.h.b16 %v1470
  %v1621 = vunpack.c.l.b16 %v1471
  %v1622 = vunpack.c.h.b16 %v1471
  %v1623 = vunpack.c.l.b16 %v1472
  %v1624 = vunpack.c.h.b16 %v1472
  %v1625 = vunpack.c.l.b16 %v1473
  %v1626 = vunpack.c.h.b16 %v1473
  %v1627 = vunpack.c.l.b16 %v1474
  %v1628 = vunpack.c.h.b16 %v1474
  %v1629 = vunpack.c.l.b16 %v1475
  %v1630 = vunpack.c.h.b16 %v1475
  %v1631 = vunpack.c.l.b16 %v1476
  %v1632 = vunpack.c.h.b16 %v1476
  %v1633 = vunpack.c.l.b16 %v1477
  %v1634 = vunpack.c.h.b16 %v1477
  %v1635 = vunpack.c.l.b16 %v1478
  %v1636 = vunpack.c.h.b16 %v1478
  %v1637 = vunpack.c.l.b16 %v1479
  %v1638 = vunpack.c.h.b16 %v1479
  %v1639 = vunpack.c.l.b16 %v1480
  %v1640 = vunpack.c.h.b16 %v1480
  %v1641 = vunpack.c.l.b16 %v1481
  %v1642 = vunpack.c.h.b16 %v1481
  %v1643 = vunpack.c.l.b16 %v1482
  %v1644 = vunpack.c.h.b16 %v1482
  %v1645 = vunpack.c.l.b16 %v1483
  %v1646 = vunpack.c.h.b16 %v1483
  %v1647 = vunpack.c.l.b16 %v1484
  %v1648 = vunpack.c.h.b16 %v1484
  %v1649 = vunpack.c.l.b16 %v1485
  %v1650 = vunpack.c.h.b16 %v1485
  %v1651 = vunpack.c.l.b16 %v1486
  %v1652 = vunpack.c.h.b16 %v1486
  %v1653 = vunpack.c.l.b16 %v1487
  %v1654 = vunpack.c.h.b16 %v1487
  %v1655 = vunpack.c.l.b16 %v1488
  %v1656 = vunpack.c.h.b16 %v1488
  %v1657 = vunpack.c.l.b16 %v1489
  %v1658 = vunpack.c.h.b16 %v1489
  %v1659 = vunpack.c.l.b16 %v1490
  %v1660 = vunpack.c.h.b16 %v1490
  %v1661 = vunpack.c.l.b16 %v1491
  %v1662 = vunpack.c.h.b16 %v1491
  %v1663 = vunpack.c.l.b16 %v1492
  %v1664 = vunpack.c.h.b16 %v1492
  %v1665 = vunpack.c.l.b16 %v1493
  %v1666 = vunpack.c.h.b16 %v1493
  %v1667 = vunpack.c.l.b16 %v1494
  %v1668 = vunpack.c.h.b16 %v1494
  %v1669 = vunpack.c.l.b16 %v1495
  %v1670 = vunpack.c.h.b16 %v1495
  %v1671 = vpack.c.b16 %v1591, %v1587
  %v1672 = vpack.c.b16 %v1592, %v1588
  %v1673 = vpack.c.b16 %v1593, %v1589
  %v1674 = vpack.c.b16 %v1594, %v1590
  %v1675 = vpack.c.b16 %v1599, %v1595
  %v1676 = vpack.c.b16 %v1600, %v1596
  %v1677 = vpack.c.b16 %v1601, %v1597
  %v1678 = vpack.c.b16 %v1602, %v1598
  %v1679 = vpack.c.b16 %v1607, %v1603
  %v1680 = vpack.c.b16 %v1608, %v1604
  %v1681 = vpack.c.b16 %v1609, %v1605
  %v1682 = vpack.c.b16 %v1610, %v1606
  %v1683 = vpack.c.b16 %v1615, %v1611
  %v1684 = vpack.c.b16 %v1616, %v1612
  %v1685 = vpack.c.b16 %v1617, %v1613
  %v1686 = vpack.c.b16 %v1618, %v1614
  %v1687 = vpack.c.b16 %v1623, %v1619
  %v1688 = vpack.c.b16 %v1624, %v1620
  %v1689 = vpack.c.b16 %v1625, %v1621
  %v1690 = vpack.c.b16 %v1626, %v1622
  %v1691 = vpack.c.b16 %v1631, %v1627
  %v1692 = vpack.c.b16 %v1632, %v1628
  %v1693 = vpack.c.b16 %v1633, %v1629
  %v1694 = vpack.c.b16 %v1634, %v1630
  %v1695 = vpack.c.b16 %v1639, %v1635
  %v1696 = vpack.c.b16 %v1640, %v1636
  %v1697 = vpack.c.b16 %v1641, %v1637
  %v1698 = vpack.c.b16 %v1642, %v1638
  %v1699 = vpack.c.b16 %v1647, %v1643
  %v1700 = vpack.c.b16 %v1648, %v1644
  %v1701 = vpack.c.b16 %v1649, %v1645
  %v1702 = vpack.c.b16 %v1650, %v1646
  %v1703 = vpack.c.b16 %v1655, %v1651
  %v1704 = vpack.c.b16 %v1656, %v1652
  %v1705 = vpack.c.b16 %v1657, %v1653
  %v1706 = vpack.c.b16 %v1658, %v1654
  %v1707 = vpack.c.b16 %v1663, %v1659
  %v1708 = vpack.c.b16 %v1664, %v1660
  %v1709 = vpack.c.b16 %v1665, %v1661
  %v1710 = vpack.c.b16 %v1666, %v1662
  %v1711 = vpack.c.b16 %v1667, %v1667
  %v1712 = vpack.c.b16 %v1668, %v1668
  %v1713 = vpack.c.b16 %v1669, %v1669
  %v1714 = vpack.c.b16 %v1670, %v1670
  %v1756 = vsel %vm108, %v1543, 0
  %v1759 = vsel %vm415, %v1711, 0
  %v1762 = vsel %vm415, %v1712, 0
  %v1765 = vsel %vm415, %v1713, 0
  %v1768 = vsel %vm415, %v1714, 0
  %1770 = vmatprep.subr.bf16.mxu0 %v1700
  %1771 = vmatpush1.bf16.msra.mxu0 %v1699
  %1772 = vmatprep.subr.bf16.mxu0 %v1696
  %1773 = vmatpush1.bf16.msra.mxu0 %v1695
  %1774 = vmatprep.subr.bf16.mxu0 %v1692
  %1775 = vmatpush1.bf16.msra.mxu0 %v1691
  %1776 = vmatprep.subr.bf16.mxu0 %v1688
  %1777 = vmatpush1.bf16.msra.mxu0 %v1687
  %1778 = vmatprep.subr.bf16.mxu0 %v1684
  %1779 = vmatpush1.bf16.msra.mxu0 %v1683
  %1780 = vmatprep.subr.bf16.mxu0 %v1680
  %1781 = vmatpush1.bf16.msra.mxu0 %v1679
  %1782 = vmatprep.subr.bf16.mxu0 %v1676
  %1783 = vmatpush1.bf16.msra.mxu0 %v1675
  %1784 = vmatprep.subr.bf16.mxu0 %v1672
  %1785 = vmatpush1.bf16.msra.mxu0 %v1671
  %1786 = vmatprep.subr.bf16.mxu0 0
  %1787 = vmatpush2.bf16.msra.mxu0 0
  %1788 = vmatprep.subr.bf16.mxu0 0
  %1789 = vmatpush2.bf16.msra.mxu0 0
  %1790 = vmatprep.subr.bf16.mxu0 0
  %1791 = vmatpush2.bf16.msra.mxu0 0
  %1792 = vmatprep.subr.bf16.mxu0 0
  %1793 = vmatpush2.bf16.msra.mxu0 0
  %1794 = vmatprep.subr.bf16.mxu0 0
  %1795 = vmatpush2.bf16.msra.mxu0 0
  %1796 = vmatprep.subr.bf16.mxu0 %v1762
  %1797 = vmatpush2.bf16.msra.mxu0 %v1759
  %1798 = vmatprep.subr.bf16.mxu0 %v1708
  %1799 = vmatpush2.bf16.msra.mxu0 %v1707
  %1800 = vmatprep.subr.bf16.mxu0 %v1704
  %1801 = vmatpush2.bf16.msra.mxu0 %v1703
  %1802 = vmatprep.mubr.bf16.mxu0 %v1756
  %1803 = vmatmul.mubr.bf16.gmra.mxu0 %v1542
  %v1804 = vpop.f32.mrf.mxu0
  %v1805 = vadd.f32 0.0, %v1804
  %v1806 = vpop.f32.mrf.mxu0
  %v1807 = vadd.f32 0.0, %v1806
  %v1808 = vpop.f32.mrf.mxu0
  %v1809 = vpop.f32.mrf.mxu0
  %1810 = vdwg.mxu0
  %1811 = vmatprep.subr.bf16.mxu0 %v1702
  %1812 = vmatpush1.bf16.msra.mxu0 %v1701
  %1813 = vmatprep.subr.bf16.mxu0 %v1698
  %1814 = vmatpush1.bf16.msra.mxu0 %v1697
  %1815 = vmatprep.subr.bf16.mxu0 %v1694
  %1816 = vmatpush1.bf16.msra.mxu0 %v1693
  %1817 = vmatprep.subr.bf16.mxu0 %v1690
  %1818 = vmatpush1.bf16.msra.mxu0 %v1689
  %1819 = vmatprep.subr.bf16.mxu0 %v1686
  %1820 = vmatpush1.bf16.msra.mxu0 %v1685
  %1821 = vmatprep.subr.bf16.mxu0 %v1682
  %1822 = vmatpush1.bf16.msra.mxu0 %v1681
  %1823 = vmatprep.subr.bf16.mxu0 %v1678
  %1824 = vmatpush1.bf16.msra.mxu0 %v1677
  %1825 = vmatprep.subr.bf16.mxu0 %v1674
  %1826 = vmatpush1.bf16.msra.mxu0 %v1673
  %1827 = vmatprep.subr.bf16.mxu0 0
  %1828 = vmatpush2.bf16.msra.mxu0 0
  %1829 = vmatprep.subr.bf16.mxu0 0
  %1830 = vmatpush2.bf16.msra.mxu0 0
  %1831 = vmatprep.subr.bf16.mxu0 0
  %1832 = vmatpush2.bf16.msra.mxu0 0
  %1833 = vmatprep.subr.bf16.mxu0 0
  %1834 = vmatpush2.bf16.msra.mxu0 0
  %1835 = vmatprep.subr.bf16.mxu0 0
  %1836 = vmatpush2.bf16.msra.mxu0 0
  %1837 = vmatprep.subr.bf16.mxu0 %v1768
  %1838 = vmatpush2.bf16.msra.mxu0 %v1765
  %1839 = vmatprep.subr.bf16.mxu0 %v1710
  %1840 = vmatpush2.bf16.msra.mxu0 %v1709
  %1841 = vmatprep.subr.bf16.mxu0 %v1706
  %1842 = vmatpush2.bf16.msra.mxu0 %v1705
  %1843 = vmatprep.mubr.bf16.mxu0 %v1756
  %1844 = vmatmul.mubr.bf16.gmra.mxu0 %v1542
  %v1845 = vpop.f32.mrf.mxu0
  %v1846 = vadd.f32 0.0, %v1845
  %v1847 = vpop.f32.mrf.mxu0
  %v1848 = vadd.f32 0.0, %v1847
  %v1849 = vpop.f32.mrf.mxu0
  %v1850 = vpop.f32.mrf.mxu0
  %1851 = vdwg.mxu0
  %v1868 = vunpack.c.l.b16 %v1252
  %v1869 = vunpack.c.l.b16 %v1253
  %v1870 = vunpack.c.l.b16 %v1254
  %v1871 = vunpack.c.l.b16 %v1255
  %v1872 = vunpack.c.l.b16 %v1256
  %v1873 = vunpack.c.l.b16 %v1257
  %v1874 = vunpack.c.l.b16 %v1258
  %v1875 = vunpack.c.l.b16 %v1259
  %v1876 = vunpack.c.l.b16 %v1260
  %v1877 = vunpack.c.l.b16 %v1261
  %v1878 = vunpack.c.l.b16 %v1262
  %v1879 = vunpack.c.l.b16 %v1263
  %v1880 = vunpack.c.l.b16 %v1264
  %v1881 = vunpack.c.l.b16 %v1265
  %v1882 = vunpack.c.l.b16 %v1266
  %v1883 = vunpack.c.l.b16 %v1267
  %v1884 = vsel %vm283, %v1870, %v1868
  %v1885 = vsel %vm285, %v1872, %v1884
  %v1886 = vsel %vm287, %v1874, %v1885
  %v1887 = vsel %vm289, %v1876, %v1886
  %v1888 = vsel %vm291, %v1878, %v1887
  %v1889 = vsel %vm293, %v1880, %v1888
  %v1890 = vsel %vm295, %v1882, %v1889
  %v1891 = vsel %vm283, %v1871, %v1869
  %v1892 = vsel %vm285, %v1873, %v1891
  %v1893 = vsel %vm287, %v1875, %v1892
  %v1894 = vsel %vm289, %v1877, %v1893
  %v1895 = vsel %vm291, %v1879, %v1894
  %v1896 = vsel %vm293, %v1881, %v1895
  %v1897 = vsel %vm295, %v1883, %v1896
  %v1898 = vpack.c.b16 %v1890, %v1890
  %v1899 = vpack.c.b16 %v1897, %v1897
  %v1943 = vunpack.c.l.b16 %v1268
  %v1944 = vunpack.c.h.b16 %v1268
  %v1945 = vunpack.c.l.b16 %v1269
  %v1946 = vunpack.c.h.b16 %v1269
  %v1947 = vunpack.c.l.b16 %v1270
  %v1948 = vunpack.c.h.b16 %v1270
  %v1949 = vunpack.c.l.b16 %v1271
  %v1950 = vunpack.c.h.b16 %v1271
  %v1951 = vunpack.c.l.b16 %v1272
  %v1952 = vunpack.c.h.b16 %v1272
  %v1953 = vunpack.c.l.b16 %v1273
  %v1954 = vunpack.c.h.b16 %v1273
  %v1955 = vunpack.c.l.b16 %v1274
  %v1956 = vunpack.c.h.b16 %v1274
  %v1957 = vunpack.c.l.b16 %v1275
  %v1958 = vunpack.c.h.b16 %v1275
  %v1959 = vunpack.c.l.b16 %v1276
  %v1960 = vunpack.c.h.b16 %v1276
  %v1961 = vunpack.c.l.b16 %v1277
  %v1962 = vunpack.c.h.b16 %v1277
  %v1963 = vunpack.c.l.b16 %v1278
  %v1964 = vunpack.c.h.b16 %v1278
  %v1965 = vunpack.c.l.b16 %v1279
  %v1966 = vunpack.c.h.b16 %v1279
  %v1967 = vunpack.c.l.b16 %v1280
  %v1968 = vunpack.c.h.b16 %v1280
  %v1969 = vunpack.c.l.b16 %v1281
  %v1970 = vunpack.c.h.b16 %v1281
  %v1971 = vunpack.c.l.b16 %v1282
  %v1972 = vunpack.c.h.b16 %v1282
  %v1973 = vunpack.c.l.b16 %v1283
  %v1974 = vunpack.c.h.b16 %v1283
  %v1975 = vunpack.c.l.b16 %v1284
  %v1976 = vunpack.c.h.b16 %v1284
  %v1977 = vunpack.c.l.b16 %v1285
  %v1978 = vunpack.c.h.b16 %v1285
  %v1979 = vunpack.c.l.b16 %v1286
  %v1980 = vunpack.c.h.b16 %v1286
  %v1981 = vunpack.c.l.b16 %v1287
  %v1982 = vunpack.c.h.b16 %v1287
  %v1983 = vunpack.c.l.b16 %v1288
  %v1984 = vunpack.c.h.b16 %v1288
  %v1985 = vunpack.c.l.b16 %v1289
  %v1986 = vunpack.c.h.b16 %v1289
  %v1987 = vunpack.c.l.b16 %v1290
  %v1988 = vunpack.c.h.b16 %v1290
  %v1989 = vunpack.c.l.b16 %v1291
  %v1990 = vunpack.c.h.b16 %v1291
  %v1991 = vunpack.c.l.b16 %v1292
  %v1992 = vunpack.c.h.b16 %v1292
  %v1993 = vunpack.c.l.b16 %v1293
  %v1994 = vunpack.c.h.b16 %v1293
  %v1995 = vunpack.c.l.b16 %v1294
  %v1996 = vunpack.c.h.b16 %v1294
  %v1997 = vunpack.c.l.b16 %v1295
  %v1998 = vunpack.c.h.b16 %v1295
  %v1999 = vunpack.c.l.b16 %v1296
  %v2000 = vunpack.c.h.b16 %v1296
  %v2001 = vunpack.c.l.b16 %v1297
  %v2002 = vunpack.c.h.b16 %v1297
  %v2003 = vunpack.c.l.b16 %v1298
  %v2004 = vunpack.c.h.b16 %v1298
  %v2005 = vunpack.c.l.b16 %v1299
  %v2006 = vunpack.c.h.b16 %v1299
  %v2007 = vunpack.c.l.b16 %v1300
  %v2008 = vunpack.c.h.b16 %v1300
  %v2009 = vunpack.c.l.b16 %v1301
  %v2010 = vunpack.c.h.b16 %v1301
  %v2011 = vunpack.c.l.b16 %v1302
  %v2012 = vunpack.c.h.b16 %v1302
  %v2013 = vunpack.c.l.b16 %v1303
  %v2014 = vunpack.c.h.b16 %v1303
  %v2015 = vunpack.c.l.b16 %v1304
  %v2016 = vunpack.c.h.b16 %v1304
  %v2017 = vunpack.c.l.b16 %v1305
  %v2018 = vunpack.c.h.b16 %v1305
  %v2019 = vunpack.c.l.b16 %v1306
  %v2020 = vunpack.c.h.b16 %v1306
  %v2021 = vunpack.c.l.b16 %v1307
  %v2022 = vunpack.c.h.b16 %v1307
  %v2023 = vunpack.c.l.b16 %v1308
  %v2024 = vunpack.c.h.b16 %v1308
  %v2025 = vunpack.c.l.b16 %v1309
  %v2026 = vunpack.c.h.b16 %v1309
  %v2027 = vpack.c.b16 %v1947, %v1943
  %v2028 = vpack.c.b16 %v1948, %v1944
  %v2029 = vpack.c.b16 %v1949, %v1945
  %v2030 = vpack.c.b16 %v1950, %v1946
  %v2031 = vpack.c.b16 %v1955, %v1951
  %v2032 = vpack.c.b16 %v1956, %v1952
  %v2033 = vpack.c.b16 %v1957, %v1953
  %v2034 = vpack.c.b16 %v1958, %v1954
  %v2035 = vpack.c.b16 %v1963, %v1959
  %v2036 = vpack.c.b16 %v1964, %v1960
  %v2037 = vpack.c.b16 %v1965, %v1961
  %v2038 = vpack.c.b16 %v1966, %v1962
  %v2039 = vpack.c.b16 %v1971, %v1967
  %v2040 = vpack.c.b16 %v1972, %v1968
  %v2041 = vpack.c.b16 %v1973, %v1969
  %v2042 = vpack.c.b16 %v1974, %v1970
  %v2043 = vpack.c.b16 %v1979, %v1975
  %v2044 = vpack.c.b16 %v1980, %v1976
  %v2045 = vpack.c.b16 %v1981, %v1977
  %v2046 = vpack.c.b16 %v1982, %v1978
  %v2047 = vpack.c.b16 %v1987, %v1983
  %v2048 = vpack.c.b16 %v1988, %v1984
  %v2049 = vpack.c.b16 %v1989, %v1985
  %v2050 = vpack.c.b16 %v1990, %v1986
  %v2051 = vpack.c.b16 %v1995, %v1991
  %v2052 = vpack.c.b16 %v1996, %v1992
  %v2053 = vpack.c.b16 %v1997, %v1993
  %v2054 = vpack.c.b16 %v1998, %v1994
  %v2055 = vpack.c.b16 %v2003, %v1999
  %v2056 = vpack.c.b16 %v2004, %v2000
  %v2057 = vpack.c.b16 %v2005, %v2001
  %v2058 = vpack.c.b16 %v2006, %v2002
  %v2059 = vpack.c.b16 %v2011, %v2007
  %v2060 = vpack.c.b16 %v2012, %v2008
  %v2061 = vpack.c.b16 %v2013, %v2009
  %v2062 = vpack.c.b16 %v2014, %v2010
  %v2063 = vpack.c.b16 %v2019, %v2015
  %v2064 = vpack.c.b16 %v2020, %v2016
  %v2065 = vpack.c.b16 %v2021, %v2017
  %v2066 = vpack.c.b16 %v2022, %v2018
  %v2067 = vpack.c.b16 %v2023, %v2023
  %v2068 = vpack.c.b16 %v2024, %v2024
  %v2069 = vpack.c.b16 %v2025, %v2025
  %v2070 = vpack.c.b16 %v2026, %v2026
  %v2112 = vsel %vm108, %v1899, 0
  %v2115 = vsel %vm415, %v2067, 0
  %v2118 = vsel %vm415, %v2068, 0
  %v2121 = vsel %vm415, %v2069, 0
  %v2124 = vsel %vm415, %v2070, 0
  %2126 = vmatprep.subr.bf16.mxu0 %v2056
  %2127 = vmatpush1.bf16.msra.mxu0 %v2055
  %2128 = vmatprep.subr.bf16.mxu0 %v2052
  %2129 = vmatpush1.bf16.msra.mxu0 %v2051
  %2130 = vmatprep.subr.bf16.mxu0 %v2048
  %2131 = vmatpush1.bf16.msra.mxu0 %v2047
  %2132 = vmatprep.subr.bf16.mxu0 %v2044
  %2133 = vmatpush1.bf16.msra.mxu0 %v2043
  %2134 = vmatprep.subr.bf16.mxu0 %v2040
  %2135 = vmatpush1.bf16.msra.mxu0 %v2039
  %2136 = vmatprep.subr.bf16.mxu0 %v2036
  %2137 = vmatpush1.bf16.msra.mxu0 %v2035
  %2138 = vmatprep.subr.bf16.mxu0 %v2032
  %2139 = vmatpush1.bf16.msra.mxu0 %v2031
  %2140 = vmatprep.subr.bf16.mxu0 %v2028
  %2141 = vmatpush1.bf16.msra.mxu0 %v2027
  %2142 = vmatprep.subr.bf16.mxu0 0
  %2143 = vmatpush2.bf16.msra.mxu0 0
  %2144 = vmatprep.subr.bf16.mxu0 0
  %2145 = vmatpush2.bf16.msra.mxu0 0
  %2146 = vmatprep.subr.bf16.mxu0 0
  %2147 = vmatpush2.bf16.msra.mxu0 0
  %2148 = vmatprep.subr.bf16.mxu0 0
  %2149 = vmatpush2.bf16.msra.mxu0 0
  %2150 = vmatprep.subr.bf16.mxu0 0
  %2151 = vmatpush2.bf16.msra.mxu0 0
  %2152 = vmatprep.subr.bf16.mxu0 %v2118
  %2153 = vmatpush2.bf16.msra.mxu0 %v2115
  %2154 = vmatprep.subr.bf16.mxu0 %v2064
  %2155 = vmatpush2.bf16.msra.mxu0 %v2063
  %2156 = vmatprep.subr.bf16.mxu0 %v2060
  %2157 = vmatpush2.bf16.msra.mxu0 %v2059
  %2158 = vmatprep.mubr.bf16.mxu0 %v2112
  %2159 = vmatmul.mubr.bf16.gmra.mxu0 %v1898
  %v2160 = vpop.f32.mrf.mxu0
  %v2161 = vadd.f32 %v1805, %v2160
  %v2162 = vpop.f32.mrf.mxu0
  %v2163 = vadd.f32 %v1807, %v2162
  %v2164 = vpop.f32.mrf.mxu0
  %v2165 = vpop.f32.mrf.mxu0
  %2166 = vdwg.mxu0
  %2167 = vmatprep.subr.bf16.mxu0 %v2058
  %2168 = vmatpush1.bf16.msra.mxu0 %v2057
  %2169 = vmatprep.subr.bf16.mxu0 %v2054
  %2170 = vmatpush1.bf16.msra.mxu0 %v2053
  %2171 = vmatprep.subr.bf16.mxu0 %v2050
  %2172 = vmatpush1.bf16.msra.mxu0 %v2049
  %2173 = vmatprep.subr.bf16.mxu0 %v2046
  %2174 = vmatpush1.bf16.msra.mxu0 %v2045
  %2175 = vmatprep.subr.bf16.mxu0 %v2042
  %2176 = vmatpush1.bf16.msra.mxu0 %v2041
  %2177 = vmatprep.subr.bf16.mxu0 %v2038
  %2178 = vmatpush1.bf16.msra.mxu0 %v2037
  %2179 = vmatprep.subr.bf16.mxu0 %v2034
  %2180 = vmatpush1.bf16.msra.mxu0 %v2033
  %2181 = vmatprep.subr.bf16.mxu0 %v2030
  %2182 = vmatpush1.bf16.msra.mxu0 %v2029
  %2183 = vmatprep.subr.bf16.mxu0 0
  %2184 = vmatpush2.bf16.msra.mxu0 0
  %2185 = vmatprep.subr.bf16.mxu0 0
  %2186 = vmatpush2.bf16.msra.mxu0 0
  %2187 = vmatprep.subr.bf16.mxu0 0
  %2188 = vmatpush2.bf16.msra.mxu0 0
  %2189 = vmatprep.subr.bf16.mxu0 0
  %2190 = vmatpush2.bf16.msra.mxu0 0
  %2191 = vmatprep.subr.bf16.mxu0 0
  %2192 = vmatpush2.bf16.msra.mxu0 0
  %2193 = vmatprep.subr.bf16.mxu0 %v2124
  %2194 = vmatpush2.bf16.msra.mxu0 %v2121
  %2195 = vmatprep.subr.bf16.mxu0 %v2066
  %2196 = vmatpush2.bf16.msra.mxu0 %v2065
  %2197 = vmatprep.subr.bf16.mxu0 %v2062
  %2198 = vmatpush2.bf16.msra.mxu0 %v2061
  %2199 = vmatprep.mubr.bf16.mxu0 %v2112
  %2200 = vmatmul.mubr.bf16.gmra.mxu0 %v1898
  %v2201 = vpop.f32.mrf.mxu0
  %v2202 = vadd.f32 %v1846, %v2201
  %v2203 = vpop.f32.mrf.mxu0
  %v2204 = vadd.f32 %v1848, %v2203
  %v2205 = vpop.f32.mrf.mxu0
  %v2206 = vpop.f32.mrf.mxu0
  %2207 = vdwg.mxu0
  %s2208 = scalar_lea.vmem %s5, 16
  %v2209 = vld [vmem:[%s2208] sm:$0xff]
  %2211 = vset.pattern.permute.xlu0 0
  %2212 = vperm.xlu0 %2211, %v2209
  %v2213 = vpop.permute.xlu0 %2212
  %v2215 = vmul.f32 %v1110, %v2213
  %v2216 = vmul.f32 %v1111, %v2213
  %v2217 = vmul.f32 %v1112, %v2213
  %v2218 = vmul.f32 %v1113, %v2213
  %v2219 = vmul.f32 %v1114, %v2213
  %v2220 = vmul.f32 %v1115, %v2213
  %v2221 = vmul.f32 %v1116, %v2213
  %v2222 = vmul.f32 %v1117, %v2213
  %v2223 = vmul.f32 %v1118, %v2213
  %v2224 = vmul.f32 %v1119, %v2213
  %v2225 = vmul.f32 %v1120, %v2213
  %v2226 = vmul.f32 %v1121, %v2213
  %v2227 = vmul.f32 %v1122, %v2213
  %v2228 = vmul.f32 %v1123, %v2213
  %v2229 = vmul.f32 %v1124, %v2213
  %v2230 = vmul.f32 %v1125, %v2213
  %v2231 = vrot.slane %v2215, 4
  %v2232 = vadd.f32 %v2215, %v2231
  %v2233 = vrot.slane %v2232, 2
  %v2234 = vadd.f32 %v2232, %v2233
  %v2235 = vrot.slane %v2234, 1
  %v2236 = vadd.f32 %v2234, %v2235
  %v2237 = vsel %vm108, %v2216, 0.0
  %v2238 = vrot.slane %v2237, 4
  %v2239 = vadd.f32 %v2237, %v2238
  %v2240 = vrot.slane %v2239, 2
  %v2241 = vadd.f32 %v2239, %v2240
  %v2242 = vrot.slane %v2241, 1
  %v2243 = vadd.f32 %v2241, %v2242
  %v2244 = vrot.slane %v2217, 4
  %v2245 = vadd.f32 %v2217, %v2244
  %v2246 = vrot.slane %v2245, 2
  %v2247 = vadd.f32 %v2245, %v2246
  %v2248 = vrot.slane %v2247, 1
  %v2249 = vadd.f32 %v2247, %v2248
  %v2250 = vsel %vm108, %v2218, 0.0
  %v2251 = vrot.slane %v2250, 4
  %v2252 = vadd.f32 %v2250, %v2251
  %v2253 = vrot.slane %v2252, 2
  %v2254 = vadd.f32 %v2252, %v2253
  %v2255 = vrot.slane %v2254, 1
  %v2256 = vadd.f32 %v2254, %v2255
  %v2257 = vrot.slane %v2219, 4
  %v2258 = vadd.f32 %v2219, %v2257
  %v2259 = vrot.slane %v2258, 2
  %v2260 = vadd.f32 %v2258, %v2259
  %v2261 = vrot.slane %v2260, 1
  %v2262 = vadd.f32 %v2260, %v2261
  %v2263 = vsel %vm108, %v2220, 0.0
  %v2264 = vrot.slane %v2263, 4
  %v2265 = vadd.f32 %v2263, %v2264
  %v2266 = vrot.slane %v2265, 2
  %v2267 = vadd.f32 %v2265, %v2266
  %v2268 = vrot.slane %v2267, 1
  %v2269 = vadd.f32 %v2267, %v2268
  %v2270 = vrot.slane %v2221, 4
  %v2271 = vadd.f32 %v2221, %v2270
  %v2272 = vrot.slane %v2271, 2
  %v2273 = vadd.f32 %v2271, %v2272
  %v2274 = vrot.slane %v2273, 1
  %v2275 = vadd.f32 %v2273, %v2274
  %v2276 = vsel %vm108, %v2222, 0.0
  %v2277 = vrot.slane %v2276, 4
  %v2278 = vadd.f32 %v2276, %v2277
  %v2279 = vrot.slane %v2278, 2
  %v2280 = vadd.f32 %v2278, %v2279
  %v2281 = vrot.slane %v2280, 1
  %v2282 = vadd.f32 %v2280, %v2281
  %v2283 = vrot.slane %v2223, 4
  %v2284 = vadd.f32 %v2223, %v2283
  %v2285 = vrot.slane %v2284, 2
  %v2286 = vadd.f32 %v2284, %v2285
  %v2287 = vrot.slane %v2286, 1
  %v2288 = vadd.f32 %v2286, %v2287
  %v2289 = vsel %vm108, %v2224, 0.0
  %v2290 = vrot.slane %v2289, 4
  %v2291 = vadd.f32 %v2289, %v2290
  %v2292 = vrot.slane %v2291, 2
  %v2293 = vadd.f32 %v2291, %v2292
  %v2294 = vrot.slane %v2293, 1
  %v2295 = vadd.f32 %v2293, %v2294
  %v2296 = vrot.slane %v2225, 4
  %v2297 = vadd.f32 %v2225, %v2296
  %v2298 = vrot.slane %v2297, 2
  %v2299 = vadd.f32 %v2297, %v2298
  %v2300 = vrot.slane %v2299, 1
  %v2301 = vadd.f32 %v2299, %v2300
  %v2302 = vsel %vm108, %v2226, 0.0
  %v2303 = vrot.slane %v2302, 4
  %v2304 = vadd.f32 %v2302, %v2303
  %v2305 = vrot.slane %v2304, 2
  %v2306 = vadd.f32 %v2304, %v2305
  %v2307 = vrot.slane %v2306, 1
  %v2308 = vadd.f32 %v2306, %v2307
  %v2309 = vrot.slane %v2227, 4
  %v2310 = vadd.f32 %v2227, %v2309
  %v2311 = vrot.slane %v2310, 2
  %v2312 = vadd.f32 %v2310, %v2311
  %v2313 = vrot.slane %v2312, 1
  %v2314 = vadd.f32 %v2312, %v2313
  %v2315 = vsel %vm108, %v2228, 0.0
  %v2316 = vrot.slane %v2315, 4
  %v2317 = vadd.f32 %v2315, %v2316
  %v2318 = vrot.slane %v2317, 2
  %v2319 = vadd.f32 %v2317, %v2318
  %v2320 = vrot.slane %v2319, 1
  %v2321 = vadd.f32 %v2319, %v2320
  %v2322 = vrot.slane %v2229, 4
  %v2323 = vadd.f32 %v2229, %v2322
  %v2324 = vrot.slane %v2323, 2
  %v2325 = vadd.f32 %v2323, %v2324
  %v2326 = vrot.slane %v2325, 1
  %v2327 = vadd.f32 %v2325, %v2326
  %v2328 = vsel %vm108, %v2230, 0.0
  %v2329 = vrot.slane %v2328, 4
  %v2330 = vadd.f32 %v2328, %v2329
  %v2331 = vrot.slane %v2330, 2
  %v2332 = vadd.f32 %v2330, %v2331
  %v2333 = vrot.slane %v2332, 1
  %v2334 = vadd.f32 %v2332, %v2333
  %v2335 = vpack.c.bf16 %v2236, %v2236
  %v2336 = vpack.c.bf16 %v2243, %v2243
  %v2337 = vpack.c.bf16 %v2249, %v2249
  %v2338 = vpack.c.bf16 %v2256, %v2256
  %v2339 = vpack.c.bf16 %v2262, %v2262
  %v2340 = vpack.c.bf16 %v2269, %v2269
  %v2341 = vpack.c.bf16 %v2275, %v2275
  %v2342 = vpack.c.bf16 %v2282, %v2282
  %v2343 = vpack.c.bf16 %v2288, %v2288
  %v2344 = vpack.c.bf16 %v2295, %v2295
  %v2345 = vpack.c.bf16 %v2301, %v2301
  %v2346 = vpack.c.bf16 %v2308, %v2308
  %v2347 = vpack.c.bf16 %v2314, %v2314
  %v2348 = vpack.c.bf16 %v2321, %v2321
  %v2349 = vpack.c.bf16 %v2327, %v2327
  %v2350 = vpack.c.bf16 %v2334, %v2334
  %s2351 = scalar_lea.vmem %s6, 672
  %v2352 = vld [vmem:[%s2351] sm:$0xff]
  %v2353 = vld [vmem:[%s2351 + $0x8] sm:$0xff]
  %v2354 = vld [vmem:[%s2351 + $0x10] sm:$0xff]
  %v2355 = vld [vmem:[%s2351 + $0x18] sm:$0xff]
  %v2356 = vld [vmem:[%s2351 + $0x20] sm:$0xff]
  %v2357 = vld [vmem:[%s2351 + $0x28] sm:$0xff]
  %v2358 = vld [vmem:[%s2351 + $0x30] sm:$0xff]
  %v2359 = vld [vmem:[%s2351 + $0x38] sm:$0xff]
  %v2360 = vld [vmem:[%s2351 + $0x40] sm:$0xff]
  %v2361 = vld [vmem:[%s2351 + $0x48] sm:$0xff]
  %v2362 = vld [vmem:[%s2351 + $0x50] sm:$0xff]
  %v2363 = vld [vmem:[%s2351 + $0x58] sm:$0xff]
  %v2364 = vld [vmem:[%s2351 + $0x60] sm:$0xff]
  %v2365 = vld [vmem:[%s2351 + $0x68] sm:$0xff]
  %v2366 = vld [vmem:[%s2351 + $0x70] sm:$0xff]
  %v2367 = vld [vmem:[%s2351 + $0x78] sm:$0xff]
  %v2368 = vld [vmem:[%s2351 + $0x80] sm:$0xff]
  %v2369 = vld [vmem:[%s2351 + $0x88] sm:$0xff]
  %v2370 = vld [vmem:[%s2351 + $0x90] sm:$0xff]
  %v2371 = vld [vmem:[%s2351 + $0x98] sm:$0xff]
  %v2372 = vld [vmem:[%s2351 + $0xa0] sm:$0xff]
  %v2373 = vld [vmem:[%s2351 + $0xa8] sm:$0xff]
  %v2374 = vld [vmem:[%s2351 + $0xb0] sm:$0xff]
  %v2375 = vld [vmem:[%s2351 + $0xb8] sm:$0xff]
  %v2376 = vld [vmem:[%s2351 + $0xc0] sm:$0xff]
  %v2377 = vld [vmem:[%s2351 + $0xc8] sm:$0xff]
  %v2378 = vld [vmem:[%s2351 + $0xd0] sm:$0xff]
  %v2379 = vld [vmem:[%s2351 + $0xd8] sm:$0xff]
  %v2380 = vld [vmem:[%s2351 + $0xe0] sm:$0xff]
  %v2381 = vld [vmem:[%s2351 + $0xe8] sm:$0xff]
  %v2382 = vld [vmem:[%s2351 + $0xf0] sm:$0xff]
  %v2383 = vld [vmem:[%s2351 + $0xf8] sm:$0xff]
  %v2384 = vld [vmem:[%s2351 + $0x100] sm:$0xff]
  %v2385 = vld [vmem:[%s2351 + $0x108] sm:$0xff]
  %v2386 = vld [vmem:[%s2351 + $0x110] sm:$0xff]
  %v2387 = vld [vmem:[%s2351 + $0x118] sm:$0xff]
  %v2388 = vld [vmem:[%s2351 + $0x120] sm:$0xff]
  %v2389 = vld [vmem:[%s2351 + $0x128] sm:$0xff]
  %v2390 = vld [vmem:[%s2351 + $0x130] sm:$0xff]
  %v2391 = vld [vmem:[%s2351 + $0x138] sm:$0xff]
  %v2392 = vld [vmem:[%s2351 + $0x140] sm:$0xff]
  %v2393 = vld [vmem:[%s2351 + $0x148] sm:$0xff]
  %v2410 = vunpack.c.l.b16 %v2335
  %v2411 = vunpack.c.l.b16 %v2336
  %v2412 = vunpack.c.l.b16 %v2337
  %v2413 = vunpack.c.l.b16 %v2338
  %v2414 = vunpack.c.l.b16 %v2339
  %v2415 = vunpack.c.l.b16 %v2340
  %v2416 = vunpack.c.l.b16 %v2341
  %v2417 = vunpack.c.l.b16 %v2342
  %v2418 = vunpack.c.l.b16 %v2343
  %v2419 = vunpack.c.l.b16 %v2344
  %v2420 = vunpack.c.l.b16 %v2345
  %v2421 = vunpack.c.l.b16 %v2346
  %v2422 = vunpack.c.l.b16 %v2347
  %v2423 = vunpack.c.l.b16 %v2348
  %v2424 = vunpack.c.l.b16 %v2349
  %v2425 = vunpack.c.l.b16 %v2350
  %v2426 = vsel %vm283, %v2412, %v2410
  %v2427 = vsel %vm285, %v2414, %v2426
  %v2428 = vsel %vm287, %v2416, %v2427
  %v2429 = vsel %vm289, %v2418, %v2428
  %v2430 = vsel %vm291, %v2420, %v2429
  %v2431 = vsel %vm293, %v2422, %v2430
  %v2432 = vsel %vm295, %v2424, %v2431
  %v2433 = vsel %vm283, %v2413, %v2411
  %v2434 = vsel %vm285, %v2415, %v2433
  %v2435 = vsel %vm287, %v2417, %v2434
  %v2436 = vsel %vm289, %v2419, %v2435
  %v2437 = vsel %vm291, %v2421, %v2436
  %v2438 = vsel %vm293, %v2423, %v2437
  %v2439 = vsel %vm295, %v2425, %v2438
  %v2440 = vpack.c.b16 %v2432, %v2432
  %v2441 = vpack.c.b16 %v2439, %v2439
  %v2485 = vunpack.c.l.b16 %v2352
  %v2486 = vunpack.c.h.b16 %v2352
  %v2487 = vunpack.c.l.b16 %v2353
  %v2488 = vunpack.c.h.b16 %v2353
  %v2489 = vunpack.c.l.b16 %v2354
  %v2490 = vunpack.c.h.b16 %v2354
  %v2491 = vunpack.c.l.b16 %v2355
  %v2492 = vunpack.c.h.b16 %v2355
  %v2493 = vunpack.c.l.b16 %v2356
  %v2494 = vunpack.c.h.b16 %v2356
  %v2495 = vunpack.c.l.b16 %v2357
  %v2496 = vunpack.c.h.b16 %v2357
  %v2497 = vunpack.c.l.b16 %v2358
  %v2498 = vunpack.c.h.b16 %v2358
  %v2499 = vunpack.c.l.b16 %v2359
  %v2500 = vunpack.c.h.b16 %v2359
  %v2501 = vunpack.c.l.b16 %v2360
  %v2502 = vunpack.c.h.b16 %v2360
  %v2503 = vunpack.c.l.b16 %v2361
  %v2504 = vunpack.c.h.b16 %v2361
  %v2505 = vunpack.c.l.b16 %v2362
  %v2506 = vunpack.c.h.b16 %v2362
  %v2507 = vunpack.c.l.b16 %v2363
  %v2508 = vunpack.c.h.b16 %v2363
  %v2509 = vunpack.c.l.b16 %v2364
  %v2510 = vunpack.c.h.b16 %v2364
  %v2511 = vunpack.c.l.b16 %v2365
  %v2512 = vunpack.c.h.b16 %v2365
  %v2513 = vunpack.c.l.b16 %v2366
  %v2514 = vunpack.c.h.b16 %v2366
  %v2515 = vunpack.c.l.b16 %v2367
  %v2516 = vunpack.c.h.b16 %v2367
  %v2517 = vunpack.c.l.b16 %v2368
  %v2518 = vunpack.c.h.b16 %v2368
  %v2519 = vunpack.c.l.b16 %v2369
  %v2520 = vunpack.c.h.b16 %v2369
  %v2521 = vunpack.c.l.b16 %v2370
  %v2522 = vunpack.c.h.b16 %v2370
  %v2523 = vunpack.c.l.b16 %v2371
  %v2524 = vunpack.c.h.b16 %v2371
  %v2525 = vunpack.c.l.b16 %v2372
  %v2526 = vunpack.c.h.b16 %v2372
  %v2527 = vunpack.c.l.b16 %v2373
  %v2528 = vunpack.c.h.b16 %v2373
  %v2529 = vunpack.c.l.b16 %v2374
  %v2530 = vunpack.c.h.b16 %v2374
  %v2531 = vunpack.c.l.b16 %v2375
  %v2532 = vunpack.c.h.b16 %v2375
  %v2533 = vunpack.c.l.b16 %v2376
  %v2534 = vunpack.c.h.b16 %v2376
  %v2535 = vunpack.c.l.b16 %v2377
  %v2536 = vunpack.c.h.b16 %v2377
  %v2537 = vunpack.c.l.b16 %v2378
  %v2538 = vunpack.c.h.b16 %v2378
  %v2539 = vunpack.c.l.b16 %v2379
  %v2540 = vunpack.c.h.b16 %v2379
  %v2541 = vunpack.c.l.b16 %v2380
  %v2542 = vunpack.c.h.b16 %v2380
  %v2543 = vunpack.c.l.b16 %v2381
  %v2544 = vunpack.c.h.b16 %v2381
  %v2545 = vunpack.c.l.b16 %v2382
  %v2546 = vunpack.c.h.b16 %v2382
  %v2547 = vunpack.c.l.b16 %v2383
  %v2548 = vunpack.c.h.b16 %v2383
  %v2549 = vunpack.c.l.b16 %v2384
  %v2550 = vunpack.c.h.b16 %v2384
  %v2551 = vunpack.c.l.b16 %v2385
  %v2552 = vunpack.c.h.b16 %v2385
  %v2553 = vunpack.c.l.b16 %v2386
  %v2554 = vunpack.c.h.b16 %v2386
  %v2555 = vunpack.c.l.b16 %v2387
  %v2556 = vunpack.c.h.b16 %v2387
  %v2557 = vunpack.c.l.b16 %v2388
  %v2558 = vunpack.c.h.b16 %v2388
  %v2559 = vunpack.c.l.b16 %v2389
  %v2560 = vunpack.c.h.b16 %v2389
  %v2561 = vunpack.c.l.b16 %v2390
  %v2562 = vunpack.c.h.b16 %v2390
  %v2563 = vunpack.c.l.b16 %v2391
  %v2564 = vunpack.c.h.b16 %v2391
  %v2565 = vunpack.c.l.b16 %v2392
  %v2566 = vunpack.c.h.b16 %v2392
  %v2567 = vunpack.c.l.b16 %v2393
  %v2568 = vunpack.c.h.b16 %v2393
  %v2569 = vpack.c.b16 %v2489, %v2485
  %v2570 = vpack.c.b16 %v2490, %v2486
  %v2571 = vpack.c.b16 %v2491, %v2487
  %v2572 = vpack.c.b16 %v2492, %v2488
  %v2573 = vpack.c.b16 %v2497, %v2493
  %v2574 = vpack.c.b16 %v2498, %v2494
  %v2575 = vpack.c.b16 %v2499, %v2495
  %v2576 = vpack.c.b16 %v2500, %v2496
  %v2577 = vpack.c.b16 %v2505, %v2501
  %v2578 = vpack.c.b16 %v2506, %v2502
  %v2579 = vpack.c.b16 %v2507, %v2503
  %v2580 = vpack.c.b16 %v2508, %v2504
  %v2581 = vpack.c.b16 %v2513, %v2509
  %v2582 = vpack.c.b16 %v2514, %v2510
  %v2583 = vpack.c.b16 %v2515, %v2511
  %v2584 = vpack.c.b16 %v2516, %v2512
  %v2585 = vpack.c.b16 %v2521, %v2517
  %v2586 = vpack.c.b16 %v2522, %v2518
  %v2587 = vpack.c.b16 %v2523, %v2519
  %v2588 = vpack.c.b16 %v2524, %v2520
  %v2589 = vpack.c.b16 %v2529, %v2525
  %v2590 = vpack.c.b16 %v2530, %v2526
  %v2591 = vpack.c.b16 %v2531, %v2527
  %v2592 = vpack.c.b16 %v2532, %v2528
  %v2593 = vpack.c.b16 %v2537, %v2533
  %v2594 = vpack.c.b16 %v2538, %v2534
  %v2595 = vpack.c.b16 %v2539, %v2535
  %v2596 = vpack.c.b16 %v2540, %v2536
  %v2597 = vpack.c.b16 %v2545, %v2541
  %v2598 = vpack.c.b16 %v2546, %v2542
  %v2599 = vpack.c.b16 %v2547, %v2543
  %v2600 = vpack.c.b16 %v2548, %v2544
  %v2601 = vpack.c.b16 %v2553, %v2549
  %v2602 = vpack.c.b16 %v2554, %v2550
  %v2603 = vpack.c.b16 %v2555, %v2551
  %v2604 = vpack.c.b16 %v2556, %v2552
  %v2605 = vpack.c.b16 %v2561, %v2557
  %v2606 = vpack.c.b16 %v2562, %v2558
  %v2607 = vpack.c.b16 %v2563, %v2559
  %v2608 = vpack.c.b16 %v2564, %v2560
  %v2609 = vpack.c.b16 %v2565, %v2565
  %v2610 = vpack.c.b16 %v2566, %v2566
  %v2611 = vpack.c.b16 %v2567, %v2567
  %v2612 = vpack.c.b16 %v2568, %v2568
  %v2654 = vsel %vm108, %v2441, 0
  %v2657 = vsel %vm415, %v2609, 0
  %v2660 = vsel %vm415, %v2610, 0
  %v2663 = vsel %vm415, %v2611, 0
  %v2666 = vsel %vm415, %v2612, 0
  %2668 = vmatprep.subr.bf16.mxu0 %v2598
  %2669 = vmatpush1.bf16.msra.mxu0 %v2597
  %2670 = vmatprep.subr.bf16.mxu0 %v2594
  %2671 = vmatpush1.bf16.msra.mxu0 %v2593
  %2672 = vmatprep.subr.bf16.mxu0 %v2590
  %2673 = vmatpush1.bf16.msra.mxu0 %v2589
  %2674 = vmatprep.subr.bf16.mxu0 %v2586
  %2675 = vmatpush1.bf16.msra.mxu0 %v2585
  %2676 = vmatprep.subr.bf16.mxu0 %v2582
  %2677 = vmatpush1.bf16.msra.mxu0 %v2581
  %2678 = vmatprep.subr.bf16.mxu0 %v2578
  %2679 = vmatpush1.bf16.msra.mxu0 %v2577
  %2680 = vmatprep.subr.bf16.mxu0 %v2574
  %2681 = vmatpush1.bf16.msra.mxu0 %v2573
  %2682 = vmatprep.subr.bf16.mxu0 %v2570
  %2683 = vmatpush1.bf16.msra.mxu0 %v2569
  %2684 = vmatprep.subr.bf16.mxu0 0
  %2685 = vmatpush2.bf16.msra.mxu0 0
  %2686 = vmatprep.subr.bf16.mxu0 0
  %2687 = vmatpush2.bf16.msra.mxu0 0
  %2688 = vmatprep.subr.bf16.mxu0 0
  %2689 = vmatpush2.bf16.msra.mxu0 0
  %2690 = vmatprep.subr.bf16.mxu0 0
  %2691 = vmatpush2.bf16.msra.mxu0 0
  %2692 = vmatprep.subr.bf16.mxu0 0
  %2693 = vmatpush2.bf16.msra.mxu0 0
  %2694 = vmatprep.subr.bf16.mxu0 %v2660
  %2695 = vmatpush2.bf16.msra.mxu0 %v2657
  %2696 = vmatprep.subr.bf16.mxu0 %v2606
  %2697 = vmatpush2.bf16.msra.mxu0 %v2605
  %2698 = vmatprep.subr.bf16.mxu0 %v2602
  %2699 = vmatpush2.bf16.msra.mxu0 %v2601
  %2700 = vmatprep.mubr.bf16.mxu0 %v2654
  %2701 = vmatmul.mubr.bf16.gmra.mxu0 %v2440
  %v2702 = vpop.f32.mrf.mxu0
  %v2703 = vadd.f32 0.0, %v2702
  %v2704 = vpop.f32.mrf.mxu0
  %v2705 = vadd.f32 0.0, %v2704
  %v2706 = vpop.f32.mrf.mxu0
  %v2707 = vpop.f32.mrf.mxu0
  %2708 = vdwg.mxu0
  %2709 = vmatprep.subr.bf16.mxu0 %v2600
  %2710 = vmatpush1.bf16.msra.mxu0 %v2599
  %2711 = vmatprep.subr.bf16.mxu0 %v2596
  %2712 = vmatpush1.bf16.msra.mxu0 %v2595
  %2713 = vmatprep.subr.bf16.mxu0 %v2592
  %2714 = vmatpush1.bf16.msra.mxu0 %v2591
  %2715 = vmatprep.subr.bf16.mxu0 %v2588
  %2716 = vmatpush1.bf16.msra.mxu0 %v2587
  %2717 = vmatprep.subr.bf16.mxu0 %v2584
  %2718 = vmatpush1.bf16.msra.mxu0 %v2583
  %2719 = vmatprep.subr.bf16.mxu0 %v2580
  %2720 = vmatpush1.bf16.msra.mxu0 %v2579
  %2721 = vmatprep.subr.bf16.mxu0 %v2576
  %2722 = vmatpush1.bf16.msra.mxu0 %v2575
  %2723 = vmatprep.subr.bf16.mxu0 %v2572
  %2724 = vmatpush1.bf16.msra.mxu0 %v2571
  %2725 = vmatprep.subr.bf16.mxu0 0
  %2726 = vmatpush2.bf16.msra.mxu0 0
  %2727 = vmatprep.subr.bf16.mxu0 0
  %2728 = vmatpush2.bf16.msra.mxu0 0
  %2729 = vmatprep.subr.bf16.mxu0 0
  %2730 = vmatpush2.bf16.msra.mxu0 0
  %2731 = vmatprep.subr.bf16.mxu0 0
  %2732 = vmatpush2.bf16.msra.mxu0 0
  %2733 = vmatprep.subr.bf16.mxu0 0
  %2734 = vmatpush2.bf16.msra.mxu0 0
  %2735 = vmatprep.subr.bf16.mxu0 %v2666
  %2736 = vmatpush2.bf16.msra.mxu0 %v2663
  %2737 = vmatprep.subr.bf16.mxu0 %v2608
  %2738 = vmatpush2.bf16.msra.mxu0 %v2607
  %2739 = vmatprep.subr.bf16.mxu0 %v2604
  %2740 = vmatpush2.bf16.msra.mxu0 %v2603
  %2741 = vmatprep.mubr.bf16.mxu0 %v2654
  %2742 = vmatmul.mubr.bf16.gmra.mxu0 %v2440
  %v2743 = vpop.f32.mrf.mxu0
  %v2744 = vadd.f32 0.0, %v2743
  %v2745 = vpop.f32.mrf.mxu0
  %v2746 = vadd.f32 0.0, %v2745
  %v2747 = vpop.f32.mrf.mxu0
  %v2748 = vpop.f32.mrf.mxu0
  %2749 = vdwg.mxu0
  %v2750 = vadd.f32 %v2161, %v2703
  %v2751 = vadd.f32 %v2163, %v2705
  %v2752 = vadd.f32 %v2202, %v2744
  %v2753 = vadd.f32 %v2204, %v2746
  %s2754 = scalar_lea.vmem %s5, 24
  %v2755 = vld [vmem:[%s2754] sm:$0xff]
  %2757 = vset.pattern.permute.xlu0 0
  %2758 = vperm.xlu0 %2757, %v2755
  %v2759 = vpop.permute.xlu0 %2758
  %v2761 = vmul.f32 %v1110, %v2759
  %v2762 = vmul.f32 %v1111, %v2759
  %v2763 = vmul.f32 %v1112, %v2759
  %v2764 = vmul.f32 %v1113, %v2759
  %v2765 = vmul.f32 %v1114, %v2759
  %v2766 = vmul.f32 %v1115, %v2759
  %v2767 = vmul.f32 %v1116, %v2759
  %v2768 = vmul.f32 %v1117, %v2759
  %v2769 = vmul.f32 %v1118, %v2759
  %v2770 = vmul.f32 %v1119, %v2759
  %v2771 = vmul.f32 %v1120, %v2759
  %v2772 = vmul.f32 %v1121, %v2759
  %v2773 = vmul.f32 %v1122, %v2759
  %v2774 = vmul.f32 %v1123, %v2759
  %v2775 = vmul.f32 %v1124, %v2759
  %v2776 = vmul.f32 %v1125, %v2759
  %v2777 = vrot.slane %v2761, 4
  %v2778 = vadd.f32 %v2761, %v2777
  %v2779 = vrot.slane %v2778, 2
  %v2780 = vadd.f32 %v2778, %v2779
  %v2781 = vrot.slane %v2780, 1
  %v2782 = vadd.f32 %v2780, %v2781
  %v2783 = vsel %vm108, %v2762, 0.0
  %v2784 = vrot.slane %v2783, 4
  %v2785 = vadd.f32 %v2783, %v2784
  %v2786 = vrot.slane %v2785, 2
  %v2787 = vadd.f32 %v2785, %v2786
  %v2788 = vrot.slane %v2787, 1
  %v2789 = vadd.f32 %v2787, %v2788
  %v2790 = vrot.slane %v2763, 4
  %v2791 = vadd.f32 %v2763, %v2790
  %v2792 = vrot.slane %v2791, 2
  %v2793 = vadd.f32 %v2791, %v2792
  %v2794 = vrot.slane %v2793, 1
  %v2795 = vadd.f32 %v2793, %v2794
  %v2796 = vsel %vm108, %v2764, 0.0
  %v2797 = vrot.slane %v2796, 4
  %v2798 = vadd.f32 %v2796, %v2797
  %v2799 = vrot.slane %v2798, 2
  %v2800 = vadd.f32 %v2798, %v2799
  %v2801 = vrot.slane %v2800, 1
  %v2802 = vadd.f32 %v2800, %v2801
  %v2803 = vrot.slane %v2765, 4
  %v2804 = vadd.f32 %v2765, %v2803
  %v2805 = vrot.slane %v2804, 2
  %v2806 = vadd.f32 %v2804, %v2805
  %v2807 = vrot.slane %v2806, 1
  %v2808 = vadd.f32 %v2806, %v2807
  %v2809 = vsel %vm108, %v2766, 0.0
  %v2810 = vrot.slane %v2809, 4
  %v2811 = vadd.f32 %v2809, %v2810
  %v2812 = vrot.slane %v2811, 2
  %v2813 = vadd.f32 %v2811, %v2812
  %v2814 = vrot.slane %v2813, 1
  %v2815 = vadd.f32 %v2813, %v2814
  %v2816 = vrot.slane %v2767, 4
  %v2817 = vadd.f32 %v2767, %v2816
  %v2818 = vrot.slane %v2817, 2
  %v2819 = vadd.f32 %v2817, %v2818
  %v2820 = vrot.slane %v2819, 1
  %v2821 = vadd.f32 %v2819, %v2820
  %v2822 = vsel %vm108, %v2768, 0.0
  %v2823 = vrot.slane %v2822, 4
  %v2824 = vadd.f32 %v2822, %v2823
  %v2825 = vrot.slane %v2824, 2
  %v2826 = vadd.f32 %v2824, %v2825
  %v2827 = vrot.slane %v2826, 1
  %v2828 = vadd.f32 %v2826, %v2827
  %v2829 = vrot.slane %v2769, 4
  %v2830 = vadd.f32 %v2769, %v2829
  %v2831 = vrot.slane %v2830, 2
  %v2832 = vadd.f32 %v2830, %v2831
  %v2833 = vrot.slane %v2832, 1
  %v2834 = vadd.f32 %v2832, %v2833
  %v2835 = vsel %vm108, %v2770, 0.0
  %v2836 = vrot.slane %v2835, 4
  %v2837 = vadd.f32 %v2835, %v2836
  %v2838 = vrot.slane %v2837, 2
  %v2839 = vadd.f32 %v2837, %v2838
  %v2840 = vrot.slane %v2839, 1
  %v2841 = vadd.f32 %v2839, %v2840
  %v2842 = vrot.slane %v2771, 4
  %v2843 = vadd.f32 %v2771, %v2842
  %v2844 = vrot.slane %v2843, 2
  %v2845 = vadd.f32 %v2843, %v2844
  %v2846 = vrot.slane %v2845, 1
  %v2847 = vadd.f32 %v2845, %v2846
  %v2848 = vsel %vm108, %v2772, 0.0
  %v2849 = vrot.slane %v2848, 4
  %v2850 = vadd.f32 %v2848, %v2849
  %v2851 = vrot.slane %v2850, 2
  %v2852 = vadd.f32 %v2850, %v2851
  %v2853 = vrot.slane %v2852, 1
  %v2854 = vadd.f32 %v2852, %v2853
  %v2855 = vrot.slane %v2773, 4
  %v2856 = vadd.f32 %v2773, %v2855
  %v2857 = vrot.slane %v2856, 2
  %v2858 = vadd.f32 %v2856, %v2857
  %v2859 = vrot.slane %v2858, 1
  %v2860 = vadd.f32 %v2858, %v2859
  %v2861 = vsel %vm108, %v2774, 0.0
  %v2862 = vrot.slane %v2861, 4
  %v2863 = vadd.f32 %v2861, %v2862
  %v2864 = vrot.slane %v2863, 2
  %v2865 = vadd.f32 %v2863, %v2864
  %v2866 = vrot.slane %v2865, 1
  %v2867 = vadd.f32 %v2865, %v2866
  %v2868 = vrot.slane %v2775, 4
  %v2869 = vadd.f32 %v2775, %v2868
  %v2870 = vrot.slane %v2869, 2
  %v2871 = vadd.f32 %v2869, %v2870
  %v2872 = vrot.slane %v2871, 1
  %v2873 = vadd.f32 %v2871, %v2872
  %v2874 = vsel %vm108, %v2776, 0.0
  %v2875 = vrot.slane %v2874, 4
  %v2876 = vadd.f32 %v2874, %v2875
  %v2877 = vrot.slane %v2876, 2
  %v2878 = vadd.f32 %v2876, %v2877
  %v2879 = vrot.slane %v2878, 1
  %v2880 = vadd.f32 %v2878, %v2879
  %v2881 = vpack.c.bf16 %v2782, %v2782
  %v2882 = vpack.c.bf16 %v2789, %v2789
  %v2883 = vpack.c.bf16 %v2795, %v2795
  %v2884 = vpack.c.bf16 %v2802, %v2802
  %v2885 = vpack.c.bf16 %v2808, %v2808
  %v2886 = vpack.c.bf16 %v2815, %v2815
  %v2887 = vpack.c.bf16 %v2821, %v2821
  %v2888 = vpack.c.bf16 %v2828, %v2828
  %v2889 = vpack.c.bf16 %v2834, %v2834
  %v2890 = vpack.c.bf16 %v2841, %v2841
  %v2891 = vpack.c.bf16 %v2847, %v2847
  %v2892 = vpack.c.bf16 %v2854, %v2854
  %v2893 = vpack.c.bf16 %v2860, %v2860
  %v2894 = vpack.c.bf16 %v2867, %v2867
  %v2895 = vpack.c.bf16 %v2873, %v2873
  %v2896 = vpack.c.bf16 %v2880, %v2880
  %s2897 = scalar_lea.vmem %s6, 1008
  %v2898 = vld [vmem:[%s2897] sm:$0xff]
  %v2899 = vld [vmem:[%s2897 + $0x8] sm:$0xff]
  %v2900 = vld [vmem:[%s2897 + $0x10] sm:$0xff]
  %v2901 = vld [vmem:[%s2897 + $0x18] sm:$0xff]
  %v2902 = vld [vmem:[%s2897 + $0x20] sm:$0xff]
  %v2903 = vld [vmem:[%s2897 + $0x28] sm:$0xff]
  %v2904 = vld [vmem:[%s2897 + $0x30] sm:$0xff]
  %v2905 = vld [vmem:[%s2897 + $0x38] sm:$0xff]
  %v2906 = vld [vmem:[%s2897 + $0x40] sm:$0xff]
  %v2907 = vld [vmem:[%s2897 + $0x48] sm:$0xff]
  %v2908 = vld [vmem:[%s2897 + $0x50] sm:$0xff]
  %v2909 = vld [vmem:[%s2897 + $0x58] sm:$0xff]
  %v2910 = vld [vmem:[%s2897 + $0x60] sm:$0xff]
  %v2911 = vld [vmem:[%s2897 + $0x68] sm:$0xff]
  %v2912 = vld [vmem:[%s2897 + $0x70] sm:$0xff]
  %v2913 = vld [vmem:[%s2897 + $0x78] sm:$0xff]
  %v2914 = vld [vmem:[%s2897 + $0x80] sm:$0xff]
  %v2915 = vld [vmem:[%s2897 + $0x88] sm:$0xff]
  %v2916 = vld [vmem:[%s2897 + $0x90] sm:$0xff]
  %v2917 = vld [vmem:[%s2897 + $0x98] sm:$0xff]
  %v2918 = vld [vmem:[%s2897 + $0xa0] sm:$0xff]
  %v2919 = vld [vmem:[%s2897 + $0xa8] sm:$0xff]
  %v2920 = vld [vmem:[%s2897 + $0xb0] sm:$0xff]
  %v2921 = vld [vmem:[%s2897 + $0xb8] sm:$0xff]
  %v2922 = vld [vmem:[%s2897 + $0xc0] sm:$0xff]
  %v2923 = vld [vmem:[%s2897 + $0xc8] sm:$0xff]
  %v2924 = vld [vmem:[%s2897 + $0xd0] sm:$0xff]
  %v2925 = vld [vmem:[%s2897 + $0xd8] sm:$0xff]
  %v2926 = vld [vmem:[%s2897 + $0xe0] sm:$0xff]
  %v2927 = vld [vmem:[%s2897 + $0xe8] sm:$0xff]
  %v2928 = vld [vmem:[%s2897 + $0xf0] sm:$0xff]
  %v2929 = vld [vmem:[%s2897 + $0xf8] sm:$0xff]
  %v2930 = vld [vmem:[%s2897 + $0x100] sm:$0xff]
  %v2931 = vld [vmem:[%s2897 + $0x108] sm:$0xff]
  %v2932 = vld [vmem:[%s2897 + $0x110] sm:$0xff]
  %v2933 = vld [vmem:[%s2897 + $0x118] sm:$0xff]
  %v2934 = vld [vmem:[%s2897 + $0x120] sm:$0xff]
  %v2935 = vld [vmem:[%s2897 + $0x128] sm:$0xff]
  %v2936 = vld [vmem:[%s2897 + $0x130] sm:$0xff]
  %v2937 = vld [vmem:[%s2897 + $0x138] sm:$0xff]
  %v2938 = vld [vmem:[%s2897 + $0x140] sm:$0xff]
  %v2939 = vld [vmem:[%s2897 + $0x148] sm:$0xff]
  %v2956 = vunpack.c.l.b16 %v2881
  %v2957 = vunpack.c.l.b16 %v2882
  %v2958 = vunpack.c.l.b16 %v2883
  %v2959 = vunpack.c.l.b16 %v2884
  %v2960 = vunpack.c.l.b16 %v2885
  %v2961 = vunpack.c.l.b16 %v2886
  %v2962 = vunpack.c.l.b16 %v2887
  %v2963 = vunpack.c.l.b16 %v2888
  %v2964 = vunpack.c.l.b16 %v2889
  %v2965 = vunpack.c.l.b16 %v2890
  %v2966 = vunpack.c.l.b16 %v2891
  %v2967 = vunpack.c.l.b16 %v2892
  %v2968 = vunpack.c.l.b16 %v2893
  %v2969 = vunpack.c.l.b16 %v2894
  %v2970 = vunpack.c.l.b16 %v2895
  %v2971 = vunpack.c.l.b16 %v2896
  %v2972 = vsel %vm283, %v2958, %v2956
  %v2973 = vsel %vm285, %v2960, %v2972
  %v2974 = vsel %vm287, %v2962, %v2973
  %v2975 = vsel %vm289, %v2964, %v2974
  %v2976 = vsel %vm291, %v2966, %v2975
  %v2977 = vsel %vm293, %v2968, %v2976
  %v2978 = vsel %vm295, %v2970, %v2977
  %v2979 = vsel %vm283, %v2959, %v2957
  %v2980 = vsel %vm285, %v2961, %v2979
  %v2981 = vsel %vm287, %v2963, %v2980
  %v2982 = vsel %vm289, %v2965, %v2981
  %v2983 = vsel %vm291, %v2967, %v2982
  %v2984 = vsel %vm293, %v2969, %v2983
  %v2985 = vsel %vm295, %v2971, %v2984
  %v2986 = vpack.c.b16 %v2978, %v2978
  %v2987 = vpack.c.b16 %v2985, %v2985
  %v3031 = vunpack.c.l.b16 %v2898
  %v3032 = vunpack.c.h.b16 %v2898
  %v3033 = vunpack.c.l.b16 %v2899
  %v3034 = vunpack.c.h.b16 %v2899
  %v3035 = vunpack.c.l.b16 %v2900
  %v3036 = vunpack.c.h.b16 %v2900
  %v3037 = vunpack.c.l.b16 %v2901
  %v3038 = vunpack.c.h.b16 %v2901
  %v3039 = vunpack.c.l.b16 %v2902
  %v3040 = vunpack.c.h.b16 %v2902
  %v3041 = vunpack.c.l.b16 %v2903
  %v3042 = vunpack.c.h.b16 %v2903
  %v3043 = vunpack.c.l.b16 %v2904
  %v3044 = vunpack.c.h.b16 %v2904
  %v3045 = vunpack.c.l.b16 %v2905
  %v3046 = vunpack.c.h.b16 %v2905
  %v3047 = vunpack.c.l.b16 %v2906
  %v3048 = vunpack.c.h.b16 %v2906
  %v3049 = vunpack.c.l.b16 %v2907
  %v3050 = vunpack.c.h.b16 %v2907
  %v3051 = vunpack.c.l.b16 %v2908
  %v3052 = vunpack.c.h.b16 %v2908
  %v3053 = vunpack.c.l.b16 %v2909
  %v3054 = vunpack.c.h.b16 %v2909
  %v3055 = vunpack.c.l.b16 %v2910
  %v3056 = vunpack.c.h.b16 %v2910
  %v3057 = vunpack.c.l.b16 %v2911
  %v3058 = vunpack.c.h.b16 %v2911
  %v3059 = vunpack.c.l.b16 %v2912
  %v3060 = vunpack.c.h.b16 %v2912
  %v3061 = vunpack.c.l.b16 %v2913
  %v3062 = vunpack.c.h.b16 %v2913
  %v3063 = vunpack.c.l.b16 %v2914
  %v3064 = vunpack.c.h.b16 %v2914
  %v3065 = vunpack.c.l.b16 %v2915
  %v3066 = vunpack.c.h.b16 %v2915
  %v3067 = vunpack.c.l.b16 %v2916
  %v3068 = vunpack.c.h.b16 %v2916
  %v3069 = vunpack.c.l.b16 %v2917
  %v3070 = vunpack.c.h.b16 %v2917
  %v3071 = vunpack.c.l.b16 %v2918
  %v3072 = vunpack.c.h.b16 %v2918
  %v3073 = vunpack.c.l.b16 %v2919
  %v3074 = vunpack.c.h.b16 %v2919
  %v3075 = vunpack.c.l.b16 %v2920
  %v3076 = vunpack.c.h.b16 %v2920
  %v3077 = vunpack.c.l.b16 %v2921
  %v3078 = vunpack.c.h.b16 %v2921
  %v3079 = vunpack.c.l.b16 %v2922
  %v3080 = vunpack.c.h.b16 %v2922
  %v3081 = vunpack.c.l.b16 %v2923
  %v3082 = vunpack.c.h.b16 %v2923
  %v3083 = vunpack.c.l.b16 %v2924
  %v3084 = vunpack.c.h.b16 %v2924
  %v3085 = vunpack.c.l.b16 %v2925
  %v3086 = vunpack.c.h.b16 %v2925
  %v3087 = vunpack.c.l.b16 %v2926
  %v3088 = vunpack.c.h.b16 %v2926
  %v3089 = vunpack.c.l.b16 %v2927
  %v3090 = vunpack.c.h.b16 %v2927
  %v3091 = vunpack.c.l.b16 %v2928
  %v3092 = vunpack.c.h.b16 %v2928
  %v3093 = vunpack.c.l.b16 %v2929
  %v3094 = vunpack.c.h.b16 %v2929
  %v3095 = vunpack.c.l.b16 %v2930
  %v3096 = vunpack.c.h.b16 %v2930
  %v3097 = vunpack.c.l.b16 %v2931
  %v3098 = vunpack.c.h.b16 %v2931
  %v3099 = vunpack.c.l.b16 %v2932
  %v3100 = vunpack.c.h.b16 %v2932
  %v3101 = vunpack.c.l.b16 %v2933
  %v3102 = vunpack.c.h.b16 %v2933
  %v3103 = vunpack.c.l.b16 %v2934
  %v3104 = vunpack.c.h.b16 %v2934
  %v3105 = vunpack.c.l.b16 %v2935
  %v3106 = vunpack.c.h.b16 %v2935
  %v3107 = vunpack.c.l.b16 %v2936
  %v3108 = vunpack.c.h.b16 %v2936
  %v3109 = vunpack.c.l.b16 %v2937
  %v3110 = vunpack.c.h.b16 %v2937
  %v3111 = vunpack.c.l.b16 %v2938
  %v3112 = vunpack.c.h.b16 %v2938
  %v3113 = vunpack.c.l.b16 %v2939
  %v3114 = vunpack.c.h.b16 %v2939
  %v3115 = vpack.c.b16 %v3035, %v3031
  %v3116 = vpack.c.b16 %v3036, %v3032
  %v3117 = vpack.c.b16 %v3037, %v3033
  %v3118 = vpack.c.b16 %v3038, %v3034
  %v3119 = vpack.c.b16 %v3043, %v3039
  %v3120 = vpack.c.b16 %v3044, %v3040
  %v3121 = vpack.c.b16 %v3045, %v3041
  %v3122 = vpack.c.b16 %v3046, %v3042
  %v3123 = vpack.c.b16 %v3051, %v3047
  %v3124 = vpack.c.b16 %v3052, %v3048
  %v3125 = vpack.c.b16 %v3053, %v3049
  %v3126 = vpack.c.b16 %v3054, %v3050
  %v3127 = vpack.c.b16 %v3059, %v3055
  %v3128 = vpack.c.b16 %v3060, %v3056
  %v3129 = vpack.c.b16 %v3061, %v3057
  %v3130 = vpack.c.b16 %v3062, %v3058
  %v3131 = vpack.c.b16 %v3067, %v3063
  %v3132 = vpack.c.b16 %v3068, %v3064
  %v3133 = vpack.c.b16 %v3069, %v3065
  %v3134 = vpack.c.b16 %v3070, %v3066
  %v3135 = vpack.c.b16 %v3075, %v3071
  %v3136 = vpack.c.b16 %v3076, %v3072
  %v3137 = vpack.c.b16 %v3077, %v3073
  %v3138 = vpack.c.b16 %v3078, %v3074
  %v3139 = vpack.c.b16 %v3083, %v3079
  %v3140 = vpack.c.b16 %v3084, %v3080
  %v3141 = vpack.c.b16 %v3085, %v3081
  %v3142 = vpack.c.b16 %v3086, %v3082
  %v3143 = vpack.c.b16 %v3091, %v3087
  %v3144 = vpack.c.b16 %v3092, %v3088
  %v3145 = vpack.c.b16 %v3093, %v3089
  %v3146 = vpack.c.b16 %v3094, %v3090
  %v3147 = vpack.c.b16 %v3099, %v3095
  %v3148 = vpack.c.b16 %v3100, %v3096
  %v3149 = vpack.c.b16 %v3101, %v3097
  %v3150 = vpack.c.b16 %v3102, %v3098
  %v3151 = vpack.c.b16 %v3107, %v3103
  %v3152 = vpack.c.b16 %v3108, %v3104
  %v3153 = vpack.c.b16 %v3109, %v3105
  %v3154 = vpack.c.b16 %v3110, %v3106
  %v3155 = vpack.c.b16 %v3111, %v3111
  %v3156 = vpack.c.b16 %v3112, %v3112
  %v3157 = vpack.c.b16 %v3113, %v3113
  %v3158 = vpack.c.b16 %v3114, %v3114
  %v3200 = vsel %vm108, %v2987, 0
  %v3203 = vsel %vm415, %v3155, 0
  %v3206 = vsel %vm415, %v3156, 0
  %v3209 = vsel %vm415, %v3157, 0
  %v3212 = vsel %vm415, %v3158, 0
  %3214 = vmatprep.subr.bf16.mxu0 %v3144
  %3215 = vmatpush1.bf16.msra.mxu0 %v3143
  %3216 = vmatprep.subr.bf16.mxu0 %v3140
  %3217 = vmatpush1.bf16.msra.mxu0 %v3139
  %3218 = vmatprep.subr.bf16.mxu0 %v3136
  %3219 = vmatpush1.bf16.msra.mxu0 %v3135
  %3220 = vmatprep.subr.bf16.mxu0 %v3132
  %3221 = vmatpush1.bf16.msra.mxu0 %v3131
  %3222 = vmatprep.subr.bf16.mxu0 %v3128
  %3223 = vmatpush1.bf16.msra.mxu0 %v3127
  %3224 = vmatprep.subr.bf16.mxu0 %v3124
  %3225 = vmatpush1.bf16.msra.mxu0 %v3123
  %3226 = vmatprep.subr.bf16.mxu0 %v3120
  %3227 = vmatpush1.bf16.msra.mxu0 %v3119
  %3228 = vmatprep.subr.bf16.mxu0 %v3116
  %3229 = vmatpush1.bf16.msra.mxu0 %v3115
  %3230 = vmatprep.subr.bf16.mxu0 0
  %3231 = vmatpush2.bf16.msra.mxu0 0
  %3232 = vmatprep.subr.bf16.mxu0 0
  %3233 = vmatpush2.bf16.msra.mxu0 0
  %3234 = vmatprep.subr.bf16.mxu0 0
  %3235 = vmatpush2.bf16.msra.mxu0 0
  %3236 = vmatprep.subr.bf16.mxu0 0
  %3237 = vmatpush2.bf16.msra.mxu0 0
  %3238 = vmatprep.subr.bf16.mxu0 0
  %3239 = vmatpush2.bf16.msra.mxu0 0
  %3240 = vmatprep.subr.bf16.mxu0 %v3206
  %3241 = vmatpush2.bf16.msra.mxu0 %v3203
  %3242 = vmatprep.subr.bf16.mxu0 %v3152
  %3243 = vmatpush2.bf16.msra.mxu0 %v3151
  %3244 = vmatprep.subr.bf16.mxu0 %v3148
  %3245 = vmatpush2.bf16.msra.mxu0 %v3147
  %3246 = vmatprep.mubr.bf16.mxu0 %v3200
  %3247 = vmatmul.mubr.bf16.gmra.mxu0 %v2986
  %v3248 = vpop.f32.mrf.mxu0
  %v3249 = vadd.f32 0.0, %v3248
  %v3250 = vpop.f32.mrf.mxu0
  %v3251 = vadd.f32 0.0, %v3250
  %v3252 = vpop.f32.mrf.mxu0
  %v3253 = vpop.f32.mrf.mxu0
  %3254 = vdwg.mxu0
  %3255 = vmatprep.subr.bf16.mxu0 %v3146
  %3256 = vmatpush1.bf16.msra.mxu0 %v3145
  %3257 = vmatprep.subr.bf16.mxu0 %v3142
  %3258 = vmatpush1.bf16.msra.mxu0 %v3141
  %3259 = vmatprep.subr.bf16.mxu0 %v3138
  %3260 = vmatpush1.bf16.msra.mxu0 %v3137
  %3261 = vmatprep.subr.bf16.mxu0 %v3134
  %3262 = vmatpush1.bf16.msra.mxu0 %v3133
  %3263 = vmatprep.subr.bf16.mxu0 %v3130
  %3264 = vmatpush1.bf16.msra.mxu0 %v3129
  %3265 = vmatprep.subr.bf16.mxu0 %v3126
  %3266 = vmatpush1.bf16.msra.mxu0 %v3125
  %3267 = vmatprep.subr.bf16.mxu0 %v3122
  %3268 = vmatpush1.bf16.msra.mxu0 %v3121
  %3269 = vmatprep.subr.bf16.mxu0 %v3118
  %3270 = vmatpush1.bf16.msra.mxu0 %v3117
  %3271 = vmatprep.subr.bf16.mxu0 0
  %3272 = vmatpush2.bf16.msra.mxu0 0
  %3273 = vmatprep.subr.bf16.mxu0 0
  %3274 = vmatpush2.bf16.msra.mxu0 0
  %3275 = vmatprep.subr.bf16.mxu0 0
  %3276 = vmatpush2.bf16.msra.mxu0 0
  %3277 = vmatprep.subr.bf16.mxu0 0
  %3278 = vmatpush2.bf16.msra.mxu0 0
  %3279 = vmatprep.subr.bf16.mxu0 0
  %3280 = vmatpush2.bf16.msra.mxu0 0
  %3281 = vmatprep.subr.bf16.mxu0 %v3212
  %3282 = vmatpush2.bf16.msra.mxu0 %v3209
  %3283 = vmatprep.subr.bf16.mxu0 %v3154
  %3284 = vmatpush2.bf16.msra.mxu0 %v3153
  %3285 = vmatprep.subr.bf16.mxu0 %v3150
  %3286 = vmatpush2.bf16.msra.mxu0 %v3149
  %3287 = vmatprep.mubr.bf16.mxu0 %v3200
  %3288 = vmatmul.mubr.bf16.gmra.mxu0 %v2986
  %v3289 = vpop.f32.mrf.mxu0
  %v3290 = vadd.f32 0.0, %v3289
  %v3291 = vpop.f32.mrf.mxu0
  %v3292 = vadd.f32 0.0, %v3291
  %v3293 = vpop.f32.mrf.mxu0
  %v3294 = vpop.f32.mrf.mxu0
  %3295 = vdwg.mxu0
  %v3296 = vadd.f32 %v2750, %v3249
  %v3297 = vadd.f32 %v2751, %v3251
  %v3298 = vadd.f32 %v2752, %v3290
  %v3299 = vadd.f32 %v2753, %v3292
  %s3300 = scalar_lea.vmem %s5, 32
  %v3301 = vld [vmem:[%s3300] sm:$0xff]
  %3303 = vset.pattern.permute.xlu0 0
  %3304 = vperm.xlu0 %3303, %v3301
  %v3305 = vpop.permute.xlu0 %3304
  %v3307 = vmul.f32 %v1110, %v3305
  %v3308 = vmul.f32 %v1111, %v3305
  %v3309 = vmul.f32 %v1112, %v3305
  %v3310 = vmul.f32 %v1113, %v3305
  %v3311 = vmul.f32 %v1114, %v3305
  %v3312 = vmul.f32 %v1115, %v3305
  %v3313 = vmul.f32 %v1116, %v3305
  %v3314 = vmul.f32 %v1117, %v3305
  %v3315 = vmul.f32 %v1118, %v3305
  %v3316 = vmul.f32 %v1119, %v3305
  %v3317 = vmul.f32 %v1120, %v3305
  %v3318 = vmul.f32 %v1121, %v3305
  %v3319 = vmul.f32 %v1122, %v3305
  %v3320 = vmul.f32 %v1123, %v3305
  %v3321 = vmul.f32 %v1124, %v3305
  %v3322 = vmul.f32 %v1125, %v3305
  %v3323 = vrot.slane %v3307, 4
  %v3324 = vadd.f32 %v3307, %v3323
  %v3325 = vrot.slane %v3324, 2
  %v3326 = vadd.f32 %v3324, %v3325
  %v3327 = vrot.slane %v3326, 1
  %v3328 = vadd.f32 %v3326, %v3327
  %v3329 = vsel %vm108, %v3308, 0.0
  %v3330 = vrot.slane %v3329, 4
  %v3331 = vadd.f32 %v3329, %v3330
  %v3332 = vrot.slane %v3331, 2
  %v3333 = vadd.f32 %v3331, %v3332
  %v3334 = vrot.slane %v3333, 1
  %v3335 = vadd.f32 %v3333, %v3334
  %v3336 = vrot.slane %v3309, 4
  %v3337 = vadd.f32 %v3309, %v3336
  %v3338 = vrot.slane %v3337, 2
  %v3339 = vadd.f32 %v3337, %v3338
  %v3340 = vrot.slane %v3339, 1
  %v3341 = vadd.f32 %v3339, %v3340
  %v3342 = vsel %vm108, %v3310, 0.0
  %v3343 = vrot.slane %v3342, 4
  %v3344 = vadd.f32 %v3342, %v3343
  %v3345 = vrot.slane %v3344, 2
  %v3346 = vadd.f32 %v3344, %v3345
  %v3347 = vrot.slane %v3346, 1
  %v3348 = vadd.f32 %v3346, %v3347
  %v3349 = vrot.slane %v3311, 4
  %v3350 = vadd.f32 %v3311, %v3349
  %v3351 = vrot.slane %v3350, 2
  %v3352 = vadd.f32 %v3350, %v3351
  %v3353 = vrot.slane %v3352, 1
  %v3354 = vadd.f32 %v3352, %v3353
  %v3355 = vsel %vm108, %v3312, 0.0
  %v3356 = vrot.slane %v3355, 4
  %v3357 = vadd.f32 %v3355, %v3356
  %v3358 = vrot.slane %v3357, 2
  %v3359 = vadd.f32 %v3357, %v3358
  %v3360 = vrot.slane %v3359, 1
  %v3361 = vadd.f32 %v3359, %v3360
  %v3362 = vrot.slane %v3313, 4
  %v3363 = vadd.f32 %v3313, %v3362
  %v3364 = vrot.slane %v3363, 2
  %v3365 = vadd.f32 %v3363, %v3364
  %v3366 = vrot.slane %v3365, 1
  %v3367 = vadd.f32 %v3365, %v3366
  %v3368 = vsel %vm108, %v3314, 0.0
  %v3369 = vrot.slane %v3368, 4
  %v3370 = vadd.f32 %v3368, %v3369
  %v3371 = vrot.slane %v3370, 2
  %v3372 = vadd.f32 %v3370, %v3371
  %v3373 = vrot.slane %v3372, 1
  %v3374 = vadd.f32 %v3372, %v3373
  %v3375 = vrot.slane %v3315, 4
  %v3376 = vadd.f32 %v3315, %v3375
  %v3377 = vrot.slane %v3376, 2
  %v3378 = vadd.f32 %v3376, %v3377
  %v3379 = vrot.slane %v3378, 1
  %v3380 = vadd.f32 %v3378, %v3379
  %v3381 = vsel %vm108, %v3316, 0.0
  %v3382 = vrot.slane %v3381, 4
  %v3383 = vadd.f32 %v3381, %v3382
  %v3384 = vrot.slane %v3383, 2
  %v3385 = vadd.f32 %v3383, %v3384
  %v3386 = vrot.slane %v3385, 1
  %v3387 = vadd.f32 %v3385, %v3386
  %v3388 = vrot.slane %v3317, 4
  %v3389 = vadd.f32 %v3317, %v3388
  %v3390 = vrot.slane %v3389, 2
  %v3391 = vadd.f32 %v3389, %v3390
  %v3392 = vrot.slane %v3391, 1
  %v3393 = vadd.f32 %v3391, %v3392
  %v3394 = vsel %vm108, %v3318, 0.0
  %v3395 = vrot.slane %v3394, 4
  %v3396 = vadd.f32 %v3394, %v3395
  %v3397 = vrot.slane %v3396, 2
  %v3398 = vadd.f32 %v3396, %v3397
  %v3399 = vrot.slane %v3398, 1
  %v3400 = vadd.f32 %v3398, %v3399
  %v3401 = vrot.slane %v3319, 4
  %v3402 = vadd.f32 %v3319, %v3401
  %v3403 = vrot.slane %v3402, 2
  %v3404 = vadd.f32 %v3402, %v3403
  %v3405 = vrot.slane %v3404, 1
  %v3406 = vadd.f32 %v3404, %v3405
  %v3407 = vsel %vm108, %v3320, 0.0
  %v3408 = vrot.slane %v3407, 4
  %v3409 = vadd.f32 %v3407, %v3408
  %v3410 = vrot.slane %v3409, 2
  %v3411 = vadd.f32 %v3409, %v3410
  %v3412 = vrot.slane %v3411, 1
  %v3413 = vadd.f32 %v3411, %v3412
  %v3414 = vrot.slane %v3321, 4
  %v3415 = vadd.f32 %v3321, %v3414
  %v3416 = vrot.slane %v3415, 2
  %v3417 = vadd.f32 %v3415, %v3416
  %v3418 = vrot.slane %v3417, 1
  %v3419 = vadd.f32 %v3417, %v3418
  %v3420 = vsel %vm108, %v3322, 0.0
  %v3421 = vrot.slane %v3420, 4
  %v3422 = vadd.f32 %v3420, %v3421
  %v3423 = vrot.slane %v3422, 2
  %v3424 = vadd.f32 %v3422, %v3423
  %v3425 = vrot.slane %v3424, 1
  %v3426 = vadd.f32 %v3424, %v3425
  %v3427 = vpack.c.bf16 %v3328, %v3328
  %v3428 = vpack.c.bf16 %v3335, %v3335
  %v3429 = vpack.c.bf16 %v3341, %v3341
  %v3430 = vpack.c.bf16 %v3348, %v3348
  %v3431 = vpack.c.bf16 %v3354, %v3354
  %v3432 = vpack.c.bf16 %v3361, %v3361
  %v3433 = vpack.c.bf16 %v3367, %v3367
  %v3434 = vpack.c.bf16 %v3374, %v3374
  %v3435 = vpack.c.bf16 %v3380, %v3380
  %v3436 = vpack.c.bf16 %v3387, %v3387
  %v3437 = vpack.c.bf16 %v3393, %v3393
  %v3438 = vpack.c.bf16 %v3400, %v3400
  %v3439 = vpack.c.bf16 %v3406, %v3406
  %v3440 = vpack.c.bf16 %v3413, %v3413
  %v3441 = vpack.c.bf16 %v3419, %v3419
  %v3442 = vpack.c.bf16 %v3426, %v3426
  %s3443 = scalar_lea.vmem %s6, 1344
  %v3444 = vld [vmem:[%s3443] sm:$0xff]
  %v3445 = vld [vmem:[%s3443 + $0x8] sm:$0xff]
  %v3446 = vld [vmem:[%s3443 + $0x10] sm:$0xff]
  %v3447 = vld [vmem:[%s3443 + $0x18] sm:$0xff]
  %v3448 = vld [vmem:[%s3443 + $0x20] sm:$0xff]
  %v3449 = vld [vmem:[%s3443 + $0x28] sm:$0xff]
  %v3450 = vld [vmem:[%s3443 + $0x30] sm:$0xff]
  %v3451 = vld [vmem:[%s3443 + $0x38] sm:$0xff]
  %v3452 = vld [vmem:[%s3443 + $0x40] sm:$0xff]
  %v3453 = vld [vmem:[%s3443 + $0x48] sm:$0xff]
  %v3454 = vld [vmem:[%s3443 + $0x50] sm:$0xff]
  %v3455 = vld [vmem:[%s3443 + $0x58] sm:$0xff]
  %v3456 = vld [vmem:[%s3443 + $0x60] sm:$0xff]
  %v3457 = vld [vmem:[%s3443 + $0x68] sm:$0xff]
  %v3458 = vld [vmem:[%s3443 + $0x70] sm:$0xff]
  %v3459 = vld [vmem:[%s3443 + $0x78] sm:$0xff]
  %v3460 = vld [vmem:[%s3443 + $0x80] sm:$0xff]
  %v3461 = vld [vmem:[%s3443 + $0x88] sm:$0xff]
  %v3462 = vld [vmem:[%s3443 + $0x90] sm:$0xff]
  %v3463 = vld [vmem:[%s3443 + $0x98] sm:$0xff]
  %v3464 = vld [vmem:[%s3443 + $0xa0] sm:$0xff]
  %v3465 = vld [vmem:[%s3443 + $0xa8] sm:$0xff]
  %v3466 = vld [vmem:[%s3443 + $0xb0] sm:$0xff]
  %v3467 = vld [vmem:[%s3443 + $0xb8] sm:$0xff]
  %v3468 = vld [vmem:[%s3443 + $0xc0] sm:$0xff]
  %v3469 = vld [vmem:[%s3443 + $0xc8] sm:$0xff]
  %v3470 = vld [vmem:[%s3443 + $0xd0] sm:$0xff]
  %v3471 = vld [vmem:[%s3443 + $0xd8] sm:$0xff]
  %v3472 = vld [vmem:[%s3443 + $0xe0] sm:$0xff]
  %v3473 = vld [vmem:[%s3443 + $0xe8] sm:$0xff]
  %v3474 = vld [vmem:[%s3443 + $0xf0] sm:$0xff]
  %v3475 = vld [vmem:[%s3443 + $0xf8] sm:$0xff]
  %v3476 = vld [vmem:[%s3443 + $0x100] sm:$0xff]
  %v3477 = vld [vmem:[%s3443 + $0x108] sm:$0xff]
  %v3478 = vld [vmem:[%s3443 + $0x110] sm:$0xff]
  %v3479 = vld [vmem:[%s3443 + $0x118] sm:$0xff]
  %v3480 = vld [vmem:[%s3443 + $0x120] sm:$0xff]
  %v3481 = vld [vmem:[%s3443 + $0x128] sm:$0xff]
  %v3482 = vld [vmem:[%s3443 + $0x130] sm:$0xff]
  %v3483 = vld [vmem:[%s3443 + $0x138] sm:$0xff]
  %v3484 = vld [vmem:[%s3443 + $0x140] sm:$0xff]
  %v3485 = vld [vmem:[%s3443 + $0x148] sm:$0xff]
  %v3502 = vunpack.c.l.b16 %v3427
  %v3503 = vunpack.c.l.b16 %v3428
  %v3504 = vunpack.c.l.b16 %v3429
  %v3505 = vunpack.c.l.b16 %v3430
  %v3506 = vunpack.c.l.b16 %v3431
  %v3507 = vunpack.c.l.b16 %v3432
  %v3508 = vunpack.c.l.b16 %v3433
  %v3509 = vunpack.c.l.b16 %v3434
  %v3510 = vunpack.c.l.b16 %v3435
  %v3511 = vunpack.c.l.b16 %v3436
  %v3512 = vunpack.c.l.b16 %v3437
  %v3513 = vunpack.c.l.b16 %v3438
  %v3514 = vunpack.c.l.b16 %v3439
  %v3515 = vunpack.c.l.b16 %v3440
  %v3516 = vunpack.c.l.b16 %v3441
  %v3517 = vunpack.c.l.b16 %v3442
  %v3518 = vsel %vm283, %v3504, %v3502
  %v3519 = vsel %vm285, %v3506, %v3518
  %v3520 = vsel %vm287, %v3508, %v3519
  %v3521 = vsel %vm289, %v3510, %v3520
  %v3522 = vsel %vm291, %v3512, %v3521
  %v3523 = vsel %vm293, %v3514, %v3522
  %v3524 = vsel %vm295, %v3516, %v3523
  %v3525 = vsel %vm283, %v3505, %v3503
  %v3526 = vsel %vm285, %v3507, %v3525
  %v3527 = vsel %vm287, %v3509, %v3526
  %v3528 = vsel %vm289, %v3511, %v3527
  %v3529 = vsel %vm291, %v3513, %v3528
  %v3530 = vsel %vm293, %v3515, %v3529
  %v3531 = vsel %vm295, %v3517, %v3530
  %v3532 = vpack.c.b16 %v3524, %v3524
  %v3533 = vpack.c.b16 %v3531, %v3531
  %v3577 = vunpack.c.l.b16 %v3444
  %v3578 = vunpack.c.h.b16 %v3444
  %v3579 = vunpack.c.l.b16 %v3445
  %v3580 = vunpack.c.h.b16 %v3445
  %v3581 = vunpack.c.l.b16 %v3446
  %v3582 = vunpack.c.h.b16 %v3446
  %v3583 = vunpack.c.l.b16 %v3447
  %v3584 = vunpack.c.h.b16 %v3447
  %v3585 = vunpack.c.l.b16 %v3448
  %v3586 = vunpack.c.h.b16 %v3448
  %v3587 = vunpack.c.l.b16 %v3449
  %v3588 = vunpack.c.h.b16 %v3449
  %v3589 = vunpack.c.l.b16 %v3450
  %v3590 = vunpack.c.h.b16 %v3450
  %v3591 = vunpack.c.l.b16 %v3451
  %v3592 = vunpack.c.h.b16 %v3451
  %v3593 = vunpack.c.l.b16 %v3452
  %v3594 = vunpack.c.h.b16 %v3452
  %v3595 = vunpack.c.l.b16 %v3453
  %v3596 = vunpack.c.h.b16 %v3453
  %v3597 = vunpack.c.l.b16 %v3454
  %v3598 = vunpack.c.h.b16 %v3454
  %v3599 = vunpack.c.l.b16 %v3455
  %v3600 = vunpack.c.h.b16 %v3455
  %v3601 = vunpack.c.l.b16 %v3456
  %v3602 = vunpack.c.h.b16 %v3456
  %v3603 = vunpack.c.l.b16 %v3457
  %v3604 = vunpack.c.h.b16 %v3457
  %v3605 = vunpack.c.l.b16 %v3458
  %v3606 = vunpack.c.h.b16 %v3458
  %v3607 = vunpack.c.l.b16 %v3459
  %v3608 = vunpack.c.h.b16 %v3459
  %v3609 = vunpack.c.l.b16 %v3460
  %v3610 = vunpack.c.h.b16 %v3460
  %v3611 = vunpack.c.l.b16 %v3461
  %v3612 = vunpack.c.h.b16 %v3461
  %v3613 = vunpack.c.l.b16 %v3462
  %v3614 = vunpack.c.h.b16 %v3462
  %v3615 = vunpack.c.l.b16 %v3463
  %v3616 = vunpack.c.h.b16 %v3463
  %v3617 = vunpack.c.l.b16 %v3464
  %v3618 = vunpack.c.h.b16 %v3464
  %v3619 = vunpack.c.l.b16 %v3465
  %v3620 = vunpack.c.h.b16 %v3465
  %v3621 = vunpack.c.l.b16 %v3466
  %v3622 = vunpack.c.h.b16 %v3466
  %v3623 = vunpack.c.l.b16 %v3467
  %v3624 = vunpack.c.h.b16 %v3467
  %v3625 = vunpack.c.l.b16 %v3468
  %v3626 = vunpack.c.h.b16 %v3468
  %v3627 = vunpack.c.l.b16 %v3469
  %v3628 = vunpack.c.h.b16 %v3469
  %v3629 = vunpack.c.l.b16 %v3470
  %v3630 = vunpack.c.h.b16 %v3470
  %v3631 = vunpack.c.l.b16 %v3471
  %v3632 = vunpack.c.h.b16 %v3471
  %v3633 = vunpack.c.l.b16 %v3472
  %v3634 = vunpack.c.h.b16 %v3472
  %v3635 = vunpack.c.l.b16 %v3473
  %v3636 = vunpack.c.h.b16 %v3473
  %v3637 = vunpack.c.l.b16 %v3474
  %v3638 = vunpack.c.h.b16 %v3474
  %v3639 = vunpack.c.l.b16 %v3475
  %v3640 = vunpack.c.h.b16 %v3475
  %v3641 = vunpack.c.l.b16 %v3476
  %v3642 = vunpack.c.h.b16 %v3476
  %v3643 = vunpack.c.l.b16 %v3477
  %v3644 = vunpack.c.h.b16 %v3477
  %v3645 = vunpack.c.l.b16 %v3478
  %v3646 = vunpack.c.h.b16 %v3478
  %v3647 = vunpack.c.l.b16 %v3479
  %v3648 = vunpack.c.h.b16 %v3479
  %v3649 = vunpack.c.l.b16 %v3480
  %v3650 = vunpack.c.h.b16 %v3480
  %v3651 = vunpack.c.l.b16 %v3481
  %v3652 = vunpack.c.h.b16 %v3481
  %v3653 = vunpack.c.l.b16 %v3482
  %v3654 = vunpack.c.h.b16 %v3482
  %v3655 = vunpack.c.l.b16 %v3483
  %v3656 = vunpack.c.h.b16 %v3483
  %v3657 = vunpack.c.l.b16 %v3484
  %v3658 = vunpack.c.h.b16 %v3484
  %v3659 = vunpack.c.l.b16 %v3485
  %v3660 = vunpack.c.h.b16 %v3485
  %v3661 = vpack.c.b16 %v3581, %v3577
  %v3662 = vpack.c.b16 %v3582, %v3578
  %v3663 = vpack.c.b16 %v3583, %v3579
  %v3664 = vpack.c.b16 %v3584, %v3580
  %v3665 = vpack.c.b16 %v3589, %v3585
  %v3666 = vpack.c.b16 %v3590, %v3586
  %v3667 = vpack.c.b16 %v3591, %v3587
  %v3668 = vpack.c.b16 %v3592, %v3588
  %v3669 = vpack.c.b16 %v3597, %v3593
  %v3670 = vpack.c.b16 %v3598, %v3594
  %v3671 = vpack.c.b16 %v3599, %v3595
  %v3672 = vpack.c.b16 %v3600, %v3596
  %v3673 = vpack.c.b16 %v3605, %v3601
  %v3674 = vpack.c.b16 %v3606, %v3602
  %v3675 = vpack.c.b16 %v3607, %v3603
  %v3676 = vpack.c.b16 %v3608, %v3604
  %v3677 = vpack.c.b16 %v3613, %v3609
  %v3678 = vpack.c.b16 %v3614, %v3610
  %v3679 = vpack.c.b16 %v3615, %v3611
  %v3680 = vpack.c.b16 %v3616, %v3612
  %v3681 = vpack.c.b16 %v3621, %v3617
  %v3682 = vpack.c.b16 %v3622, %v3618
  %v3683 = vpack.c.b16 %v3623, %v3619
  %v3684 = vpack.c.b16 %v3624, %v3620
  %v3685 = vpack.c.b16 %v3629, %v3625
  %v3686 = vpack.c.b16 %v3630, %v3626
  %v3687 = vpack.c.b16 %v3631, %v3627
  %v3688 = vpack.c.b16 %v3632, %v3628
  %v3689 = vpack.c.b16 %v3637, %v3633
  %v3690 = vpack.c.b16 %v3638, %v3634
  %v3691 = vpack.c.b16 %v3639, %v3635
  %v3692 = vpack.c.b16 %v3640, %v3636
  %v3693 = vpack.c.b16 %v3645, %v3641
  %v3694 = vpack.c.b16 %v3646, %v3642
  %v3695 = vpack.c.b16 %v3647, %v3643
  %v3696 = vpack.c.b16 %v3648, %v3644
  %v3697 = vpack.c.b16 %v3653, %v3649
  %v3698 = vpack.c.b16 %v3654, %v3650
  %v3699 = vpack.c.b16 %v3655, %v3651
  %v3700 = vpack.c.b16 %v3656, %v3652
  %v3701 = vpack.c.b16 %v3657, %v3657
  %v3702 = vpack.c.b16 %v3658, %v3658
  %v3703 = vpack.c.b16 %v3659, %v3659
  %v3704 = vpack.c.b16 %v3660, %v3660
  %v3746 = vsel %vm108, %v3533, 0
  %v3749 = vsel %vm415, %v3701, 0
  %v3752 = vsel %vm415, %v3702, 0
  %v3755 = vsel %vm415, %v3703, 0
  %v3758 = vsel %vm415, %v3704, 0
  %3760 = vmatprep.subr.bf16.mxu0 %v3690
  %3761 = vmatpush1.bf16.msra.mxu0 %v3689
  %3762 = vmatprep.subr.bf16.mxu0 %v3686
  %3763 = vmatpush1.bf16.msra.mxu0 %v3685
  %3764 = vmatprep.subr.bf16.mxu0 %v3682
  %3765 = vmatpush1.bf16.msra.mxu0 %v3681
  %3766 = vmatprep.subr.bf16.mxu0 %v3678
  %3767 = vmatpush1.bf16.msra.mxu0 %v3677
  %3768 = vmatprep.subr.bf16.mxu0 %v3674
  %3769 = vmatpush1.bf16.msra.mxu0 %v3673
  %3770 = vmatprep.subr.bf16.mxu0 %v3670
  %3771 = vmatpush1.bf16.msra.mxu0 %v3669
  %3772 = vmatprep.subr.bf16.mxu0 %v3666
  %3773 = vmatpush1.bf16.msra.mxu0 %v3665
  %3774 = vmatprep.subr.bf16.mxu0 %v3662
  %3775 = vmatpush1.bf16.msra.mxu0 %v3661
  %3776 = vmatprep.subr.bf16.mxu0 0
  %3777 = vmatpush2.bf16.msra.mxu0 0
  %3778 = vmatprep.subr.bf16.mxu0 0
  %3779 = vmatpush2.bf16.msra.mxu0 0
  %3780 = vmatprep.subr.bf16.mxu0 0
  %3781 = vmatpush2.bf16.msra.mxu0 0
  %3782 = vmatprep.subr.bf16.mxu0 0
  %3783 = vmatpush2.bf16.msra.mxu0 0
  %3784 = vmatprep.subr.bf16.mxu0 0
  %3785 = vmatpush2.bf16.msra.mxu0 0
  %3786 = vmatprep.subr.bf16.mxu0 %v3752
  %3787 = vmatpush2.bf16.msra.mxu0 %v3749
  %3788 = vmatprep.subr.bf16.mxu0 %v3698
  %3789 = vmatpush2.bf16.msra.mxu0 %v3697
  %3790 = vmatprep.subr.bf16.mxu0 %v3694
  %3791 = vmatpush2.bf16.msra.mxu0 %v3693
  %3792 = vmatprep.mubr.bf16.mxu0 %v3746
  %3793 = vmatmul.mubr.bf16.gmra.mxu0 %v3532
  %v3794 = vpop.f32.mrf.mxu0
  %v3795 = vadd.f32 0.0, %v3794
  %v3796 = vpop.f32.mrf.mxu0
  %v3797 = vadd.f32 0.0, %v3796
  %v3798 = vpop.f32.mrf.mxu0
  %v3799 = vpop.f32.mrf.mxu0
  %3800 = vdwg.mxu0
  %3801 = vmatprep.subr.bf16.mxu0 %v3692
  %3802 = vmatpush1.bf16.msra.mxu0 %v3691
  %3803 = vmatprep.subr.bf16.mxu0 %v3688
  %3804 = vmatpush1.bf16.msra.mxu0 %v3687
  %3805 = vmatprep.subr.bf16.mxu0 %v3684
  %3806 = vmatpush1.bf16.msra.mxu0 %v3683
  %3807 = vmatprep.subr.bf16.mxu0 %v3680
  %3808 = vmatpush1.bf16.msra.mxu0 %v3679
  %3809 = vmatprep.subr.bf16.mxu0 %v3676
  %3810 = vmatpush1.bf16.msra.mxu0 %v3675
  %3811 = vmatprep.subr.bf16.mxu0 %v3672
  %3812 = vmatpush1.bf16.msra.mxu0 %v3671
  %3813 = vmatprep.subr.bf16.mxu0 %v3668
  %3814 = vmatpush1.bf16.msra.mxu0 %v3667
  %3815 = vmatprep.subr.bf16.mxu0 %v3664
  %3816 = vmatpush1.bf16.msra.mxu0 %v3663
  %3817 = vmatprep.subr.bf16.mxu0 0
  %3818 = vmatpush2.bf16.msra.mxu0 0
  %3819 = vmatprep.subr.bf16.mxu0 0
  %3820 = vmatpush2.bf16.msra.mxu0 0
  %3821 = vmatprep.subr.bf16.mxu0 0
  %3822 = vmatpush2.bf16.msra.mxu0 0
  %3823 = vmatprep.subr.bf16.mxu0 0
  %3824 = vmatpush2.bf16.msra.mxu0 0
  %3825 = vmatprep.subr.bf16.mxu0 0
  %3826 = vmatpush2.bf16.msra.mxu0 0
  %3827 = vmatprep.subr.bf16.mxu0 %v3758
  %3828 = vmatpush2.bf16.msra.mxu0 %v3755
  %3829 = vmatprep.subr.bf16.mxu0 %v3700
  %3830 = vmatpush2.bf16.msra.mxu0 %v3699
  %3831 = vmatprep.subr.bf16.mxu0 %v3696
  %3832 = vmatpush2.bf16.msra.mxu0 %v3695
  %3833 = vmatprep.mubr.bf16.mxu0 %v3746
  %3834 = vmatmul.mubr.bf16.gmra.mxu0 %v3532
  %v3835 = vpop.f32.mrf.mxu0
  %v3836 = vadd.f32 0.0, %v3835
  %v3837 = vpop.f32.mrf.mxu0
  %v3838 = vadd.f32 0.0, %v3837
  %v3839 = vpop.f32.mrf.mxu0
  %v3840 = vpop.f32.mrf.mxu0
  %3841 = vdwg.mxu0
  %v3842 = vadd.f32 %v3296, %v3795
  %v3843 = vadd.f32 %v3297, %v3797
  %v3844 = vadd.f32 %v3298, %v3836
  %v3845 = vadd.f32 %v3299, %v3838
  %s3846 = scalar_lea.vmem %s5, 40
  %v3847 = vld [vmem:[%s3846] sm:$0xff]
  %3849 = vset.pattern.permute.xlu0 0
  %3850 = vperm.xlu0 %3849, %v3847
  %v3851 = vpop.permute.xlu0 %3850
  %v3853 = vmul.f32 %v1110, %v3851
  %v3854 = vmul.f32 %v1111, %v3851
  %v3855 = vmul.f32 %v1112, %v3851
  %v3856 = vmul.f32 %v1113, %v3851
  %v3857 = vmul.f32 %v1114, %v3851
  %v3858 = vmul.f32 %v1115, %v3851
  %v3859 = vmul.f32 %v1116, %v3851
  %v3860 = vmul.f32 %v1117, %v3851
  %v3861 = vmul.f32 %v1118, %v3851
  %v3862 = vmul.f32 %v1119, %v3851
  %v3863 = vmul.f32 %v1120, %v3851
  %v3864 = vmul.f32 %v1121, %v3851
  %v3865 = vmul.f32 %v1122, %v3851
  %v3866 = vmul.f32 %v1123, %v3851
  %v3867 = vmul.f32 %v1124, %v3851
  %v3868 = vmul.f32 %v1125, %v3851
  %v3869 = vrot.slane %v3853, 4
  %v3870 = vadd.f32 %v3853, %v3869
  %v3871 = vrot.slane %v3870, 2
  %v3872 = vadd.f32 %v3870, %v3871
  %v3873 = vrot.slane %v3872, 1
  %v3874 = vadd.f32 %v3872, %v3873
  %v3875 = vsel %vm108, %v3854, 0.0
  %v3876 = vrot.slane %v3875, 4
  %v3877 = vadd.f32 %v3875, %v3876
  %v3878 = vrot.slane %v3877, 2
  %v3879 = vadd.f32 %v3877, %v3878
  %v3880 = vrot.slane %v3879, 1
  %v3881 = vadd.f32 %v3879, %v3880
  %v3882 = vrot.slane %v3855, 4
  %v3883 = vadd.f32 %v3855, %v3882
  %v3884 = vrot.slane %v3883, 2
  %v3885 = vadd.f32 %v3883, %v3884
  %v3886 = vrot.slane %v3885, 1
  %v3887 = vadd.f32 %v3885, %v3886
  %v3888 = vsel %vm108, %v3856, 0.0
  %v3889 = vrot.slane %v3888, 4
  %v3890 = vadd.f32 %v3888, %v3889
  %v3891 = vrot.slane %v3890, 2
  %v3892 = vadd.f32 %v3890, %v3891
  %v3893 = vrot.slane %v3892, 1
  %v3894 = vadd.f32 %v3892, %v3893
  %v3895 = vrot.slane %v3857, 4
  %v3896 = vadd.f32 %v3857, %v3895
  %v3897 = vrot.slane %v3896, 2
  %v3898 = vadd.f32 %v3896, %v3897
  %v3899 = vrot.slane %v3898, 1
  %v3900 = vadd.f32 %v3898, %v3899
  %v3901 = vsel %vm108, %v3858, 0.0
  %v3902 = vrot.slane %v3901, 4
  %v3903 = vadd.f32 %v3901, %v3902
  %v3904 = vrot.slane %v3903, 2
  %v3905 = vadd.f32 %v3903, %v3904
  %v3906 = vrot.slane %v3905, 1
  %v3907 = vadd.f32 %v3905, %v3906
  %v3908 = vrot.slane %v3859, 4
  %v3909 = vadd.f32 %v3859, %v3908
  %v3910 = vrot.slane %v3909, 2
  %v3911 = vadd.f32 %v3909, %v3910
  %v3912 = vrot.slane %v3911, 1
  %v3913 = vadd.f32 %v3911, %v3912
  %v3914 = vsel %vm108, %v3860, 0.0
  %v3915 = vrot.slane %v3914, 4
  %v3916 = vadd.f32 %v3914, %v3915
  %v3917 = vrot.slane %v3916, 2
  %v3918 = vadd.f32 %v3916, %v3917
  %v3919 = vrot.slane %v3918, 1
  %v3920 = vadd.f32 %v3918, %v3919
  %v3921 = vrot.slane %v3861, 4
  %v3922 = vadd.f32 %v3861, %v3921
  %v3923 = vrot.slane %v3922, 2
  %v3924 = vadd.f32 %v3922, %v3923
  %v3925 = vrot.slane %v3924, 1
  %v3926 = vadd.f32 %v3924, %v3925
  %v3927 = vsel %vm108, %v3862, 0.0
  %v3928 = vrot.slane %v3927, 4
  %v3929 = vadd.f32 %v3927, %v3928
  %v3930 = vrot.slane %v3929, 2
  %v3931 = vadd.f32 %v3929, %v3930
  %v3932 = vrot.slane %v3931, 1
  %v3933 = vadd.f32 %v3931, %v3932
  %v3934 = vrot.slane %v3863, 4
  %v3935 = vadd.f32 %v3863, %v3934
  %v3936 = vrot.slane %v3935, 2
  %v3937 = vadd.f32 %v3935, %v3936
  %v3938 = vrot.slane %v3937, 1
  %v3939 = vadd.f32 %v3937, %v3938
  %v3940 = vsel %vm108, %v3864, 0.0
  %v3941 = vrot.slane %v3940, 4
  %v3942 = vadd.f32 %v3940, %v3941
  %v3943 = vrot.slane %v3942, 2
  %v3944 = vadd.f32 %v3942, %v3943
  %v3945 = vrot.slane %v3944, 1
  %v3946 = vadd.f32 %v3944, %v3945
  %v3947 = vrot.slane %v3865, 4
  %v3948 = vadd.f32 %v3865, %v3947
  %v3949 = vrot.slane %v3948, 2
  %v3950 = vadd.f32 %v3948, %v3949
  %v3951 = vrot.slane %v3950, 1
  %v3952 = vadd.f32 %v3950, %v3951
  %v3953 = vsel %vm108, %v3866, 0.0
  %v3954 = vrot.slane %v3953, 4
  %v3955 = vadd.f32 %v3953, %v3954
  %v3956 = vrot.slane %v3955, 2
  %v3957 = vadd.f32 %v3955, %v3956
  %v3958 = vrot.slane %v3957, 1
  %v3959 = vadd.f32 %v3957, %v3958
  %v3960 = vrot.slane %v3867, 4
  %v3961 = vadd.f32 %v3867, %v3960
  %v3962 = vrot.slane %v3961, 2
  %v3963 = vadd.f32 %v3961, %v3962
  %v3964 = vrot.slane %v3963, 1
  %v3965 = vadd.f32 %v3963, %v3964
  %v3966 = vsel %vm108, %v3868, 0.0
  %v3967 = vrot.slane %v3966, 4
  %v3968 = vadd.f32 %v3966, %v3967
  %v3969 = vrot.slane %v3968, 2
  %v3970 = vadd.f32 %v3968, %v3969
  %v3971 = vrot.slane %v3970, 1
  %v3972 = vadd.f32 %v3970, %v3971
  %v3973 = vpack.c.bf16 %v3874, %v3874
  %v3974 = vpack.c.bf16 %v3881, %v3881
  %v3975 = vpack.c.bf16 %v3887, %v3887
  %v3976 = vpack.c.bf16 %v3894, %v3894
  %v3977 = vpack.c.bf16 %v3900, %v3900
  %v3978 = vpack.c.bf16 %v3907, %v3907
  %v3979 = vpack.c.bf16 %v3913, %v3913
  %v3980 = vpack.c.bf16 %v3920, %v3920
  %v3981 = vpack.c.bf16 %v3926, %v3926
  %v3982 = vpack.c.bf16 %v3933, %v3933
  %v3983 = vpack.c.bf16 %v3939, %v3939
  %v3984 = vpack.c.bf16 %v3946, %v3946
  %v3985 = vpack.c.bf16 %v3952, %v3952
  %v3986 = vpack.c.bf16 %v3959, %v3959
  %v3987 = vpack.c.bf16 %v3965, %v3965
  %v3988 = vpack.c.bf16 %v3972, %v3972
  %s3989 = scalar_lea.vmem %s6, 1680
  %v3990 = vld [vmem:[%s3989] sm:$0xff]
  %v3991 = vld [vmem:[%s3989 + $0x8] sm:$0xff]
  %v3992 = vld [vmem:[%s3989 + $0x10] sm:$0xff]
  %v3993 = vld [vmem:[%s3989 + $0x18] sm:$0xff]
  %v3994 = vld [vmem:[%s3989 + $0x20] sm:$0xff]
  %v3995 = vld [vmem:[%s3989 + $0x28] sm:$0xff]
  %v3996 = vld [vmem:[%s3989 + $0x30] sm:$0xff]
  %v3997 = vld [vmem:[%s3989 + $0x38] sm:$0xff]
  %v3998 = vld [vmem:[%s3989 + $0x40] sm:$0xff]
  %v3999 = vld [vmem:[%s3989 + $0x48] sm:$0xff]
  %v4000 = vld [vmem:[%s3989 + $0x50] sm:$0xff]
  %v4001 = vld [vmem:[%s3989 + $0x58] sm:$0xff]
  %v4002 = vld [vmem:[%s3989 + $0x60] sm:$0xff]
  %v4003 = vld [vmem:[%s3989 + $0x68] sm:$0xff]
  %v4004 = vld [vmem:[%s3989 + $0x70] sm:$0xff]
  %v4005 = vld [vmem:[%s3989 + $0x78] sm:$0xff]
  %v4006 = vld [vmem:[%s3989 + $0x80] sm:$0xff]
  %v4007 = vld [vmem:[%s3989 + $0x88] sm:$0xff]
  %v4008 = vld [vmem:[%s3989 + $0x90] sm:$0xff]
  %v4009 = vld [vmem:[%s3989 + $0x98] sm:$0xff]
  %v4010 = vld [vmem:[%s3989 + $0xa0] sm:$0xff]
  %v4011 = vld [vmem:[%s3989 + $0xa8] sm:$0xff]
  %v4012 = vld [vmem:[%s3989 + $0xb0] sm:$0xff]
  %v4013 = vld [vmem:[%s3989 + $0xb8] sm:$0xff]
  %v4014 = vld [vmem:[%s3989 + $0xc0] sm:$0xff]
  %v4015 = vld [vmem:[%s3989 + $0xc8] sm:$0xff]
  %v4016 = vld [vmem:[%s3989 + $0xd0] sm:$0xff]
  %v4017 = vld [vmem:[%s3989 + $0xd8] sm:$0xff]
  %v4018 = vld [vmem:[%s3989 + $0xe0] sm:$0xff]
  %v4019 = vld [vmem:[%s3989 + $0xe8] sm:$0xff]
  %v4020 = vld [vmem:[%s3989 + $0xf0] sm:$0xff]
  %v4021 = vld [vmem:[%s3989 + $0xf8] sm:$0xff]
  %v4022 = vld [vmem:[%s3989 + $0x100] sm:$0xff]
  %v4023 = vld [vmem:[%s3989 + $0x108] sm:$0xff]
  %v4024 = vld [vmem:[%s3989 + $0x110] sm:$0xff]
  %v4025 = vld [vmem:[%s3989 + $0x118] sm:$0xff]
  %v4026 = vld [vmem:[%s3989 + $0x120] sm:$0xff]
  %v4027 = vld [vmem:[%s3989 + $0x128] sm:$0xff]
  %v4028 = vld [vmem:[%s3989 + $0x130] sm:$0xff]
  %v4029 = vld [vmem:[%s3989 + $0x138] sm:$0xff]
  %v4030 = vld [vmem:[%s3989 + $0x140] sm:$0xff]
  %v4031 = vld [vmem:[%s3989 + $0x148] sm:$0xff]
  %v4048 = vunpack.c.l.b16 %v3973
  %v4049 = vunpack.c.l.b16 %v3974
  %v4050 = vunpack.c.l.b16 %v3975
  %v4051 = vunpack.c.l.b16 %v3976
  %v4052 = vunpack.c.l.b16 %v3977
  %v4053 = vunpack.c.l.b16 %v3978
  %v4054 = vunpack.c.l.b16 %v3979
  %v4055 = vunpack.c.l.b16 %v3980
  %v4056 = vunpack.c.l.b16 %v3981
  %v4057 = vunpack.c.l.b16 %v3982
  %v4058 = vunpack.c.l.b16 %v3983
  %v4059 = vunpack.c.l.b16 %v3984
  %v4060 = vunpack.c.l.b16 %v3985
  %v4061 = vunpack.c.l.b16 %v3986
  %v4062 = vunpack.c.l.b16 %v3987
  %v4063 = vunpack.c.l.b16 %v3988
  %v4064 = vsel %vm283, %v4050, %v4048
  %v4065 = vsel %vm285, %v4052, %v4064
  %v4066 = vsel %vm287, %v4054, %v4065
  %v4067 = vsel %vm289, %v4056, %v4066
  %v4068 = vsel %vm291, %v4058, %v4067
  %v4069 = vsel %vm293, %v4060, %v4068
  %v4070 = vsel %vm295, %v4062, %v4069
  %v4071 = vsel %vm283, %v4051, %v4049
  %v4072 = vsel %vm285, %v4053, %v4071
  %v4073 = vsel %vm287, %v4055, %v4072
  %v4074 = vsel %vm289, %v4057, %v4073
  %v4075 = vsel %vm291, %v4059, %v4074
  %v4076 = vsel %vm293, %v4061, %v4075
  %v4077 = vsel %vm295, %v4063, %v4076
  %v4078 = vpack.c.b16 %v4070, %v4070
  %v4079 = vpack.c.b16 %v4077, %v4077
  %v4123 = vunpack.c.l.b16 %v3990
  %v4124 = vunpack.c.h.b16 %v3990
  %v4125 = vunpack.c.l.b16 %v3991
  %v4126 = vunpack.c.h.b16 %v3991
  %v4127 = vunpack.c.l.b16 %v3992
  %v4128 = vunpack.c.h.b16 %v3992
  %v4129 = vunpack.c.l.b16 %v3993
  %v4130 = vunpack.c.h.b16 %v3993
  %v4131 = vunpack.c.l.b16 %v3994
  %v4132 = vunpack.c.h.b16 %v3994
  %v4133 = vunpack.c.l.b16 %v3995
  %v4134 = vunpack.c.h.b16 %v3995
  %v4135 = vunpack.c.l.b16 %v3996
  %v4136 = vunpack.c.h.b16 %v3996
  %v4137 = vunpack.c.l.b16 %v3997
  %v4138 = vunpack.c.h.b16 %v3997
  %v4139 = vunpack.c.l.b16 %v3998
  %v4140 = vunpack.c.h.b16 %v3998
  %v4141 = vunpack.c.l.b16 %v3999
  %v4142 = vunpack.c.h.b16 %v3999
  %v4143 = vunpack.c.l.b16 %v4000
  %v4144 = vunpack.c.h.b16 %v4000
  %v4145 = vunpack.c.l.b16 %v4001
  %v4146 = vunpack.c.h.b16 %v4001
  %v4147 = vunpack.c.l.b16 %v4002
  %v4148 = vunpack.c.h.b16 %v4002
  %v4149 = vunpack.c.l.b16 %v4003
  %v4150 = vunpack.c.h.b16 %v4003
  %v4151 = vunpack.c.l.b16 %v4004
  %v4152 = vunpack.c.h.b16 %v4004
  %v4153 = vunpack.c.l.b16 %v4005
  %v4154 = vunpack.c.h.b16 %v4005
  %v4155 = vunpack.c.l.b16 %v4006
  %v4156 = vunpack.c.h.b16 %v4006
  %v4157 = vunpack.c.l.b16 %v4007
  %v4158 = vunpack.c.h.b16 %v4007
  %v4159 = vunpack.c.l.b16 %v4008
  %v4160 = vunpack.c.h.b16 %v4008
  %v4161 = vunpack.c.l.b16 %v4009
  %v4162 = vunpack.c.h.b16 %v4009
  %v4163 = vunpack.c.l.b16 %v4010
  %v4164 = vunpack.c.h.b16 %v4010
  %v4165 = vunpack.c.l.b16 %v4011
  %v4166 = vunpack.c.h.b16 %v4011
  %v4167 = vunpack.c.l.b16 %v4012
  %v4168 = vunpack.c.h.b16 %v4012
  %v4169 = vunpack.c.l.b16 %v4013
  %v4170 = vunpack.c.h.b16 %v4013
  %v4171 = vunpack.c.l.b16 %v4014
  %v4172 = vunpack.c.h.b16 %v4014
  %v4173 = vunpack.c.l.b16 %v4015
  %v4174 = vunpack.c.h.b16 %v4015
  %v4175 = vunpack.c.l.b16 %v4016
  %v4176 = vunpack.c.h.b16 %v4016
  %v4177 = vunpack.c.l.b16 %v4017
  %v4178 = vunpack.c.h.b16 %v4017
  %v4179 = vunpack.c.l.b16 %v4018
  %v4180 = vunpack.c.h.b16 %v4018
  %v4181 = vunpack.c.l.b16 %v4019
  %v4182 = vunpack.c.h.b16 %v4019
  %v4183 = vunpack.c.l.b16 %v4020
  %v4184 = vunpack.c.h.b16 %v4020
  %v4185 = vunpack.c.l.b16 %v4021
  %v4186 = vunpack.c.h.b16 %v4021
  %v4187 = vunpack.c.l.b16 %v4022
  %v4188 = vunpack.c.h.b16 %v4022
  %v4189 = vunpack.c.l.b16 %v4023
  %v4190 = vunpack.c.h.b16 %v4023
  %v4191 = vunpack.c.l.b16 %v4024
  %v4192 = vunpack.c.h.b16 %v4024
  %v4193 = vunpack.c.l.b16 %v4025
  %v4194 = vunpack.c.h.b16 %v4025
  %v4195 = vunpack.c.l.b16 %v4026
  %v4196 = vunpack.c.h.b16 %v4026
  %v4197 = vunpack.c.l.b16 %v4027
  %v4198 = vunpack.c.h.b16 %v4027
  %v4199 = vunpack.c.l.b16 %v4028
  %v4200 = vunpack.c.h.b16 %v4028
  %v4201 = vunpack.c.l.b16 %v4029
  %v4202 = vunpack.c.h.b16 %v4029
  %v4203 = vunpack.c.l.b16 %v4030
  %v4204 = vunpack.c.h.b16 %v4030
  %v4205 = vunpack.c.l.b16 %v4031
  %v4206 = vunpack.c.h.b16 %v4031
  %v4207 = vpack.c.b16 %v4127, %v4123
  %v4208 = vpack.c.b16 %v4128, %v4124
  %v4209 = vpack.c.b16 %v4129, %v4125
  %v4210 = vpack.c.b16 %v4130, %v4126
  %v4211 = vpack.c.b16 %v4135, %v4131
  %v4212 = vpack.c.b16 %v4136, %v4132
  %v4213 = vpack.c.b16 %v4137, %v4133
  %v4214 = vpack.c.b16 %v4138, %v4134
  %v4215 = vpack.c.b16 %v4143, %v4139
  %v4216 = vpack.c.b16 %v4144, %v4140
  %v4217 = vpack.c.b16 %v4145, %v4141
  %v4218 = vpack.c.b16 %v4146, %v4142
  %v4219 = vpack.c.b16 %v4151, %v4147
  %v4220 = vpack.c.b16 %v4152, %v4148
  %v4221 = vpack.c.b16 %v4153, %v4149
  %v4222 = vpack.c.b16 %v4154, %v4150
  %v4223 = vpack.c.b16 %v4159, %v4155
  %v4224 = vpack.c.b16 %v4160, %v4156
  %v4225 = vpack.c.b16 %v4161, %v4157
  %v4226 = vpack.c.b16 %v4162, %v4158
  %v4227 = vpack.c.b16 %v4167, %v4163
  %v4228 = vpack.c.b16 %v4168, %v4164
  %v4229 = vpack.c.b16 %v4169, %v4165
  %v4230 = vpack.c.b16 %v4170, %v4166
  %v4231 = vpack.c.b16 %v4175, %v4171
  %v4232 = vpack.c.b16 %v4176, %v4172
  %v4233 = vpack.c.b16 %v4177, %v4173
  %v4234 = vpack.c.b16 %v4178, %v4174
  %v4235 = vpack.c.b16 %v4183, %v4179
  %v4236 = vpack.c.b16 %v4184, %v4180
  %v4237 = vpack.c.b16 %v4185, %v4181
  %v4238 = vpack.c.b16 %v4186, %v4182
  %v4239 = vpack.c.b16 %v4191, %v4187
  %v4240 = vpack.c.b16 %v4192, %v4188
  %v4241 = vpack.c.b16 %v4193, %v4189
  %v4242 = vpack.c.b16 %v4194, %v4190
  %v4243 = vpack.c.b16 %v4199, %v4195
  %v4244 = vpack.c.b16 %v4200, %v4196
  %v4245 = vpack.c.b16 %v4201, %v4197
  %v4246 = vpack.c.b16 %v4202, %v4198
  %v4247 = vpack.c.b16 %v4203, %v4203
  %v4248 = vpack.c.b16 %v4204, %v4204
  %v4249 = vpack.c.b16 %v4205, %v4205
  %v4250 = vpack.c.b16 %v4206, %v4206
  %v4292 = vsel %vm108, %v4079, 0
  %v4295 = vsel %vm415, %v4247, 0
  %v4298 = vsel %vm415, %v4248, 0
  %v4301 = vsel %vm415, %v4249, 0
  %v4304 = vsel %vm415, %v4250, 0
  %4306 = vmatprep.subr.bf16.mxu0 %v4236
  %4307 = vmatpush1.bf16.msra.mxu0 %v4235
  %4308 = vmatprep.subr.bf16.mxu0 %v4232
  %4309 = vmatpush1.bf16.msra.mxu0 %v4231
  %4310 = vmatprep.subr.bf16.mxu0 %v4228
  %4311 = vmatpush1.bf16.msra.mxu0 %v4227
  %4312 = vmatprep.subr.bf16.mxu0 %v4224
  %4313 = vmatpush1.bf16.msra.mxu0 %v4223
  %4314 = vmatprep.subr.bf16.mxu0 %v4220
  %4315 = vmatpush1.bf16.msra.mxu0 %v4219
  %4316 = vmatprep.subr.bf16.mxu0 %v4216
  %4317 = vmatpush1.bf16.msra.mxu0 %v4215
  %4318 = vmatprep.subr.bf16.mxu0 %v4212
  %4319 = vmatpush1.bf16.msra.mxu0 %v4211
  %4320 = vmatprep.subr.bf16.mxu0 %v4208
  %4321 = vmatpush1.bf16.msra.mxu0 %v4207
  %4322 = vmatprep.subr.bf16.mxu0 0
  %4323 = vmatpush2.bf16.msra.mxu0 0
  %4324 = vmatprep.subr.bf16.mxu0 0
  %4325 = vmatpush2.bf16.msra.mxu0 0
  %4326 = vmatprep.subr.bf16.mxu0 0
  %4327 = vmatpush2.bf16.msra.mxu0 0
  %4328 = vmatprep.subr.bf16.mxu0 0
  %4329 = vmatpush2.bf16.msra.mxu0 0
  %4330 = vmatprep.subr.bf16.mxu0 0
  %4331 = vmatpush2.bf16.msra.mxu0 0
  %4332 = vmatprep.subr.bf16.mxu0 %v4298
  %4333 = vmatpush2.bf16.msra.mxu0 %v4295
  %4334 = vmatprep.subr.bf16.mxu0 %v4244
  %4335 = vmatpush2.bf16.msra.mxu0 %v4243
  %4336 = vmatprep.subr.bf16.mxu0 %v4240
  %4337 = vmatpush2.bf16.msra.mxu0 %v4239
  %4338 = vmatprep.mubr.bf16.mxu0 %v4292
  %4339 = vmatmul.mubr.bf16.gmra.mxu0 %v4078
  %v4340 = vpop.f32.mrf.mxu0
  %v4341 = vadd.f32 0.0, %v4340
  %v4342 = vpop.f32.mrf.mxu0
  %v4343 = vadd.f32 0.0, %v4342
  %v4344 = vpop.f32.mrf.mxu0
  %v4345 = vpop.f32.mrf.mxu0
  %4346 = vdwg.mxu0
  %4347 = vmatprep.subr.bf16.mxu0 %v4238
  %4348 = vmatpush1.bf16.msra.mxu0 %v4237
  %4349 = vmatprep.subr.bf16.mxu0 %v4234
  %4350 = vmatpush1.bf16.msra.mxu0 %v4233
  %4351 = vmatprep.subr.bf16.mxu0 %v4230
  %4352 = vmatpush1.bf16.msra.mxu0 %v4229
  %4353 = vmatprep.subr.bf16.mxu0 %v4226
  %4354 = vmatpush1.bf16.msra.mxu0 %v4225
  %4355 = vmatprep.subr.bf16.mxu0 %v4222
  %4356 = vmatpush1.bf16.msra.mxu0 %v4221
  %4357 = vmatprep.subr.bf16.mxu0 %v4218
  %4358 = vmatpush1.bf16.msra.mxu0 %v4217
  %4359 = vmatprep.subr.bf16.mxu0 %v4214
  %4360 = vmatpush1.bf16.msra.mxu0 %v4213
  %4361 = vmatprep.subr.bf16.mxu0 %v4210
  %4362 = vmatpush1.bf16.msra.mxu0 %v4209
  %4363 = vmatprep.subr.bf16.mxu0 0
  %4364 = vmatpush2.bf16.msra.mxu0 0
  %4365 = vmatprep.subr.bf16.mxu0 0
  %4366 = vmatpush2.bf16.msra.mxu0 0
  %4367 = vmatprep.subr.bf16.mxu0 0
  %4368 = vmatpush2.bf16.msra.mxu0 0
  %4369 = vmatprep.subr.bf16.mxu0 0
  %4370 = vmatpush2.bf16.msra.mxu0 0
  %4371 = vmatprep.subr.bf16.mxu0 0
  %4372 = vmatpush2.bf16.msra.mxu0 0
  %4373 = vmatprep.subr.bf16.mxu0 %v4304
  %4374 = vmatpush2.bf16.msra.mxu0 %v4301
  %4375 = vmatprep.subr.bf16.mxu0 %v4246
  %4376 = vmatpush2.bf16.msra.mxu0 %v4245
  %4377 = vmatprep.subr.bf16.mxu0 %v4242
  %4378 = vmatpush2.bf16.msra.mxu0 %v4241
  %4379 = vmatprep.mubr.bf16.mxu0 %v4292
  %4380 = vmatmul.mubr.bf16.gmra.mxu0 %v4078
  %v4381 = vpop.f32.mrf.mxu0
  %v4382 = vadd.f32 0.0, %v4381
  %v4383 = vpop.f32.mrf.mxu0
  %v4384 = vadd.f32 0.0, %v4383
  %v4385 = vpop.f32.mrf.mxu0
  %v4386 = vpop.f32.mrf.mxu0
  %4387 = vdwg.mxu0
  %v4388 = vadd.f32 %v3842, %v4341
  %v4389 = vadd.f32 %v3843, %v4343
  %v4390 = vadd.f32 %v3844, %v4382
  %v4391 = vadd.f32 %v3845, %v4384
  %s4392 = scalar_lea.vmem %s5, 48
  %v4393 = vld [vmem:[%s4392] sm:$0xff]
  %4395 = vset.pattern.permute.xlu0 0
  %4396 = vperm.xlu0 %4395, %v4393
  %v4397 = vpop.permute.xlu0 %4396
  %v4399 = vmul.f32 %v1110, %v4397
  %v4400 = vmul.f32 %v1111, %v4397
  %v4401 = vmul.f32 %v1112, %v4397
  %v4402 = vmul.f32 %v1113, %v4397
  %v4403 = vmul.f32 %v1114, %v4397
  %v4404 = vmul.f32 %v1115, %v4397
  %v4405 = vmul.f32 %v1116, %v4397
  %v4406 = vmul.f32 %v1117, %v4397
  %v4407 = vmul.f32 %v1118, %v4397
  %v4408 = vmul.f32 %v1119, %v4397
  %v4409 = vmul.f32 %v1120, %v4397
  %v4410 = vmul.f32 %v1121, %v4397
  %v4411 = vmul.f32 %v1122, %v4397
  %v4412 = vmul.f32 %v1123, %v4397
  %v4413 = vmul.f32 %v1124, %v4397
  %v4414 = vmul.f32 %v1125, %v4397
  %v4415 = vrot.slane %v4399, 4
  %v4416 = vadd.f32 %v4399, %v4415
  %v4417 = vrot.slane %v4416, 2
  %v4418 = vadd.f32 %v4416, %v4417
  %v4419 = vrot.slane %v4418, 1
  %v4420 = vadd.f32 %v4418, %v4419
  %v4421 = vsel %vm108, %v4400, 0.0
  %v4422 = vrot.slane %v4421, 4
  %v4423 = vadd.f32 %v4421, %v4422
  %v4424 = vrot.slane %v4423, 2
  %v4425 = vadd.f32 %v4423, %v4424
  %v4426 = vrot.slane %v4425, 1
  %v4427 = vadd.f32 %v4425, %v4426
  %v4428 = vrot.slane %v4401, 4
  %v4429 = vadd.f32 %v4401, %v4428
  %v4430 = vrot.slane %v4429, 2
  %v4431 = vadd.f32 %v4429, %v4430
  %v4432 = vrot.slane %v4431, 1
  %v4433 = vadd.f32 %v4431, %v4432
  %v4434 = vsel %vm108, %v4402, 0.0
  %v4435 = vrot.slane %v4434, 4
  %v4436 = vadd.f32 %v4434, %v4435
  %v4437 = vrot.slane %v4436, 2
  %v4438 = vadd.f32 %v4436, %v4437
  %v4439 = vrot.slane %v4438, 1
  %v4440 = vadd.f32 %v4438, %v4439
  %v4441 = vrot.slane %v4403, 4
  %v4442 = vadd.f32 %v4403, %v4441
  %v4443 = vrot.slane %v4442, 2
  %v4444 = vadd.f32 %v4442, %v4443
  %v4445 = vrot.slane %v4444, 1
  %v4446 = vadd.f32 %v4444, %v4445
  %v4447 = vsel %vm108, %v4404, 0.0
  %v4448 = vrot.slane %v4447, 4
  %v4449 = vadd.f32 %v4447, %v4448
  %v4450 = vrot.slane %v4449, 2
  %v4451 = vadd.f32 %v4449, %v4450
  %v4452 = vrot.slane %v4451, 1
  %v4453 = vadd.f32 %v4451, %v4452
  %v4454 = vrot.slane %v4405, 4
  %v4455 = vadd.f32 %v4405, %v4454
  %v4456 = vrot.slane %v4455, 2
  %v4457 = vadd.f32 %v4455, %v4456
  %v4458 = vrot.slane %v4457, 1
  %v4459 = vadd.f32 %v4457, %v4458
  %v4460 = vsel %vm108, %v4406, 0.0
  %v4461 = vrot.slane %v4460, 4
  %v4462 = vadd.f32 %v4460, %v4461
  %v4463 = vrot.slane %v4462, 2
  %v4464 = vadd.f32 %v4462, %v4463
  %v4465 = vrot.slane %v4464, 1
  %v4466 = vadd.f32 %v4464, %v4465
  %v4467 = vrot.slane %v4407, 4
  %v4468 = vadd.f32 %v4407, %v4467
  %v4469 = vrot.slane %v4468, 2
  %v4470 = vadd.f32 %v4468, %v4469
  %v4471 = vrot.slane %v4470, 1
  %v4472 = vadd.f32 %v4470, %v4471
  %v4473 = vsel %vm108, %v4408, 0.0
  %v4474 = vrot.slane %v4473, 4
  %v4475 = vadd.f32 %v4473, %v4474
  %v4476 = vrot.slane %v4475, 2
  %v4477 = vadd.f32 %v4475, %v4476
  %v4478 = vrot.slane %v4477, 1
  %v4479 = vadd.f32 %v4477, %v4478
  %v4480 = vrot.slane %v4409, 4
  %v4481 = vadd.f32 %v4409, %v4480
  %v4482 = vrot.slane %v4481, 2
  %v4483 = vadd.f32 %v4481, %v4482
  %v4484 = vrot.slane %v4483, 1
  %v4485 = vadd.f32 %v4483, %v4484
  %v4486 = vsel %vm108, %v4410, 0.0
  %v4487 = vrot.slane %v4486, 4
  %v4488 = vadd.f32 %v4486, %v4487
  %v4489 = vrot.slane %v4488, 2
  %v4490 = vadd.f32 %v4488, %v4489
  %v4491 = vrot.slane %v4490, 1
  %v4492 = vadd.f32 %v4490, %v4491
  %v4493 = vrot.slane %v4411, 4
  %v4494 = vadd.f32 %v4411, %v4493
  %v4495 = vrot.slane %v4494, 2
  %v4496 = vadd.f32 %v4494, %v4495
  %v4497 = vrot.slane %v4496, 1
  %v4498 = vadd.f32 %v4496, %v4497
  %v4499 = vsel %vm108, %v4412, 0.0
  %v4500 = vrot.slane %v4499, 4
  %v4501 = vadd.f32 %v4499, %v4500
  %v4502 = vrot.slane %v4501, 2
  %v4503 = vadd.f32 %v4501, %v4502
  %v4504 = vrot.slane %v4503, 1
  %v4505 = vadd.f32 %v4503, %v4504
  %v4506 = vrot.slane %v4413, 4
  %v4507 = vadd.f32 %v4413, %v4506
  %v4508 = vrot.slane %v4507, 2
  %v4509 = vadd.f32 %v4507, %v4508
  %v4510 = vrot.slane %v4509, 1
  %v4511 = vadd.f32 %v4509, %v4510
  %v4512 = vsel %vm108, %v4414, 0.0
  %v4513 = vrot.slane %v4512, 4
  %v4514 = vadd.f32 %v4512, %v4513
  %v4515 = vrot.slane %v4514, 2
  %v4516 = vadd.f32 %v4514, %v4515
  %v4517 = vrot.slane %v4516, 1
  %v4518 = vadd.f32 %v4516, %v4517
  %v4519 = vpack.c.bf16 %v4420, %v4420
  %v4520 = vpack.c.bf16 %v4427, %v4427
  %v4521 = vpack.c.bf16 %v4433, %v4433
  %v4522 = vpack.c.bf16 %v4440, %v4440
  %v4523 = vpack.c.bf16 %v4446, %v4446
  %v4524 = vpack.c.bf16 %v4453, %v4453
  %v4525 = vpack.c.bf16 %v4459, %v4459
  %v4526 = vpack.c.bf16 %v4466, %v4466
  %v4527 = vpack.c.bf16 %v4472, %v4472
  %v4528 = vpack.c.bf16 %v4479, %v4479
  %v4529 = vpack.c.bf16 %v4485, %v4485
  %v4530 = vpack.c.bf16 %v4492, %v4492
  %v4531 = vpack.c.bf16 %v4498, %v4498
  %v4532 = vpack.c.bf16 %v4505, %v4505
  %v4533 = vpack.c.bf16 %v4511, %v4511
  %v4534 = vpack.c.bf16 %v4518, %v4518
  %s4535 = scalar_lea.vmem %s6, 2016
  %v4536 = vld [vmem:[%s4535] sm:$0xff]
  %v4537 = vld [vmem:[%s4535 + $0x8] sm:$0xff]
  %v4538 = vld [vmem:[%s4535 + $0x10] sm:$0xff]
  %v4539 = vld [vmem:[%s4535 + $0x18] sm:$0xff]
  %v4540 = vld [vmem:[%s4535 + $0x20] sm:$0xff]
  %v4541 = vld [vmem:[%s4535 + $0x28] sm:$0xff]
  %v4542 = vld [vmem:[%s4535 + $0x30] sm:$0xff]
  %v4543 = vld [vmem:[%s4535 + $0x38] sm:$0xff]
  %v4544 = vld [vmem:[%s4535 + $0x40] sm:$0xff]
  %v4545 = vld [vmem:[%s4535 + $0x48] sm:$0xff]
  %v4546 = vld [vmem:[%s4535 + $0x50] sm:$0xff]
  %v4547 = vld [vmem:[%s4535 + $0x58] sm:$0xff]
  %v4548 = vld [vmem:[%s4535 + $0x60] sm:$0xff]
  %v4549 = vld [vmem:[%s4535 + $0x68] sm:$0xff]
  %v4550 = vld [vmem:[%s4535 + $0x70] sm:$0xff]
  %v4551 = vld [vmem:[%s4535 + $0x78] sm:$0xff]
  %v4552 = vld [vmem:[%s4535 + $0x80] sm:$0xff]
  %v4553 = vld [vmem:[%s4535 + $0x88] sm:$0xff]
  %v4554 = vld [vmem:[%s4535 + $0x90] sm:$0xff]
  %v4555 = vld [vmem:[%s4535 + $0x98] sm:$0xff]
  %v4556 = vld [vmem:[%s4535 + $0xa0] sm:$0xff]
  %v4557 = vld [vmem:[%s4535 + $0xa8] sm:$0xff]
  %v4558 = vld [vmem:[%s4535 + $0xb0] sm:$0xff]
  %v4559 = vld [vmem:[%s4535 + $0xb8] sm:$0xff]
  %v4560 = vld [vmem:[%s4535 + $0xc0] sm:$0xff]
  %v4561 = vld [vmem:[%s4535 + $0xc8] sm:$0xff]
  %v4562 = vld [vmem:[%s4535 + $0xd0] sm:$0xff]
  %v4563 = vld [vmem:[%s4535 + $0xd8] sm:$0xff]
  %v4564 = vld [vmem:[%s4535 + $0xe0] sm:$0xff]
  %v4565 = vld [vmem:[%s4535 + $0xe8] sm:$0xff]
  %v4566 = vld [vmem:[%s4535 + $0xf0] sm:$0xff]
  %v4567 = vld [vmem:[%s4535 + $0xf8] sm:$0xff]
  %v4568 = vld [vmem:[%s4535 + $0x100] sm:$0xff]
  %v4569 = vld [vmem:[%s4535 + $0x108] sm:$0xff]
  %v4570 = vld [vmem:[%s4535 + $0x110] sm:$0xff]
  %v4571 = vld [vmem:[%s4535 + $0x118] sm:$0xff]
  %v4572 = vld [vmem:[%s4535 + $0x120] sm:$0xff]
  %v4573 = vld [vmem:[%s4535 + $0x128] sm:$0xff]
  %v4574 = vld [vmem:[%s4535 + $0x130] sm:$0xff]
  %v4575 = vld [vmem:[%s4535 + $0x138] sm:$0xff]
  %v4576 = vld [vmem:[%s4535 + $0x140] sm:$0xff]
  %v4577 = vld [vmem:[%s4535 + $0x148] sm:$0xff]
  %v4594 = vunpack.c.l.b16 %v4519
  %v4595 = vunpack.c.l.b16 %v4520
  %v4596 = vunpack.c.l.b16 %v4521
  %v4597 = vunpack.c.l.b16 %v4522
  %v4598 = vunpack.c.l.b16 %v4523
  %v4599 = vunpack.c.l.b16 %v4524
  %v4600 = vunpack.c.l.b16 %v4525
  %v4601 = vunpack.c.l.b16 %v4526
  %v4602 = vunpack.c.l.b16 %v4527
  %v4603 = vunpack.c.l.b16 %v4528
  %v4604 = vunpack.c.l.b16 %v4529
  %v4605 = vunpack.c.l.b16 %v4530
  %v4606 = vunpack.c.l.b16 %v4531
  %v4607 = vunpack.c.l.b16 %v4532
  %v4608 = vunpack.c.l.b16 %v4533
  %v4609 = vunpack.c.l.b16 %v4534
  %v4610 = vsel %vm283, %v4596, %v4594
  %v4611 = vsel %vm285, %v4598, %v4610
  %v4612 = vsel %vm287, %v4600, %v4611
  %v4613 = vsel %vm289, %v4602, %v4612
  %v4614 = vsel %vm291, %v4604, %v4613
  %v4615 = vsel %vm293, %v4606, %v4614
  %v4616 = vsel %vm295, %v4608, %v4615
  %v4617 = vsel %vm283, %v4597, %v4595
  %v4618 = vsel %vm285, %v4599, %v4617
  %v4619 = vsel %vm287, %v4601, %v4618
  %v4620 = vsel %vm289, %v4603, %v4619
  %v4621 = vsel %vm291, %v4605, %v4620
  %v4622 = vsel %vm293, %v4607, %v4621
  %v4623 = vsel %vm295, %v4609, %v4622
  %v4624 = vpack.c.b16 %v4616, %v4616
  %v4625 = vpack.c.b16 %v4623, %v4623
  %v4669 = vunpack.c.l.b16 %v4536
  %v4670 = vunpack.c.h.b16 %v4536
  %v4671 = vunpack.c.l.b16 %v4537
  %v4672 = vunpack.c.h.b16 %v4537
  %v4673 = vunpack.c.l.b16 %v4538
  %v4674 = vunpack.c.h.b16 %v4538
  %v4675 = vunpack.c.l.b16 %v4539
  %v4676 = vunpack.c.h.b16 %v4539
  %v4677 = vunpack.c.l.b16 %v4540
  %v4678 = vunpack.c.h.b16 %v4540
  %v4679 = vunpack.c.l.b16 %v4541
  %v4680 = vunpack.c.h.b16 %v4541
  %v4681 = vunpack.c.l.b16 %v4542
  %v4682 = vunpack.c.h.b16 %v4542
  %v4683 = vunpack.c.l.b16 %v4543
  %v4684 = vunpack.c.h.b16 %v4543
  %v4685 = vunpack.c.l.b16 %v4544
  %v4686 = vunpack.c.h.b16 %v4544
  %v4687 = vunpack.c.l.b16 %v4545
  %v4688 = vunpack.c.h.b16 %v4545
  %v4689 = vunpack.c.l.b16 %v4546
  %v4690 = vunpack.c.h.b16 %v4546
  %v4691 = vunpack.c.l.b16 %v4547
  %v4692 = vunpack.c.h.b16 %v4547
  %v4693 = vunpack.c.l.b16 %v4548
  %v4694 = vunpack.c.h.b16 %v4548
  %v4695 = vunpack.c.l.b16 %v4549
  %v4696 = vunpack.c.h.b16 %v4549
  %v4697 = vunpack.c.l.b16 %v4550
  %v4698 = vunpack.c.h.b16 %v4550
  %v4699 = vunpack.c.l.b16 %v4551
  %v4700 = vunpack.c.h.b16 %v4551
  %v4701 = vunpack.c.l.b16 %v4552
  %v4702 = vunpack.c.h.b16 %v4552
  %v4703 = vunpack.c.l.b16 %v4553
  %v4704 = vunpack.c.h.b16 %v4553
  %v4705 = vunpack.c.l.b16 %v4554
  %v4706 = vunpack.c.h.b16 %v4554
  %v4707 = vunpack.c.l.b16 %v4555
  %v4708 = vunpack.c.h.b16 %v4555
  %v4709 = vunpack.c.l.b16 %v4556
  %v4710 = vunpack.c.h.b16 %v4556
  %v4711 = vunpack.c.l.b16 %v4557
  %v4712 = vunpack.c.h.b16 %v4557
  %v4713 = vunpack.c.l.b16 %v4558
  %v4714 = vunpack.c.h.b16 %v4558
  %v4715 = vunpack.c.l.b16 %v4559
  %v4716 = vunpack.c.h.b16 %v4559
  %v4717 = vunpack.c.l.b16 %v4560
  %v4718 = vunpack.c.h.b16 %v4560
  %v4719 = vunpack.c.l.b16 %v4561
  %v4720 = vunpack.c.h.b16 %v4561
  %v4721 = vunpack.c.l.b16 %v4562
  %v4722 = vunpack.c.h.b16 %v4562
  %v4723 = vunpack.c.l.b16 %v4563
  %v4724 = vunpack.c.h.b16 %v4563
  %v4725 = vunpack.c.l.b16 %v4564
  %v4726 = vunpack.c.h.b16 %v4564
  %v4727 = vunpack.c.l.b16 %v4565
  %v4728 = vunpack.c.h.b16 %v4565
  %v4729 = vunpack.c.l.b16 %v4566
  %v4730 = vunpack.c.h.b16 %v4566
  %v4731 = vunpack.c.l.b16 %v4567
  %v4732 = vunpack.c.h.b16 %v4567
  %v4733 = vunpack.c.l.b16 %v4568
  %v4734 = vunpack.c.h.b16 %v4568
  %v4735 = vunpack.c.l.b16 %v4569
  %v4736 = vunpack.c.h.b16 %v4569
  %v4737 = vunpack.c.l.b16 %v4570
  %v4738 = vunpack.c.h.b16 %v4570
  %v4739 = vunpack.c.l.b16 %v4571
  %v4740 = vunpack.c.h.b16 %v4571
  %v4741 = vunpack.c.l.b16 %v4572
  %v4742 = vunpack.c.h.b16 %v4572
  %v4743 = vunpack.c.l.b16 %v4573
  %v4744 = vunpack.c.h.b16 %v4573
  %v4745 = vunpack.c.l.b16 %v4574
  %v4746 = vunpack.c.h.b16 %v4574
  %v4747 = vunpack.c.l.b16 %v4575
  %v4748 = vunpack.c.h.b16 %v4575
  %v4749 = vunpack.c.l.b16 %v4576
  %v4750 = vunpack.c.h.b16 %v4576
  %v4751 = vunpack.c.l.b16 %v4577
  %v4752 = vunpack.c.h.b16 %v4577
  %v4753 = vpack.c.b16 %v4673, %v4669
  %v4754 = vpack.c.b16 %v4674, %v4670
  %v4755 = vpack.c.b16 %v4675, %v4671
  %v4756 = vpack.c.b16 %v4676, %v4672
  %v4757 = vpack.c.b16 %v4681, %v4677
  %v4758 = vpack.c.b16 %v4682, %v4678
  %v4759 = vpack.c.b16 %v4683, %v4679
  %v4760 = vpack.c.b16 %v4684, %v4680
  %v4761 = vpack.c.b16 %v4689, %v4685
  %v4762 = vpack.c.b16 %v4690, %v4686
  %v4763 = vpack.c.b16 %v4691, %v4687
  %v4764 = vpack.c.b16 %v4692, %v4688
  %v4765 = vpack.c.b16 %v4697, %v4693
  %v4766 = vpack.c.b16 %v4698, %v4694
  %v4767 = vpack.c.b16 %v4699, %v4695
  %v4768 = vpack.c.b16 %v4700, %v4696
  %v4769 = vpack.c.b16 %v4705, %v4701
  %v4770 = vpack.c.b16 %v4706, %v4702
  %v4771 = vpack.c.b16 %v4707, %v4703
  %v4772 = vpack.c.b16 %v4708, %v4704
  %v4773 = vpack.c.b16 %v4713, %v4709
  %v4774 = vpack.c.b16 %v4714, %v4710
  %v4775 = vpack.c.b16 %v4715, %v4711
  %v4776 = vpack.c.b16 %v4716, %v4712
  %v4777 = vpack.c.b16 %v4721, %v4717
  %v4778 = vpack.c.b16 %v4722, %v4718
  %v4779 = vpack.c.b16 %v4723, %v4719
  %v4780 = vpack.c.b16 %v4724, %v4720
  %v4781 = vpack.c.b16 %v4729, %v4725
  %v4782 = vpack.c.b16 %v4730, %v4726
  %v4783 = vpack.c.b16 %v4731, %v4727
  %v4784 = vpack.c.b16 %v4732, %v4728
  %v4785 = vpack.c.b16 %v4737, %v4733
  %v4786 = vpack.c.b16 %v4738, %v4734
  %v4787 = vpack.c.b16 %v4739, %v4735
  %v4788 = vpack.c.b16 %v4740, %v4736
  %v4789 = vpack.c.b16 %v4745, %v4741
  %v4790 = vpack.c.b16 %v4746, %v4742
  %v4791 = vpack.c.b16 %v4747, %v4743
  %v4792 = vpack.c.b16 %v4748, %v4744
  %v4793 = vpack.c.b16 %v4749, %v4749
  %v4794 = vpack.c.b16 %v4750, %v4750
  %v4795 = vpack.c.b16 %v4751, %v4751
  %v4796 = vpack.c.b16 %v4752, %v4752
  %v4838 = vsel %vm108, %v4625, 0
  %v4841 = vsel %vm415, %v4793, 0
  %v4844 = vsel %vm415, %v4794, 0
  %v4847 = vsel %vm415, %v4795, 0
  %v4850 = vsel %vm415, %v4796, 0
  %4852 = vmatprep.subr.bf16.mxu0 %v4782
  %4853 = vmatpush1.bf16.msra.mxu0 %v4781
  %4854 = vmatprep.subr.bf16.mxu0 %v4778
  %4855 = vmatpush1.bf16.msra.mxu0 %v4777
  %4856 = vmatprep.subr.bf16.mxu0 %v4774
  %4857 = vmatpush1.bf16.msra.mxu0 %v4773
  %4858 = vmatprep.subr.bf16.mxu0 %v4770
  %4859 = vmatpush1.bf16.msra.mxu0 %v4769
  %4860 = vmatprep.subr.bf16.mxu0 %v4766
  %4861 = vmatpush1.bf16.msra.mxu0 %v4765
  %4862 = vmatprep.subr.bf16.mxu0 %v4762
  %4863 = vmatpush1.bf16.msra.mxu0 %v4761
  %4864 = vmatprep.subr.bf16.mxu0 %v4758
  %4865 = vmatpush1.bf16.msra.mxu0 %v4757
  %4866 = vmatprep.subr.bf16.mxu0 %v4754
  %4867 = vmatpush1.bf16.msra.mxu0 %v4753
  %4868 = vmatprep.subr.bf16.mxu0 0
  %4869 = vmatpush2.bf16.msra.mxu0 0
  %4870 = vmatprep.subr.bf16.mxu0 0
  %4871 = vmatpush2.bf16.msra.mxu0 0
  %4872 = vmatprep.subr.bf16.mxu0 0
  %4873 = vmatpush2.bf16.msra.mxu0 0
  %4874 = vmatprep.subr.bf16.mxu0 0
  %4875 = vmatpush2.bf16.msra.mxu0 0
  %4876 = vmatprep.subr.bf16.mxu0 0
  %4877 = vmatpush2.bf16.msra.mxu0 0
  %4878 = vmatprep.subr.bf16.mxu0 %v4844
  %4879 = vmatpush2.bf16.msra.mxu0 %v4841
  %4880 = vmatprep.subr.bf16.mxu0 %v4790
  %4881 = vmatpush2.bf16.msra.mxu0 %v4789
  %4882 = vmatprep.subr.bf16.mxu0 %v4786
  %4883 = vmatpush2.bf16.msra.mxu0 %v4785
  %4884 = vmatprep.mubr.bf16.mxu0 %v4838
  %4885 = vmatmul.mubr.bf16.gmra.mxu0 %v4624
  %v4886 = vpop.f32.mrf.mxu0
  %v4887 = vadd.f32 0.0, %v4886
  %v4888 = vpop.f32.mrf.mxu0
  %v4889 = vadd.f32 0.0, %v4888
  %v4890 = vpop.f32.mrf.mxu0
  %v4891 = vpop.f32.mrf.mxu0
  %4892 = vdwg.mxu0
  %4893 = vmatprep.subr.bf16.mxu0 %v4784
  %4894 = vmatpush1.bf16.msra.mxu0 %v4783
  %4895 = vmatprep.subr.bf16.mxu0 %v4780
  %4896 = vmatpush1.bf16.msra.mxu0 %v4779
  %4897 = vmatprep.subr.bf16.mxu0 %v4776
  %4898 = vmatpush1.bf16.msra.mxu0 %v4775
  %4899 = vmatprep.subr.bf16.mxu0 %v4772
  %4900 = vmatpush1.bf16.msra.mxu0 %v4771
  %4901 = vmatprep.subr.bf16.mxu0 %v4768
  %4902 = vmatpush1.bf16.msra.mxu0 %v4767
  %4903 = vmatprep.subr.bf16.mxu0 %v4764
  %4904 = vmatpush1.bf16.msra.mxu0 %v4763
  %4905 = vmatprep.subr.bf16.mxu0 %v4760
  %4906 = vmatpush1.bf16.msra.mxu0 %v4759
  %4907 = vmatprep.subr.bf16.mxu0 %v4756
  %4908 = vmatpush1.bf16.msra.mxu0 %v4755
  %4909 = vmatprep.subr.bf16.mxu0 0
  %4910 = vmatpush2.bf16.msra.mxu0 0
  %4911 = vmatprep.subr.bf16.mxu0 0
  %4912 = vmatpush2.bf16.msra.mxu0 0
  %4913 = vmatprep.subr.bf16.mxu0 0
  %4914 = vmatpush2.bf16.msra.mxu0 0
  %4915 = vmatprep.subr.bf16.mxu0 0
  %4916 = vmatpush2.bf16.msra.mxu0 0
  %4917 = vmatprep.subr.bf16.mxu0 0
  %4918 = vmatpush2.bf16.msra.mxu0 0
  %4919 = vmatprep.subr.bf16.mxu0 %v4850
  %4920 = vmatpush2.bf16.msra.mxu0 %v4847
  %4921 = vmatprep.subr.bf16.mxu0 %v4792
  %4922 = vmatpush2.bf16.msra.mxu0 %v4791
  %4923 = vmatprep.subr.bf16.mxu0 %v4788
  %4924 = vmatpush2.bf16.msra.mxu0 %v4787
  %4925 = vmatprep.mubr.bf16.mxu0 %v4838
  %4926 = vmatmul.mubr.bf16.gmra.mxu0 %v4624
  %v4927 = vpop.f32.mrf.mxu0
  %v4928 = vadd.f32 0.0, %v4927
  %v4929 = vpop.f32.mrf.mxu0
  %v4930 = vadd.f32 0.0, %v4929
  %v4931 = vpop.f32.mrf.mxu0
  %v4932 = vpop.f32.mrf.mxu0
  %4933 = vdwg.mxu0
  %v4934 = vadd.f32 %v4388, %v4887
  %v4935 = vadd.f32 %v4389, %v4889
  %v4936 = vadd.f32 %v4390, %v4928
  %v4937 = vadd.f32 %v4391, %v4930
  %s4938 = scalar_lea.vmem %s5, 56
  %v4939 = vld [vmem:[%s4938] sm:$0xff]
  %4941 = vset.pattern.permute.xlu0 0
  %4942 = vperm.xlu0 %4941, %v4939
  %v4943 = vpop.permute.xlu0 %4942
  %v4945 = vmul.f32 %v1110, %v4943
  %v4946 = vmul.f32 %v1111, %v4943
  %v4947 = vmul.f32 %v1112, %v4943
  %v4948 = vmul.f32 %v1113, %v4943
  %v4949 = vmul.f32 %v1114, %v4943
  %v4950 = vmul.f32 %v1115, %v4943
  %v4951 = vmul.f32 %v1116, %v4943
  %v4952 = vmul.f32 %v1117, %v4943
  %v4953 = vmul.f32 %v1118, %v4943
  %v4954 = vmul.f32 %v1119, %v4943
  %v4955 = vmul.f32 %v1120, %v4943
  %v4956 = vmul.f32 %v1121, %v4943
  %v4957 = vmul.f32 %v1122, %v4943
  %v4958 = vmul.f32 %v1123, %v4943
  %v4959 = vmul.f32 %v1124, %v4943
  %v4960 = vmul.f32 %v1125, %v4943
  %v4961 = vrot.slane %v4945, 4
  %v4962 = vadd.f32 %v4945, %v4961
  %v4963 = vrot.slane %v4962, 2
  %v4964 = vadd.f32 %v4962, %v4963
  %v4965 = vrot.slane %v4964, 1
  %v4966 = vadd.f32 %v4964, %v4965
  %v4967 = vsel %vm108, %v4946, 0.0
  %v4968 = vrot.slane %v4967, 4
  %v4969 = vadd.f32 %v4967, %v4968
  %v4970 = vrot.slane %v4969, 2
  %v4971 = vadd.f32 %v4969, %v4970
  %v4972 = vrot.slane %v4971, 1
  %v4973 = vadd.f32 %v4971, %v4972
  %v4974 = vrot.slane %v4947, 4
  %v4975 = vadd.f32 %v4947, %v4974
  %v4976 = vrot.slane %v4975, 2
  %v4977 = vadd.f32 %v4975, %v4976
  %v4978 = vrot.slane %v4977, 1
  %v4979 = vadd.f32 %v4977, %v4978
  %v4980 = vsel %vm108, %v4948, 0.0
  %v4981 = vrot.slane %v4980, 4
  %v4982 = vadd.f32 %v4980, %v4981
  %v4983 = vrot.slane %v4982, 2
  %v4984 = vadd.f32 %v4982, %v4983
  %v4985 = vrot.slane %v4984, 1
  %v4986 = vadd.f32 %v4984, %v4985
  %v4987 = vrot.slane %v4949, 4
  %v4988 = vadd.f32 %v4949, %v4987
  %v4989 = vrot.slane %v4988, 2
  %v4990 = vadd.f32 %v4988, %v4989
  %v4991 = vrot.slane %v4990, 1
  %v4992 = vadd.f32 %v4990, %v4991
  %v4993 = vsel %vm108, %v4950, 0.0
  %v4994 = vrot.slane %v4993, 4
  %v4995 = vadd.f32 %v4993, %v4994
  %v4996 = vrot.slane %v4995, 2
  %v4997 = vadd.f32 %v4995, %v4996
  %v4998 = vrot.slane %v4997, 1
  %v4999 = vadd.f32 %v4997, %v4998
  %v5000 = vrot.slane %v4951, 4
  %v5001 = vadd.f32 %v4951, %v5000
  %v5002 = vrot.slane %v5001, 2
  %v5003 = vadd.f32 %v5001, %v5002
  %v5004 = vrot.slane %v5003, 1
  %v5005 = vadd.f32 %v5003, %v5004
  %v5006 = vsel %vm108, %v4952, 0.0
  %v5007 = vrot.slane %v5006, 4
  %v5008 = vadd.f32 %v5006, %v5007
  %v5009 = vrot.slane %v5008, 2
  %v5010 = vadd.f32 %v5008, %v5009
  %v5011 = vrot.slane %v5010, 1
  %v5012 = vadd.f32 %v5010, %v5011
  %v5013 = vrot.slane %v4953, 4
  %v5014 = vadd.f32 %v4953, %v5013
  %v5015 = vrot.slane %v5014, 2
  %v5016 = vadd.f32 %v5014, %v5015
  %v5017 = vrot.slane %v5016, 1
  %v5018 = vadd.f32 %v5016, %v5017
  %v5019 = vsel %vm108, %v4954, 0.0
  %v5020 = vrot.slane %v5019, 4
  %v5021 = vadd.f32 %v5019, %v5020
  %v5022 = vrot.slane %v5021, 2
  %v5023 = vadd.f32 %v5021, %v5022
  %v5024 = vrot.slane %v5023, 1
  %v5025 = vadd.f32 %v5023, %v5024
  %v5026 = vrot.slane %v4955, 4
  %v5027 = vadd.f32 %v4955, %v5026
  %v5028 = vrot.slane %v5027, 2
  %v5029 = vadd.f32 %v5027, %v5028
  %v5030 = vrot.slane %v5029, 1
  %v5031 = vadd.f32 %v5029, %v5030
  %v5032 = vsel %vm108, %v4956, 0.0
  %v5033 = vrot.slane %v5032, 4
  %v5034 = vadd.f32 %v5032, %v5033
  %v5035 = vrot.slane %v5034, 2
  %v5036 = vadd.f32 %v5034, %v5035
  %v5037 = vrot.slane %v5036, 1
  %v5038 = vadd.f32 %v5036, %v5037
  %v5039 = vrot.slane %v4957, 4
  %v5040 = vadd.f32 %v4957, %v5039
  %v5041 = vrot.slane %v5040, 2
  %v5042 = vadd.f32 %v5040, %v5041
  %v5043 = vrot.slane %v5042, 1
  %v5044 = vadd.f32 %v5042, %v5043
  %v5045 = vsel %vm108, %v4958, 0.0
  %v5046 = vrot.slane %v5045, 4
  %v5047 = vadd.f32 %v5045, %v5046
  %v5048 = vrot.slane %v5047, 2
  %v5049 = vadd.f32 %v5047, %v5048
  %v5050 = vrot.slane %v5049, 1
  %v5051 = vadd.f32 %v5049, %v5050
  %v5052 = vrot.slane %v4959, 4
  %v5053 = vadd.f32 %v4959, %v5052
  %v5054 = vrot.slane %v5053, 2
  %v5055 = vadd.f32 %v5053, %v5054
  %v5056 = vrot.slane %v5055, 1
  %v5057 = vadd.f32 %v5055, %v5056
  %v5058 = vsel %vm108, %v4960, 0.0
  %v5059 = vrot.slane %v5058, 4
  %v5060 = vadd.f32 %v5058, %v5059
  %v5061 = vrot.slane %v5060, 2
  %v5062 = vadd.f32 %v5060, %v5061
  %v5063 = vrot.slane %v5062, 1
  %v5064 = vadd.f32 %v5062, %v5063
  %v5065 = vpack.c.bf16 %v4966, %v4966
  %v5066 = vpack.c.bf16 %v4973, %v4973
  %v5067 = vpack.c.bf16 %v4979, %v4979
  %v5068 = vpack.c.bf16 %v4986, %v4986
  %v5069 = vpack.c.bf16 %v4992, %v4992
  %v5070 = vpack.c.bf16 %v4999, %v4999
  %v5071 = vpack.c.bf16 %v5005, %v5005
  %v5072 = vpack.c.bf16 %v5012, %v5012
  %v5073 = vpack.c.bf16 %v5018, %v5018
  %v5074 = vpack.c.bf16 %v5025, %v5025
  %v5075 = vpack.c.bf16 %v5031, %v5031
  %v5076 = vpack.c.bf16 %v5038, %v5038
  %v5077 = vpack.c.bf16 %v5044, %v5044
  %v5078 = vpack.c.bf16 %v5051, %v5051
  %v5079 = vpack.c.bf16 %v5057, %v5057
  %v5080 = vpack.c.bf16 %v5064, %v5064
  %s5081 = scalar_lea.vmem %s6, 2352
  %v5082 = vld [vmem:[%s5081] sm:$0xff]
  %v5083 = vld [vmem:[%s5081 + $0x8] sm:$0xff]
  %v5084 = vld [vmem:[%s5081 + $0x10] sm:$0xff]
  %v5085 = vld [vmem:[%s5081 + $0x18] sm:$0xff]
  %v5086 = vld [vmem:[%s5081 + $0x20] sm:$0xff]
  %v5087 = vld [vmem:[%s5081 + $0x28] sm:$0xff]
  %v5088 = vld [vmem:[%s5081 + $0x30] sm:$0xff]
  %v5089 = vld [vmem:[%s5081 + $0x38] sm:$0xff]
  %v5090 = vld [vmem:[%s5081 + $0x40] sm:$0xff]
  %v5091 = vld [vmem:[%s5081 + $0x48] sm:$0xff]
  %v5092 = vld [vmem:[%s5081 + $0x50] sm:$0xff]
  %v5093 = vld [vmem:[%s5081 + $0x58] sm:$0xff]
  %v5094 = vld [vmem:[%s5081 + $0x60] sm:$0xff]
  %v5095 = vld [vmem:[%s5081 + $0x68] sm:$0xff]
  %v5096 = vld [vmem:[%s5081 + $0x70] sm:$0xff]
  %v5097 = vld [vmem:[%s5081 + $0x78] sm:$0xff]
  %v5098 = vld [vmem:[%s5081 + $0x80] sm:$0xff]
  %v5099 = vld [vmem:[%s5081 + $0x88] sm:$0xff]
  %v5100 = vld [vmem:[%s5081 + $0x90] sm:$0xff]
  %v5101 = vld [vmem:[%s5081 + $0x98] sm:$0xff]
  %v5102 = vld [vmem:[%s5081 + $0xa0] sm:$0xff]
  %v5103 = vld [vmem:[%s5081 + $0xa8] sm:$0xff]
  %v5104 = vld [vmem:[%s5081 + $0xb0] sm:$0xff]
  %v5105 = vld [vmem:[%s5081 + $0xb8] sm:$0xff]
  %v5106 = vld [vmem:[%s5081 + $0xc0] sm:$0xff]
  %v5107 = vld [vmem:[%s5081 + $0xc8] sm:$0xff]
  %v5108 = vld [vmem:[%s5081 + $0xd0] sm:$0xff]
  %v5109 = vld [vmem:[%s5081 + $0xd8] sm:$0xff]
  %v5110 = vld [vmem:[%s5081 + $0xe0] sm:$0xff]
  %v5111 = vld [vmem:[%s5081 + $0xe8] sm:$0xff]
  %v5112 = vld [vmem:[%s5081 + $0xf0] sm:$0xff]
  %v5113 = vld [vmem:[%s5081 + $0xf8] sm:$0xff]
  %v5114 = vld [vmem:[%s5081 + $0x100] sm:$0xff]
  %v5115 = vld [vmem:[%s5081 + $0x108] sm:$0xff]
  %v5116 = vld [vmem:[%s5081 + $0x110] sm:$0xff]
  %v5117 = vld [vmem:[%s5081 + $0x118] sm:$0xff]
  %v5118 = vld [vmem:[%s5081 + $0x120] sm:$0xff]
  %v5119 = vld [vmem:[%s5081 + $0x128] sm:$0xff]
  %v5120 = vld [vmem:[%s5081 + $0x130] sm:$0xff]
  %v5121 = vld [vmem:[%s5081 + $0x138] sm:$0xff]
  %v5122 = vld [vmem:[%s5081 + $0x140] sm:$0xff]
  %v5123 = vld [vmem:[%s5081 + $0x148] sm:$0xff]
  %v5140 = vunpack.c.l.b16 %v5065
  %v5141 = vunpack.c.l.b16 %v5066
  %v5142 = vunpack.c.l.b16 %v5067
  %v5143 = vunpack.c.l.b16 %v5068
  %v5144 = vunpack.c.l.b16 %v5069
  %v5145 = vunpack.c.l.b16 %v5070
  %v5146 = vunpack.c.l.b16 %v5071
  %v5147 = vunpack.c.l.b16 %v5072
  %v5148 = vunpack.c.l.b16 %v5073
  %v5149 = vunpack.c.l.b16 %v5074
  %v5150 = vunpack.c.l.b16 %v5075
  %v5151 = vunpack.c.l.b16 %v5076
  %v5152 = vunpack.c.l.b16 %v5077
  %v5153 = vunpack.c.l.b16 %v5078
  %v5154 = vunpack.c.l.b16 %v5079
  %v5155 = vunpack.c.l.b16 %v5080
  %v5156 = vsel %vm283, %v5142, %v5140
  %v5157 = vsel %vm285, %v5144, %v5156
  %v5158 = vsel %vm287, %v5146, %v5157
  %v5159 = vsel %vm289, %v5148, %v5158
  %v5160 = vsel %vm291, %v5150, %v5159
  %v5161 = vsel %vm293, %v5152, %v5160
  %v5162 = vsel %vm295, %v5154, %v5161
  %v5163 = vsel %vm283, %v5143, %v5141
  %v5164 = vsel %vm285, %v5145, %v5163
  %v5165 = vsel %vm287, %v5147, %v5164
  %v5166 = vsel %vm289, %v5149, %v5165
  %v5167 = vsel %vm291, %v5151, %v5166
  %v5168 = vsel %vm293, %v5153, %v5167
  %v5169 = vsel %vm295, %v5155, %v5168
  %v5170 = vpack.c.b16 %v5162, %v5162
  %v5171 = vpack.c.b16 %v5169, %v5169
  %v5215 = vunpack.c.l.b16 %v5082
  %v5216 = vunpack.c.h.b16 %v5082
  %v5217 = vunpack.c.l.b16 %v5083
  %v5218 = vunpack.c.h.b16 %v5083
  %v5219 = vunpack.c.l.b16 %v5084
  %v5220 = vunpack.c.h.b16 %v5084
  %v5221 = vunpack.c.l.b16 %v5085
  %v5222 = vunpack.c.h.b16 %v5085
  %v5223 = vunpack.c.l.b16 %v5086
  %v5224 = vunpack.c.h.b16 %v5086
  %v5225 = vunpack.c.l.b16 %v5087
  %v5226 = vunpack.c.h.b16 %v5087
  %v5227 = vunpack.c.l.b16 %v5088
  %v5228 = vunpack.c.h.b16 %v5088
  %v5229 = vunpack.c.l.b16 %v5089
  %v5230 = vunpack.c.h.b16 %v5089
  %v5231 = vunpack.c.l.b16 %v5090
  %v5232 = vunpack.c.h.b16 %v5090
  %v5233 = vunpack.c.l.b16 %v5091
  %v5234 = vunpack.c.h.b16 %v5091
  %v5235 = vunpack.c.l.b16 %v5092
  %v5236 = vunpack.c.h.b16 %v5092
  %v5237 = vunpack.c.l.b16 %v5093
  %v5238 = vunpack.c.h.b16 %v5093
  %v5239 = vunpack.c.l.b16 %v5094
  %v5240 = vunpack.c.h.b16 %v5094
  %v5241 = vunpack.c.l.b16 %v5095
  %v5242 = vunpack.c.h.b16 %v5095
  %v5243 = vunpack.c.l.b16 %v5096
  %v5244 = vunpack.c.h.b16 %v5096
  %v5245 = vunpack.c.l.b16 %v5097
  %v5246 = vunpack.c.h.b16 %v5097
  %v5247 = vunpack.c.l.b16 %v5098
  %v5248 = vunpack.c.h.b16 %v5098
  %v5249 = vunpack.c.l.b16 %v5099
  %v5250 = vunpack.c.h.b16 %v5099
  %v5251 = vunpack.c.l.b16 %v5100
  %v5252 = vunpack.c.h.b16 %v5100
  %v5253 = vunpack.c.l.b16 %v5101
  %v5254 = vunpack.c.h.b16 %v5101
  %v5255 = vunpack.c.l.b16 %v5102
  %v5256 = vunpack.c.h.b16 %v5102
  %v5257 = vunpack.c.l.b16 %v5103
  %v5258 = vunpack.c.h.b16 %v5103
  %v5259 = vunpack.c.l.b16 %v5104
  %v5260 = vunpack.c.h.b16 %v5104
  %v5261 = vunpack.c.l.b16 %v5105
  %v5262 = vunpack.c.h.b16 %v5105
  %v5263 = vunpack.c.l.b16 %v5106
  %v5264 = vunpack.c.h.b16 %v5106
  %v5265 = vunpack.c.l.b16 %v5107
  %v5266 = vunpack.c.h.b16 %v5107
  %v5267 = vunpack.c.l.b16 %v5108
  %v5268 = vunpack.c.h.b16 %v5108
  %v5269 = vunpack.c.l.b16 %v5109
  %v5270 = vunpack.c.h.b16 %v5109
  %v5271 = vunpack.c.l.b16 %v5110
  %v5272 = vunpack.c.h.b16 %v5110
  %v5273 = vunpack.c.l.b16 %v5111
  %v5274 = vunpack.c.h.b16 %v5111
  %v5275 = vunpack.c.l.b16 %v5112
  %v5276 = vunpack.c.h.b16 %v5112
  %v5277 = vunpack.c.l.b16 %v5113
  %v5278 = vunpack.c.h.b16 %v5113
  %v5279 = vunpack.c.l.b16 %v5114
  %v5280 = vunpack.c.h.b16 %v5114
  %v5281 = vunpack.c.l.b16 %v5115
  %v5282 = vunpack.c.h.b16 %v5115
  %v5283 = vunpack.c.l.b16 %v5116
  %v5284 = vunpack.c.h.b16 %v5116
  %v5285 = vunpack.c.l.b16 %v5117
  %v5286 = vunpack.c.h.b16 %v5117
  %v5287 = vunpack.c.l.b16 %v5118
  %v5288 = vunpack.c.h.b16 %v5118
  %v5289 = vunpack.c.l.b16 %v5119
  %v5290 = vunpack.c.h.b16 %v5119
  %v5291 = vunpack.c.l.b16 %v5120
  %v5292 = vunpack.c.h.b16 %v5120
  %v5293 = vunpack.c.l.b16 %v5121
  %v5294 = vunpack.c.h.b16 %v5121
  %v5295 = vunpack.c.l.b16 %v5122
  %v5296 = vunpack.c.h.b16 %v5122
  %v5297 = vunpack.c.l.b16 %v5123
  %v5298 = vunpack.c.h.b16 %v5123
  %v5299 = vpack.c.b16 %v5219, %v5215
  %v5300 = vpack.c.b16 %v5220, %v5216
  %v5301 = vpack.c.b16 %v5221, %v5217
  %v5302 = vpack.c.b16 %v5222, %v5218
  %v5303 = vpack.c.b16 %v5227, %v5223
  %v5304 = vpack.c.b16 %v5228, %v5224
  %v5305 = vpack.c.b16 %v5229, %v5225
  %v5306 = vpack.c.b16 %v5230, %v5226
  %v5307 = vpack.c.b16 %v5235, %v5231
  %v5308 = vpack.c.b16 %v5236, %v5232
  %v5309 = vpack.c.b16 %v5237, %v5233
  %v5310 = vpack.c.b16 %v5238, %v5234
  %v5311 = vpack.c.b16 %v5243, %v5239
  %v5312 = vpack.c.b16 %v5244, %v5240
  %v5313 = vpack.c.b16 %v5245, %v5241
  %v5314 = vpack.c.b16 %v5246, %v5242
  %v5315 = vpack.c.b16 %v5251, %v5247
  %v5316 = vpack.c.b16 %v5252, %v5248
  %v5317 = vpack.c.b16 %v5253, %v5249
  %v5318 = vpack.c.b16 %v5254, %v5250
  %v5319 = vpack.c.b16 %v5259, %v5255
  %v5320 = vpack.c.b16 %v5260, %v5256
  %v5321 = vpack.c.b16 %v5261, %v5257
  %v5322 = vpack.c.b16 %v5262, %v5258
  %v5323 = vpack.c.b16 %v5267, %v5263
  %v5324 = vpack.c.b16 %v5268, %v5264
  %v5325 = vpack.c.b16 %v5269, %v5265
  %v5326 = vpack.c.b16 %v5270, %v5266
  %v5327 = vpack.c.b16 %v5275, %v5271
  %v5328 = vpack.c.b16 %v5276, %v5272
  %v5329 = vpack.c.b16 %v5277, %v5273
  %v5330 = vpack.c.b16 %v5278, %v5274
  %v5331 = vpack.c.b16 %v5283, %v5279
  %v5332 = vpack.c.b16 %v5284, %v5280
  %v5333 = vpack.c.b16 %v5285, %v5281
  %v5334 = vpack.c.b16 %v5286, %v5282
  %v5335 = vpack.c.b16 %v5291, %v5287
  %v5336 = vpack.c.b16 %v5292, %v5288
  %v5337 = vpack.c.b16 %v5293, %v5289
  %v5338 = vpack.c.b16 %v5294, %v5290
  %v5339 = vpack.c.b16 %v5295, %v5295
  %v5340 = vpack.c.b16 %v5296, %v5296
  %v5341 = vpack.c.b16 %v5297, %v5297
  %v5342 = vpack.c.b16 %v5298, %v5298
  %v5384 = vsel %vm108, %v5171, 0
  %v5387 = vsel %vm415, %v5339, 0
  %v5390 = vsel %vm415, %v5340, 0
  %v5393 = vsel %vm415, %v5341, 0
  %v5396 = vsel %vm415, %v5342, 0
  %5398 = vmatprep.subr.bf16.mxu0 %v5328
  %5399 = vmatpush1.bf16.msra.mxu0 %v5327
  %5400 = vmatprep.subr.bf16.mxu0 %v5324
  %5401 = vmatpush1.bf16.msra.mxu0 %v5323
  %5402 = vmatprep.subr.bf16.mxu0 %v5320
  %5403 = vmatpush1.bf16.msra.mxu0 %v5319
  %5404 = vmatprep.subr.bf16.mxu0 %v5316
  %5405 = vmatpush1.bf16.msra.mxu0 %v5315
  %5406 = vmatprep.subr.bf16.mxu0 %v5312
  %5407 = vmatpush1.bf16.msra.mxu0 %v5311
  %5408 = vmatprep.subr.bf16.mxu0 %v5308
  %5409 = vmatpush1.bf16.msra.mxu0 %v5307
  %5410 = vmatprep.subr.bf16.mxu0 %v5304
  %5411 = vmatpush1.bf16.msra.mxu0 %v5303
  %5412 = vmatprep.subr.bf16.mxu0 %v5300
  %5413 = vmatpush1.bf16.msra.mxu0 %v5299
  %5414 = vmatprep.subr.bf16.mxu0 0
  %5415 = vmatpush2.bf16.msra.mxu0 0
  %5416 = vmatprep.subr.bf16.mxu0 0
  %5417 = vmatpush2.bf16.msra.mxu0 0
  %5418 = vmatprep.subr.bf16.mxu0 0
  %5419 = vmatpush2.bf16.msra.mxu0 0
  %5420 = vmatprep.subr.bf16.mxu0 0
  %5421 = vmatpush2.bf16.msra.mxu0 0
  %5422 = vmatprep.subr.bf16.mxu0 0
  %5423 = vmatpush2.bf16.msra.mxu0 0
  %5424 = vmatprep.subr.bf16.mxu0 %v5390
  %5425 = vmatpush2.bf16.msra.mxu0 %v5387
  %5426 = vmatprep.subr.bf16.mxu0 %v5336
  %5427 = vmatpush2.bf16.msra.mxu0 %v5335
  %5428 = vmatprep.subr.bf16.mxu0 %v5332
  %5429 = vmatpush2.bf16.msra.mxu0 %v5331
  %5430 = vmatprep.mubr.bf16.mxu0 %v5384
  %5431 = vmatmul.mubr.bf16.gmra.mxu0 %v5170
  %v5432 = vpop.f32.mrf.mxu0
  %v5433 = vadd.f32 0.0, %v5432
  %v5434 = vpop.f32.mrf.mxu0
  %v5435 = vadd.f32 0.0, %v5434
  %v5436 = vpop.f32.mrf.mxu0
  %v5437 = vpop.f32.mrf.mxu0
  %5438 = vdwg.mxu0
  %5439 = vmatprep.subr.bf16.mxu0 %v5330
  %5440 = vmatpush1.bf16.msra.mxu0 %v5329
  %5441 = vmatprep.subr.bf16.mxu0 %v5326
  %5442 = vmatpush1.bf16.msra.mxu0 %v5325
  %5443 = vmatprep.subr.bf16.mxu0 %v5322
  %5444 = vmatpush1.bf16.msra.mxu0 %v5321
  %5445 = vmatprep.subr.bf16.mxu0 %v5318
  %5446 = vmatpush1.bf16.msra.mxu0 %v5317
  %5447 = vmatprep.subr.bf16.mxu0 %v5314
  %5448 = vmatpush1.bf16.msra.mxu0 %v5313
  %5449 = vmatprep.subr.bf16.mxu0 %v5310
  %5450 = vmatpush1.bf16.msra.mxu0 %v5309
  %5451 = vmatprep.subr.bf16.mxu0 %v5306
  %5452 = vmatpush1.bf16.msra.mxu0 %v5305
  %5453 = vmatprep.subr.bf16.mxu0 %v5302
  %5454 = vmatpush1.bf16.msra.mxu0 %v5301
  %5455 = vmatprep.subr.bf16.mxu0 0
  %5456 = vmatpush2.bf16.msra.mxu0 0
  %5457 = vmatprep.subr.bf16.mxu0 0
  %5458 = vmatpush2.bf16.msra.mxu0 0
  %5459 = vmatprep.subr.bf16.mxu0 0
  %5460 = vmatpush2.bf16.msra.mxu0 0
  %5461 = vmatprep.subr.bf16.mxu0 0
  %5462 = vmatpush2.bf16.msra.mxu0 0
  %5463 = vmatprep.subr.bf16.mxu0 0
  %5464 = vmatpush2.bf16.msra.mxu0 0
  %5465 = vmatprep.subr.bf16.mxu0 %v5396
  %5466 = vmatpush2.bf16.msra.mxu0 %v5393
  %5467 = vmatprep.subr.bf16.mxu0 %v5338
  %5468 = vmatpush2.bf16.msra.mxu0 %v5337
  %5469 = vmatprep.subr.bf16.mxu0 %v5334
  %5470 = vmatpush2.bf16.msra.mxu0 %v5333
  %5471 = vmatprep.mubr.bf16.mxu0 %v5384
  %5472 = vmatmul.mubr.bf16.gmra.mxu0 %v5170
  %v5473 = vpop.f32.mrf.mxu0
  %v5474 = vadd.f32 0.0, %v5473
  %v5475 = vpop.f32.mrf.mxu0
  %v5476 = vadd.f32 0.0, %v5475
  %v5477 = vpop.f32.mrf.mxu0
  %v5478 = vpop.f32.mrf.mxu0
  %5479 = vdwg.mxu0
  %v5480 = vadd.f32 %v4934, %v5433
  %v5481 = vadd.f32 %v4935, %v5435
  %v5482 = vadd.f32 %v4936, %v5474
  %v5483 = vadd.f32 %v4937, %v5476
  %v5484 = vld [vmem:[%s7] sm:$0xf]
  %v5486 = vlaneseq
  %v5487 = vshrl.u32 %v5486, 7
  %v5488 = vsub.s32 0, %v5487
  %v5489 = vrot.slane %v5484, %v5488
  %v5490 = vlaneseq
  %v5491 = vshrl.u32 %v5490, 7
  %v5492 = vsub.s32 1, %v5491
  %v5493 = vrot.slane %v5484, %v5492
  %v5494 = vlaneseq
  %v5495 = vshrl.u32 %v5494, 7
  %v5496 = vsub.s32 2, %v5495
  %v5497 = vrot.slane %v5484, %v5496
  %v5498 = vlaneseq
  %v5499 = vshrl.u32 %v5498, 7
  %v5500 = vsub.s32 3, %v5499
  %v5501 = vrot.slane %v5484, %v5500
  %v5506 = vadd.f32 %v5480, %v5489
  %v5507 = vadd.f32 %v5481, %v5493
  %v5508 = vadd.f32 %v5482, %v5497
  %v5509 = vadd.f32 %v5483, %v5501
  %v5510 = vmax.f32 %v5506, 0.0
  %v5511 = vmax.f32 %v5507, 0.0
  %v5512 = vmax.f32 %v5508, 0.0
  %v5513 = vmax.f32 %v5509, 0.0
  %v5514 = vpack.c.bf16 %v5510, %v5510
  %v5515 = vpack.c.bf16 %v5511, %v5511
  %v5516 = vpack.c.bf16 %v5512, %v5512
  %v5517 = vpack.c.bf16 %v5513, %v5513
  %v5518 = vld [vmem:[%s8] sm:$0xff]
  %v5519 = vld [vmem:[%s8 + $0x8] sm:$0xff]
  %v5520 = vld [vmem:[%s8 + $0x10] sm:$0xff]
  %v5521 = vld [vmem:[%s8 + $0x18] sm:$0xff]
  %v5522 = vld [vmem:[%s8 + $0x20] sm:$0xff]
  %v5523 = vld [vmem:[%s8 + $0x28] sm:$0xff]
  %v5524 = vld [vmem:[%s8 + $0x30] sm:$0xff]
  %v5525 = vld [vmem:[%s8 + $0x38] sm:$0xff]
  %v5526 = vld [vmem:[%s8 + $0x40] sm:$0xff]
  %v5527 = vld [vmem:[%s8 + $0x48] sm:$0xff]
  %v5528 = vld [vmem:[%s8 + $0x50] sm:$0xff]
  %v5529 = vld [vmem:[%s8 + $0x58] sm:$0xff]
  %v5530 = vld [vmem:[%s8 + $0x60] sm:$0xff]
  %v5531 = vld [vmem:[%s8 + $0x68] sm:$0xff]
  %v5532 = vld [vmem:[%s8 + $0x70] sm:$0xff]
  %v5533 = vld [vmem:[%s8 + $0x78] sm:$0xff]
  %v5534 = vld [vmem:[%s8 + $0x80] sm:$0xff]
  %v5535 = vld [vmem:[%s8 + $0x88] sm:$0xff]
  %v5536 = vld [vmem:[%s8 + $0x90] sm:$0xff]
  %v5537 = vld [vmem:[%s8 + $0x98] sm:$0xff]
  %v5538 = vld [vmem:[%s8 + $0xa0] sm:$0xff]
  %v5539 = vld [vmem:[%s8 + $0xa8] sm:$0xff]
  %v5540 = vld [vmem:[%s8 + $0xb0] sm:$0xff]
  %v5541 = vld [vmem:[%s8 + $0xb8] sm:$0xff]
  %v5542 = vld [vmem:[%s8 + $0xc0] sm:$0xff]
  %v5543 = vld [vmem:[%s8 + $0xc8] sm:$0xff]
  %v5544 = vld [vmem:[%s8 + $0xd0] sm:$0xff]
  %v5545 = vld [vmem:[%s8 + $0xd8] sm:$0xff]
  %v5546 = vld [vmem:[%s8 + $0xe0] sm:$0xff]
  %v5547 = vld [vmem:[%s8 + $0xe8] sm:$0xff]
  %v5548 = vld [vmem:[%s8 + $0xf0] sm:$0xff]
  %v5549 = vld [vmem:[%s8 + $0xf8] sm:$0xff]
  %v5550 = vld [vmem:[%s8 + $0x100] sm:$0xff]
  %v5551 = vld [vmem:[%s8 + $0x108] sm:$0xff]
  %v5552 = vld [vmem:[%s8 + $0x110] sm:$0xff]
  %v5553 = vld [vmem:[%s8 + $0x118] sm:$0xff]
  %v5554 = vld [vmem:[%s8 + $0x120] sm:$0xff]
  %v5555 = vld [vmem:[%s8 + $0x128] sm:$0xff]
  %v5556 = vld [vmem:[%s8 + $0x130] sm:$0xff]
  %v5557 = vld [vmem:[%s8 + $0x138] sm:$0xff]
  %v5558 = vld [vmem:[%s8 + $0x140] sm:$0xff]
  %v5559 = vld [vmem:[%s8 + $0x148] sm:$0xff]
  %v5560 = vld [vmem:[%s8 + $0x150] sm:$0xff]
  %v5561 = vld [vmem:[%s8 + $0x158] sm:$0xff]
  %v5562 = vld [vmem:[%s8 + $0x160] sm:$0xff]
  %v5563 = vld [vmem:[%s8 + $0x168] sm:$0xff]
  %v5564 = vld [vmem:[%s8 + $0x170] sm:$0xff]
  %v5565 = vld [vmem:[%s8 + $0x178] sm:$0xff]
  %v5566 = vld [vmem:[%s8 + $0x180] sm:$0xff]
  %v5567 = vld [vmem:[%s8 + $0x188] sm:$0xff]
  %v5568 = vld [vmem:[%s8 + $0x190] sm:$0xff]
  %v5569 = vld [vmem:[%s8 + $0x198] sm:$0xff]
  %v5570 = vld [vmem:[%s8 + $0x1a0] sm:$0xff]
  %v5571 = vld [vmem:[%s8 + $0x1a8] sm:$0xff]
  %v5572 = vld [vmem:[%s8 + $0x1b0] sm:$0xff]
  %v5573 = vld [vmem:[%s8 + $0x1b8] sm:$0xff]
  %v5574 = vld [vmem:[%s8 + $0x1c0] sm:$0xff]
  %v5575 = vld [vmem:[%s8 + $0x1c8] sm:$0xff]
  %v5576 = vld [vmem:[%s8 + $0x1d0] sm:$0xff]
  %v5577 = vld [vmem:[%s8 + $0x1d8] sm:$0xff]
  %v5578 = vld [vmem:[%s8 + $0x1e0] sm:$0xff]
  %v5579 = vld [vmem:[%s8 + $0x1e8] sm:$0xff]
  %v5580 = vld [vmem:[%s8 + $0x1f0] sm:$0xff]
  %v5581 = vld [vmem:[%s8 + $0x1f8] sm:$0xff]
  %v5582 = vld [vmem:[%s8 + $0x200] sm:$0xff]
  %v5583 = vld [vmem:[%s8 + $0x208] sm:$0xff]
  %v5584 = vld [vmem:[%s8 + $0x210] sm:$0xff]
  %v5585 = vld [vmem:[%s8 + $0x218] sm:$0xff]
  %v5586 = vld [vmem:[%s8 + $0x220] sm:$0xff]
  %v5587 = vld [vmem:[%s8 + $0x228] sm:$0xff]
  %v5588 = vld [vmem:[%s8 + $0x230] sm:$0xff]
  %v5589 = vld [vmem:[%s8 + $0x238] sm:$0xff]
  %v5590 = vld [vmem:[%s8 + $0x240] sm:$0xff]
  %v5591 = vld [vmem:[%s8 + $0x248] sm:$0xff]
  %v5592 = vld [vmem:[%s8 + $0x250] sm:$0xff]
  %v5593 = vld [vmem:[%s8 + $0x258] sm:$0xff]
  %v5594 = vld [vmem:[%s8 + $0x260] sm:$0xff]
  %v5595 = vld [vmem:[%s8 + $0x268] sm:$0xff]
  %v5596 = vld [vmem:[%s8 + $0x270] sm:$0xff]
  %v5597 = vld [vmem:[%s8 + $0x278] sm:$0xff]
  %v5598 = vld [vmem:[%s8 + $0x280] sm:$0xff]
  %v5599 = vld [vmem:[%s8 + $0x288] sm:$0xff]
  %v5600 = vld [vmem:[%s8 + $0x290] sm:$0xff]
  %v5601 = vld [vmem:[%s8 + $0x298] sm:$0xff]
  %v5602 = vld [vmem:[%s8 + $0x2a0] sm:$0xff]
  %v5603 = vld [vmem:[%s8 + $0x2a8] sm:$0xff]
  %v5604 = vld [vmem:[%s8 + $0x2b0] sm:$0xff]
  %v5605 = vld [vmem:[%s8 + $0x2b8] sm:$0xff]
  %v5606 = vld [vmem:[%s8 + $0x2c0] sm:$0xff]
  %v5607 = vld [vmem:[%s8 + $0x2c8] sm:$0xff]
  %v5608 = vld [vmem:[%s8 + $0x2d0] sm:$0xff]
  %v5609 = vld [vmem:[%s8 + $0x2d8] sm:$0xff]
  %v5610 = vld [vmem:[%s8 + $0x2e0] sm:$0xff]
  %v5611 = vld [vmem:[%s8 + $0x2e8] sm:$0xff]
  %v5612 = vld [vmem:[%s8 + $0x2f0] sm:$0xff]
  %v5613 = vld [vmem:[%s8 + $0x2f8] sm:$0xff]
  %v5614 = vld [vmem:[%s8 + $0x300] sm:$0xff]
  %v5615 = vld [vmem:[%s8 + $0x308] sm:$0xff]
  %v5616 = vld [vmem:[%s8 + $0x310] sm:$0xff]
  %v5617 = vld [vmem:[%s8 + $0x318] sm:$0xff]
  %v5618 = vld [vmem:[%s8 + $0x320] sm:$0xff]
  %v5619 = vld [vmem:[%s8 + $0x328] sm:$0xff]
  %v5620 = vld [vmem:[%s8 + $0x330] sm:$0xff]
  %v5621 = vld [vmem:[%s8 + $0x338] sm:$0xff]
  %v5622 = vld [vmem:[%s8 + $0x340] sm:$0xff]
  %v5623 = vld [vmem:[%s8 + $0x348] sm:$0xff]
  %v5624 = vld [vmem:[%s8 + $0x350] sm:$0xff]
  %v5625 = vld [vmem:[%s8 + $0x358] sm:$0xff]
  %v5626 = vld [vmem:[%s8 + $0x360] sm:$0xff]
  %v5627 = vld [vmem:[%s8 + $0x368] sm:$0xff]
  %v5628 = vld [vmem:[%s8 + $0x370] sm:$0xff]
  %v5629 = vld [vmem:[%s8 + $0x378] sm:$0xff]
  %v5630 = vld [vmem:[%s8 + $0x380] sm:$0xff]
  %v5631 = vld [vmem:[%s8 + $0x388] sm:$0xff]
  %v5632 = vld [vmem:[%s8 + $0x390] sm:$0xff]
  %v5633 = vld [vmem:[%s8 + $0x398] sm:$0xff]
  %v5634 = vld [vmem:[%s8 + $0x3a0] sm:$0xff]
  %v5635 = vld [vmem:[%s8 + $0x3a8] sm:$0xff]
  %v5636 = vld [vmem:[%s8 + $0x3b0] sm:$0xff]
  %v5637 = vld [vmem:[%s8 + $0x3b8] sm:$0xff]
  %v5638 = vld [vmem:[%s8 + $0x3c0] sm:$0xff]
  %v5639 = vld [vmem:[%s8 + $0x3c8] sm:$0xff]
  %v5640 = vld [vmem:[%s8 + $0x3d0] sm:$0xff]
  %v5641 = vld [vmem:[%s8 + $0x3d8] sm:$0xff]
  %v5642 = vld [vmem:[%s8 + $0x3e0] sm:$0xff]
  %v5643 = vld [vmem:[%s8 + $0x3e8] sm:$0xff]
  %v5644 = vld [vmem:[%s8 + $0x3f0] sm:$0xff]
  %v5645 = vld [vmem:[%s8 + $0x3f8] sm:$0xff]
  %v5646 = vld [vmem:[%s8 + $0x400] sm:$0xff]
  %v5647 = vld [vmem:[%s8 + $0x408] sm:$0xff]
  %v5648 = vld [vmem:[%s8 + $0x410] sm:$0xff]
  %v5649 = vld [vmem:[%s8 + $0x418] sm:$0xff]
  %v5650 = vld [vmem:[%s8 + $0x420] sm:$0xff]
  %v5651 = vld [vmem:[%s8 + $0x428] sm:$0xff]
  %v5652 = vld [vmem:[%s8 + $0x430] sm:$0xff]
  %v5653 = vld [vmem:[%s8 + $0x438] sm:$0xff]
  %v5654 = vld [vmem:[%s8 + $0x440] sm:$0xff]
  %v5655 = vld [vmem:[%s8 + $0x448] sm:$0xff]
  %v5656 = vld [vmem:[%s8 + $0x450] sm:$0xff]
  %v5657 = vld [vmem:[%s8 + $0x458] sm:$0xff]
  %v5658 = vld [vmem:[%s8 + $0x460] sm:$0xff]
  %v5659 = vld [vmem:[%s8 + $0x468] sm:$0xff]
  %v5660 = vld [vmem:[%s8 + $0x470] sm:$0xff]
  %v5661 = vld [vmem:[%s8 + $0x478] sm:$0xff]
  %v5662 = vld [vmem:[%s8 + $0x480] sm:$0xff]
  %v5663 = vld [vmem:[%s8 + $0x488] sm:$0xff]
  %v5664 = vld [vmem:[%s8 + $0x490] sm:$0xff]
  %v5665 = vld [vmem:[%s8 + $0x498] sm:$0xff]
  %v5666 = vld [vmem:[%s8 + $0x4a0] sm:$0xff]
  %v5667 = vld [vmem:[%s8 + $0x4a8] sm:$0xff]
  %v5668 = vld [vmem:[%s8 + $0x4b0] sm:$0xff]
  %v5669 = vld [vmem:[%s8 + $0x4b8] sm:$0xff]
  %v5670 = vld [vmem:[%s8 + $0x4c0] sm:$0xff]
  %v5671 = vld [vmem:[%s8 + $0x4c8] sm:$0xff]
  %v5672 = vld [vmem:[%s8 + $0x4d0] sm:$0xff]
  %v5673 = vld [vmem:[%s8 + $0x4d8] sm:$0xff]
  %v5674 = vld [vmem:[%s8 + $0x4e0] sm:$0xff]
  %v5675 = vld [vmem:[%s8 + $0x4e8] sm:$0xff]
  %v5676 = vld [vmem:[%s8 + $0x4f0] sm:$0xff]
  %v5677 = vld [vmem:[%s8 + $0x4f8] sm:$0xff]
  %v5678 = vld [vmem:[%s8 + $0x500] sm:$0xff]
  %v5679 = vld [vmem:[%s8 + $0x508] sm:$0xff]
  %v5680 = vld [vmem:[%s8 + $0x510] sm:$0xff]
  %v5681 = vld [vmem:[%s8 + $0x518] sm:$0xff]
  %v5682 = vld [vmem:[%s8 + $0x520] sm:$0xff]
  %v5683 = vld [vmem:[%s8 + $0x528] sm:$0xff]
  %v5684 = vld [vmem:[%s8 + $0x530] sm:$0xff]
  %v5685 = vld [vmem:[%s8 + $0x538] sm:$0xff]
  %v5686 = vld [vmem:[%s8 + $0x540] sm:$0xff]
  %v5687 = vld [vmem:[%s8 + $0x548] sm:$0xff]
  %v5688 = vld [vmem:[%s8 + $0x550] sm:$0xff]
  %v5689 = vld [vmem:[%s8 + $0x558] sm:$0xff]
  %v5690 = vld [vmem:[%s8 + $0x560] sm:$0xff]
  %v5691 = vld [vmem:[%s8 + $0x568] sm:$0xff]
  %v5692 = vld [vmem:[%s8 + $0x570] sm:$0xff]
  %v5693 = vld [vmem:[%s8 + $0x578] sm:$0xff]
  %v5694 = vld [vmem:[%s8 + $0x580] sm:$0xff]
  %v5695 = vld [vmem:[%s8 + $0x588] sm:$0xff]
  %v5696 = vld [vmem:[%s8 + $0x590] sm:$0xff]
  %v5697 = vld [vmem:[%s8 + $0x598] sm:$0xff]
  %v5698 = vld [vmem:[%s8 + $0x5a0] sm:$0xff]
  %v5699 = vld [vmem:[%s8 + $0x5a8] sm:$0xff]
  %v5700 = vld [vmem:[%s8 + $0x5b0] sm:$0xff]
  %v5701 = vld [vmem:[%s8 + $0x5b8] sm:$0xff]
  %v5702 = vld [vmem:[%s8 + $0x5c0] sm:$0xff]
  %v5703 = vld [vmem:[%s8 + $0x5c8] sm:$0xff]
  %v5704 = vld [vmem:[%s8 + $0x5d0] sm:$0xff]
  %v5705 = vld [vmem:[%s8 + $0x5d8] sm:$0xff]
  %v5706 = vld [vmem:[%s8 + $0x5e0] sm:$0xff]
  %v5707 = vld [vmem:[%s8 + $0x5e8] sm:$0xff]
  %v5708 = vld [vmem:[%s8 + $0x5f0] sm:$0xff]
  %v5709 = vld [vmem:[%s8 + $0x5f8] sm:$0xff]
  %v5710 = vld [vmem:[%s8 + $0x600] sm:$0xff]
  %v5711 = vld [vmem:[%s8 + $0x608] sm:$0xff]
  %v5712 = vld [vmem:[%s8 + $0x610] sm:$0xff]
  %v5713 = vld [vmem:[%s8 + $0x618] sm:$0xff]
  %v5714 = vld [vmem:[%s8 + $0x620] sm:$0xff]
  %v5715 = vld [vmem:[%s8 + $0x628] sm:$0xff]
  %v5716 = vld [vmem:[%s8 + $0x630] sm:$0xff]
  %v5717 = vld [vmem:[%s8 + $0x638] sm:$0xff]
  %v5718 = vld [vmem:[%s8 + $0x640] sm:$0xff]
  %v5719 = vld [vmem:[%s8 + $0x648] sm:$0xff]
  %v5720 = vld [vmem:[%s8 + $0x650] sm:$0xff]
  %v5721 = vld [vmem:[%s8 + $0x658] sm:$0xff]
  %v5722 = vld [vmem:[%s8 + $0x660] sm:$0xff]
  %v5723 = vld [vmem:[%s8 + $0x668] sm:$0xff]
  %v5724 = vld [vmem:[%s8 + $0x670] sm:$0xff]
  %v5725 = vld [vmem:[%s8 + $0x678] sm:$0xff]
  %v5726 = vld [vmem:[%s8 + $0x680] sm:$0xff]
  %v5727 = vld [vmem:[%s8 + $0x688] sm:$0xff]
  %v5728 = vld [vmem:[%s8 + $0x690] sm:$0xff]
  %v5729 = vld [vmem:[%s8 + $0x698] sm:$0xff]
  %v5730 = vld [vmem:[%s8 + $0x6a0] sm:$0xff]
  %v5731 = vld [vmem:[%s8 + $0x6a8] sm:$0xff]
  %v5732 = vld [vmem:[%s8 + $0x6b0] sm:$0xff]
  %v5733 = vld [vmem:[%s8 + $0x6b8] sm:$0xff]
  %v5734 = vld [vmem:[%s8 + $0x6c0] sm:$0xff]
  %v5735 = vld [vmem:[%s8 + $0x6c8] sm:$0xff]
  %v5736 = vld [vmem:[%s8 + $0x6d0] sm:$0xff]
  %v5737 = vld [vmem:[%s8 + $0x6d8] sm:$0xff]
  %v5738 = vld [vmem:[%s8 + $0x6e0] sm:$0xff]
  %v5739 = vld [vmem:[%s8 + $0x6e8] sm:$0xff]
  %v5740 = vld [vmem:[%s8 + $0x6f0] sm:$0xff]
  %v5741 = vld [vmem:[%s8 + $0x6f8] sm:$0xff]
  %v5742 = vld [vmem:[%s8 + $0x700] sm:$0xff]
  %v5743 = vld [vmem:[%s8 + $0x708] sm:$0xff]
  %v5744 = vld [vmem:[%s8 + $0x710] sm:$0xff]
  %v5745 = vld [vmem:[%s8 + $0x718] sm:$0xff]
  %v5746 = vld [vmem:[%s8 + $0x720] sm:$0xff]
  %v5747 = vld [vmem:[%s8 + $0x728] sm:$0xff]
  %v5748 = vld [vmem:[%s8 + $0x730] sm:$0xff]
  %v5749 = vld [vmem:[%s8 + $0x738] sm:$0xff]
  %v5750 = vld [vmem:[%s8 + $0x740] sm:$0xff]
  %v5751 = vld [vmem:[%s8 + $0x748] sm:$0xff]
  %v5752 = vld [vmem:[%s8 + $0x750] sm:$0xff]
  %v5753 = vld [vmem:[%s8 + $0x758] sm:$0xff]
  %v5754 = vld [vmem:[%s8 + $0x760] sm:$0xff]
  %v5755 = vld [vmem:[%s8 + $0x768] sm:$0xff]
  %v5756 = vld [vmem:[%s8 + $0x770] sm:$0xff]
  %v5757 = vld [vmem:[%s8 + $0x778] sm:$0xff]
  %v5758 = vld [vmem:[%s8 + $0x780] sm:$0xff]
  %v5759 = vld [vmem:[%s8 + $0x788] sm:$0xff]
  %v5760 = vld [vmem:[%s8 + $0x790] sm:$0xff]
  %v5761 = vld [vmem:[%s8 + $0x798] sm:$0xff]
  %v5762 = vld [vmem:[%s8 + $0x7a0] sm:$0xff]
  %v5763 = vld [vmem:[%s8 + $0x7a8] sm:$0xff]
  %v5764 = vld [vmem:[%s8 + $0x7b0] sm:$0xff]
  %v5765 = vld [vmem:[%s8 + $0x7b8] sm:$0xff]
  %v5766 = vld [vmem:[%s8 + $0x7c0] sm:$0xff]
  %v5767 = vld [vmem:[%s8 + $0x7c8] sm:$0xff]
  %v5768 = vld [vmem:[%s8 + $0x7d0] sm:$0xff]
  %v5769 = vld [vmem:[%s8 + $0x7d8] sm:$0xff]
  %v5770 = vld [vmem:[%s8 + $0x7e0] sm:$0xff]
  %v5771 = vld [vmem:[%s8 + $0x7e8] sm:$0xff]
  %v5772 = vld [vmem:[%s8 + $0x7f0] sm:$0xff]
  %v5773 = vld [vmem:[%s8 + $0x7f8] sm:$0xff]
  %v5774 = vld [vmem:[%s8 + $0x800] sm:$0xff]
  %v5775 = vld [vmem:[%s8 + $0x808] sm:$0xff]
  %v5776 = vld [vmem:[%s8 + $0x810] sm:$0xff]
  %v5777 = vld [vmem:[%s8 + $0x818] sm:$0xff]
  %v5778 = vld [vmem:[%s8 + $0x820] sm:$0xff]
  %v5779 = vld [vmem:[%s8 + $0x828] sm:$0xff]
  %v5780 = vld [vmem:[%s8 + $0x830] sm:$0xff]
  %v5781 = vld [vmem:[%s8 + $0x838] sm:$0xff]
  %v5782 = vld [vmem:[%s8 + $0x840] sm:$0xff]
  %v5783 = vld [vmem:[%s8 + $0x848] sm:$0xff]
  %v5784 = vld [vmem:[%s8 + $0x850] sm:$0xff]
  %v5785 = vld [vmem:[%s8 + $0x858] sm:$0xff]
  %v5786 = vld [vmem:[%s8 + $0x860] sm:$0xff]
  %v5787 = vld [vmem:[%s8 + $0x868] sm:$0xff]
  %v5788 = vld [vmem:[%s8 + $0x870] sm:$0xff]
  %v5789 = vld [vmem:[%s8 + $0x878] sm:$0xff]
  %v5790 = vld [vmem:[%s8 + $0x880] sm:$0xff]
  %v5791 = vld [vmem:[%s8 + $0x888] sm:$0xff]
  %v5792 = vld [vmem:[%s8 + $0x890] sm:$0xff]
  %v5793 = vld [vmem:[%s8 + $0x898] sm:$0xff]
  %v5794 = vld [vmem:[%s8 + $0x8a0] sm:$0xff]
  %v5795 = vld [vmem:[%s8 + $0x8a8] sm:$0xff]
  %v5796 = vld [vmem:[%s8 + $0x8b0] sm:$0xff]
  %v5797 = vld [vmem:[%s8 + $0x8b8] sm:$0xff]
  %v5798 = vld [vmem:[%s8 + $0x8c0] sm:$0xff]
  %v5799 = vld [vmem:[%s8 + $0x8c8] sm:$0xff]
  %v5800 = vld [vmem:[%s8 + $0x8d0] sm:$0xff]
  %v5801 = vld [vmem:[%s8 + $0x8d8] sm:$0xff]
  %v5802 = vld [vmem:[%s8 + $0x8e0] sm:$0xff]
  %v5803 = vld [vmem:[%s8 + $0x8e8] sm:$0xff]
  %v5804 = vld [vmem:[%s8 + $0x8f0] sm:$0xff]
  %v5805 = vld [vmem:[%s8 + $0x8f8] sm:$0xff]
  %v5806 = vld [vmem:[%s8 + $0x900] sm:$0xff]
  %v5807 = vld [vmem:[%s8 + $0x908] sm:$0xff]
  %v5808 = vld [vmem:[%s8 + $0x910] sm:$0xff]
  %v5809 = vld [vmem:[%s8 + $0x918] sm:$0xff]
  %v5810 = vld [vmem:[%s8 + $0x920] sm:$0xff]
  %v5811 = vld [vmem:[%s8 + $0x928] sm:$0xff]
  %v5812 = vld [vmem:[%s8 + $0x930] sm:$0xff]
  %v5813 = vld [vmem:[%s8 + $0x938] sm:$0xff]
  %v5814 = vld [vmem:[%s8 + $0x940] sm:$0xff]
  %v5815 = vld [vmem:[%s8 + $0x948] sm:$0xff]
  %v5816 = vld [vmem:[%s8 + $0x950] sm:$0xff]
  %v5817 = vld [vmem:[%s8 + $0x958] sm:$0xff]
  %v5818 = vld [vmem:[%s8 + $0x960] sm:$0xff]
  %v5819 = vld [vmem:[%s8 + $0x968] sm:$0xff]
  %v5820 = vld [vmem:[%s8 + $0x970] sm:$0xff]
  %v5821 = vld [vmem:[%s8 + $0x978] sm:$0xff]
  %v5822 = vld [vmem:[%s8 + $0x980] sm:$0xff]
  %v5823 = vld [vmem:[%s8 + $0x988] sm:$0xff]
  %v5824 = vld [vmem:[%s8 + $0x990] sm:$0xff]
  %v5825 = vld [vmem:[%s8 + $0x998] sm:$0xff]
  %v5826 = vld [vmem:[%s8 + $0x9a0] sm:$0xff]
  %v5827 = vld [vmem:[%s8 + $0x9a8] sm:$0xff]
  %v5828 = vld [vmem:[%s8 + $0x9b0] sm:$0xff]
  %v5829 = vld [vmem:[%s8 + $0x9b8] sm:$0xff]
  %v5830 = vld [vmem:[%s8 + $0x9c0] sm:$0xff]
  %v5831 = vld [vmem:[%s8 + $0x9c8] sm:$0xff]
  %v5832 = vld [vmem:[%s8 + $0x9d0] sm:$0xff]
  %v5833 = vld [vmem:[%s8 + $0x9d8] sm:$0xff]
  %v5834 = vld [vmem:[%s8 + $0x9e0] sm:$0xff]
  %v5835 = vld [vmem:[%s8 + $0x9e8] sm:$0xff]
  %v5836 = vld [vmem:[%s8 + $0x9f0] sm:$0xff]
  %v5837 = vld [vmem:[%s8 + $0x9f8] sm:$0xff]
  %v5838 = vld [vmem:[%s8 + $0xa00] sm:$0xff]
  %v5839 = vld [vmem:[%s8 + $0xa08] sm:$0xff]
  %v5840 = vld [vmem:[%s8 + $0xa10] sm:$0xff]
  %v5841 = vld [vmem:[%s8 + $0xa18] sm:$0xff]
  %v5842 = vld [vmem:[%s8 + $0xa20] sm:$0xff]
  %v5843 = vld [vmem:[%s8 + $0xa28] sm:$0xff]
  %v5844 = vld [vmem:[%s8 + $0xa30] sm:$0xff]
  %v5845 = vld [vmem:[%s8 + $0xa38] sm:$0xff]
  %v5846 = vld [vmem:[%s8 + $0xa40] sm:$0xff]
  %v5847 = vld [vmem:[%s8 + $0xa48] sm:$0xff]
  %v5848 = vld [vmem:[%s8 + $0xa50] sm:$0xff]
  %v5849 = vld [vmem:[%s8 + $0xa58] sm:$0xff]
  %v5850 = vld [vmem:[%s8 + $0xa60] sm:$0xff]
  %v5851 = vld [vmem:[%s8 + $0xa68] sm:$0xff]
  %v5852 = vld [vmem:[%s8 + $0xa70] sm:$0xff]
  %v5853 = vld [vmem:[%s8 + $0xa78] sm:$0xff]
  %v5854 = vld [vmem:[%s8 + $0xa80] sm:$0xff]
  %v5855 = vld [vmem:[%s8 + $0xa88] sm:$0xff]
  %v5856 = vld [vmem:[%s8 + $0xa90] sm:$0xff]
  %v5857 = vld [vmem:[%s8 + $0xa98] sm:$0xff]
  %v5858 = vld [vmem:[%s8 + $0xaa0] sm:$0xff]
  %v5859 = vld [vmem:[%s8 + $0xaa8] sm:$0xff]
  %v5860 = vld [vmem:[%s8 + $0xab0] sm:$0xff]
  %v5861 = vld [vmem:[%s8 + $0xab8] sm:$0xff]
  %v5862 = vld [vmem:[%s8 + $0xac0] sm:$0xff]
  %v5863 = vld [vmem:[%s8 + $0xac8] sm:$0xff]
  %v5864 = vld [vmem:[%s8 + $0xad0] sm:$0xff]
  %v5865 = vld [vmem:[%s8 + $0xad8] sm:$0xff]
  %v5866 = vld [vmem:[%s8 + $0xae0] sm:$0xff]
  %v5867 = vld [vmem:[%s8 + $0xae8] sm:$0xff]
  %v5868 = vld [vmem:[%s8 + $0xaf0] sm:$0xff]
  %v5869 = vld [vmem:[%s8 + $0xaf8] sm:$0xff]
  %v5870 = vld [vmem:[%s8 + $0xb00] sm:$0xff]
  %v5871 = vld [vmem:[%s8 + $0xb08] sm:$0xff]
  %v5872 = vld [vmem:[%s8 + $0xb10] sm:$0xff]
  %v5873 = vld [vmem:[%s8 + $0xb18] sm:$0xff]
  %v5874 = vld [vmem:[%s8 + $0xb20] sm:$0xff]
  %v5875 = vld [vmem:[%s8 + $0xb28] sm:$0xff]
  %v5876 = vld [vmem:[%s8 + $0xb30] sm:$0xff]
  %v5877 = vld [vmem:[%s8 + $0xb38] sm:$0xff]
  %v5878 = vld [vmem:[%s8 + $0xb40] sm:$0xff]
  %v5879 = vld [vmem:[%s8 + $0xb48] sm:$0xff]
  %v5880 = vld [vmem:[%s8 + $0xb50] sm:$0xff]
  %v5881 = vld [vmem:[%s8 + $0xb58] sm:$0xff]
  %v5882 = vld [vmem:[%s8 + $0xb60] sm:$0xff]
  %v5883 = vld [vmem:[%s8 + $0xb68] sm:$0xff]
  %v5884 = vld [vmem:[%s8 + $0xb70] sm:$0xff]
  %v5885 = vld [vmem:[%s8 + $0xb78] sm:$0xff]
  %v5886 = vld [vmem:[%s8 + $0xb80] sm:$0xff]
  %v5887 = vld [vmem:[%s8 + $0xb88] sm:$0xff]
  %v5888 = vld [vmem:[%s8 + $0xb90] sm:$0xff]
  %v5889 = vld [vmem:[%s8 + $0xb98] sm:$0xff]
  %v5890 = vld [vmem:[%s8 + $0xba0] sm:$0xff]
  %v5891 = vld [vmem:[%s8 + $0xba8] sm:$0xff]
  %v5892 = vld [vmem:[%s8 + $0xbb0] sm:$0xff]
  %v5893 = vld [vmem:[%s8 + $0xbb8] sm:$0xff]
  %v5894 = vld [vmem:[%s8 + $0xbc0] sm:$0xff]
  %v5895 = vld [vmem:[%s8 + $0xbc8] sm:$0xff]
  %v5896 = vld [vmem:[%s8 + $0xbd0] sm:$0xff]
  %v5897 = vld [vmem:[%s8 + $0xbd8] sm:$0xff]
  %v5898 = vld [vmem:[%s8 + $0xbe0] sm:$0xff]
  %v5899 = vld [vmem:[%s8 + $0xbe8] sm:$0xff]
  %v5900 = vld [vmem:[%s8 + $0xbf0] sm:$0xff]
  %v5901 = vld [vmem:[%s8 + $0xbf8] sm:$0xff]
  %v5902 = vld [vmem:[%s8 + $0xc00] sm:$0xff]
  %v5903 = vld [vmem:[%s8 + $0xc08] sm:$0xff]
  %v5904 = vld [vmem:[%s8 + $0xc10] sm:$0xff]
  %v5905 = vld [vmem:[%s8 + $0xc18] sm:$0xff]
  %v5906 = vld [vmem:[%s8 + $0xc20] sm:$0xff]
  %v5907 = vld [vmem:[%s8 + $0xc28] sm:$0xff]
  %v5908 = vld [vmem:[%s8 + $0xc30] sm:$0xff]
  %v5909 = vld [vmem:[%s8 + $0xc38] sm:$0xff]
  %v5910 = vld [vmem:[%s8 + $0xc40] sm:$0xff]
  %v5911 = vld [vmem:[%s8 + $0xc48] sm:$0xff]
  %v5912 = vld [vmem:[%s8 + $0xc50] sm:$0xff]
  %v5913 = vld [vmem:[%s8 + $0xc58] sm:$0xff]
  %v5914 = vld [vmem:[%s8 + $0xc60] sm:$0xff]
  %v5915 = vld [vmem:[%s8 + $0xc68] sm:$0xff]
  %v5916 = vld [vmem:[%s8 + $0xc70] sm:$0xff]
  %v5917 = vld [vmem:[%s8 + $0xc78] sm:$0xff]
  %v5918 = vld [vmem:[%s8 + $0xc80] sm:$0xff]
  %v5919 = vld [vmem:[%s8 + $0xc88] sm:$0xff]
  %v5920 = vld [vmem:[%s8 + $0xc90] sm:$0xff]
  %v5921 = vld [vmem:[%s8 + $0xc98] sm:$0xff]
  %v5922 = vld [vmem:[%s8 + $0xca0] sm:$0xff]
  %v5923 = vld [vmem:[%s8 + $0xca8] sm:$0xff]
  %v5924 = vld [vmem:[%s8 + $0xcb0] sm:$0xff]
  %v5925 = vld [vmem:[%s8 + $0xcb8] sm:$0xff]
  %v5926 = vld [vmem:[%s8 + $0xcc0] sm:$0xff]
  %v5927 = vld [vmem:[%s8 + $0xcc8] sm:$0xff]
  %v5928 = vld [vmem:[%s8 + $0xcd0] sm:$0xff]
  %v5929 = vld [vmem:[%s8 + $0xcd8] sm:$0xff]
  %v5930 = vld [vmem:[%s8 + $0xce0] sm:$0xff]
  %v5931 = vld [vmem:[%s8 + $0xce8] sm:$0xff]
  %v5932 = vld [vmem:[%s8 + $0xcf0] sm:$0xff]
  %v5933 = vld [vmem:[%s8 + $0xcf8] sm:$0xff]
  %v5934 = vld [vmem:[%s8 + $0xd00] sm:$0xff]
  %v5935 = vld [vmem:[%s8 + $0xd08] sm:$0xff]
  %v5936 = vld [vmem:[%s8 + $0xd10] sm:$0xff]
  %v5937 = vld [vmem:[%s8 + $0xd18] sm:$0xff]
  %v5938 = vld [vmem:[%s8 + $0xd20] sm:$0xff]
  %v5939 = vld [vmem:[%s8 + $0xd28] sm:$0xff]
  %v5940 = vld [vmem:[%s8 + $0xd30] sm:$0xff]
  %v5941 = vld [vmem:[%s8 + $0xd38] sm:$0xff]
  %v5942 = vld [vmem:[%s8 + $0xd40] sm:$0xff]
  %v5943 = vld [vmem:[%s8 + $0xd48] sm:$0xff]
  %v5944 = vld [vmem:[%s8 + $0xd50] sm:$0xff]
  %v5945 = vld [vmem:[%s8 + $0xd58] sm:$0xff]
  %v5946 = vld [vmem:[%s8 + $0xd60] sm:$0xff]
  %v5947 = vld [vmem:[%s8 + $0xd68] sm:$0xff]
  %v5948 = vld [vmem:[%s8 + $0xd70] sm:$0xff]
  %v5949 = vld [vmem:[%s8 + $0xd78] sm:$0xff]
  %v5950 = vld [vmem:[%s8 + $0xd80] sm:$0xff]
  %v5951 = vld [vmem:[%s8 + $0xd88] sm:$0xff]
  %v5952 = vld [vmem:[%s8 + $0xd90] sm:$0xff]
  %v5953 = vld [vmem:[%s8 + $0xd98] sm:$0xff]
  %v5954 = vld [vmem:[%s8 + $0xda0] sm:$0xff]
  %v5955 = vld [vmem:[%s8 + $0xda8] sm:$0xff]
  %v5956 = vld [vmem:[%s8 + $0xdb0] sm:$0xff]
  %v5957 = vld [vmem:[%s8 + $0xdb8] sm:$0xff]
  %v5958 = vld [vmem:[%s8 + $0xdc0] sm:$0xff]
  %v5959 = vld [vmem:[%s8 + $0xdc8] sm:$0xff]
  %v5960 = vld [vmem:[%s8 + $0xdd0] sm:$0xff]
  %v5961 = vld [vmem:[%s8 + $0xdd8] sm:$0xff]
  %v5962 = vld [vmem:[%s8 + $0xde0] sm:$0xff]
  %v5963 = vld [vmem:[%s8 + $0xde8] sm:$0xff]
  %v5964 = vld [vmem:[%s8 + $0xdf0] sm:$0xff]
  %v5965 = vld [vmem:[%s8 + $0xdf8] sm:$0xff]
  %v5966 = vld [vmem:[%s8 + $0xe00] sm:$0xff]
  %v5967 = vld [vmem:[%s8 + $0xe08] sm:$0xff]
  %v5968 = vld [vmem:[%s8 + $0xe10] sm:$0xff]
  %v5969 = vld [vmem:[%s8 + $0xe18] sm:$0xff]
  %v5970 = vld [vmem:[%s8 + $0xe20] sm:$0xff]
  %v5971 = vld [vmem:[%s8 + $0xe28] sm:$0xff]
  %v5972 = vld [vmem:[%s8 + $0xe30] sm:$0xff]
  %v5973 = vld [vmem:[%s8 + $0xe38] sm:$0xff]
  %v5974 = vld [vmem:[%s8 + $0xe40] sm:$0xff]
  %v5975 = vld [vmem:[%s8 + $0xe48] sm:$0xff]
  %v5976 = vld [vmem:[%s8 + $0xe50] sm:$0xff]
  %v5977 = vld [vmem:[%s8 + $0xe58] sm:$0xff]
  %v5978 = vld [vmem:[%s8 + $0xe60] sm:$0xff]
  %v5979 = vld [vmem:[%s8 + $0xe68] sm:$0xff]
  %v5980 = vld [vmem:[%s8 + $0xe70] sm:$0xff]
  %v5981 = vld [vmem:[%s8 + $0xe78] sm:$0xff]
  %v5982 = vld [vmem:[%s8 + $0xe80] sm:$0xff]
  %v5983 = vld [vmem:[%s8 + $0xe88] sm:$0xff]
  %v5984 = vld [vmem:[%s8 + $0xe90] sm:$0xff]
  %v5985 = vld [vmem:[%s8 + $0xe98] sm:$0xff]
  %v5986 = vld [vmem:[%s8 + $0xea0] sm:$0xff]
  %v5987 = vld [vmem:[%s8 + $0xea8] sm:$0xff]
  %v5988 = vld [vmem:[%s8 + $0xeb0] sm:$0xff]
  %v5989 = vld [vmem:[%s8 + $0xeb8] sm:$0xff]
  %v5990 = vld [vmem:[%s8 + $0xec0] sm:$0xff]
  %v5991 = vld [vmem:[%s8 + $0xec8] sm:$0xff]
  %v5992 = vld [vmem:[%s8 + $0xed0] sm:$0xff]
  %v5993 = vld [vmem:[%s8 + $0xed8] sm:$0xff]
  %v5994 = vld [vmem:[%s8 + $0xee0] sm:$0xff]
  %v5995 = vld [vmem:[%s8 + $0xee8] sm:$0xff]
  %v5996 = vld [vmem:[%s8 + $0xef0] sm:$0xff]
  %v5997 = vld [vmem:[%s8 + $0xef8] sm:$0xff]
  %v5998 = vld [vmem:[%s8 + $0xf00] sm:$0xff]
  %v5999 = vld [vmem:[%s8 + $0xf08] sm:$0xff]
  %v6000 = vld [vmem:[%s8 + $0xf10] sm:$0xff]
  %v6001 = vld [vmem:[%s8 + $0xf18] sm:$0xff]
  %v6002 = vld [vmem:[%s8 + $0xf20] sm:$0xff]
  %v6003 = vld [vmem:[%s8 + $0xf28] sm:$0xff]
  %v6004 = vld [vmem:[%s8 + $0xf30] sm:$0xff]
  %v6005 = vld [vmem:[%s8 + $0xf38] sm:$0xff]
  %v6006 = vld [vmem:[%s8 + $0xf40] sm:$0xff]
  %v6007 = vld [vmem:[%s8 + $0xf48] sm:$0xff]
  %v6008 = vld [vmem:[%s8 + $0xf50] sm:$0xff]
  %v6009 = vld [vmem:[%s8 + $0xf58] sm:$0xff]
  %v6010 = vld [vmem:[%s8 + $0xf60] sm:$0xff]
  %v6011 = vld [vmem:[%s8 + $0xf68] sm:$0xff]
  %v6012 = vld [vmem:[%s8 + $0xf70] sm:$0xff]
  %v6013 = vld [vmem:[%s8 + $0xf78] sm:$0xff]
  %v6014 = vld [vmem:[%s8 + $0xf80] sm:$0x33]
  %v6015 = vld [vmem:[%s8 + $0xf88] sm:$0x33]
  %v6016 = vld [vmem:[%s8 + $0xf90] sm:$0x33]
  %v6017 = vld [vmem:[%s8 + $0xf98] sm:$0x33]
  %v6018 = vld [vmem:[%s8 + $0xfa0] sm:$0x33]
  %v6019 = vld [vmem:[%s8 + $0xfa8] sm:$0x33]
  %v6020 = vld [vmem:[%s8 + $0xfb0] sm:$0x33]
  %v6021 = vld [vmem:[%s8 + $0xfb8] sm:$0x33]
  %v6022 = vld [vmem:[%s9] sm:$0xff]
  %v6023 = vld [vmem:[%s9 + $0x8] sm:$0xff]
  %v6026 = vlaneseq
  %v6027 = vshrl.u32 %v6026, 7
  %v6028 = vsub.s32 0, %v6027
  %v6029 = vrot.slane %v6022, %v6028
  %v6030 = vlaneseq
  %v6031 = vshrl.u32 %v6030, 7
  %v6032 = vsub.s32 1, %v6031
  %v6033 = vrot.slane %v6022, %v6032
  %v6034 = vlaneseq
  %v6035 = vshrl.u32 %v6034, 7
  %v6036 = vsub.s32 2, %v6035
  %v6037 = vrot.slane %v6022, %v6036
  %v6038 = vlaneseq
  %v6039 = vshrl.u32 %v6038, 7
  %v6040 = vsub.s32 3, %v6039
  %v6041 = vrot.slane %v6022, %v6040
  %v6042 = vlaneseq
  %v6043 = vshrl.u32 %v6042, 7
  %v6044 = vsub.s32 4, %v6043
  %v6045 = vrot.slane %v6022, %v6044
  %v6046 = vlaneseq
  %v6047 = vshrl.u32 %v6046, 7
  %v6048 = vsub.s32 5, %v6047
  %v6049 = vrot.slane %v6022, %v6048
  %v6050 = vlaneseq
  %v6051 = vshrl.u32 %v6050, 7
  %v6052 = vsub.s32 6, %v6051
  %v6053 = vrot.slane %v6022, %v6052
  %v6054 = vlaneseq
  %v6055 = vshrl.u32 %v6054, 7
  %v6056 = vsub.s32 7, %v6055
  %v6057 = vrot.slane %v6022, %v6056
  %v6058 = vlaneseq
  %v6059 = vshrl.u32 %v6058, 7
  %v6060 = vsub.s32 0, %v6059
  %v6061 = vrot.slane %v6023, %v6060
  %v6062 = vlaneseq
  %v6063 = vshrl.u32 %v6062, 7
  %v6064 = vsub.s32 1, %v6063
  %v6065 = vrot.slane %v6023, %v6064
  %v6066 = vlaneseq
  %v6067 = vshrl.u32 %v6066, 7
  %v6068 = vsub.s32 2, %v6067
  %v6069 = vrot.slane %v6023, %v6068
  %v6070 = vlaneseq
  %v6071 = vshrl.u32 %v6070, 7
  %v6072 = vsub.s32 3, %v6071
  %v6073 = vrot.slane %v6023, %v6072
  %v6074 = vlaneseq
  %v6075 = vshrl.u32 %v6074, 7
  %v6076 = vsub.s32 4, %v6075
  %v6077 = vrot.slane %v6023, %v6076
  %v6078 = vlaneseq
  %v6079 = vshrl.u32 %v6078, 7
  %v6080 = vsub.s32 5, %v6079
  %v6081 = vrot.slane %v6023, %v6080
  %v6082 = vlaneseq
  %v6083 = vshrl.u32 %v6082, 7
  %v6084 = vsub.s32 6, %v6083
  %v6085 = vrot.slane %v6023, %v6084
  %v6086 = vlaneseq
  %v6087 = vshrl.u32 %v6086, 7
  %v6088 = vsub.s32 7, %v6087
  %v6089 = vrot.slane %v6023, %v6088
  %v6610 = vunpack.c.l.b16 %v5518
  %v6611 = vunpack.c.h.b16 %v5518
  %v6612 = vunpack.c.l.b16 %v5519
  %v6613 = vunpack.c.h.b16 %v5519
  %v6614 = vunpack.c.l.b16 %v5520
  %v6615 = vunpack.c.h.b16 %v5520
  %v6616 = vunpack.c.l.b16 %v5521
  %v6617 = vunpack.c.h.b16 %v5521
  %v6618 = vunpack.c.l.b16 %v5522
  %v6619 = vunpack.c.h.b16 %v5522
  %v6620 = vunpack.c.l.b16 %v5523
  %v6621 = vunpack.c.h.b16 %v5523
  %v6622 = vunpack.c.l.b16 %v5524
  %v6623 = vunpack.c.h.b16 %v5524
  %v6624 = vunpack.c.l.b16 %v5525
  %v6625 = vunpack.c.h.b16 %v5525
  %v6626 = vunpack.c.l.b16 %v5526
  %v6627 = vunpack.c.h.b16 %v5526
  %v6628 = vunpack.c.l.b16 %v5527
  %v6629 = vunpack.c.h.b16 %v5527
  %v6630 = vunpack.c.l.b16 %v5528
  %v6631 = vunpack.c.h.b16 %v5528
  %v6632 = vunpack.c.l.b16 %v5529
  %v6633 = vunpack.c.h.b16 %v5529
  %v6634 = vunpack.c.l.b16 %v5530
  %v6635 = vunpack.c.h.b16 %v5530
  %v6636 = vunpack.c.l.b16 %v5531
  %v6637 = vunpack.c.h.b16 %v5531
  %v6638 = vunpack.c.l.b16 %v5532
  %v6639 = vunpack.c.h.b16 %v5532
  %v6640 = vunpack.c.l.b16 %v5533
  %v6641 = vunpack.c.h.b16 %v5533
  %v6642 = vunpack.c.l.b16 %v5534
  %v6643 = vunpack.c.h.b16 %v5534
  %v6644 = vunpack.c.l.b16 %v5535
  %v6645 = vunpack.c.h.b16 %v5535
  %v6646 = vunpack.c.l.b16 %v5536
  %v6647 = vunpack.c.h.b16 %v5536
  %v6648 = vunpack.c.l.b16 %v5537
  %v6649 = vunpack.c.h.b16 %v5537
  %v6650 = vunpack.c.l.b16 %v5538
  %v6651 = vunpack.c.h.b16 %v5538
  %v6652 = vunpack.c.l.b16 %v5539
  %v6653 = vunpack.c.h.b16 %v5539
  %v6654 = vunpack.c.l.b16 %v5540
  %v6655 = vunpack.c.h.b16 %v5540
  %v6656 = vunpack.c.l.b16 %v5541
  %v6657 = vunpack.c.h.b16 %v5541
  %v6658 = vunpack.c.l.b16 %v5542
  %v6659 = vunpack.c.h.b16 %v5542
  %v6660 = vunpack.c.l.b16 %v5543
  %v6661 = vunpack.c.h.b16 %v5543
  %v6662 = vunpack.c.l.b16 %v5544
  %v6663 = vunpack.c.h.b16 %v5544
  %v6664 = vunpack.c.l.b16 %v5545
  %v6665 = vunpack.c.h.b16 %v5545
  %v6666 = vunpack.c.l.b16 %v5546
  %v6667 = vunpack.c.h.b16 %v5546
  %v6668 = vunpack.c.l.b16 %v5547
  %v6669 = vunpack.c.h.b16 %v5547
  %v6670 = vunpack.c.l.b16 %v5548
  %v6671 = vunpack.c.h.b16 %v5548
  %v6672 = vunpack.c.l.b16 %v5549
  %v6673 = vunpack.c.h.b16 %v5549
  %v6674 = vunpack.c.l.b16 %v5550
  %v6675 = vunpack.c.h.b16 %v5550
  %v6676 = vunpack.c.l.b16 %v5551
  %v6677 = vunpack.c.h.b16 %v5551
  %v6678 = vunpack.c.l.b16 %v5552
  %v6679 = vunpack.c.h.b16 %v5552
  %v6680 = vunpack.c.l.b16 %v5553
  %v6681 = vunpack.c.h.b16 %v5553
  %v6682 = vunpack.c.l.b16 %v5554
  %v6683 = vunpack.c.h.b16 %v5554
  %v6684 = vunpack.c.l.b16 %v5555
  %v6685 = vunpack.c.h.b16 %v5555
  %v6686 = vunpack.c.l.b16 %v5556
  %v6687 = vunpack.c.h.b16 %v5556
  %v6688 = vunpack.c.l.b16 %v5557
  %v6689 = vunpack.c.h.b16 %v5557
  %v6690 = vunpack.c.l.b16 %v5558
  %v6691 = vunpack.c.h.b16 %v5558
  %v6692 = vunpack.c.l.b16 %v5559
  %v6693 = vunpack.c.h.b16 %v5559
  %v6694 = vunpack.c.l.b16 %v5560
  %v6695 = vunpack.c.h.b16 %v5560
  %v6696 = vunpack.c.l.b16 %v5561
  %v6697 = vunpack.c.h.b16 %v5561
  %v6698 = vunpack.c.l.b16 %v5562
  %v6699 = vunpack.c.h.b16 %v5562
  %v6700 = vunpack.c.l.b16 %v5563
  %v6701 = vunpack.c.h.b16 %v5563
  %v6702 = vunpack.c.l.b16 %v5564
  %v6703 = vunpack.c.h.b16 %v5564
  %v6704 = vunpack.c.l.b16 %v5565
  %v6705 = vunpack.c.h.b16 %v5565
  %v6706 = vunpack.c.l.b16 %v5566
  %v6707 = vunpack.c.h.b16 %v5566
  %v6708 = vunpack.c.l.b16 %v5567
  %v6709 = vunpack.c.h.b16 %v5567
  %v6710 = vunpack.c.l.b16 %v5568
  %v6711 = vunpack.c.h.b16 %v5568
  %v6712 = vunpack.c.l.b16 %v5569
  %v6713 = vunpack.c.h.b16 %v5569
  %v6714 = vunpack.c.l.b16 %v5570
  %v6715 = vunpack.c.h.b16 %v5570
  %v6716 = vunpack.c.l.b16 %v5571
  %v6717 = vunpack.c.h.b16 %v5571
  %v6718 = vunpack.c.l.b16 %v5572
  %v6719 = vunpack.c.h.b16 %v5572
  %v6720 = vunpack.c.l.b16 %v5573
  %v6721 = vunpack.c.h.b16 %v5573
  %v6722 = vunpack.c.l.b16 %v5574
  %v6723 = vunpack.c.h.b16 %v5574
  %v6724 = vunpack.c.l.b16 %v5575
  %v6725 = vunpack.c.h.b16 %v5575
  %v6726 = vunpack.c.l.b16 %v5576
  %v6727 = vunpack.c.h.b16 %v5576
  %v6728 = vunpack.c.l.b16 %v5577
  %v6729 = vunpack.c.h.b16 %v5577
  %v6730 = vunpack.c.l.b16 %v5578
  %v6731 = vunpack.c.h.b16 %v5578
  %v6732 = vunpack.c.l.b16 %v5579
  %v6733 = vunpack.c.h.b16 %v5579
  %v6734 = vunpack.c.l.b16 %v5580
  %v6735 = vunpack.c.h.b16 %v5580
  %v6736 = vunpack.c.l.b16 %v5581
  %v6737 = vunpack.c.h.b16 %v5581
  %v6738 = vunpack.c.l.b16 %v5582
  %v6739 = vunpack.c.h.b16 %v5582
  %v6740 = vunpack.c.l.b16 %v5583
  %v6741 = vunpack.c.h.b16 %v5583
  %v6742 = vunpack.c.l.b16 %v5584
  %v6743 = vunpack.c.h.b16 %v5584
  %v6744 = vunpack.c.l.b16 %v5585
  %v6745 = vunpack.c.h.b16 %v5585
  %v6746 = vunpack.c.l.b16 %v5586
  %v6747 = vunpack.c.h.b16 %v5586
  %v6748 = vunpack.c.l.b16 %v5587
  %v6749 = vunpack.c.h.b16 %v5587
  %v6750 = vunpack.c.l.b16 %v5588
  %v6751 = vunpack.c.h.b16 %v5588
  %v6752 = vunpack.c.l.b16 %v5589
  %v6753 = vunpack.c.h.b16 %v5589
  %v6754 = vunpack.c.l.b16 %v5590
  %v6755 = vunpack.c.h.b16 %v5590
  %v6756 = vunpack.c.l.b16 %v5591
  %v6757 = vunpack.c.h.b16 %v5591
  %v6758 = vunpack.c.l.b16 %v5592
  %v6759 = vunpack.c.h.b16 %v5592
  %v6760 = vunpack.c.l.b16 %v5593
  %v6761 = vunpack.c.h.b16 %v5593
  %v6762 = vunpack.c.l.b16 %v5594
  %v6763 = vunpack.c.h.b16 %v5594
  %v6764 = vunpack.c.l.b16 %v5595
  %v6765 = vunpack.c.h.b16 %v5595
  %v6766 = vunpack.c.l.b16 %v5596
  %v6767 = vunpack.c.h.b16 %v5596
  %v6768 = vunpack.c.l.b16 %v5597
  %v6769 = vunpack.c.h.b16 %v5597
  %v6770 = vunpack.c.l.b16 %v5598
  %v6771 = vunpack.c.h.b16 %v5598
  %v6772 = vunpack.c.l.b16 %v5599
  %v6773 = vunpack.c.h.b16 %v5599
  %v6774 = vunpack.c.l.b16 %v5600
  %v6775 = vunpack.c.h.b16 %v5600
  %v6776 = vunpack.c.l.b16 %v5601
  %v6777 = vunpack.c.h.b16 %v5601
  %v6778 = vunpack.c.l.b16 %v5602
  %v6779 = vunpack.c.h.b16 %v5602
  %v6780 = vunpack.c.l.b16 %v5603
  %v6781 = vunpack.c.h.b16 %v5603
  %v6782 = vunpack.c.l.b16 %v5604
  %v6783 = vunpack.c.h.b16 %v5604
  %v6784 = vunpack.c.l.b16 %v5605
  %v6785 = vunpack.c.h.b16 %v5605
  %v6786 = vunpack.c.l.b16 %v5606
  %v6787 = vunpack.c.h.b16 %v5606
  %v6788 = vunpack.c.l.b16 %v5607
  %v6789 = vunpack.c.h.b16 %v5607
  %v6790 = vunpack.c.l.b16 %v5608
  %v6791 = vunpack.c.h.b16 %v5608
  %v6792 = vunpack.c.l.b16 %v5609
  %v6793 = vunpack.c.h.b16 %v5609
  %v6794 = vunpack.c.l.b16 %v5610
  %v6795 = vunpack.c.h.b16 %v5610
  %v6796 = vunpack.c.l.b16 %v5611
  %v6797 = vunpack.c.h.b16 %v5611
  %v6798 = vunpack.c.l.b16 %v5612
  %v6799 = vunpack.c.h.b16 %v5612
  %v6800 = vunpack.c.l.b16 %v5613
  %v6801 = vunpack.c.h.b16 %v5613
  %v6802 = vunpack.c.l.b16 %v5614
  %v6803 = vunpack.c.h.b16 %v5614
  %v6804 = vunpack.c.l.b16 %v5615
  %v6805 = vunpack.c.h.b16 %v5615
  %v6806 = vunpack.c.l.b16 %v5616
  %v6807 = vunpack.c.h.b16 %v5616
  %v6808 = vunpack.c.l.b16 %v5617
  %v6809 = vunpack.c.h.b16 %v5617
  %v6810 = vunpack.c.l.b16 %v5618
  %v6811 = vunpack.c.h.b16 %v5618
  %v6812 = vunpack.c.l.b16 %v5619
  %v6813 = vunpack.c.h.b16 %v5619
  %v6814 = vunpack.c.l.b16 %v5620
  %v6815 = vunpack.c.h.b16 %v5620
  %v6816 = vunpack.c.l.b16 %v5621
  %v6817 = vunpack.c.h.b16 %v5621
  %v6818 = vunpack.c.l.b16 %v5622
  %v6819 = vunpack.c.h.b16 %v5622
  %v6820 = vunpack.c.l.b16 %v5623
  %v6821 = vunpack.c.h.b16 %v5623
  %v6822 = vunpack.c.l.b16 %v5624
  %v6823 = vunpack.c.h.b16 %v5624
  %v6824 = vunpack.c.l.b16 %v5625
  %v6825 = vunpack.c.h.b16 %v5625
  %v6826 = vunpack.c.l.b16 %v5626
  %v6827 = vunpack.c.h.b16 %v5626
  %v6828 = vunpack.c.l.b16 %v5627
  %v6829 = vunpack.c.h.b16 %v5627
  %v6830 = vunpack.c.l.b16 %v5628
  %v6831 = vunpack.c.h.b16 %v5628
  %v6832 = vunpack.c.l.b16 %v5629
  %v6833 = vunpack.c.h.b16 %v5629
  %v6834 = vunpack.c.l.b16 %v5630
  %v6835 = vunpack.c.h.b16 %v5630
  %v6836 = vunpack.c.l.b16 %v5631
  %v6837 = vunpack.c.h.b16 %v5631
  %v6838 = vunpack.c.l.b16 %v5632
  %v6839 = vunpack.c.h.b16 %v5632
  %v6840 = vunpack.c.l.b16 %v5633
  %v6841 = vunpack.c.h.b16 %v5633
  %v6842 = vunpack.c.l.b16 %v5634
  %v6843 = vunpack.c.h.b16 %v5634
  %v6844 = vunpack.c.l.b16 %v5635
  %v6845 = vunpack.c.h.b16 %v5635
  %v6846 = vunpack.c.l.b16 %v5636
  %v6847 = vunpack.c.h.b16 %v5636
  %v6848 = vunpack.c.l.b16 %v5637
  %v6849 = vunpack.c.h.b16 %v5637
  %v6850 = vunpack.c.l.b16 %v5638
  %v6851 = vunpack.c.h.b16 %v5638
  %v6852 = vunpack.c.l.b16 %v5639
  %v6853 = vunpack.c.h.b16 %v5639
  %v6854 = vunpack.c.l.b16 %v5640
  %v6855 = vunpack.c.h.b16 %v5640
  %v6856 = vunpack.c.l.b16 %v5641
  %v6857 = vunpack.c.h.b16 %v5641
  %v6858 = vunpack.c.l.b16 %v5642
  %v6859 = vunpack.c.h.b16 %v5642
  %v6860 = vunpack.c.l.b16 %v5643
  %v6861 = vunpack.c.h.b16 %v5643
  %v6862 = vunpack.c.l.b16 %v5644
  %v6863 = vunpack.c.h.b16 %v5644
  %v6864 = vunpack.c.l.b16 %v5645
  %v6865 = vunpack.c.h.b16 %v5645
  %v6866 = vunpack.c.l.b16 %v5646
  %v6867 = vunpack.c.h.b16 %v5646
  %v6868 = vunpack.c.l.b16 %v5647
  %v6869 = vunpack.c.h.b16 %v5647
  %v6870 = vunpack.c.l.b16 %v5648
  %v6871 = vunpack.c.h.b16 %v5648
  %v6872 = vunpack.c.l.b16 %v5649
  %v6873 = vunpack.c.h.b16 %v5649
  %v6874 = vunpack.c.l.b16 %v5650
  %v6875 = vunpack.c.h.b16 %v5650
  %v6876 = vunpack.c.l.b16 %v5651
  %v6877 = vunpack.c.h.b16 %v5651
  %v6878 = vunpack.c.l.b16 %v5652
  %v6879 = vunpack.c.h.b16 %v5652
  %v6880 = vunpack.c.l.b16 %v5653
  %v6881 = vunpack.c.h.b16 %v5653
  %v6882 = vunpack.c.l.b16 %v5654
  %v6883 = vunpack.c.h.b16 %v5654
  %v6884 = vunpack.c.l.b16 %v5655
  %v6885 = vunpack.c.h.b16 %v5655
  %v6886 = vunpack.c.l.b16 %v5656
  %v6887 = vunpack.c.h.b16 %v5656
  %v6888 = vunpack.c.l.b16 %v5657
  %v6889 = vunpack.c.h.b16 %v5657
  %v6890 = vunpack.c.l.b16 %v5658
  %v6891 = vunpack.c.h.b16 %v5658
  %v6892 = vunpack.c.l.b16 %v5659
  %v6893 = vunpack.c.h.b16 %v5659
  %v6894 = vunpack.c.l.b16 %v5660
  %v6895 = vunpack.c.h.b16 %v5660
  %v6896 = vunpack.c.l.b16 %v5661
  %v6897 = vunpack.c.h.b16 %v5661
  %v6898 = vunpack.c.l.b16 %v5662
  %v6899 = vunpack.c.h.b16 %v5662
  %v6900 = vunpack.c.l.b16 %v5663
  %v6901 = vunpack.c.h.b16 %v5663
  %v6902 = vunpack.c.l.b16 %v5664
  %v6903 = vunpack.c.h.b16 %v5664
  %v6904 = vunpack.c.l.b16 %v5665
  %v6905 = vunpack.c.h.b16 %v5665
  %v6906 = vunpack.c.l.b16 %v5666
  %v6907 = vunpack.c.h.b16 %v5666
  %v6908 = vunpack.c.l.b16 %v5667
  %v6909 = vunpack.c.h.b16 %v5667
  %v6910 = vunpack.c.l.b16 %v5668
  %v6911 = vunpack.c.h.b16 %v5668
  %v6912 = vunpack.c.l.b16 %v5669
  %v6913 = vunpack.c.h.b16 %v5669
  %v6914 = vunpack.c.l.b16 %v5670
  %v6915 = vunpack.c.h.b16 %v5670
  %v6916 = vunpack.c.l.b16 %v5671
  %v6917 = vunpack.c.h.b16 %v5671
  %v6918 = vunpack.c.l.b16 %v5672
  %v6919 = vunpack.c.h.b16 %v5672
  %v6920 = vunpack.c.l.b16 %v5673
  %v6921 = vunpack.c.h.b16 %v5673
  %v6922 = vunpack.c.l.b16 %v5674
  %v6923 = vunpack.c.h.b16 %v5674
  %v6924 = vunpack.c.l.b16 %v5675
  %v6925 = vunpack.c.h.b16 %v5675
  %v6926 = vunpack.c.l.b16 %v5676
  %v6927 = vunpack.c.h.b16 %v5676
  %v6928 = vunpack.c.l.b16 %v5677
  %v6929 = vunpack.c.h.b16 %v5677
  %v6930 = vunpack.c.l.b16 %v5678
  %v6931 = vunpack.c.h.b16 %v5678
  %v6932 = vunpack.c.l.b16 %v5679
  %v6933 = vunpack.c.h.b16 %v5679
  %v6934 = vunpack.c.l.b16 %v5680
  %v6935 = vunpack.c.h.b16 %v5680
  %v6936 = vunpack.c.l.b16 %v5681
  %v6937 = vunpack.c.h.b16 %v5681
  %v6938 = vunpack.c.l.b16 %v5682
  %v6939 = vunpack.c.h.b16 %v5682
  %v6940 = vunpack.c.l.b16 %v5683
  %v6941 = vunpack.c.h.b16 %v5683
  %v6942 = vunpack.c.l.b16 %v5684
  %v6943 = vunpack.c.h.b16 %v5684
  %v6944 = vunpack.c.l.b16 %v5685
  %v6945 = vunpack.c.h.b16 %v5685
  %v6946 = vunpack.c.l.b16 %v5686
  %v6947 = vunpack.c.h.b16 %v5686
  %v6948 = vunpack.c.l.b16 %v5687
  %v6949 = vunpack.c.h.b16 %v5687
  %v6950 = vunpack.c.l.b16 %v5688
  %v6951 = vunpack.c.h.b16 %v5688
  %v6952 = vunpack.c.l.b16 %v5689
  %v6953 = vunpack.c.h.b16 %v5689
  %v6954 = vunpack.c.l.b16 %v5690
  %v6955 = vunpack.c.h.b16 %v5690
  %v6956 = vunpack.c.l.b16 %v5691
  %v6957 = vunpack.c.h.b16 %v5691
  %v6958 = vunpack.c.l.b16 %v5692
  %v6959 = vunpack.c.h.b16 %v5692
  %v6960 = vunpack.c.l.b16 %v5693
  %v6961 = vunpack.c.h.b16 %v5693
  %v6962 = vunpack.c.l.b16 %v5694
  %v6963 = vunpack.c.h.b16 %v5694
  %v6964 = vunpack.c.l.b16 %v5695
  %v6965 = vunpack.c.h.b16 %v5695
  %v6966 = vunpack.c.l.b16 %v5696
  %v6967 = vunpack.c.h.b16 %v5696
  %v6968 = vunpack.c.l.b16 %v5697
  %v6969 = vunpack.c.h.b16 %v5697
  %v6970 = vunpack.c.l.b16 %v5698
  %v6971 = vunpack.c.h.b16 %v5698
  %v6972 = vunpack.c.l.b16 %v5699
  %v6973 = vunpack.c.h.b16 %v5699
  %v6974 = vunpack.c.l.b16 %v5700
  %v6975 = vunpack.c.h.b16 %v5700
  %v6976 = vunpack.c.l.b16 %v5701
  %v6977 = vunpack.c.h.b16 %v5701
  %v6978 = vunpack.c.l.b16 %v5702
  %v6979 = vunpack.c.h.b16 %v5702
  %v6980 = vunpack.c.l.b16 %v5703
  %v6981 = vunpack.c.h.b16 %v5703
  %v6982 = vunpack.c.l.b16 %v5704
  %v6983 = vunpack.c.h.b16 %v5704
  %v6984 = vunpack.c.l.b16 %v5705
  %v6985 = vunpack.c.h.b16 %v5705
  %v6986 = vunpack.c.l.b16 %v5706
  %v6987 = vunpack.c.h.b16 %v5706
  %v6988 = vunpack.c.l.b16 %v5707
  %v6989 = vunpack.c.h.b16 %v5707
  %v6990 = vunpack.c.l.b16 %v5708
  %v6991 = vunpack.c.h.b16 %v5708
  %v6992 = vunpack.c.l.b16 %v5709
  %v6993 = vunpack.c.h.b16 %v5709
  %v6994 = vunpack.c.l.b16 %v5710
  %v6995 = vunpack.c.h.b16 %v5710
  %v6996 = vunpack.c.l.b16 %v5711
  %v6997 = vunpack.c.h.b16 %v5711
  %v6998 = vunpack.c.l.b16 %v5712
  %v6999 = vunpack.c.h.b16 %v5712
  %v7000 = vunpack.c.l.b16 %v5713
  %v7001 = vunpack.c.h.b16 %v5713
  %v7002 = vunpack.c.l.b16 %v5714
  %v7003 = vunpack.c.h.b16 %v5714
  %v7004 = vunpack.c.l.b16 %v5715
  %v7005 = vunpack.c.h.b16 %v5715
  %v7006 = vunpack.c.l.b16 %v5716
  %v7007 = vunpack.c.h.b16 %v5716
  %v7008 = vunpack.c.l.b16 %v5717
  %v7009 = vunpack.c.h.b16 %v5717
  %v7010 = vunpack.c.l.b16 %v5718
  %v7011 = vunpack.c.h.b16 %v5718
  %v7012 = vunpack.c.l.b16 %v5719
  %v7013 = vunpack.c.h.b16 %v5719
  %v7014 = vunpack.c.l.b16 %v5720
  %v7015 = vunpack.c.h.b16 %v5720
  %v7016 = vunpack.c.l.b16 %v5721
  %v7017 = vunpack.c.h.b16 %v5721
  %v7018 = vunpack.c.l.b16 %v5722
  %v7019 = vunpack.c.h.b16 %v5722
  %v7020 = vunpack.c.l.b16 %v5723
  %v7021 = vunpack.c.h.b16 %v5723
  %v7022 = vunpack.c.l.b16 %v5724
  %v7023 = vunpack.c.h.b16 %v5724
  %v7024 = vunpack.c.l.b16 %v5725
  %v7025 = vunpack.c.h.b16 %v5725
  %v7026 = vunpack.c.l.b16 %v5726
  %v7027 = vunpack.c.h.b16 %v5726
  %v7028 = vunpack.c.l.b16 %v5727
  %v7029 = vunpack.c.h.b16 %v5727
  %v7030 = vunpack.c.l.b16 %v5728
  %v7031 = vunpack.c.h.b16 %v5728
  %v7032 = vunpack.c.l.b16 %v5729
  %v7033 = vunpack.c.h.b16 %v5729
  %v7034 = vunpack.c.l.b16 %v5730
  %v7035 = vunpack.c.h.b16 %v5730
  %v7036 = vunpack.c.l.b16 %v5731
  %v7037 = vunpack.c.h.b16 %v5731
  %v7038 = vunpack.c.l.b16 %v5732
  %v7039 = vunpack.c.h.b16 %v5732
  %v7040 = vunpack.c.l.b16 %v5733
  %v7041 = vunpack.c.h.b16 %v5733
  %v7042 = vunpack.c.l.b16 %v5734
  %v7043 = vunpack.c.h.b16 %v5734
  %v7044 = vunpack.c.l.b16 %v5735
  %v7045 = vunpack.c.h.b16 %v5735
  %v7046 = vunpack.c.l.b16 %v5736
  %v7047 = vunpack.c.h.b16 %v5736
  %v7048 = vunpack.c.l.b16 %v5737
  %v7049 = vunpack.c.h.b16 %v5737
  %v7050 = vunpack.c.l.b16 %v5738
  %v7051 = vunpack.c.h.b16 %v5738
  %v7052 = vunpack.c.l.b16 %v5739
  %v7053 = vunpack.c.h.b16 %v5739
  %v7054 = vunpack.c.l.b16 %v5740
  %v7055 = vunpack.c.h.b16 %v5740
  %v7056 = vunpack.c.l.b16 %v5741
  %v7057 = vunpack.c.h.b16 %v5741
  %v7058 = vunpack.c.l.b16 %v5742
  %v7059 = vunpack.c.h.b16 %v5742
  %v7060 = vunpack.c.l.b16 %v5743
  %v7061 = vunpack.c.h.b16 %v5743
  %v7062 = vunpack.c.l.b16 %v5744
  %v7063 = vunpack.c.h.b16 %v5744
  %v7064 = vunpack.c.l.b16 %v5745
  %v7065 = vunpack.c.h.b16 %v5745
  %v7066 = vunpack.c.l.b16 %v5746
  %v7067 = vunpack.c.h.b16 %v5746
  %v7068 = vunpack.c.l.b16 %v5747
  %v7069 = vunpack.c.h.b16 %v5747
  %v7070 = vunpack.c.l.b16 %v5748
  %v7071 = vunpack.c.h.b16 %v5748
  %v7072 = vunpack.c.l.b16 %v5749
  %v7073 = vunpack.c.h.b16 %v5749
  %v7074 = vunpack.c.l.b16 %v5750
  %v7075 = vunpack.c.h.b16 %v5750
  %v7076 = vunpack.c.l.b16 %v5751
  %v7077 = vunpack.c.h.b16 %v5751
  %v7078 = vunpack.c.l.b16 %v5752
  %v7079 = vunpack.c.h.b16 %v5752
  %v7080 = vunpack.c.l.b16 %v5753
  %v7081 = vunpack.c.h.b16 %v5753
  %v7082 = vunpack.c.l.b16 %v5754
  %v7083 = vunpack.c.h.b16 %v5754
  %v7084 = vunpack.c.l.b16 %v5755
  %v7085 = vunpack.c.h.b16 %v5755
  %v7086 = vunpack.c.l.b16 %v5756
  %v7087 = vunpack.c.h.b16 %v5756
  %v7088 = vunpack.c.l.b16 %v5757
  %v7089 = vunpack.c.h.b16 %v5757
  %v7090 = vunpack.c.l.b16 %v5758
  %v7091 = vunpack.c.h.b16 %v5758
  %v7092 = vunpack.c.l.b16 %v5759
  %v7093 = vunpack.c.h.b16 %v5759
  %v7094 = vunpack.c.l.b16 %v5760
  %v7095 = vunpack.c.h.b16 %v5760
  %v7096 = vunpack.c.l.b16 %v5761
  %v7097 = vunpack.c.h.b16 %v5761
  %v7098 = vunpack.c.l.b16 %v5762
  %v7099 = vunpack.c.h.b16 %v5762
  %v7100 = vunpack.c.l.b16 %v5763
  %v7101 = vunpack.c.h.b16 %v5763
  %v7102 = vunpack.c.l.b16 %v5764
  %v7103 = vunpack.c.h.b16 %v5764
  %v7104 = vunpack.c.l.b16 %v5765
  %v7105 = vunpack.c.h.b16 %v5765
  %v7106 = vunpack.c.l.b16 %v5766
  %v7107 = vunpack.c.h.b16 %v5766
  %v7108 = vunpack.c.l.b16 %v5767
  %v7109 = vunpack.c.h.b16 %v5767
  %v7110 = vunpack.c.l.b16 %v5768
  %v7111 = vunpack.c.h.b16 %v5768
  %v7112 = vunpack.c.l.b16 %v5769
  %v7113 = vunpack.c.h.b16 %v5769
  %v7114 = vunpack.c.l.b16 %v5770
  %v7115 = vunpack.c.h.b16 %v5770
  %v7116 = vunpack.c.l.b16 %v5771
  %v7117 = vunpack.c.h.b16 %v5771
  %v7118 = vunpack.c.l.b16 %v5772
  %v7119 = vunpack.c.h.b16 %v5772
  %v7120 = vunpack.c.l.b16 %v5773
  %v7121 = vunpack.c.h.b16 %v5773
  %v7122 = vunpack.c.l.b16 %v5774
  %v7123 = vunpack.c.h.b16 %v5774
  %v7124 = vunpack.c.l.b16 %v5775
  %v7125 = vunpack.c.h.b16 %v5775
  %v7126 = vunpack.c.l.b16 %v5776
  %v7127 = vunpack.c.h.b16 %v5776
  %v7128 = vunpack.c.l.b16 %v5777
  %v7129 = vunpack.c.h.b16 %v5777
  %v7130 = vunpack.c.l.b16 %v5778
  %v7131 = vunpack.c.h.b16 %v5778
  %v7132 = vunpack.c.l.b16 %v5779
  %v7133 = vunpack.c.h.b16 %v5779
  %v7134 = vunpack.c.l.b16 %v5780
  %v7135 = vunpack.c.h.b16 %v5780
  %v7136 = vunpack.c.l.b16 %v5781
  %v7137 = vunpack.c.h.b16 %v5781
  %v7138 = vunpack.c.l.b16 %v5782
  %v7139 = vunpack.c.h.b16 %v5782
  %v7140 = vunpack.c.l.b16 %v5783
  %v7141 = vunpack.c.h.b16 %v5783
  %v7142 = vunpack.c.l.b16 %v5784
  %v7143 = vunpack.c.h.b16 %v5784
  %v7144 = vunpack.c.l.b16 %v5785
  %v7145 = vunpack.c.h.b16 %v5785
  %v7146 = vunpack.c.l.b16 %v5786
  %v7147 = vunpack.c.h.b16 %v5786
  %v7148 = vunpack.c.l.b16 %v5787
  %v7149 = vunpack.c.h.b16 %v5787
  %v7150 = vunpack.c.l.b16 %v5788
  %v7151 = vunpack.c.h.b16 %v5788
  %v7152 = vunpack.c.l.b16 %v5789
  %v7153 = vunpack.c.h.b16 %v5789
  %v7154 = vunpack.c.l.b16 %v5790
  %v7155 = vunpack.c.h.b16 %v5790
  %v7156 = vunpack.c.l.b16 %v5791
  %v7157 = vunpack.c.h.b16 %v5791
  %v7158 = vunpack.c.l.b16 %v5792
  %v7159 = vunpack.c.h.b16 %v5792
  %v7160 = vunpack.c.l.b16 %v5793
  %v7161 = vunpack.c.h.b16 %v5793
  %v7162 = vunpack.c.l.b16 %v5794
  %v7163 = vunpack.c.h.b16 %v5794
  %v7164 = vunpack.c.l.b16 %v5795
  %v7165 = vunpack.c.h.b16 %v5795
  %v7166 = vunpack.c.l.b16 %v5796
  %v7167 = vunpack.c.h.b16 %v5796
  %v7168 = vunpack.c.l.b16 %v5797
  %v7169 = vunpack.c.h.b16 %v5797
  %v7170 = vunpack.c.l.b16 %v5798
  %v7171 = vunpack.c.h.b16 %v5798
  %v7172 = vunpack.c.l.b16 %v5799
  %v7173 = vunpack.c.h.b16 %v5799
  %v7174 = vunpack.c.l.b16 %v5800
  %v7175 = vunpack.c.h.b16 %v5800
  %v7176 = vunpack.c.l.b16 %v5801
  %v7177 = vunpack.c.h.b16 %v5801
  %v7178 = vunpack.c.l.b16 %v5802
  %v7179 = vunpack.c.h.b16 %v5802
  %v7180 = vunpack.c.l.b16 %v5803
  %v7181 = vunpack.c.h.b16 %v5803
  %v7182 = vunpack.c.l.b16 %v5804
  %v7183 = vunpack.c.h.b16 %v5804
  %v7184 = vunpack.c.l.b16 %v5805
  %v7185 = vunpack.c.h.b16 %v5805
  %v7186 = vunpack.c.l.b16 %v5806
  %v7187 = vunpack.c.h.b16 %v5806
  %v7188 = vunpack.c.l.b16 %v5807
  %v7189 = vunpack.c.h.b16 %v5807
  %v7190 = vunpack.c.l.b16 %v5808
  %v7191 = vunpack.c.h.b16 %v5808
  %v7192 = vunpack.c.l.b16 %v5809
  %v7193 = vunpack.c.h.b16 %v5809
  %v7194 = vunpack.c.l.b16 %v5810
  %v7195 = vunpack.c.h.b16 %v5810
  %v7196 = vunpack.c.l.b16 %v5811
  %v7197 = vunpack.c.h.b16 %v5811
  %v7198 = vunpack.c.l.b16 %v5812
  %v7199 = vunpack.c.h.b16 %v5812
  %v7200 = vunpack.c.l.b16 %v5813
  %v7201 = vunpack.c.h.b16 %v5813
  %v7202 = vunpack.c.l.b16 %v5814
  %v7203 = vunpack.c.h.b16 %v5814
  %v7204 = vunpack.c.l.b16 %v5815
  %v7205 = vunpack.c.h.b16 %v5815
  %v7206 = vunpack.c.l.b16 %v5816
  %v7207 = vunpack.c.h.b16 %v5816
  %v7208 = vunpack.c.l.b16 %v5817
  %v7209 = vunpack.c.h.b16 %v5817
  %v7210 = vunpack.c.l.b16 %v5818
  %v7211 = vunpack.c.h.b16 %v5818
  %v7212 = vunpack.c.l.b16 %v5819
  %v7213 = vunpack.c.h.b16 %v5819
  %v7214 = vunpack.c.l.b16 %v5820
  %v7215 = vunpack.c.h.b16 %v5820
  %v7216 = vunpack.c.l.b16 %v5821
  %v7217 = vunpack.c.h.b16 %v5821
  %v7218 = vunpack.c.l.b16 %v5822
  %v7219 = vunpack.c.h.b16 %v5822
  %v7220 = vunpack.c.l.b16 %v5823
  %v7221 = vunpack.c.h.b16 %v5823
  %v7222 = vunpack.c.l.b16 %v5824
  %v7223 = vunpack.c.h.b16 %v5824
  %v7224 = vunpack.c.l.b16 %v5825
  %v7225 = vunpack.c.h.b16 %v5825
  %v7226 = vunpack.c.l.b16 %v5826
  %v7227 = vunpack.c.h.b16 %v5826
  %v7228 = vunpack.c.l.b16 %v5827
  %v7229 = vunpack.c.h.b16 %v5827
  %v7230 = vunpack.c.l.b16 %v5828
  %v7231 = vunpack.c.h.b16 %v5828
  %v7232 = vunpack.c.l.b16 %v5829
  %v7233 = vunpack.c.h.b16 %v5829
  %v7234 = vunpack.c.l.b16 %v5830
  %v7235 = vunpack.c.h.b16 %v5830
  %v7236 = vunpack.c.l.b16 %v5831
  %v7237 = vunpack.c.h.b16 %v5831
  %v7238 = vunpack.c.l.b16 %v5832
  %v7239 = vunpack.c.h.b16 %v5832
  %v7240 = vunpack.c.l.b16 %v5833
  %v7241 = vunpack.c.h.b16 %v5833
  %v7242 = vunpack.c.l.b16 %v5834
  %v7243 = vunpack.c.h.b16 %v5834
  %v7244 = vunpack.c.l.b16 %v5835
  %v7245 = vunpack.c.h.b16 %v5835
  %v7246 = vunpack.c.l.b16 %v5836
  %v7247 = vunpack.c.h.b16 %v5836
  %v7248 = vunpack.c.l.b16 %v5837
  %v7249 = vunpack.c.h.b16 %v5837
  %v7250 = vunpack.c.l.b16 %v5838
  %v7251 = vunpack.c.h.b16 %v5838
  %v7252 = vunpack.c.l.b16 %v5839
  %v7253 = vunpack.c.h.b16 %v5839
  %v7254 = vunpack.c.l.b16 %v5840
  %v7255 = vunpack.c.h.b16 %v5840
  %v7256 = vunpack.c.l.b16 %v5841
  %v7257 = vunpack.c.h.b16 %v5841
  %v7258 = vunpack.c.l.b16 %v5842
  %v7259 = vunpack.c.h.b16 %v5842
  %v7260 = vunpack.c.l.b16 %v5843
  %v7261 = vunpack.c.h.b16 %v5843
  %v7262 = vunpack.c.l.b16 %v5844
  %v7263 = vunpack.c.h.b16 %v5844
  %v7264 = vunpack.c.l.b16 %v5845
  %v7265 = vunpack.c.h.b16 %v5845
  %v7266 = vunpack.c.l.b16 %v5846
  %v7267 = vunpack.c.h.b16 %v5846
  %v7268 = vunpack.c.l.b16 %v5847
  %v7269 = vunpack.c.h.b16 %v5847
  %v7270 = vunpack.c.l.b16 %v5848
  %v7271 = vunpack.c.h.b16 %v5848
  %v7272 = vunpack.c.l.b16 %v5849
  %v7273 = vunpack.c.h.b16 %v5849
  %v7274 = vunpack.c.l.b16 %v5850
  %v7275 = vunpack.c.h.b16 %v5850
  %v7276 = vunpack.c.l.b16 %v5851
  %v7277 = vunpack.c.h.b16 %v5851
  %v7278 = vunpack.c.l.b16 %v5852
  %v7279 = vunpack.c.h.b16 %v5852
  %v7280 = vunpack.c.l.b16 %v5853
  %v7281 = vunpack.c.h.b16 %v5853
  %v7282 = vunpack.c.l.b16 %v5854
  %v7283 = vunpack.c.h.b16 %v5854
  %v7284 = vunpack.c.l.b16 %v5855
  %v7285 = vunpack.c.h.b16 %v5855
  %v7286 = vunpack.c.l.b16 %v5856
  %v7287 = vunpack.c.h.b16 %v5856
  %v7288 = vunpack.c.l.b16 %v5857
  %v7289 = vunpack.c.h.b16 %v5857
  %v7290 = vunpack.c.l.b16 %v5858
  %v7291 = vunpack.c.h.b16 %v5858
  %v7292 = vunpack.c.l.b16 %v5859
  %v7293 = vunpack.c.h.b16 %v5859
  %v7294 = vunpack.c.l.b16 %v5860
  %v7295 = vunpack.c.h.b16 %v5860
  %v7296 = vunpack.c.l.b16 %v5861
  %v7297 = vunpack.c.h.b16 %v5861
  %v7298 = vunpack.c.l.b16 %v5862
  %v7299 = vunpack.c.h.b16 %v5862
  %v7300 = vunpack.c.l.b16 %v5863
  %v7301 = vunpack.c.h.b16 %v5863
  %v7302 = vunpack.c.l.b16 %v5864
  %v7303 = vunpack.c.h.b16 %v5864
  %v7304 = vunpack.c.l.b16 %v5865
  %v7305 = vunpack.c.h.b16 %v5865
  %v7306 = vunpack.c.l.b16 %v5866
  %v7307 = vunpack.c.h.b16 %v5866
  %v7308 = vunpack.c.l.b16 %v5867
  %v7309 = vunpack.c.h.b16 %v5867
  %v7310 = vunpack.c.l.b16 %v5868
  %v7311 = vunpack.c.h.b16 %v5868
  %v7312 = vunpack.c.l.b16 %v5869
  %v7313 = vunpack.c.h.b16 %v5869
  %v7314 = vunpack.c.l.b16 %v5870
  %v7315 = vunpack.c.h.b16 %v5870
  %v7316 = vunpack.c.l.b16 %v5871
  %v7317 = vunpack.c.h.b16 %v5871
  %v7318 = vunpack.c.l.b16 %v5872
  %v7319 = vunpack.c.h.b16 %v5872
  %v7320 = vunpack.c.l.b16 %v5873
  %v7321 = vunpack.c.h.b16 %v5873
  %v7322 = vunpack.c.l.b16 %v5874
  %v7323 = vunpack.c.h.b16 %v5874
  %v7324 = vunpack.c.l.b16 %v5875
  %v7325 = vunpack.c.h.b16 %v5875
  %v7326 = vunpack.c.l.b16 %v5876
  %v7327 = vunpack.c.h.b16 %v5876
  %v7328 = vunpack.c.l.b16 %v5877
  %v7329 = vunpack.c.h.b16 %v5877
  %v7330 = vunpack.c.l.b16 %v5878
  %v7331 = vunpack.c.h.b16 %v5878
  %v7332 = vunpack.c.l.b16 %v5879
  %v7333 = vunpack.c.h.b16 %v5879
  %v7334 = vunpack.c.l.b16 %v5880
  %v7335 = vunpack.c.h.b16 %v5880
  %v7336 = vunpack.c.l.b16 %v5881
  %v7337 = vunpack.c.h.b16 %v5881
  %v7338 = vunpack.c.l.b16 %v5882
  %v7339 = vunpack.c.h.b16 %v5882
  %v7340 = vunpack.c.l.b16 %v5883
  %v7341 = vunpack.c.h.b16 %v5883
  %v7342 = vunpack.c.l.b16 %v5884
  %v7343 = vunpack.c.h.b16 %v5884
  %v7344 = vunpack.c.l.b16 %v5885
  %v7345 = vunpack.c.h.b16 %v5885
  %v7346 = vunpack.c.l.b16 %v5886
  %v7347 = vunpack.c.h.b16 %v5886
  %v7348 = vunpack.c.l.b16 %v5887
  %v7349 = vunpack.c.h.b16 %v5887
  %v7350 = vunpack.c.l.b16 %v5888
  %v7351 = vunpack.c.h.b16 %v5888
  %v7352 = vunpack.c.l.b16 %v5889
  %v7353 = vunpack.c.h.b16 %v5889
  %v7354 = vunpack.c.l.b16 %v5890
  %v7355 = vunpack.c.h.b16 %v5890
  %v7356 = vunpack.c.l.b16 %v5891
  %v7357 = vunpack.c.h.b16 %v5891
  %v7358 = vunpack.c.l.b16 %v5892
  %v7359 = vunpack.c.h.b16 %v5892
  %v7360 = vunpack.c.l.b16 %v5893
  %v7361 = vunpack.c.h.b16 %v5893
  %v7362 = vunpack.c.l.b16 %v5894
  %v7363 = vunpack.c.h.b16 %v5894
  %v7364 = vunpack.c.l.b16 %v5895
  %v7365 = vunpack.c.h.b16 %v5895
  %v7366 = vunpack.c.l.b16 %v5896
  %v7367 = vunpack.c.h.b16 %v5896
  %v7368 = vunpack.c.l.b16 %v5897
  %v7369 = vunpack.c.h.b16 %v5897
  %v7370 = vunpack.c.l.b16 %v5898
  %v7371 = vunpack.c.h.b16 %v5898
  %v7372 = vunpack.c.l.b16 %v5899
  %v7373 = vunpack.c.h.b16 %v5899
  %v7374 = vunpack.c.l.b16 %v5900
  %v7375 = vunpack.c.h.b16 %v5900
  %v7376 = vunpack.c.l.b16 %v5901
  %v7377 = vunpack.c.h.b16 %v5901
  %v7378 = vunpack.c.l.b16 %v5902
  %v7379 = vunpack.c.h.b16 %v5902
  %v7380 = vunpack.c.l.b16 %v5903
  %v7381 = vunpack.c.h.b16 %v5903
  %v7382 = vunpack.c.l.b16 %v5904
  %v7383 = vunpack.c.h.b16 %v5904
  %v7384 = vunpack.c.l.b16 %v5905
  %v7385 = vunpack.c.h.b16 %v5905
  %v7386 = vunpack.c.l.b16 %v5906
  %v7387 = vunpack.c.h.b16 %v5906
  %v7388 = vunpack.c.l.b16 %v5907
  %v7389 = vunpack.c.h.b16 %v5907
  %v7390 = vunpack.c.l.b16 %v5908
  %v7391 = vunpack.c.h.b16 %v5908
  %v7392 = vunpack.c.l.b16 %v5909
  %v7393 = vunpack.c.h.b16 %v5909
  %v7394 = vunpack.c.l.b16 %v5910
  %v7395 = vunpack.c.h.b16 %v5910
  %v7396 = vunpack.c.l.b16 %v5911
  %v7397 = vunpack.c.h.b16 %v5911
  %v7398 = vunpack.c.l.b16 %v5912
  %v7399 = vunpack.c.h.b16 %v5912
  %v7400 = vunpack.c.l.b16 %v5913
  %v7401 = vunpack.c.h.b16 %v5913
  %v7402 = vunpack.c.l.b16 %v5914
  %v7403 = vunpack.c.h.b16 %v5914
  %v7404 = vunpack.c.l.b16 %v5915
  %v7405 = vunpack.c.h.b16 %v5915
  %v7406 = vunpack.c.l.b16 %v5916
  %v7407 = vunpack.c.h.b16 %v5916
  %v7408 = vunpack.c.l.b16 %v5917
  %v7409 = vunpack.c.h.b16 %v5917
  %v7410 = vunpack.c.l.b16 %v5918
  %v7411 = vunpack.c.h.b16 %v5918
  %v7412 = vunpack.c.l.b16 %v5919
  %v7413 = vunpack.c.h.b16 %v5919
  %v7414 = vunpack.c.l.b16 %v5920
  %v7415 = vunpack.c.h.b16 %v5920
  %v7416 = vunpack.c.l.b16 %v5921
  %v7417 = vunpack.c.h.b16 %v5921
  %v7418 = vunpack.c.l.b16 %v5922
  %v7419 = vunpack.c.h.b16 %v5922
  %v7420 = vunpack.c.l.b16 %v5923
  %v7421 = vunpack.c.h.b16 %v5923
  %v7422 = vunpack.c.l.b16 %v5924
  %v7423 = vunpack.c.h.b16 %v5924
  %v7424 = vunpack.c.l.b16 %v5925
  %v7425 = vunpack.c.h.b16 %v5925
  %v7426 = vunpack.c.l.b16 %v5926
  %v7427 = vunpack.c.h.b16 %v5926
  %v7428 = vunpack.c.l.b16 %v5927
  %v7429 = vunpack.c.h.b16 %v5927
  %v7430 = vunpack.c.l.b16 %v5928
  %v7431 = vunpack.c.h.b16 %v5928
  %v7432 = vunpack.c.l.b16 %v5929
  %v7433 = vunpack.c.h.b16 %v5929
  %v7434 = vunpack.c.l.b16 %v5930
  %v7435 = vunpack.c.h.b16 %v5930
  %v7436 = vunpack.c.l.b16 %v5931
  %v7437 = vunpack.c.h.b16 %v5931
  %v7438 = vunpack.c.l.b16 %v5932
  %v7439 = vunpack.c.h.b16 %v5932
  %v7440 = vunpack.c.l.b16 %v5933
  %v7441 = vunpack.c.h.b16 %v5933
  %v7442 = vunpack.c.l.b16 %v5934
  %v7443 = vunpack.c.h.b16 %v5934
  %v7444 = vunpack.c.l.b16 %v5935
  %v7445 = vunpack.c.h.b16 %v5935
  %v7446 = vunpack.c.l.b16 %v5936
  %v7447 = vunpack.c.h.b16 %v5936
  %v7448 = vunpack.c.l.b16 %v5937
  %v7449 = vunpack.c.h.b16 %v5937
  %v7450 = vunpack.c.l.b16 %v5938
  %v7451 = vunpack.c.h.b16 %v5938
  %v7452 = vunpack.c.l.b16 %v5939
  %v7453 = vunpack.c.h.b16 %v5939
  %v7454 = vunpack.c.l.b16 %v5940
  %v7455 = vunpack.c.h.b16 %v5940
  %v7456 = vunpack.c.l.b16 %v5941
  %v7457 = vunpack.c.h.b16 %v5941
  %v7458 = vunpack.c.l.b16 %v5942
  %v7459 = vunpack.c.h.b16 %v5942
  %v7460 = vunpack.c.l.b16 %v5943
  %v7461 = vunpack.c.h.b16 %v5943
  %v7462 = vunpack.c.l.b16 %v5944
  %v7463 = vunpack.c.h.b16 %v5944
  %v7464 = vunpack.c.l.b16 %v5945
  %v7465 = vunpack.c.h.b16 %v5945
  %v7466 = vunpack.c.l.b16 %v5946
  %v7467 = vunpack.c.h.b16 %v5946
  %v7468 = vunpack.c.l.b16 %v5947
  %v7469 = vunpack.c.h.b16 %v5947
  %v7470 = vunpack.c.l.b16 %v5948
  %v7471 = vunpack.c.h.b16 %v5948
  %v7472 = vunpack.c.l.b16 %v5949
  %v7473 = vunpack.c.h.b16 %v5949
  %v7474 = vunpack.c.l.b16 %v5950
  %v7475 = vunpack.c.h.b16 %v5950
  %v7476 = vunpack.c.l.b16 %v5951
  %v7477 = vunpack.c.h.b16 %v5951
  %v7478 = vunpack.c.l.b16 %v5952
  %v7479 = vunpack.c.h.b16 %v5952
  %v7480 = vunpack.c.l.b16 %v5953
  %v7481 = vunpack.c.h.b16 %v5953
  %v7482 = vunpack.c.l.b16 %v5954
  %v7483 = vunpack.c.h.b16 %v5954
  %v7484 = vunpack.c.l.b16 %v5955
  %v7485 = vunpack.c.h.b16 %v5955
  %v7486 = vunpack.c.l.b16 %v5956
  %v7487 = vunpack.c.h.b16 %v5956
  %v7488 = vunpack.c.l.b16 %v5957
  %v7489 = vunpack.c.h.b16 %v5957
  %v7490 = vunpack.c.l.b16 %v5958
  %v7491 = vunpack.c.h.b16 %v5958
  %v7492 = vunpack.c.l.b16 %v5959
  %v7493 = vunpack.c.h.b16 %v5959
  %v7494 = vunpack.c.l.b16 %v5960
  %v7495 = vunpack.c.h.b16 %v5960
  %v7496 = vunpack.c.l.b16 %v5961
  %v7497 = vunpack.c.h.b16 %v5961
  %v7498 = vunpack.c.l.b16 %v5962
  %v7499 = vunpack.c.h.b16 %v5962
  %v7500 = vunpack.c.l.b16 %v5963
  %v7501 = vunpack.c.h.b16 %v5963
  %v7502 = vunpack.c.l.b16 %v5964
  %v7503 = vunpack.c.h.b16 %v5964
  %v7504 = vunpack.c.l.b16 %v5965
  %v7505 = vunpack.c.h.b16 %v5965
  %v7506 = vunpack.c.l.b16 %v5966
  %v7507 = vunpack.c.h.b16 %v5966
  %v7508 = vunpack.c.l.b16 %v5967
  %v7509 = vunpack.c.h.b16 %v5967
  %v7510 = vunpack.c.l.b16 %v5968
  %v7511 = vunpack.c.h.b16 %v5968
  %v7512 = vunpack.c.l.b16 %v5969
  %v7513 = vunpack.c.h.b16 %v5969
  %v7514 = vunpack.c.l.b16 %v5970
  %v7515 = vunpack.c.h.b16 %v5970
  %v7516 = vunpack.c.l.b16 %v5971
  %v7517 = vunpack.c.h.b16 %v5971
  %v7518 = vunpack.c.l.b16 %v5972
  %v7519 = vunpack.c.h.b16 %v5972
  %v7520 = vunpack.c.l.b16 %v5973
  %v7521 = vunpack.c.h.b16 %v5973
  %v7522 = vunpack.c.l.b16 %v5974
  %v7523 = vunpack.c.h.b16 %v5974
  %v7524 = vunpack.c.l.b16 %v5975
  %v7525 = vunpack.c.h.b16 %v5975
  %v7526 = vunpack.c.l.b16 %v5976
  %v7527 = vunpack.c.h.b16 %v5976
  %v7528 = vunpack.c.l.b16 %v5977
  %v7529 = vunpack.c.h.b16 %v5977
  %v7530 = vunpack.c.l.b16 %v5978
  %v7531 = vunpack.c.h.b16 %v5978
  %v7532 = vunpack.c.l.b16 %v5979
  %v7533 = vunpack.c.h.b16 %v5979
  %v7534 = vunpack.c.l.b16 %v5980
  %v7535 = vunpack.c.h.b16 %v5980
  %v7536 = vunpack.c.l.b16 %v5981
  %v7537 = vunpack.c.h.b16 %v5981
  %v7538 = vunpack.c.l.b16 %v5982
  %v7539 = vunpack.c.h.b16 %v5982
  %v7540 = vunpack.c.l.b16 %v5983
  %v7541 = vunpack.c.h.b16 %v5983
  %v7542 = vunpack.c.l.b16 %v5984
  %v7543 = vunpack.c.h.b16 %v5984
  %v7544 = vunpack.c.l.b16 %v5985
  %v7545 = vunpack.c.h.b16 %v5985
  %v7546 = vunpack.c.l.b16 %v5986
  %v7547 = vunpack.c.h.b16 %v5986
  %v7548 = vunpack.c.l.b16 %v5987
  %v7549 = vunpack.c.h.b16 %v5987
  %v7550 = vunpack.c.l.b16 %v5988
  %v7551 = vunpack.c.h.b16 %v5988
  %v7552 = vunpack.c.l.b16 %v5989
  %v7553 = vunpack.c.h.b16 %v5989
  %v7554 = vunpack.c.l.b16 %v5990
  %v7555 = vunpack.c.h.b16 %v5990
  %v7556 = vunpack.c.l.b16 %v5991
  %v7557 = vunpack.c.h.b16 %v5991
  %v7558 = vunpack.c.l.b16 %v5992
  %v7559 = vunpack.c.h.b16 %v5992
  %v7560 = vunpack.c.l.b16 %v5993
  %v7561 = vunpack.c.h.b16 %v5993
  %v7562 = vunpack.c.l.b16 %v5994
  %v7563 = vunpack.c.h.b16 %v5994
  %v7564 = vunpack.c.l.b16 %v5995
  %v7565 = vunpack.c.h.b16 %v5995
  %v7566 = vunpack.c.l.b16 %v5996
  %v7567 = vunpack.c.h.b16 %v5996
  %v7568 = vunpack.c.l.b16 %v5997
  %v7569 = vunpack.c.h.b16 %v5997
  %v7570 = vunpack.c.l.b16 %v5998
  %v7571 = vunpack.c.h.b16 %v5998
  %v7572 = vunpack.c.l.b16 %v5999
  %v7573 = vunpack.c.h.b16 %v5999
  %v7574 = vunpack.c.l.b16 %v6000
  %v7575 = vunpack.c.h.b16 %v6000
  %v7576 = vunpack.c.l.b16 %v6001
  %v7577 = vunpack.c.h.b16 %v6001
  %v7578 = vunpack.c.l.b16 %v6002
  %v7579 = vunpack.c.h.b16 %v6002
  %v7580 = vunpack.c.l.b16 %v6003
  %v7581 = vunpack.c.h.b16 %v6003
  %v7582 = vunpack.c.l.b16 %v6004
  %v7583 = vunpack.c.h.b16 %v6004
  %v7584 = vunpack.c.l.b16 %v6005
  %v7585 = vunpack.c.h.b16 %v6005
  %v7586 = vunpack.c.l.b16 %v6006
  %v7587 = vunpack.c.h.b16 %v6006
  %v7588 = vunpack.c.l.b16 %v6007
  %v7589 = vunpack.c.h.b16 %v6007
  %v7590 = vunpack.c.l.b16 %v6008
  %v7591 = vunpack.c.h.b16 %v6008
  %v7592 = vunpack.c.l.b16 %v6009
  %v7593 = vunpack.c.h.b16 %v6009
  %v7594 = vunpack.c.l.b16 %v6010
  %v7595 = vunpack.c.h.b16 %v6010
  %v7596 = vunpack.c.l.b16 %v6011
  %v7597 = vunpack.c.h.b16 %v6011
  %v7598 = vunpack.c.l.b16 %v6012
  %v7599 = vunpack.c.h.b16 %v6012
  %v7600 = vunpack.c.l.b16 %v6013
  %v7601 = vunpack.c.h.b16 %v6013
  %v7602 = vunpack.c.l.b16 %v6014
  %v7603 = vunpack.c.h.b16 %v6014
  %v7604 = vunpack.c.l.b16 %v6015
  %v7605 = vunpack.c.h.b16 %v6015
  %v7606 = vunpack.c.l.b16 %v6016
  %v7607 = vunpack.c.h.b16 %v6016
  %v7608 = vunpack.c.l.b16 %v6017
  %v7609 = vunpack.c.h.b16 %v6017
  %v7610 = vunpack.c.l.b16 %v6018
  %v7611 = vunpack.c.h.b16 %v6018
  %v7612 = vunpack.c.l.b16 %v6019
  %v7613 = vunpack.c.h.b16 %v6019
  %v7614 = vunpack.c.l.b16 %v6020
  %v7615 = vunpack.c.h.b16 %v6020
  %v7616 = vunpack.c.l.b16 %v6021
  %v7617 = vunpack.c.h.b16 %v6021
  %v7618 = vpack.c.b16 %v6626, %v6610
  %v7619 = vpack.c.b16 %v6627, %v6611
  %v7620 = vpack.c.b16 %v6628, %v6612
  %v7621 = vpack.c.b16 %v6629, %v6613
  %v7622 = vpack.c.b16 %v6630, %v6614
  %v7623 = vpack.c.b16 %v6631, %v6615
  %v7624 = vpack.c.b16 %v6632, %v6616
  %v7625 = vpack.c.b16 %v6633, %v6617
  %v7626 = vpack.c.b16 %v6634, %v6618
  %v7627 = vpack.c.b16 %v6635, %v6619
  %v7628 = vpack.c.b16 %v6636, %v6620
  %v7629 = vpack.c.b16 %v6637, %v6621
  %v7630 = vpack.c.b16 %v6638, %v6622
  %v7631 = vpack.c.b16 %v6639, %v6623
  %v7632 = vpack.c.b16 %v6640, %v6624
  %v7633 = vpack.c.b16 %v6641, %v6625
  %v7634 = vpack.c.b16 %v6658, %v6642
  %v7635 = vpack.c.b16 %v6659, %v6643
  %v7636 = vpack.c.b16 %v6660, %v6644
  %v7637 = vpack.c.b16 %v6661, %v6645
  %v7638 = vpack.c.b16 %v6662, %v6646
  %v7639 = vpack.c.b16 %v6663, %v6647
  %v7640 = vpack.c.b16 %v6664, %v6648
  %v7641 = vpack.c.b16 %v6665, %v6649
  %v7642 = vpack.c.b16 %v6666, %v6650
  %v7643 = vpack.c.b16 %v6667, %v6651
  %v7644 = vpack.c.b16 %v6668, %v6652
  %v7645 = vpack.c.b16 %v6669, %v6653
  %v7646 = vpack.c.b16 %v6670, %v6654
  %v7647 = vpack.c.b16 %v6671, %v6655
  %v7648 = vpack.c.b16 %v6672, %v6656
  %v7649 = vpack.c.b16 %v6673, %v6657
  %v7650 = vpack.c.b16 %v6690, %v6674
  %v7651 = vpack.c.b16 %v6691, %v6675
  %v7652 = vpack.c.b16 %v6692, %v6676
  %v7653 = vpack.c.b16 %v6693, %v6677
  %v7654 = vpack.c.b16 %v6694, %v6678
  %v7655 = vpack.c.b16 %v6695, %v6679
  %v7656 = vpack.c.b16 %v6696, %v6680
  %v7657 = vpack.c.b16 %v6697, %v6681
  %v7658 = vpack.c.b16 %v6698, %v6682
  %v7659 = vpack.c.b16 %v6699, %v6683
  %v7660 = vpack.c.b16 %v6700, %v6684
  %v7661 = vpack.c.b16 %v6701, %v6685
  %v7662 = vpack.c.b16 %v6702, %v6686
  %v7663 = vpack.c.b16 %v6703, %v6687
  %v7664 = vpack.c.b16 %v6704, %v6688
  %v7665 = vpack.c.b16 %v6705, %v6689
  %v7666 = vpack.c.b16 %v6722, %v6706
  %v7667 = vpack.c.b16 %v6723, %v6707
  %v7668 = vpack.c.b16 %v6724, %v6708
  %v7669 = vpack.c.b16 %v6725, %v6709
  %v7670 = vpack.c.b16 %v6726, %v6710
  %v7671 = vpack.c.b16 %v6727, %v6711
  %v7672 = vpack.c.b16 %v6728, %v6712
  %v7673 = vpack.c.b16 %v6729, %v6713
  %v7674 = vpack.c.b16 %v6730, %v6714
  %v7675 = vpack.c.b16 %v6731, %v6715
  %v7676 = vpack.c.b16 %v6732, %v6716
  %v7677 = vpack.c.b16 %v6733, %v6717
  %v7678 = vpack.c.b16 %v6734, %v6718
  %v7679 = vpack.c.b16 %v6735, %v6719
  %v7680 = vpack.c.b16 %v6736, %v6720
  %v7681 = vpack.c.b16 %v6737, %v6721
  %v7682 = vpack.c.b16 %v6754, %v6738
  %v7683 = vpack.c.b16 %v6755, %v6739
  %v7684 = vpack.c.b16 %v6756, %v6740
  %v7685 = vpack.c.b16 %v6757, %v6741
  %v7686 = vpack.c.b16 %v6758, %v6742
  %v7687 = vpack.c.b16 %v6759, %v6743
  %v7688 = vpack.c.b16 %v6760, %v6744
  %v7689 = vpack.c.b16 %v6761, %v6745
  %v7690 = vpack.c.b16 %v6762, %v6746
  %v7691 = vpack.c.b16 %v6763, %v6747
  %v7692 = vpack.c.b16 %v6764, %v6748
  %v7693 = vpack.c.b16 %v6765, %v6749
  %v7694 = vpack.c.b16 %v6766, %v6750
  %v7695 = vpack.c.b16 %v6767, %v6751
  %v7696 = vpack.c.b16 %v6768, %v6752
  %v7697 = vpack.c.b16 %v6769, %v6753
  %v7698 = vpack.c.b16 %v6786, %v6770
  %v7699 = vpack.c.b16 %v6787, %v6771
  %v7700 = vpack.c.b16 %v6788, %v6772
  %v7701 = vpack.c.b16 %v6789, %v6773
  %v7702 = vpack.c.b16 %v6790, %v6774
  %v7703 = vpack.c.b16 %v6791, %v6775
  %v7704 = vpack.c.b16 %v6792, %v6776
  %v7705 = vpack.c.b16 %v6793, %v6777
  %v7706 = vpack.c.b16 %v6794, %v6778
  %v7707 = vpack.c.b16 %v6795, %v6779
  %v7708 = vpack.c.b16 %v6796, %v6780
  %v7709 = vpack.c.b16 %v6797, %v6781
  %v7710 = vpack.c.b16 %v6798, %v6782
  %v7711 = vpack.c.b16 %v6799, %v6783
  %v7712 = vpack.c.b16 %v6800, %v6784
  %v7713 = vpack.c.b16 %v6801, %v6785
  %v7714 = vpack.c.b16 %v6818, %v6802
  %v7715 = vpack.c.b16 %v6819, %v6803
  %v7716 = vpack.c.b16 %v6820, %v6804
  %v7717 = vpack.c.b16 %v6821, %v6805
  %v7718 = vpack.c.b16 %v6822, %v6806
  %v7719 = vpack.c.b16 %v6823, %v6807
  %v7720 = vpack.c.b16 %v6824, %v6808
  %v7721 = vpack.c.b16 %v6825, %v6809
  %v7722 = vpack.c.b16 %v6826, %v6810
  %v7723 = vpack.c.b16 %v6827, %v6811
  %v7724 = vpack.c.b16 %v6828, %v6812
  %v7725 = vpack.c.b16 %v6829, %v6813
  %v7726 = vpack.c.b16 %v6830, %v6814
  %v7727 = vpack.c.b16 %v6831, %v6815
  %v7728 = vpack.c.b16 %v6832, %v6816
  %v7729 = vpack.c.b16 %v6833, %v6817
  %v7730 = vpack.c.b16 %v6850, %v6834
  %v7731 = vpack.c.b16 %v6851, %v6835
  %v7732 = vpack.c.b16 %v6852, %v6836
  %v7733 = vpack.c.b16 %v6853, %v6837
  %v7734 = vpack.c.b16 %v6854, %v6838
  %v7735 = vpack.c.b16 %v6855, %v6839
  %v7736 = vpack.c.b16 %v6856, %v6840
  %v7737 = vpack.c.b16 %v6857, %v6841
  %v7738 = vpack.c.b16 %v6858, %v6842
  %v7739 = vpack.c.b16 %v6859, %v6843
  %v7740 = vpack.c.b16 %v6860, %v6844
  %v7741 = vpack.c.b16 %v6861, %v6845
  %v7742 = vpack.c.b16 %v6862, %v6846
  %v7743 = vpack.c.b16 %v6863, %v6847
  %v7744 = vpack.c.b16 %v6864, %v6848
  %v7745 = vpack.c.b16 %v6865, %v6849
  %v7746 = vpack.c.b16 %v6882, %v6866
  %v7747 = vpack.c.b16 %v6883, %v6867
  %v7748 = vpack.c.b16 %v6884, %v6868
  %v7749 = vpack.c.b16 %v6885, %v6869
  %v7750 = vpack.c.b16 %v6886, %v6870
  %v7751 = vpack.c.b16 %v6887, %v6871
  %v7752 = vpack.c.b16 %v6888, %v6872
  %v7753 = vpack.c.b16 %v6889, %v6873
  %v7754 = vpack.c.b16 %v6890, %v6874
  %v7755 = vpack.c.b16 %v6891, %v6875
  %v7756 = vpack.c.b16 %v6892, %v6876
  %v7757 = vpack.c.b16 %v6893, %v6877
  %v7758 = vpack.c.b16 %v6894, %v6878
  %v7759 = vpack.c.b16 %v6895, %v6879
  %v7760 = vpack.c.b16 %v6896, %v6880
  %v7761 = vpack.c.b16 %v6897, %v6881
  %v7762 = vpack.c.b16 %v6914, %v6898
  %v7763 = vpack.c.b16 %v6915, %v6899
  %v7764 = vpack.c.b16 %v6916, %v6900
  %v7765 = vpack.c.b16 %v6917, %v6901
  %v7766 = vpack.c.b16 %v6918, %v6902
  %v7767 = vpack.c.b16 %v6919, %v6903
  %v7768 = vpack.c.b16 %v6920, %v6904
  %v7769 = vpack.c.b16 %v6921, %v6905
  %v7770 = vpack.c.b16 %v6922, %v6906
  %v7771 = vpack.c.b16 %v6923, %v6907
  %v7772 = vpack.c.b16 %v6924, %v6908
  %v7773 = vpack.c.b16 %v6925, %v6909
  %v7774 = vpack.c.b16 %v6926, %v6910
  %v7775 = vpack.c.b16 %v6927, %v6911
  %v7776 = vpack.c.b16 %v6928, %v6912
  %v7777 = vpack.c.b16 %v6929, %v6913
  %v7778 = vpack.c.b16 %v6946, %v6930
  %v7779 = vpack.c.b16 %v6947, %v6931
  %v7780 = vpack.c.b16 %v6948, %v6932
  %v7781 = vpack.c.b16 %v6949, %v6933
  %v7782 = vpack.c.b16 %v6950, %v6934
  %v7783 = vpack.c.b16 %v6951, %v6935
  %v7784 = vpack.c.b16 %v6952, %v6936
  %v7785 = vpack.c.b16 %v6953, %v6937
  %v7786 = vpack.c.b16 %v6954, %v6938
  %v7787 = vpack.c.b16 %v6955, %v6939
  %v7788 = vpack.c.b16 %v6956, %v6940
  %v7789 = vpack.c.b16 %v6957, %v6941
  %v7790 = vpack.c.b16 %v6958, %v6942
  %v7791 = vpack.c.b16 %v6959, %v6943
  %v7792 = vpack.c.b16 %v6960, %v6944
  %v7793 = vpack.c.b16 %v6961, %v6945
  %v7794 = vpack.c.b16 %v6978, %v6962
  %v7795 = vpack.c.b16 %v6979, %v6963
  %v7796 = vpack.c.b16 %v6980, %v6964
  %v7797 = vpack.c.b16 %v6981, %v6965
  %v7798 = vpack.c.b16 %v6982, %v6966
  %v7799 = vpack.c.b16 %v6983, %v6967
  %v7800 = vpack.c.b16 %v6984, %v6968
  %v7801 = vpack.c.b16 %v6985, %v6969
  %v7802 = vpack.c.b16 %v6986, %v6970
  %v7803 = vpack.c.b16 %v6987, %v6971
  %v7804 = vpack.c.b16 %v6988, %v6972
  %v7805 = vpack.c.b16 %v6989, %v6973
  %v7806 = vpack.c.b16 %v6990, %v6974
  %v7807 = vpack.c.b16 %v6991, %v6975
  %v7808 = vpack.c.b16 %v6992, %v6976
  %v7809 = vpack.c.b16 %v6993, %v6977
  %v7810 = vpack.c.b16 %v7010, %v6994
  %v7811 = vpack.c.b16 %v7011, %v6995
  %v7812 = vpack.c.b16 %v7012, %v6996
  %v7813 = vpack.c.b16 %v7013, %v6997
  %v7814 = vpack.c.b16 %v7014, %v6998
  %v7815 = vpack.c.b16 %v7015, %v6999
  %v7816 = vpack.c.b16 %v7016, %v7000
  %v7817 = vpack.c.b16 %v7017, %v7001
  %v7818 = vpack.c.b16 %v7018, %v7002
  %v7819 = vpack.c.b16 %v7019, %v7003
  %v7820 = vpack.c.b16 %v7020, %v7004
  %v7821 = vpack.c.b16 %v7021, %v7005
  %v7822 = vpack.c.b16 %v7022, %v7006
  %v7823 = vpack.c.b16 %v7023, %v7007
  %v7824 = vpack.c.b16 %v7024, %v7008
  %v7825 = vpack.c.b16 %v7025, %v7009
  %v7826 = vpack.c.b16 %v7042, %v7026
  %v7827 = vpack.c.b16 %v7043, %v7027
  %v7828 = vpack.c.b16 %v7044, %v7028
  %v7829 = vpack.c.b16 %v7045, %v7029
  %v7830 = vpack.c.b16 %v7046, %v7030
  %v7831 = vpack.c.b16 %v7047, %v7031
  %v7832 = vpack.c.b16 %v7048, %v7032
  %v7833 = vpack.c.b16 %v7049, %v7033
  %v7834 = vpack.c.b16 %v7050, %v7034
  %v7835 = vpack.c.b16 %v7051, %v7035
  %v7836 = vpack.c.b16 %v7052, %v7036
  %v7837 = vpack.c.b16 %v7053, %v7037
  %v7838 = vpack.c.b16 %v7054, %v7038
  %v7839 = vpack.c.b16 %v7055, %v7039
  %v7840 = vpack.c.b16 %v7056, %v7040
  %v7841 = vpack.c.b16 %v7057, %v7041
  %v7842 = vpack.c.b16 %v7074, %v7058
  %v7843 = vpack.c.b16 %v7075, %v7059
  %v7844 = vpack.c.b16 %v7076, %v7060
  %v7845 = vpack.c.b16 %v7077, %v7061
  %v7846 = vpack.c.b16 %v7078, %v7062
  %v7847 = vpack.c.b16 %v7079, %v7063
  %v7848 = vpack.c.b16 %v7080, %v7064
  %v7849 = vpack.c.b16 %v7081, %v7065
  %v7850 = vpack.c.b16 %v7082, %v7066
  %v7851 = vpack.c.b16 %v7083, %v7067
  %v7852 = vpack.c.b16 %v7084, %v7068
  %v7853 = vpack.c.b16 %v7085, %v7069
  %v7854 = vpack.c.b16 %v7086, %v7070
  %v7855 = vpack.c.b16 %v7087, %v7071
  %v7856 = vpack.c.b16 %v7088, %v7072
  %v7857 = vpack.c.b16 %v7089, %v7073
  %v7858 = vpack.c.b16 %v7106, %v7090
  %v7859 = vpack.c.b16 %v7107, %v7091
  %v7860 = vpack.c.b16 %v7108, %v7092
  %v7861 = vpack.c.b16 %v7109, %v7093
  %v7862 = vpack.c.b16 %v7110, %v7094
  %v7863 = vpack.c.b16 %v7111, %v7095
  %v7864 = vpack.c.b16 %v7112, %v7096
  %v7865 = vpack.c.b16 %v7113, %v7097
  %v7866 = vpack.c.b16 %v7114, %v7098
  %v7867 = vpack.c.b16 %v7115, %v7099
  %v7868 = vpack.c.b16 %v7116, %v7100
  %v7869 = vpack.c.b16 %v7117, %v7101
  %v7870 = vpack.c.b16 %v7118, %v7102
  %v7871 = vpack.c.b16 %v7119, %v7103
  %v7872 = vpack.c.b16 %v7120, %v7104
  %v7873 = vpack.c.b16 %v7121, %v7105
  %v7874 = vpack.c.b16 %v7138, %v7122
  %v7875 = vpack.c.b16 %v7139, %v7123
  %v7876 = vpack.c.b16 %v7140, %v7124
  %v7877 = vpack.c.b16 %v7141, %v7125
  %v7878 = vpack.c.b16 %v7142, %v7126
  %v7879 = vpack.c.b16 %v7143, %v7127
  %v7880 = vpack.c.b16 %v7144, %v7128
  %v7881 = vpack.c.b16 %v7145, %v7129
  %v7882 = vpack.c.b16 %v7146, %v7130
  %v7883 = vpack.c.b16 %v7147, %v7131
  %v7884 = vpack.c.b16 %v7148, %v7132
  %v7885 = vpack.c.b16 %v7149, %v7133
  %v7886 = vpack.c.b16 %v7150, %v7134
  %v7887 = vpack.c.b16 %v7151, %v7135
  %v7888 = vpack.c.b16 %v7152, %v7136
  %v7889 = vpack.c.b16 %v7153, %v7137
  %v7890 = vpack.c.b16 %v7170, %v7154
  %v7891 = vpack.c.b16 %v7171, %v7155
  %v7892 = vpack.c.b16 %v7172, %v7156
  %v7893 = vpack.c.b16 %v7173, %v7157
  %v7894 = vpack.c.b16 %v7174, %v7158
  %v7895 = vpack.c.b16 %v7175, %v7159
  %v7896 = vpack.c.b16 %v7176, %v7160
  %v7897 = vpack.c.b16 %v7177, %v7161
  %v7898 = vpack.c.b16 %v7178, %v7162
  %v7899 = vpack.c.b16 %v7179, %v7163
  %v7900 = vpack.c.b16 %v7180, %v7164
  %v7901 = vpack.c.b16 %v7181, %v7165
  %v7902 = vpack.c.b16 %v7182, %v7166
  %v7903 = vpack.c.b16 %v7183, %v7167
  %v7904 = vpack.c.b16 %v7184, %v7168
  %v7905 = vpack.c.b16 %v7185, %v7169
  %v7906 = vpack.c.b16 %v7202, %v7186
  %v7907 = vpack.c.b16 %v7203, %v7187
  %v7908 = vpack.c.b16 %v7204, %v7188
  %v7909 = vpack.c.b16 %v7205, %v7189
  %v7910 = vpack.c.b16 %v7206, %v7190
  %v7911 = vpack.c.b16 %v7207, %v7191
  %v7912 = vpack.c.b16 %v7208, %v7192
  %v7913 = vpack.c.b16 %v7209, %v7193
  %v7914 = vpack.c.b16 %v7210, %v7194
  %v7915 = vpack.c.b16 %v7211, %v7195
  %v7916 = vpack.c.b16 %v7212, %v7196
  %v7917 = vpack.c.b16 %v7213, %v7197
  %v7918 = vpack.c.b16 %v7214, %v7198
  %v7919 = vpack.c.b16 %v7215, %v7199
  %v7920 = vpack.c.b16 %v7216, %v7200
  %v7921 = vpack.c.b16 %v7217, %v7201
  %v7922 = vpack.c.b16 %v7234, %v7218
  %v7923 = vpack.c.b16 %v7235, %v7219
  %v7924 = vpack.c.b16 %v7236, %v7220
  %v7925 = vpack.c.b16 %v7237, %v7221
  %v7926 = vpack.c.b16 %v7238, %v7222
  %v7927 = vpack.c.b16 %v7239, %v7223
  %v7928 = vpack.c.b16 %v7240, %v7224
  %v7929 = vpack.c.b16 %v7241, %v7225
  %v7930 = vpack.c.b16 %v7242, %v7226
  %v7931 = vpack.c.b16 %v7243, %v7227
  %v7932 = vpack.c.b16 %v7244, %v7228
  %v7933 = vpack.c.b16 %v7245, %v7229
  %v7934 = vpack.c.b16 %v7246, %v7230
  %v7935 = vpack.c.b16 %v7247, %v7231
  %v7936 = vpack.c.b16 %v7248, %v7232
  %v7937 = vpack.c.b16 %v7249, %v7233
  %v7938 = vpack.c.b16 %v7266, %v7250
  %v7939 = vpack.c.b16 %v7267, %v7251
  %v7940 = vpack.c.b16 %v7268, %v7252
  %v7941 = vpack.c.b16 %v7269, %v7253
  %v7942 = vpack.c.b16 %v7270, %v7254
  %v7943 = vpack.c.b16 %v7271, %v7255
  %v7944 = vpack.c.b16 %v7272, %v7256
  %v7945 = vpack.c.b16 %v7273, %v7257
  %v7946 = vpack.c.b16 %v7274, %v7258
  %v7947 = vpack.c.b16 %v7275, %v7259
  %v7948 = vpack.c.b16 %v7276, %v7260
  %v7949 = vpack.c.b16 %v7277, %v7261
  %v7950 = vpack.c.b16 %v7278, %v7262
  %v7951 = vpack.c.b16 %v7279, %v7263
  %v7952 = vpack.c.b16 %v7280, %v7264
  %v7953 = vpack.c.b16 %v7281, %v7265
  %v7954 = vpack.c.b16 %v7298, %v7282
  %v7955 = vpack.c.b16 %v7299, %v7283
  %v7956 = vpack.c.b16 %v7300, %v7284
  %v7957 = vpack.c.b16 %v7301, %v7285
  %v7958 = vpack.c.b16 %v7302, %v7286
  %v7959 = vpack.c.b16 %v7303, %v7287
  %v7960 = vpack.c.b16 %v7304, %v7288
  %v7961 = vpack.c.b16 %v7305, %v7289
  %v7962 = vpack.c.b16 %v7306, %v7290
  %v7963 = vpack.c.b16 %v7307, %v7291
  %v7964 = vpack.c.b16 %v7308, %v7292
  %v7965 = vpack.c.b16 %v7309, %v7293
  %v7966 = vpack.c.b16 %v7310, %v7294
  %v7967 = vpack.c.b16 %v7311, %v7295
  %v7968 = vpack.c.b16 %v7312, %v7296
  %v7969 = vpack.c.b16 %v7313, %v7297
  %v7970 = vpack.c.b16 %v7330, %v7314
  %v7971 = vpack.c.b16 %v7331, %v7315
  %v7972 = vpack.c.b16 %v7332, %v7316
  %v7973 = vpack.c.b16 %v7333, %v7317
  %v7974 = vpack.c.b16 %v7334, %v7318
  %v7975 = vpack.c.b16 %v7335, %v7319
  %v7976 = vpack.c.b16 %v7336, %v7320
  %v7977 = vpack.c.b16 %v7337, %v7321
  %v7978 = vpack.c.b16 %v7338, %v7322
  %v7979 = vpack.c.b16 %v7339, %v7323
  %v7980 = vpack.c.b16 %v7340, %v7324
  %v7981 = vpack.c.b16 %v7341, %v7325
  %v7982 = vpack.c.b16 %v7342, %v7326
  %v7983 = vpack.c.b16 %v7343, %v7327
  %v7984 = vpack.c.b16 %v7344, %v7328
  %v7985 = vpack.c.b16 %v7345, %v7329
  %v7986 = vpack.c.b16 %v7362, %v7346
  %v7987 = vpack.c.b16 %v7363, %v7347
  %v7988 = vpack.c.b16 %v7364, %v7348
  %v7989 = vpack.c.b16 %v7365, %v7349
  %v7990 = vpack.c.b16 %v7366, %v7350
  %v7991 = vpack.c.b16 %v7367, %v7351
  %v7992 = vpack.c.b16 %v7368, %v7352
  %v7993 = vpack.c.b16 %v7369, %v7353
  %v7994 = vpack.c.b16 %v7370, %v7354
  %v7995 = vpack.c.b16 %v7371, %v7355
  %v7996 = vpack.c.b16 %v7372, %v7356
  %v7997 = vpack.c.b16 %v7373, %v7357
  %v7998 = vpack.c.b16 %v7374, %v7358
  %v7999 = vpack.c.b16 %v7375, %v7359
  %v8000 = vpack.c.b16 %v7376, %v7360
  %v8001 = vpack.c.b16 %v7377, %v7361
  %v8002 = vpack.c.b16 %v7394, %v7378
  %v8003 = vpack.c.b16 %v7395, %v7379
  %v8004 = vpack.c.b16 %v7396, %v7380
  %v8005 = vpack.c.b16 %v7397, %v7381
  %v8006 = vpack.c.b16 %v7398, %v7382
  %v8007 = vpack.c.b16 %v7399, %v7383
  %v8008 = vpack.c.b16 %v7400, %v7384
  %v8009 = vpack.c.b16 %v7401, %v7385
  %v8010 = vpack.c.b16 %v7402, %v7386
  %v8011 = vpack.c.b16 %v7403, %v7387
  %v8012 = vpack.c.b16 %v7404, %v7388
  %v8013 = vpack.c.b16 %v7405, %v7389
  %v8014 = vpack.c.b16 %v7406, %v7390
  %v8015 = vpack.c.b16 %v7407, %v7391
  %v8016 = vpack.c.b16 %v7408, %v7392
  %v8017 = vpack.c.b16 %v7409, %v7393
  %v8018 = vpack.c.b16 %v7426, %v7410
  %v8019 = vpack.c.b16 %v7427, %v7411
  %v8020 = vpack.c.b16 %v7428, %v7412
  %v8021 = vpack.c.b16 %v7429, %v7413
  %v8022 = vpack.c.b16 %v7430, %v7414
  %v8023 = vpack.c.b16 %v7431, %v7415
  %v8024 = vpack.c.b16 %v7432, %v7416
  %v8025 = vpack.c.b16 %v7433, %v7417
  %v8026 = vpack.c.b16 %v7434, %v7418
  %v8027 = vpack.c.b16 %v7435, %v7419
  %v8028 = vpack.c.b16 %v7436, %v7420
  %v8029 = vpack.c.b16 %v7437, %v7421
  %v8030 = vpack.c.b16 %v7438, %v7422
  %v8031 = vpack.c.b16 %v7439, %v7423
  %v8032 = vpack.c.b16 %v7440, %v7424
  %v8033 = vpack.c.b16 %v7441, %v7425
  %v8034 = vpack.c.b16 %v7458, %v7442
  %v8035 = vpack.c.b16 %v7459, %v7443
  %v8036 = vpack.c.b16 %v7460, %v7444
  %v8037 = vpack.c.b16 %v7461, %v7445
  %v8038 = vpack.c.b16 %v7462, %v7446
  %v8039 = vpack.c.b16 %v7463, %v7447
  %v8040 = vpack.c.b16 %v7464, %v7448
  %v8041 = vpack.c.b16 %v7465, %v7449
  %v8042 = vpack.c.b16 %v7466, %v7450
  %v8043 = vpack.c.b16 %v7467, %v7451
  %v8044 = vpack.c.b16 %v7468, %v7452
  %v8045 = vpack.c.b16 %v7469, %v7453
  %v8046 = vpack.c.b16 %v7470, %v7454
  %v8047 = vpack.c.b16 %v7471, %v7455
  %v8048 = vpack.c.b16 %v7472, %v7456
  %v8049 = vpack.c.b16 %v7473, %v7457
  %v8050 = vpack.c.b16 %v7490, %v7474
  %v8051 = vpack.c.b16 %v7491, %v7475
  %v8052 = vpack.c.b16 %v7492, %v7476
  %v8053 = vpack.c.b16 %v7493, %v7477
  %v8054 = vpack.c.b16 %v7494, %v7478
  %v8055 = vpack.c.b16 %v7495, %v7479
  %v8056 = vpack.c.b16 %v7496, %v7480
  %v8057 = vpack.c.b16 %v7497, %v7481
  %v8058 = vpack.c.b16 %v7498, %v7482
  %v8059 = vpack.c.b16 %v7499, %v7483
  %v8060 = vpack.c.b16 %v7500, %v7484
  %v8061 = vpack.c.b16 %v7501, %v7485
  %v8062 = vpack.c.b16 %v7502, %v7486
  %v8063 = vpack.c.b16 %v7503, %v7487
  %v8064 = vpack.c.b16 %v7504, %v7488
  %v8065 = vpack.c.b16 %v7505, %v7489
  %v8066 = vpack.c.b16 %v7522, %v7506
  %v8067 = vpack.c.b16 %v7523, %v7507
  %v8068 = vpack.c.b16 %v7524, %v7508
  %v8069 = vpack.c.b16 %v7525, %v7509
  %v8070 = vpack.c.b16 %v7526, %v7510
  %v8071 = vpack.c.b16 %v7527, %v7511
  %v8072 = vpack.c.b16 %v7528, %v7512
  %v8073 = vpack.c.b16 %v7529, %v7513
  %v8074 = vpack.c.b16 %v7530, %v7514
  %v8075 = vpack.c.b16 %v7531, %v7515
  %v8076 = vpack.c.b16 %v7532, %v7516
  %v8077 = vpack.c.b16 %v7533, %v7517
  %v8078 = vpack.c.b16 %v7534, %v7518
  %v8079 = vpack.c.b16 %v7535, %v7519
  %v8080 = vpack.c.b16 %v7536, %v7520
  %v8081 = vpack.c.b16 %v7537, %v7521
  %v8082 = vpack.c.b16 %v7554, %v7538
  %v8083 = vpack.c.b16 %v7555, %v7539
  %v8084 = vpack.c.b16 %v7556, %v7540
  %v8085 = vpack.c.b16 %v7557, %v7541
  %v8086 = vpack.c.b16 %v7558, %v7542
  %v8087 = vpack.c.b16 %v7559, %v7543
  %v8088 = vpack.c.b16 %v7560, %v7544
  %v8089 = vpack.c.b16 %v7561, %v7545
  %v8090 = vpack.c.b16 %v7562, %v7546
  %v8091 = vpack.c.b16 %v7563, %v7547
  %v8092 = vpack.c.b16 %v7564, %v7548
  %v8093 = vpack.c.b16 %v7565, %v7549
  %v8094 = vpack.c.b16 %v7566, %v7550
  %v8095 = vpack.c.b16 %v7567, %v7551
  %v8096 = vpack.c.b16 %v7568, %v7552
  %v8097 = vpack.c.b16 %v7569, %v7553
  %v8098 = vpack.c.b16 %v7586, %v7570
  %v8099 = vpack.c.b16 %v7587, %v7571
  %v8100 = vpack.c.b16 %v7588, %v7572
  %v8101 = vpack.c.b16 %v7589, %v7573
  %v8102 = vpack.c.b16 %v7590, %v7574
  %v8103 = vpack.c.b16 %v7591, %v7575
  %v8104 = vpack.c.b16 %v7592, %v7576
  %v8105 = vpack.c.b16 %v7593, %v7577
  %v8106 = vpack.c.b16 %v7594, %v7578
  %v8107 = vpack.c.b16 %v7595, %v7579
  %v8108 = vpack.c.b16 %v7596, %v7580
  %v8109 = vpack.c.b16 %v7597, %v7581
  %v8110 = vpack.c.b16 %v7598, %v7582
  %v8111 = vpack.c.b16 %v7599, %v7583
  %v8112 = vpack.c.b16 %v7600, %v7584
  %v8113 = vpack.c.b16 %v7601, %v7585
  %v8114 = vpack.c.b16 %v7602, %v7602
  %v8115 = vpack.c.b16 %v7603, %v7603
  %v8116 = vpack.c.b16 %v7604, %v7604
  %v8117 = vpack.c.b16 %v7605, %v7605
  %v8118 = vpack.c.b16 %v7606, %v7606
  %v8119 = vpack.c.b16 %v7607, %v7607
  %v8120 = vpack.c.b16 %v7608, %v7608
  %v8121 = vpack.c.b16 %v7609, %v7609
  %v8122 = vpack.c.b16 %v7610, %v7610
  %v8123 = vpack.c.b16 %v7611, %v7611
  %v8124 = vpack.c.b16 %v7612, %v7612
  %v8125 = vpack.c.b16 %v7613, %v7613
  %v8126 = vpack.c.b16 %v7614, %v7614
  %v8127 = vpack.c.b16 %v7615, %v7615
  %v8128 = vpack.c.b16 %v7616, %v7616
  %v8129 = vpack.c.b16 %v7617, %v7617
  %vm8626 = vcmask 949248
  %v8628 = vsel %vm8626, %v5517, 0
  %vm8630 = vcmask 1041408
  %v8632 = vsel %vm8630, %v8114, 0
  %v8635 = vsel %vm8630, %v8115, 0
  %v8638 = vsel %vm8630, %v8116, 0
  %v8641 = vsel %vm8630, %v8117, 0
  %v8644 = vsel %vm8630, %v8118, 0
  %v8647 = vsel %vm8630, %v8119, 0
  %v8650 = vsel %vm8630, %v8120, 0
  %v8653 = vsel %vm8630, %v8121, 0
  %v8656 = vsel %vm8630, %v8122, 0
  %v8659 = vsel %vm8630, %v8123, 0
  %v8662 = vsel %vm8630, %v8124, 0
  %v8665 = vsel %vm8630, %v8125, 0
  %v8668 = vsel %vm8630, %v8126, 0
  %v8671 = vsel %vm8630, %v8127, 0
  %v8674 = vsel %vm8630, %v8128, 0
  %v8677 = vsel %vm8630, %v8129, 0
  %8679 = vmatprep.subr.bf16.mxu0 %v7731
  %8680 = vmatpush1.bf16.msra.mxu0 %v7730
  %8681 = vmatprep.subr.bf16.mxu0 %v7715
  %8682 = vmatpush1.bf16.msra.mxu0 %v7714
  %8683 = vmatprep.subr.bf16.mxu0 %v7699
  %8684 = vmatpush1.bf16.msra.mxu0 %v7698
  %8685 = vmatprep.subr.bf16.mxu0 %v7683
  %8686 = vmatpush1.bf16.msra.mxu0 %v7682
  %8687 = vmatprep.subr.bf16.mxu0 %v7667
  %8688 = vmatpush1.bf16.msra.mxu0 %v7666
  %8689 = vmatprep.subr.bf16.mxu0 %v7651
  %8690 = vmatpush1.bf16.msra.mxu0 %v7650
  %8691 = vmatprep.subr.bf16.mxu0 %v7635
  %8692 = vmatpush1.bf16.msra.mxu0 %v7634
  %8693 = vmatprep.subr.bf16.mxu0 %v7619
  %8694 = vmatpush1.bf16.msra.mxu0 %v7618
  %8695 = vmatprep.subr.bf16.mxu0 %v7859
  %8696 = vmatpush2.bf16.msra.mxu0 %v7858
  %8697 = vmatprep.subr.bf16.mxu0 %v7843
  %8698 = vmatpush2.bf16.msra.mxu0 %v7842
  %8699 = vmatprep.subr.bf16.mxu0 %v7827
  %8700 = vmatpush2.bf16.msra.mxu0 %v7826
  %8701 = vmatprep.subr.bf16.mxu0 %v7811
  %8702 = vmatpush2.bf16.msra.mxu0 %v7810
  %8703 = vmatprep.subr.bf16.mxu0 %v7795
  %8704 = vmatpush2.bf16.msra.mxu0 %v7794
  %8705 = vmatprep.subr.bf16.mxu0 %v7779
  %8706 = vmatpush2.bf16.msra.mxu0 %v7778
  %8707 = vmatprep.subr.bf16.mxu0 %v7763
  %8708 = vmatpush2.bf16.msra.mxu0 %v7762
  %8709 = vmatprep.subr.bf16.mxu0 %v7747
  %8710 = vmatpush2.bf16.msra.mxu0 %v7746
  %8711 = vmatprep.mubr.bf16.mxu0 %v5515
  %8712 = vmatmul.mubr.bf16.gmra.mxu0 %v5514
  %v8713 = vpop.f32.mrf.mxu0
  %v8714 = vadd.f32 %v6029, %v8713
  %v8715 = vpop.f32.mrf.mxu0
  %v8716 = vadd.f32 %v6033, %v8715
  %v8717 = vpop.f32.mrf.mxu0
  %v8718 = vpop.f32.mrf.mxu0
  %8719 = vdwg.mxu0
  %8720 = vmatprep.subr.bf16.mxu0 %v7987
  %8721 = vmatpush1.bf16.msra.mxu0 %v7986
  %8722 = vmatprep.subr.bf16.mxu0 %v7971
  %8723 = vmatpush1.bf16.msra.mxu0 %v7970
  %8724 = vmatprep.subr.bf16.mxu0 %v7955
  %8725 = vmatpush1.bf16.msra.mxu0 %v7954
  %8726 = vmatprep.subr.bf16.mxu0 %v7939
  %8727 = vmatpush1.bf16.msra.mxu0 %v7938
  %8728 = vmatprep.subr.bf16.mxu0 %v7923
  %8729 = vmatpush1.bf16.msra.mxu0 %v7922
  %8730 = vmatprep.subr.bf16.mxu0 %v7907
  %8731 = vmatpush1.bf16.msra.mxu0 %v7906
  %8732 = vmatprep.subr.bf16.mxu0 %v7891
  %8733 = vmatpush1.bf16.msra.mxu0 %v7890
  %8734 = vmatprep.subr.bf16.mxu0 %v7875
  %8735 = vmatpush1.bf16.msra.mxu0 %v7874
  %8736 = vmatprep.subr.bf16.mxu0 %v8635
  %8737 = vmatpush2.bf16.msra.mxu0 %v8632
  %8738 = vmatprep.subr.bf16.mxu0 %v8099
  %8739 = vmatpush2.bf16.msra.mxu0 %v8098
  %8740 = vmatprep.subr.bf16.mxu0 %v8083
  %8741 = vmatpush2.bf16.msra.mxu0 %v8082
  %8742 = vmatprep.subr.bf16.mxu0 %v8067
  %8743 = vmatpush2.bf16.msra.mxu0 %v8066
  %8744 = vmatprep.subr.bf16.mxu0 %v8051
  %8745 = vmatpush2.bf16.msra.mxu0 %v8050
  %8746 = vmatprep.subr.bf16.mxu0 %v8035
  %8747 = vmatpush2.bf16.msra.mxu0 %v8034
  %8748 = vmatprep.subr.bf16.mxu0 %v8019
  %8749 = vmatpush2.bf16.msra.mxu0 %v8018
  %8750 = vmatprep.subr.bf16.mxu0 %v8003
  %8751 = vmatpush2.bf16.msra.mxu0 %v8002
  %8752 = vmatprep.mubr.bf16.mxu0 %v8628
  %8753 = vmatmul.mubr.bf16.gmra.mxu0 %v5516
  %v8754 = vpop.f32.mrf.mxu0
  %v8755 = vadd.f32 %v8714, %v8754
  %v8756 = vpop.f32.mrf.mxu0
  %v8757 = vadd.f32 %v8716, %v8756
  %v8758 = vpop.f32.mrf.mxu0
  %v8759 = vpop.f32.mrf.mxu0
  %8760 = vdwg.mxu0
  %8761 = vmatprep.subr.bf16.mxu0 %v7733
  %8762 = vmatpush1.bf16.msra.mxu0 %v7732
  %8763 = vmatprep.subr.bf16.mxu0 %v7717
  %8764 = vmatpush1.bf16.msra.mxu0 %v7716
  %8765 = vmatprep.subr.bf16.mxu0 %v7701
  %8766 = vmatpush1.bf16.msra.mxu0 %v7700
  %8767 = vmatprep.subr.bf16.mxu0 %v7685
  %8768 = vmatpush1.bf16.msra.mxu0 %v7684
  %8769 = vmatprep.subr.bf16.mxu0 %v7669
  %8770 = vmatpush1.bf16.msra.mxu0 %v7668
  %8771 = vmatprep.subr.bf16.mxu0 %v7653
  %8772 = vmatpush1.bf16.msra.mxu0 %v7652
  %8773 = vmatprep.subr.bf16.mxu0 %v7637
  %8774 = vmatpush1.bf16.msra.mxu0 %v7636
  %8775 = vmatprep.subr.bf16.mxu0 %v7621
  %8776 = vmatpush1.bf16.msra.mxu0 %v7620
  %8777 = vmatprep.subr.bf16.mxu0 %v7861
  %8778 = vmatpush2.bf16.msra.mxu0 %v7860
  %8779 = vmatprep.subr.bf16.mxu0 %v7845
  %8780 = vmatpush2.bf16.msra.mxu0 %v7844
  %8781 = vmatprep.subr.bf16.mxu0 %v7829
  %8782 = vmatpush2.bf16.msra.mxu0 %v7828
  %8783 = vmatprep.subr.bf16.mxu0 %v7813
  %8784 = vmatpush2.bf16.msra.mxu0 %v7812
  %8785 = vmatprep.subr.bf16.mxu0 %v7797
  %8786 = vmatpush2.bf16.msra.mxu0 %v7796
  %8787 = vmatprep.subr.bf16.mxu0 %v7781
  %8788 = vmatpush2.bf16.msra.mxu0 %v7780
  %8789 = vmatprep.subr.bf16.mxu0 %v7765
  %8790 = vmatpush2.bf16.msra.mxu0 %v7764
  %8791 = vmatprep.subr.bf16.mxu0 %v7749
  %8792 = vmatpush2.bf16.msra.mxu0 %v7748
  %8793 = vmatprep.mubr.bf16.mxu0 %v5515
  %8794 = vmatmul.mubr.bf16.gmra.mxu0 %v5514
  %v8795 = vpop.f32.mrf.mxu0
  %v8796 = vadd.f32 %v6037, %v8795
  %v8797 = vpop.f32.mrf.mxu0
  %v8798 = vadd.f32 %v6041, %v8797
  %v8799 = vpop.f32.mrf.mxu0
  %v8800 = vpop.f32.mrf.mxu0
  %8801 = vdwg.mxu0
  %8802 = vmatprep.subr.bf16.mxu0 %v7989
  %8803 = vmatpush1.bf16.msra.mxu0 %v7988
  %8804 = vmatprep.subr.bf16.mxu0 %v7973
  %8805 = vmatpush1.bf16.msra.mxu0 %v7972
  %8806 = vmatprep.subr.bf16.mxu0 %v7957
  %8807 = vmatpush1.bf16.msra.mxu0 %v7956
  %8808 = vmatprep.subr.bf16.mxu0 %v7941
  %8809 = vmatpush1.bf16.msra.mxu0 %v7940
  %8810 = vmatprep.subr.bf16.mxu0 %v7925
  %8811 = vmatpush1.bf16.msra.mxu0 %v7924
  %8812 = vmatprep.subr.bf16.mxu0 %v7909
  %8813 = vmatpush1.bf16.msra.mxu0 %v7908
  %8814 = vmatprep.subr.bf16.mxu0 %v7893
  %8815 = vmatpush1.bf16.msra.mxu0 %v7892
  %8816 = vmatprep.subr.bf16.mxu0 %v7877
  %8817 = vmatpush1.bf16.msra.mxu0 %v7876
  %8818 = vmatprep.subr.bf16.mxu0 %v8641
  %8819 = vmatpush2.bf16.msra.mxu0 %v8638
  %8820 = vmatprep.subr.bf16.mxu0 %v8101
  %8821 = vmatpush2.bf16.msra.mxu0 %v8100
  %8822 = vmatprep.subr.bf16.mxu0 %v8085
  %8823 = vmatpush2.bf16.msra.mxu0 %v8084
  %8824 = vmatprep.subr.bf16.mxu0 %v8069
  %8825 = vmatpush2.bf16.msra.mxu0 %v8068
  %8826 = vmatprep.subr.bf16.mxu0 %v8053
  %8827 = vmatpush2.bf16.msra.mxu0 %v8052
  %8828 = vmatprep.subr.bf16.mxu0 %v8037
  %8829 = vmatpush2.bf16.msra.mxu0 %v8036
  %8830 = vmatprep.subr.bf16.mxu0 %v8021
  %8831 = vmatpush2.bf16.msra.mxu0 %v8020
  %8832 = vmatprep.subr.bf16.mxu0 %v8005
  %8833 = vmatpush2.bf16.msra.mxu0 %v8004
  %8834 = vmatprep.mubr.bf16.mxu0 %v8628
  %8835 = vmatmul.mubr.bf16.gmra.mxu0 %v5516
  %v8836 = vpop.f32.mrf.mxu0
  %v8837 = vadd.f32 %v8796, %v8836
  %v8838 = vpop.f32.mrf.mxu0
  %v8839 = vadd.f32 %v8798, %v8838
  %v8840 = vpop.f32.mrf.mxu0
  %v8841 = vpop.f32.mrf.mxu0
  %8842 = vdwg.mxu0
  %8843 = vmatprep.subr.bf16.mxu0 %v7735
  %8844 = vmatpush1.bf16.msra.mxu0 %v7734
  %8845 = vmatprep.subr.bf16.mxu0 %v7719
  %8846 = vmatpush1.bf16.msra.mxu0 %v7718
  %8847 = vmatprep.subr.bf16.mxu0 %v7703
  %8848 = vmatpush1.bf16.msra.mxu0 %v7702
  %8849 = vmatprep.subr.bf16.mxu0 %v7687
  %8850 = vmatpush1.bf16.msra.mxu0 %v7686
  %8851 = vmatprep.subr.bf16.mxu0 %v7671
  %8852 = vmatpush1.bf16.msra.mxu0 %v7670
  %8853 = vmatprep.subr.bf16.mxu0 %v7655
  %8854 = vmatpush1.bf16.msra.mxu0 %v7654
  %8855 = vmatprep.subr.bf16.mxu0 %v7639
  %8856 = vmatpush1.bf16.msra.mxu0 %v7638
  %8857 = vmatprep.subr.bf16.mxu0 %v7623
  %8858 = vmatpush1.bf16.msra.mxu0 %v7622
  %8859 = vmatprep.subr.bf16.mxu0 %v7863
  %8860 = vmatpush2.bf16.msra.mxu0 %v7862
  %8861 = vmatprep.subr.bf16.mxu0 %v7847
  %8862 = vmatpush2.bf16.msra.mxu0 %v7846
  %8863 = vmatprep.subr.bf16.mxu0 %v7831
  %8864 = vmatpush2.bf16.msra.mxu0 %v7830
  %8865 = vmatprep.subr.bf16.mxu0 %v7815
  %8866 = vmatpush2.bf16.msra.mxu0 %v7814
  %8867 = vmatprep.subr.bf16.mxu0 %v7799
  %8868 = vmatpush2.bf16.msra.mxu0 %v7798
  %8869 = vmatprep.subr.bf16.mxu0 %v7783
  %8870 = vmatpush2.bf16.msra.mxu0 %v7782
  %8871 = vmatprep.subr.bf16.mxu0 %v7767
  %8872 = vmatpush2.bf16.msra.mxu0 %v7766
  %8873 = vmatprep.subr.bf16.mxu0 %v7751
  %8874 = vmatpush2.bf16.msra.mxu0 %v7750
  %8875 = vmatprep.mubr.bf16.mxu0 %v5515
  %8876 = vmatmul.mubr.bf16.gmra.mxu0 %v5514
  %v8877 = vpop.f32.mrf.mxu0
  %v8878 = vadd.f32 %v6045, %v8877
  %v8879 = vpop.f32.mrf.mxu0
  %v8880 = vadd.f32 %v6049, %v8879
  %v8881 = vpop.f32.mrf.mxu0
  %v8882 = vpop.f32.mrf.mxu0
  %8883 = vdwg.mxu0
  %8884 = vmatprep.subr.bf16.mxu0 %v7991
  %8885 = vmatpush1.bf16.msra.mxu0 %v7990
  %8886 = vmatprep.subr.bf16.mxu0 %v7975
  %8887 = vmatpush1.bf16.msra.mxu0 %v7974
  %8888 = vmatprep.subr.bf16.mxu0 %v7959
  %8889 = vmatpush1.bf16.msra.mxu0 %v7958
  %8890 = vmatprep.subr.bf16.mxu0 %v7943
  %8891 = vmatpush1.bf16.msra.mxu0 %v7942
  %8892 = vmatprep.subr.bf16.mxu0 %v7927
  %8893 = vmatpush1.bf16.msra.mxu0 %v7926
  %8894 = vmatprep.subr.bf16.mxu0 %v7911
  %8895 = vmatpush1.bf16.msra.mxu0 %v7910
  %8896 = vmatprep.subr.bf16.mxu0 %v7895
  %8897 = vmatpush1.bf16.msra.mxu0 %v7894
  %8898 = vmatprep.subr.bf16.mxu0 %v7879
  %8899 = vmatpush1.bf16.msra.mxu0 %v7878
  %8900 = vmatprep.subr.bf16.mxu0 %v8647
  %8901 = vmatpush2.bf16.msra.mxu0 %v8644
  %8902 = vmatprep.subr.bf16.mxu0 %v8103
  %8903 = vmatpush2.bf16.msra.mxu0 %v8102
  %8904 = vmatprep.subr.bf16.mxu0 %v8087
  %8905 = vmatpush2.bf16.msra.mxu0 %v8086
  %8906 = vmatprep.subr.bf16.mxu0 %v8071
  %8907 = vmatpush2.bf16.msra.mxu0 %v8070
  %8908 = vmatprep.subr.bf16.mxu0 %v8055
  %8909 = vmatpush2.bf16.msra.mxu0 %v8054
  %8910 = vmatprep.subr.bf16.mxu0 %v8039
  %8911 = vmatpush2.bf16.msra.mxu0 %v8038
  %8912 = vmatprep.subr.bf16.mxu0 %v8023
  %8913 = vmatpush2.bf16.msra.mxu0 %v8022
  %8914 = vmatprep.subr.bf16.mxu0 %v8007
  %8915 = vmatpush2.bf16.msra.mxu0 %v8006
  %8916 = vmatprep.mubr.bf16.mxu0 %v8628
  %8917 = vmatmul.mubr.bf16.gmra.mxu0 %v5516
  %v8918 = vpop.f32.mrf.mxu0
  %v8919 = vadd.f32 %v8878, %v8918
  %v8920 = vpop.f32.mrf.mxu0
  %v8921 = vadd.f32 %v8880, %v8920
  %v8922 = vpop.f32.mrf.mxu0
  %v8923 = vpop.f32.mrf.mxu0
  %8924 = vdwg.mxu0
  %8925 = vmatprep.subr.bf16.mxu0 %v7737
  %8926 = vmatpush1.bf16.msra.mxu0 %v7736
  %8927 = vmatprep.subr.bf16.mxu0 %v7721
  %8928 = vmatpush1.bf16.msra.mxu0 %v7720
  %8929 = vmatprep.subr.bf16.mxu0 %v7705
  %8930 = vmatpush1.bf16.msra.mxu0 %v7704
  %8931 = vmatprep.subr.bf16.mxu0 %v7689
  %8932 = vmatpush1.bf16.msra.mxu0 %v7688
  %8933 = vmatprep.subr.bf16.mxu0 %v7673
  %8934 = vmatpush1.bf16.msra.mxu0 %v7672
  %8935 = vmatprep.subr.bf16.mxu0 %v7657
  %8936 = vmatpush1.bf16.msra.mxu0 %v7656
  %8937 = vmatprep.subr.bf16.mxu0 %v7641
  %8938 = vmatpush1.bf16.msra.mxu0 %v7640
  %8939 = vmatprep.subr.bf16.mxu0 %v7625
  %8940 = vmatpush1.bf16.msra.mxu0 %v7624
  %8941 = vmatprep.subr.bf16.mxu0 %v7865
  %8942 = vmatpush2.bf16.msra.mxu0 %v7864
  %8943 = vmatprep.subr.bf16.mxu0 %v7849
  %8944 = vmatpush2.bf16.msra.mxu0 %v7848
  %8945 = vmatprep.subr.bf16.mxu0 %v7833
  %8946 = vmatpush2.bf16.msra.mxu0 %v7832
  %8947 = vmatprep.subr.bf16.mxu0 %v7817
  %8948 = vmatpush2.bf16.msra.mxu0 %v7816
  %8949 = vmatprep.subr.bf16.mxu0 %v7801
  %8950 = vmatpush2.bf16.msra.mxu0 %v7800
  %8951 = vmatprep.subr.bf16.mxu0 %v7785
  %8952 = vmatpush2.bf16.msra.mxu0 %v7784
  %8953 = vmatprep.subr.bf16.mxu0 %v7769
  %8954 = vmatpush2.bf16.msra.mxu0 %v7768
  %8955 = vmatprep.subr.bf16.mxu0 %v7753
  %8956 = vmatpush2.bf16.msra.mxu0 %v7752
  %8957 = vmatprep.mubr.bf16.mxu0 %v5515
  %8958 = vmatmul.mubr.bf16.gmra.mxu0 %v5514
  %v8959 = vpop.f32.mrf.mxu0
  %v8960 = vadd.f32 %v6053, %v8959
  %v8961 = vpop.f32.mrf.mxu0
  %v8962 = vadd.f32 %v6057, %v8961
  %v8963 = vpop.f32.mrf.mxu0
  %v8964 = vpop.f32.mrf.mxu0
  %8965 = vdwg.mxu0
  %8966 = vmatprep.subr.bf16.mxu0 %v7993
  %8967 = vmatpush1.bf16.msra.mxu0 %v7992
  %8968 = vmatprep.subr.bf16.mxu0 %v7977
  %8969 = vmatpush1.bf16.msra.mxu0 %v7976
  %8970 = vmatprep.subr.bf16.mxu0 %v7961
  %8971 = vmatpush1.bf16.msra.mxu0 %v7960
  %8972 = vmatprep.subr.bf16.mxu0 %v7945
  %8973 = vmatpush1.bf16.msra.mxu0 %v7944
  %8974 = vmatprep.subr.bf16.mxu0 %v7929
  %8975 = vmatpush1.bf16.msra.mxu0 %v7928
  %8976 = vmatprep.subr.bf16.mxu0 %v7913
  %8977 = vmatpush1.bf16.msra.mxu0 %v7912
  %8978 = vmatprep.subr.bf16.mxu0 %v7897
  %8979 = vmatpush1.bf16.msra.mxu0 %v7896
  %8980 = vmatprep.subr.bf16.mxu0 %v7881
  %8981 = vmatpush1.bf16.msra.mxu0 %v7880
  %8982 = vmatprep.subr.bf16.mxu0 %v8653
  %8983 = vmatpush2.bf16.msra.mxu0 %v8650
  %8984 = vmatprep.subr.bf16.mxu0 %v8105
  %8985 = vmatpush2.bf16.msra.mxu0 %v8104
  %8986 = vmatprep.subr.bf16.mxu0 %v8089
  %8987 = vmatpush2.bf16.msra.mxu0 %v8088
  %8988 = vmatprep.subr.bf16.mxu0 %v8073
  %8989 = vmatpush2.bf16.msra.mxu0 %v8072
  %8990 = vmatprep.subr.bf16.mxu0 %v8057
  %8991 = vmatpush2.bf16.msra.mxu0 %v8056
  %8992 = vmatprep.subr.bf16.mxu0 %v8041
  %8993 = vmatpush2.bf16.msra.mxu0 %v8040
  %8994 = vmatprep.subr.bf16.mxu0 %v8025
  %8995 = vmatpush2.bf16.msra.mxu0 %v8024
  %8996 = vmatprep.subr.bf16.mxu0 %v8009
  %8997 = vmatpush2.bf16.msra.mxu0 %v8008
  %8998 = vmatprep.mubr.bf16.mxu0 %v8628
  %8999 = vmatmul.mubr.bf16.gmra.mxu0 %v5516
  %v9000 = vpop.f32.mrf.mxu0
  %v9001 = vadd.f32 %v8960, %v9000
  %v9002 = vpop.f32.mrf.mxu0
  %v9003 = vadd.f32 %v8962, %v9002
  %v9004 = vpop.f32.mrf.mxu0
  %v9005 = vpop.f32.mrf.mxu0
  %9006 = vdwg.mxu0
  %9007 = vmatprep.subr.bf16.mxu0 %v7739
  %9008 = vmatpush1.bf16.msra.mxu0 %v7738
  %9009 = vmatprep.subr.bf16.mxu0 %v7723
  %9010 = vmatpush1.bf16.msra.mxu0 %v7722
  %9011 = vmatprep.subr.bf16.mxu0 %v7707
  %9012 = vmatpush1.bf16.msra.mxu0 %v7706
  %9013 = vmatprep.subr.bf16.mxu0 %v7691
  %9014 = vmatpush1.bf16.msra.mxu0 %v7690
  %9015 = vmatprep.subr.bf16.mxu0 %v7675
  %9016 = vmatpush1.bf16.msra.mxu0 %v7674
  %9017 = vmatprep.subr.bf16.mxu0 %v7659
  %9018 = vmatpush1.bf16.msra.mxu0 %v7658
  %9019 = vmatprep.subr.bf16.mxu0 %v7643
  %9020 = vmatpush1.bf16.msra.mxu0 %v7642
  %9021 = vmatprep.subr.bf16.mxu0 %v7627
  %9022 = vmatpush1.bf16.msra.mxu0 %v7626
  %9023 = vmatprep.subr.bf16.mxu0 %v7867
  %9024 = vmatpush2.bf16.msra.mxu0 %v7866
  %9025 = vmatprep.subr.bf16.mxu0 %v7851
  %9026 = vmatpush2.bf16.msra.mxu0 %v7850
  %9027 = vmatprep.subr.bf16.mxu0 %v7835
  %9028 = vmatpush2.bf16.msra.mxu0 %v7834
  %9029 = vmatprep.subr.bf16.mxu0 %v7819
  %9030 = vmatpush2.bf16.msra.mxu0 %v7818
  %9031 = vmatprep.subr.bf16.mxu0 %v7803
  %9032 = vmatpush2.bf16.msra.mxu0 %v7802
  %9033 = vmatprep.subr.bf16.mxu0 %v7787
  %9034 = vmatpush2.bf16.msra.mxu0 %v7786
  %9035 = vmatprep.subr.bf16.mxu0 %v7771
  %9036 = vmatpush2.bf16.msra.mxu0 %v7770
  %9037 = vmatprep.subr.bf16.mxu0 %v7755
  %9038 = vmatpush2.bf16.msra.mxu0 %v7754
  %9039 = vmatprep.mubr.bf16.mxu0 %v5515
  %9040 = vmatmul.mubr.bf16.gmra.mxu0 %v5514
  %v9041 = vpop.f32.mrf.mxu0
  %v9042 = vadd.f32 %v6061, %v9041
  %v9043 = vpop.f32.mrf.mxu0
  %v9044 = vadd.f32 %v6065, %v9043
  %v9045 = vpop.f32.mrf.mxu0
  %v9046 = vpop.f32.mrf.mxu0
  %9047 = vdwg.mxu0
  %9048 = vmatprep.subr.bf16.mxu0 %v7995
  %9049 = vmatpush1.bf16.msra.mxu0 %v7994
  %9050 = vmatprep.subr.bf16.mxu0 %v7979
  %9051 = vmatpush1.bf16.msra.mxu0 %v7978
  %9052 = vmatprep.subr.bf16.mxu0 %v7963
  %9053 = vmatpush1.bf16.msra.mxu0 %v7962
  %9054 = vmatprep.subr.bf16.mxu0 %v7947
  %9055 = vmatpush1.bf16.msra.mxu0 %v7946
  %9056 = vmatprep.subr.bf16.mxu0 %v7931
  %9057 = vmatpush1.bf16.msra.mxu0 %v7930
  %9058 = vmatprep.subr.bf16.mxu0 %v7915
  %9059 = vmatpush1.bf16.msra.mxu0 %v7914
  %9060 = vmatprep.subr.bf16.mxu0 %v7899
  %9061 = vmatpush1.bf16.msra.mxu0 %v7898
  %9062 = vmatprep.subr.bf16.mxu0 %v7883
  %9063 = vmatpush1.bf16.msra.mxu0 %v7882
  %9064 = vmatprep.subr.bf16.mxu0 %v8659
  %9065 = vmatpush2.bf16.msra.mxu0 %v8656
  %9066 = vmatprep.subr.bf16.mxu0 %v8107
  %9067 = vmatpush2.bf16.msra.mxu0 %v8106
  %9068 = vmatprep.subr.bf16.mxu0 %v8091
  %9069 = vmatpush2.bf16.msra.mxu0 %v8090
  %9070 = vmatprep.subr.bf16.mxu0 %v8075
  %9071 = vmatpush2.bf16.msra.mxu0 %v8074
  %9072 = vmatprep.subr.bf16.mxu0 %v8059
  %9073 = vmatpush2.bf16.msra.mxu0 %v8058
  %9074 = vmatprep.subr.bf16.mxu0 %v8043
  %9075 = vmatpush2.bf16.msra.mxu0 %v8042
  %9076 = vmatprep.subr.bf16.mxu0 %v8027
  %9077 = vmatpush2.bf16.msra.mxu0 %v8026
  %9078 = vmatprep.subr.bf16.mxu0 %v8011
  %9079 = vmatpush2.bf16.msra.mxu0 %v8010
  %9080 = vmatprep.mubr.bf16.mxu0 %v8628
  %9081 = vmatmul.mubr.bf16.gmra.mxu0 %v5516
  %v9082 = vpop.f32.mrf.mxu0
  %v9083 = vadd.f32 %v9042, %v9082
  %v9084 = vpop.f32.mrf.mxu0
  %v9085 = vadd.f32 %v9044, %v9084
  %v9086 = vpop.f32.mrf.mxu0
  %v9087 = vpop.f32.mrf.mxu0
  %9088 = vdwg.mxu0
  %9089 = vmatprep.subr.bf16.mxu0 %v7741
  %9090 = vmatpush1.bf16.msra.mxu0 %v7740
  %9091 = vmatprep.subr.bf16.mxu0 %v7725
  %9092 = vmatpush1.bf16.msra.mxu0 %v7724
  %9093 = vmatprep.subr.bf16.mxu0 %v7709
  %9094 = vmatpush1.bf16.msra.mxu0 %v7708
  %9095 = vmatprep.subr.bf16.mxu0 %v7693
  %9096 = vmatpush1.bf16.msra.mxu0 %v7692
  %9097 = vmatprep.subr.bf16.mxu0 %v7677
  %9098 = vmatpush1.bf16.msra.mxu0 %v7676
  %9099 = vmatprep.subr.bf16.mxu0 %v7661
  %9100 = vmatpush1.bf16.msra.mxu0 %v7660
  %9101 = vmatprep.subr.bf16.mxu0 %v7645
  %9102 = vmatpush1.bf16.msra.mxu0 %v7644
  %9103 = vmatprep.subr.bf16.mxu0 %v7629
  %9104 = vmatpush1.bf16.msra.mxu0 %v7628
  %9105 = vmatprep.subr.bf16.mxu0 %v7869
  %9106 = vmatpush2.bf16.msra.mxu0 %v7868
  %9107 = vmatprep.subr.bf16.mxu0 %v7853
  %9108 = vmatpush2.bf16.msra.mxu0 %v7852
  %9109 = vmatprep.subr.bf16.mxu0 %v7837
  %9110 = vmatpush2.bf16.msra.mxu0 %v7836
  %9111 = vmatprep.subr.bf16.mxu0 %v7821
  %9112 = vmatpush2.bf16.msra.mxu0 %v7820
  %9113 = vmatprep.subr.bf16.mxu0 %v7805
  %9114 = vmatpush2.bf16.msra.mxu0 %v7804
  %9115 = vmatprep.subr.bf16.mxu0 %v7789
  %9116 = vmatpush2.bf16.msra.mxu0 %v7788
  %9117 = vmatprep.subr.bf16.mxu0 %v7773
  %9118 = vmatpush2.bf16.msra.mxu0 %v7772
  %9119 = vmatprep.subr.bf16.mxu0 %v7757
  %9120 = vmatpush2.bf16.msra.mxu0 %v7756
  %9121 = vmatprep.mubr.bf16.mxu0 %v5515
  %9122 = vmatmul.mubr.bf16.gmra.mxu0 %v5514
  %v9123 = vpop.f32.mrf.mxu0
  %v9124 = vadd.f32 %v6069, %v9123
  %v9125 = vpop.f32.mrf.mxu0
  %v9126 = vadd.f32 %v6073, %v9125
  %v9127 = vpop.f32.mrf.mxu0
  %v9128 = vpop.f32.mrf.mxu0
  %9129 = vdwg.mxu0
  %9130 = vmatprep.subr.bf16.mxu0 %v7997
  %9131 = vmatpush1.bf16.msra.mxu0 %v7996
  %9132 = vmatprep.subr.bf16.mxu0 %v7981
  %9133 = vmatpush1.bf16.msra.mxu0 %v7980
  %9134 = vmatprep.subr.bf16.mxu0 %v7965
  %9135 = vmatpush1.bf16.msra.mxu0 %v7964
  %9136 = vmatprep.subr.bf16.mxu0 %v7949
  %9137 = vmatpush1.bf16.msra.mxu0 %v7948
  %9138 = vmatprep.subr.bf16.mxu0 %v7933
  %9139 = vmatpush1.bf16.msra.mxu0 %v7932
  %9140 = vmatprep.subr.bf16.mxu0 %v7917
  %9141 = vmatpush1.bf16.msra.mxu0 %v7916
  %9142 = vmatprep.subr.bf16.mxu0 %v7901
  %9143 = vmatpush1.bf16.msra.mxu0 %v7900
  %9144 = vmatprep.subr.bf16.mxu0 %v7885
  %9145 = vmatpush1.bf16.msra.mxu0 %v7884
  %9146 = vmatprep.subr.bf16.mxu0 %v8665
  %9147 = vmatpush2.bf16.msra.mxu0 %v8662
  %9148 = vmatprep.subr.bf16.mxu0 %v8109
  %9149 = vmatpush2.bf16.msra.mxu0 %v8108
  %9150 = vmatprep.subr.bf16.mxu0 %v8093
  %9151 = vmatpush2.bf16.msra.mxu0 %v8092
  %9152 = vmatprep.subr.bf16.mxu0 %v8077
  %9153 = vmatpush2.bf16.msra.mxu0 %v8076
  %9154 = vmatprep.subr.bf16.mxu0 %v8061
  %9155 = vmatpush2.bf16.msra.mxu0 %v8060
  %9156 = vmatprep.subr.bf16.mxu0 %v8045
  %9157 = vmatpush2.bf16.msra.mxu0 %v8044
  %9158 = vmatprep.subr.bf16.mxu0 %v8029
  %9159 = vmatpush2.bf16.msra.mxu0 %v8028
  %9160 = vmatprep.subr.bf16.mxu0 %v8013
  %9161 = vmatpush2.bf16.msra.mxu0 %v8012
  %9162 = vmatprep.mubr.bf16.mxu0 %v8628
  %9163 = vmatmul.mubr.bf16.gmra.mxu0 %v5516
  %v9164 = vpop.f32.mrf.mxu0
  %v9165 = vadd.f32 %v9124, %v9164
  %v9166 = vpop.f32.mrf.mxu0
  %v9167 = vadd.f32 %v9126, %v9166
  %v9168 = vpop.f32.mrf.mxu0
  %v9169 = vpop.f32.mrf.mxu0
  %9170 = vdwg.mxu0
  %9171 = vmatprep.subr.bf16.mxu0 %v7743
  %9172 = vmatpush1.bf16.msra.mxu0 %v7742
  %9173 = vmatprep.subr.bf16.mxu0 %v7727
  %9174 = vmatpush1.bf16.msra.mxu0 %v7726
  %9175 = vmatprep.subr.bf16.mxu0 %v7711
  %9176 = vmatpush1.bf16.msra.mxu0 %v7710
  %9177 = vmatprep.subr.bf16.mxu0 %v7695
  %9178 = vmatpush1.bf16.msra.mxu0 %v7694
  %9179 = vmatprep.subr.bf16.mxu0 %v7679
  %9180 = vmatpush1.bf16.msra.mxu0 %v7678
  %9181 = vmatprep.subr.bf16.mxu0 %v7663
  %9182 = vmatpush1.bf16.msra.mxu0 %v7662
  %9183 = vmatprep.subr.bf16.mxu0 %v7647
  %9184 = vmatpush1.bf16.msra.mxu0 %v7646
  %9185 = vmatprep.subr.bf16.mxu0 %v7631
  %9186 = vmatpush1.bf16.msra.mxu0 %v7630
  %9187 = vmatprep.subr.bf16.mxu0 %v7871
  %9188 = vmatpush2.bf16.msra.mxu0 %v7870
  %9189 = vmatprep.subr.bf16.mxu0 %v7855
  %9190 = vmatpush2.bf16.msra.mxu0 %v7854
  %9191 = vmatprep.subr.bf16.mxu0 %v7839
  %9192 = vmatpush2.bf16.msra.mxu0 %v7838
  %9193 = vmatprep.subr.bf16.mxu0 %v7823
  %9194 = vmatpush2.bf16.msra.mxu0 %v7822
  %9195 = vmatprep.subr.bf16.mxu0 %v7807
  %9196 = vmatpush2.bf16.msra.mxu0 %v7806
  %9197 = vmatprep.subr.bf16.mxu0 %v7791
  %9198 = vmatpush2.bf16.msra.mxu0 %v7790
  %9199 = vmatprep.subr.bf16.mxu0 %v7775
  %9200 = vmatpush2.bf16.msra.mxu0 %v7774
  %9201 = vmatprep.subr.bf16.mxu0 %v7759
  %9202 = vmatpush2.bf16.msra.mxu0 %v7758
  %9203 = vmatprep.mubr.bf16.mxu0 %v5515
  %9204 = vmatmul.mubr.bf16.gmra.mxu0 %v5514
  %v9205 = vpop.f32.mrf.mxu0
  %v9206 = vadd.f32 %v6077, %v9205
  %v9207 = vpop.f32.mrf.mxu0
  %v9208 = vadd.f32 %v6081, %v9207
  %v9209 = vpop.f32.mrf.mxu0
  %v9210 = vpop.f32.mrf.mxu0
  %9211 = vdwg.mxu0
  %9212 = vmatprep.subr.bf16.mxu0 %v7999
  %9213 = vmatpush1.bf16.msra.mxu0 %v7998
  %9214 = vmatprep.subr.bf16.mxu0 %v7983
  %9215 = vmatpush1.bf16.msra.mxu0 %v7982
  %9216 = vmatprep.subr.bf16.mxu0 %v7967
  %9217 = vmatpush1.bf16.msra.mxu0 %v7966
  %9218 = vmatprep.subr.bf16.mxu0 %v7951
  %9219 = vmatpush1.bf16.msra.mxu0 %v7950
  %9220 = vmatprep.subr.bf16.mxu0 %v7935
  %9221 = vmatpush1.bf16.msra.mxu0 %v7934
  %9222 = vmatprep.subr.bf16.mxu0 %v7919
  %9223 = vmatpush1.bf16.msra.mxu0 %v7918
  %9224 = vmatprep.subr.bf16.mxu0 %v7903
  %9225 = vmatpush1.bf16.msra.mxu0 %v7902
  %9226 = vmatprep.subr.bf16.mxu0 %v7887
  %9227 = vmatpush1.bf16.msra.mxu0 %v7886
  %9228 = vmatprep.subr.bf16.mxu0 %v8671
  %9229 = vmatpush2.bf16.msra.mxu0 %v8668
  %9230 = vmatprep.subr.bf16.mxu0 %v8111
  %9231 = vmatpush2.bf16.msra.mxu0 %v8110
  %9232 = vmatprep.subr.bf16.mxu0 %v8095
  %9233 = vmatpush2.bf16.msra.mxu0 %v8094
  %9234 = vmatprep.subr.bf16.mxu0 %v8079
  %9235 = vmatpush2.bf16.msra.mxu0 %v8078
  %9236 = vmatprep.subr.bf16.mxu0 %v8063
  %9237 = vmatpush2.bf16.msra.mxu0 %v8062
  %9238 = vmatprep.subr.bf16.mxu0 %v8047
  %9239 = vmatpush2.bf16.msra.mxu0 %v8046
  %9240 = vmatprep.subr.bf16.mxu0 %v8031
  %9241 = vmatpush2.bf16.msra.mxu0 %v8030
  %9242 = vmatprep.subr.bf16.mxu0 %v8015
  %9243 = vmatpush2.bf16.msra.mxu0 %v8014
  %9244 = vmatprep.mubr.bf16.mxu0 %v8628
  %9245 = vmatmul.mubr.bf16.gmra.mxu0 %v5516
  %v9246 = vpop.f32.mrf.mxu0
  %v9247 = vadd.f32 %v9206, %v9246
  %v9248 = vpop.f32.mrf.mxu0
  %v9249 = vadd.f32 %v9208, %v9248
  %v9250 = vpop.f32.mrf.mxu0
  %v9251 = vpop.f32.mrf.mxu0
  %9252 = vdwg.mxu0
  %9253 = vmatprep.subr.bf16.mxu0 %v7745
  %9254 = vmatpush1.bf16.msra.mxu0 %v7744
  %9255 = vmatprep.subr.bf16.mxu0 %v7729
  %9256 = vmatpush1.bf16.msra.mxu0 %v7728
  %9257 = vmatprep.subr.bf16.mxu0 %v7713
  %9258 = vmatpush1.bf16.msra.mxu0 %v7712
  %9259 = vmatprep.subr.bf16.mxu0 %v7697
  %9260 = vmatpush1.bf16.msra.mxu0 %v7696
  %9261 = vmatprep.subr.bf16.mxu0 %v7681
  %9262 = vmatpush1.bf16.msra.mxu0 %v7680
  %9263 = vmatprep.subr.bf16.mxu0 %v7665
  %9264 = vmatpush1.bf16.msra.mxu0 %v7664
  %9265 = vmatprep.subr.bf16.mxu0 %v7649
  %9266 = vmatpush1.bf16.msra.mxu0 %v7648
  %9267 = vmatprep.subr.bf16.mxu0 %v7633
  %9268 = vmatpush1.bf16.msra.mxu0 %v7632
  %9269 = vmatprep.subr.bf16.mxu0 %v7873
  %9270 = vmatpush2.bf16.msra.mxu0 %v7872
  %9271 = vmatprep.subr.bf16.mxu0 %v7857
  %9272 = vmatpush2.bf16.msra.mxu0 %v7856
  %9273 = vmatprep.subr.bf16.mxu0 %v7841
  %9274 = vmatpush2.bf16.msra.mxu0 %v7840
  %9275 = vmatprep.subr.bf16.mxu0 %v7825
  %9276 = vmatpush2.bf16.msra.mxu0 %v7824
  %9277 = vmatprep.subr.bf16.mxu0 %v7809
  %9278 = vmatpush2.bf16.msra.mxu0 %v7808
  %9279 = vmatprep.subr.bf16.mxu0 %v7793
  %9280 = vmatpush2.bf16.msra.mxu0 %v7792
  %9281 = vmatprep.subr.bf16.mxu0 %v7777
  %9282 = vmatpush2.bf16.msra.mxu0 %v7776
  %9283 = vmatprep.subr.bf16.mxu0 %v7761
  %9284 = vmatpush2.bf16.msra.mxu0 %v7760
  %9285 = vmatprep.mubr.bf16.mxu0 %v5515
  %9286 = vmatmul.mubr.bf16.gmra.mxu0 %v5514
  %v9287 = vpop.f32.mrf.mxu0
  %v9288 = vadd.f32 %v6085, %v9287
  %v9289 = vpop.f32.mrf.mxu0
  %v9290 = vadd.f32 %v6089, %v9289
  %v9291 = vpop.f32.mrf.mxu0
  %v9292 = vpop.f32.mrf.mxu0
  %9293 = vdwg.mxu0
  %9294 = vmatprep.subr.bf16.mxu0 %v8001
  %9295 = vmatpush1.bf16.msra.mxu0 %v8000
  %9296 = vmatprep.subr.bf16.mxu0 %v7985
  %9297 = vmatpush1.bf16.msra.mxu0 %v7984
  %9298 = vmatprep.subr.bf16.mxu0 %v7969
  %9299 = vmatpush1.bf16.msra.mxu0 %v7968
  %9300 = vmatprep.subr.bf16.mxu0 %v7953
  %9301 = vmatpush1.bf16.msra.mxu0 %v7952
  %9302 = vmatprep.subr.bf16.mxu0 %v7937
  %9303 = vmatpush1.bf16.msra.mxu0 %v7936
  %9304 = vmatprep.subr.bf16.mxu0 %v7921
  %9305 = vmatpush1.bf16.msra.mxu0 %v7920
  %9306 = vmatprep.subr.bf16.mxu0 %v7905
  %9307 = vmatpush1.bf16.msra.mxu0 %v7904
  %9308 = vmatprep.subr.bf16.mxu0 %v7889
  %9309 = vmatpush1.bf16.msra.mxu0 %v7888
  %9310 = vmatprep.subr.bf16.mxu0 %v8677
  %9311 = vmatpush2.bf16.msra.mxu0 %v8674
  %9312 = vmatprep.subr.bf16.mxu0 %v8113
  %9313 = vmatpush2.bf16.msra.mxu0 %v8112
  %9314 = vmatprep.subr.bf16.mxu0 %v8097
  %9315 = vmatpush2.bf16.msra.mxu0 %v8096
  %9316 = vmatprep.subr.bf16.mxu0 %v8081
  %9317 = vmatpush2.bf16.msra.mxu0 %v8080
  %9318 = vmatprep.subr.bf16.mxu0 %v8065
  %9319 = vmatpush2.bf16.msra.mxu0 %v8064
  %9320 = vmatprep.subr.bf16.mxu0 %v8049
  %9321 = vmatpush2.bf16.msra.mxu0 %v8048
  %9322 = vmatprep.subr.bf16.mxu0 %v8033
  %9323 = vmatpush2.bf16.msra.mxu0 %v8032
  %9324 = vmatprep.subr.bf16.mxu0 %v8017
  %9325 = vmatpush2.bf16.msra.mxu0 %v8016
  %9326 = vmatprep.mubr.bf16.mxu0 %v8628
  %9327 = vmatmul.mubr.bf16.gmra.mxu0 %v5516
  %v9328 = vpop.f32.mrf.mxu0
  %v9329 = vadd.f32 %v9288, %v9328
  %v9330 = vpop.f32.mrf.mxu0
  %v9331 = vadd.f32 %v9290, %v9330
  %v9332 = vpop.f32.mrf.mxu0
  %v9333 = vpop.f32.mrf.mxu0
  %9334 = vdwg.mxu0
  %v9335 = vmax.f32 %v8755, 0.0
  %v9336 = vmax.f32 %v8757, 0.0
  %v9337 = vmax.f32 %v8837, 0.0
  %v9338 = vmax.f32 %v8839, 0.0
  %v9339 = vmax.f32 %v8919, 0.0
  %v9340 = vmax.f32 %v8921, 0.0
  %v9341 = vmax.f32 %v9001, 0.0
  %v9342 = vmax.f32 %v9003, 0.0
  %v9343 = vmax.f32 %v9083, 0.0
  %v9344 = vmax.f32 %v9085, 0.0
  %v9345 = vmax.f32 %v9165, 0.0
  %v9346 = vmax.f32 %v9167, 0.0
  %v9347 = vmax.f32 %v9247, 0.0
  %v9348 = vmax.f32 %v9249, 0.0
  %v9349 = vmax.f32 %v9329, 0.0
  %v9350 = vmax.f32 %v9331, 0.0
  %v9351 = vpack.c.bf16 %v9335, %v9335
  %v9352 = vpack.c.bf16 %v9336, %v9336
  %v9353 = vpack.c.bf16 %v9337, %v9337
  %v9354 = vpack.c.bf16 %v9338, %v9338
  %v9355 = vpack.c.bf16 %v9339, %v9339
  %v9356 = vpack.c.bf16 %v9340, %v9340
  %v9357 = vpack.c.bf16 %v9341, %v9341
  %v9358 = vpack.c.bf16 %v9342, %v9342
  %v9359 = vpack.c.bf16 %v9343, %v9343
  %v9360 = vpack.c.bf16 %v9344, %v9344
  %v9361 = vpack.c.bf16 %v9345, %v9345
  %v9362 = vpack.c.bf16 %v9346, %v9346
  %v9363 = vpack.c.bf16 %v9347, %v9347
  %v9364 = vpack.c.bf16 %v9348, %v9348
  %v9365 = vpack.c.bf16 %v9349, %v9349
  %v9366 = vpack.c.bf16 %v9350, %v9350
  %v9367 = vld [vmem:[%s10] sm:$0xf]
  %v9368 = vld [vmem:[%s10 + $0x4] sm:$0xf]
  %v9369 = vld [vmem:[%s10 + $0x8] sm:$0xf]
  %v9370 = vld [vmem:[%s10 + $0xc] sm:$0xf]
  %v9371 = vld [vmem:[%s10 + $0x10] sm:$0xf]
  %v9372 = vld [vmem:[%s10 + $0x14] sm:$0xf]
  %v9373 = vld [vmem:[%s10 + $0x18] sm:$0xf]
  %v9374 = vld [vmem:[%s10 + $0x1c] sm:$0xf]
  %v9375 = vld [vmem:[%s10 + $0x20] sm:$0xf]
  %v9376 = vld [vmem:[%s10 + $0x24] sm:$0xf]
  %v9377 = vld [vmem:[%s10 + $0x28] sm:$0xf]
  %v9378 = vld [vmem:[%s10 + $0x2c] sm:$0xf]
  %v9379 = vld [vmem:[%s10 + $0x30] sm:$0xf]
  %v9380 = vld [vmem:[%s10 + $0x34] sm:$0xf]
  %v9381 = vld [vmem:[%s10 + $0x38] sm:$0xf]
  %v9382 = vld [vmem:[%s10 + $0x3c] sm:$0xf]
  %v9383 = vld [vmem:[%s10 + $0x40] sm:$0xf]
  %v9384 = vld [vmem:[%s10 + $0x44] sm:$0xf]
  %v9385 = vld [vmem:[%s10 + $0x48] sm:$0xf]
  %v9386 = vld [vmem:[%s10 + $0x4c] sm:$0xf]
  %v9387 = vld [vmem:[%s10 + $0x50] sm:$0xf]
  %v9388 = vld [vmem:[%s10 + $0x54] sm:$0xf]
  %v9389 = vld [vmem:[%s10 + $0x58] sm:$0xf]
  %v9390 = vld [vmem:[%s10 + $0x5c] sm:$0xf]
  %v9391 = vld [vmem:[%s10 + $0x60] sm:$0xf]
  %v9392 = vld [vmem:[%s10 + $0x64] sm:$0xf]
  %v9393 = vld [vmem:[%s10 + $0x68] sm:$0xf]
  %v9394 = vld [vmem:[%s10 + $0x6c] sm:$0xf]
  %v9395 = vld [vmem:[%s10 + $0x70] sm:$0xf]
  %v9396 = vld [vmem:[%s10 + $0x74] sm:$0xf]
  %v9397 = vld [vmem:[%s10 + $0x78] sm:$0xf]
  %v9398 = vld [vmem:[%s10 + $0x7c] sm:$0xf]
  %v9399 = vld [vmem:[%s10 + $0x80] sm:$0xf]
  %v9400 = vld [vmem:[%s10 + $0x84] sm:$0xf]
  %v9401 = vld [vmem:[%s10 + $0x88] sm:$0xf]
  %v9402 = vld [vmem:[%s10 + $0x8c] sm:$0xf]
  %v9403 = vld [vmem:[%s10 + $0x90] sm:$0xf]
  %v9404 = vld [vmem:[%s10 + $0x94] sm:$0xf]
  %v9405 = vld [vmem:[%s10 + $0x98] sm:$0xf]
  %v9406 = vld [vmem:[%s10 + $0x9c] sm:$0xf]
  %v9407 = vld [vmem:[%s10 + $0xa0] sm:$0xf]
  %v9408 = vld [vmem:[%s10 + $0xa4] sm:$0xf]
  %v9409 = vld [vmem:[%s10 + $0xa8] sm:$0xf]
  %v9410 = vld [vmem:[%s10 + $0xac] sm:$0xf]
  %v9411 = vld [vmem:[%s10 + $0xb0] sm:$0xf]
  %v9412 = vld [vmem:[%s10 + $0xb4] sm:$0xf]
  %v9413 = vld [vmem:[%s10 + $0xb8] sm:$0xf]
  %v9414 = vld [vmem:[%s10 + $0xbc] sm:$0xf]
  %v9415 = vld [vmem:[%s10 + $0xc0] sm:$0xf]
  %v9416 = vld [vmem:[%s10 + $0xc4] sm:$0xf]
  %v9417 = vld [vmem:[%s10 + $0xc8] sm:$0xf]
  %v9418 = vld [vmem:[%s10 + $0xcc] sm:$0xf]
  %v9419 = vld [vmem:[%s10 + $0xd0] sm:$0xf]
  %v9420 = vld [vmem:[%s10 + $0xd4] sm:$0xf]
  %v9421 = vld [vmem:[%s10 + $0xd8] sm:$0xf]
  %v9422 = vld [vmem:[%s10 + $0xdc] sm:$0xf]
  %v9423 = vld [vmem:[%s10 + $0xe0] sm:$0xf]
  %v9424 = vld [vmem:[%s10 + $0xe4] sm:$0xf]
  %v9425 = vld [vmem:[%s10 + $0xe8] sm:$0xf]
  %v9426 = vld [vmem:[%s10 + $0xec] sm:$0xf]
  %v9427 = vld [vmem:[%s10 + $0xf0] sm:$0xf]
  %v9428 = vld [vmem:[%s10 + $0xf4] sm:$0xf]
  %v9429 = vld [vmem:[%s10 + $0xf8] sm:$0xf]
  %v9430 = vld [vmem:[%s10 + $0xfc] sm:$0xf]
  %v9431 = vld [vmem:[%s10 + $0x100] sm:$0xf]
  %v9432 = vld [vmem:[%s10 + $0x104] sm:$0xf]
  %v9433 = vld [vmem:[%s10 + $0x108] sm:$0xf]
  %v9434 = vld [vmem:[%s10 + $0x10c] sm:$0xf]
  %v9435 = vld [vmem:[%s10 + $0x110] sm:$0xf]
  %v9436 = vld [vmem:[%s10 + $0x114] sm:$0xf]
  %v9437 = vld [vmem:[%s10 + $0x118] sm:$0xf]
  %v9438 = vld [vmem:[%s10 + $0x11c] sm:$0xf]
  %v9439 = vld [vmem:[%s10 + $0x120] sm:$0xf]
  %v9440 = vld [vmem:[%s10 + $0x124] sm:$0xf]
  %v9441 = vld [vmem:[%s10 + $0x128] sm:$0xf]
  %v9442 = vld [vmem:[%s10 + $0x12c] sm:$0xf]
  %v9443 = vld [vmem:[%s10 + $0x130] sm:$0xf]
  %v9444 = vld [vmem:[%s10 + $0x134] sm:$0xf]
  %v9445 = vld [vmem:[%s10 + $0x138] sm:$0xf]
  %v9446 = vld [vmem:[%s10 + $0x13c] sm:$0xf]
  %v9447 = vld [vmem:[%s10 + $0x140] sm:$0xf]
  %v9448 = vld [vmem:[%s10 + $0x144] sm:$0xf]
  %v9449 = vld [vmem:[%s10 + $0x148] sm:$0xf]
  %v9450 = vld [vmem:[%s10 + $0x14c] sm:$0xf]
  %v9451 = vld [vmem:[%s10 + $0x150] sm:$0xf]
  %v9452 = vld [vmem:[%s10 + $0x154] sm:$0xf]
  %v9453 = vld [vmem:[%s10 + $0x158] sm:$0xf]
  %v9454 = vld [vmem:[%s10 + $0x15c] sm:$0xf]
  %v9455 = vld [vmem:[%s10 + $0x160] sm:$0xf]
  %v9456 = vld [vmem:[%s10 + $0x164] sm:$0xf]
  %v9457 = vld [vmem:[%s10 + $0x168] sm:$0xf]
  %v9458 = vld [vmem:[%s10 + $0x16c] sm:$0xf]
  %v9459 = vld [vmem:[%s10 + $0x170] sm:$0xf]
  %v9460 = vld [vmem:[%s10 + $0x174] sm:$0xf]
  %v9461 = vld [vmem:[%s10 + $0x178] sm:$0xf]
  %v9462 = vld [vmem:[%s10 + $0x17c] sm:$0xf]
  %v9463 = vld [vmem:[%s10 + $0x180] sm:$0xf]
  %v9464 = vld [vmem:[%s10 + $0x184] sm:$0xf]
  %v9465 = vld [vmem:[%s10 + $0x188] sm:$0xf]
  %v9466 = vld [vmem:[%s10 + $0x18c] sm:$0xf]
  %v9467 = vld [vmem:[%s10 + $0x190] sm:$0xf]
  %v9468 = vld [vmem:[%s10 + $0x194] sm:$0xf]
  %v9469 = vld [vmem:[%s10 + $0x198] sm:$0xf]
  %v9470 = vld [vmem:[%s10 + $0x19c] sm:$0xf]
  %v9471 = vld [vmem:[%s10 + $0x1a0] sm:$0xf]
  %v9472 = vld [vmem:[%s10 + $0x1a4] sm:$0xf]
  %v9473 = vld [vmem:[%s10 + $0x1a8] sm:$0xf]
  %v9474 = vld [vmem:[%s10 + $0x1ac] sm:$0xf]
  %v9475 = vld [vmem:[%s10 + $0x1b0] sm:$0xf]
  %v9476 = vld [vmem:[%s10 + $0x1b4] sm:$0xf]
  %v9477 = vld [vmem:[%s10 + $0x1b8] sm:$0xf]
  %v9478 = vld [vmem:[%s10 + $0x1bc] sm:$0xf]
  %v9479 = vld [vmem:[%s10 + $0x1c0] sm:$0xf]
  %v9480 = vld [vmem:[%s10 + $0x1c4] sm:$0xf]
  %v9481 = vld [vmem:[%s10 + $0x1c8] sm:$0xf]
  %v9482 = vld [vmem:[%s10 + $0x1cc] sm:$0xf]
  %v9483 = vld [vmem:[%s10 + $0x1d0] sm:$0xf]
  %v9484 = vld [vmem:[%s10 + $0x1d4] sm:$0xf]
  %v9485 = vld [vmem:[%s10 + $0x1d8] sm:$0xf]
  %v9486 = vld [vmem:[%s10 + $0x1dc] sm:$0xf]
  %v9487 = vld [vmem:[%s10 + $0x1e0] sm:$0xf]
  %v9488 = vld [vmem:[%s10 + $0x1e4] sm:$0xf]
  %v9489 = vld [vmem:[%s10 + $0x1e8] sm:$0xf]
  %v9490 = vld [vmem:[%s10 + $0x1ec] sm:$0xf]
  %v9491 = vld [vmem:[%s10 + $0x1f0] sm:$0xf]
  %v9492 = vld [vmem:[%s10 + $0x1f4] sm:$0xf]
  %v9493 = vld [vmem:[%s10 + $0x1f8] sm:$0xf]
  %v9494 = vld [vmem:[%s10 + $0x1fc] sm:$0xf]
  %v9495 = vld [vmem:[%s10 + $0x200] sm:$0xf]
  %v9496 = vld [vmem:[%s10 + $0x204] sm:$0xf]
  %v9497 = vld [vmem:[%s10 + $0x208] sm:$0xf]
  %v9498 = vld [vmem:[%s10 + $0x20c] sm:$0xf]
  %v9499 = vld [vmem:[%s10 + $0x210] sm:$0xf]
  %v9500 = vld [vmem:[%s10 + $0x214] sm:$0xf]
  %v9501 = vld [vmem:[%s10 + $0x218] sm:$0xf]
  %v9502 = vld [vmem:[%s10 + $0x21c] sm:$0xf]
  %v9503 = vld [vmem:[%s10 + $0x220] sm:$0xf]
  %v9504 = vld [vmem:[%s10 + $0x224] sm:$0xf]
  %v9505 = vld [vmem:[%s10 + $0x228] sm:$0xf]
  %v9506 = vld [vmem:[%s10 + $0x22c] sm:$0xf]
  %v9507 = vld [vmem:[%s10 + $0x230] sm:$0xf]
  %v9508 = vld [vmem:[%s10 + $0x234] sm:$0xf]
  %v9509 = vld [vmem:[%s10 + $0x238] sm:$0xf]
  %v9510 = vld [vmem:[%s10 + $0x23c] sm:$0xf]
  %v9511 = vld [vmem:[%s10 + $0x240] sm:$0xf]
  %v9512 = vld [vmem:[%s10 + $0x244] sm:$0xf]
  %v9513 = vld [vmem:[%s10 + $0x248] sm:$0xf]
  %v9514 = vld [vmem:[%s10 + $0x24c] sm:$0xf]
  %v9515 = vld [vmem:[%s10 + $0x250] sm:$0xf]
  %v9516 = vld [vmem:[%s10 + $0x254] sm:$0xf]
  %v9517 = vld [vmem:[%s10 + $0x258] sm:$0xf]
  %v9518 = vld [vmem:[%s10 + $0x25c] sm:$0xf]
  %v9519 = vld [vmem:[%s10 + $0x260] sm:$0xf]
  %v9520 = vld [vmem:[%s10 + $0x264] sm:$0xf]
  %v9521 = vld [vmem:[%s10 + $0x268] sm:$0xf]
  %v9522 = vld [vmem:[%s10 + $0x26c] sm:$0xf]
  %v9523 = vld [vmem:[%s10 + $0x270] sm:$0xf]
  %v9524 = vld [vmem:[%s10 + $0x274] sm:$0xf]
  %v9525 = vld [vmem:[%s10 + $0x278] sm:$0xf]
  %v9526 = vld [vmem:[%s10 + $0x27c] sm:$0xf]
  %v9527 = vld [vmem:[%s10 + $0x280] sm:$0xf]
  %v9528 = vld [vmem:[%s10 + $0x284] sm:$0xf]
  %v9529 = vld [vmem:[%s10 + $0x288] sm:$0xf]
  %v9530 = vld [vmem:[%s10 + $0x28c] sm:$0xf]
  %v9531 = vld [vmem:[%s10 + $0x290] sm:$0xf]
  %v9532 = vld [vmem:[%s10 + $0x294] sm:$0xf]
  %v9533 = vld [vmem:[%s10 + $0x298] sm:$0xf]
  %v9534 = vld [vmem:[%s10 + $0x29c] sm:$0xf]
  %v9535 = vld [vmem:[%s10 + $0x2a0] sm:$0xf]
  %v9536 = vld [vmem:[%s10 + $0x2a4] sm:$0xf]
  %v9537 = vld [vmem:[%s10 + $0x2a8] sm:$0xf]
  %v9538 = vld [vmem:[%s10 + $0x2ac] sm:$0xf]
  %v9539 = vld [vmem:[%s10 + $0x2b0] sm:$0xf]
  %v9540 = vld [vmem:[%s10 + $0x2b4] sm:$0xf]
  %v9541 = vld [vmem:[%s10 + $0x2b8] sm:$0xf]
  %v9542 = vld [vmem:[%s10 + $0x2bc] sm:$0xf]
  %v9543 = vld [vmem:[%s10 + $0x2c0] sm:$0xf]
  %v9544 = vld [vmem:[%s10 + $0x2c4] sm:$0xf]
  %v9545 = vld [vmem:[%s10 + $0x2c8] sm:$0xf]
  %v9546 = vld [vmem:[%s10 + $0x2cc] sm:$0xf]
  %v9547 = vld [vmem:[%s10 + $0x2d0] sm:$0xf]
  %v9548 = vld [vmem:[%s10 + $0x2d4] sm:$0xf]
  %v9549 = vld [vmem:[%s10 + $0x2d8] sm:$0xf]
  %v9550 = vld [vmem:[%s10 + $0x2dc] sm:$0xf]
  %v9551 = vld [vmem:[%s10 + $0x2e0] sm:$0xf]
  %v9552 = vld [vmem:[%s10 + $0x2e4] sm:$0xf]
  %v9553 = vld [vmem:[%s10 + $0x2e8] sm:$0xf]
  %v9554 = vld [vmem:[%s10 + $0x2ec] sm:$0xf]
  %v9555 = vld [vmem:[%s10 + $0x2f0] sm:$0xf]
  %v9556 = vld [vmem:[%s10 + $0x2f4] sm:$0xf]
  %v9557 = vld [vmem:[%s10 + $0x2f8] sm:$0xf]
  %v9558 = vld [vmem:[%s10 + $0x2fc] sm:$0xf]
  %v9559 = vld [vmem:[%s10 + $0x300] sm:$0xf]
  %v9560 = vld [vmem:[%s10 + $0x304] sm:$0xf]
  %v9561 = vld [vmem:[%s10 + $0x308] sm:$0xf]
  %v9562 = vld [vmem:[%s10 + $0x30c] sm:$0xf]
  %v9563 = vld [vmem:[%s10 + $0x310] sm:$0xf]
  %v9564 = vld [vmem:[%s10 + $0x314] sm:$0xf]
  %v9565 = vld [vmem:[%s10 + $0x318] sm:$0xf]
  %v9566 = vld [vmem:[%s10 + $0x31c] sm:$0xf]
  %v9567 = vld [vmem:[%s10 + $0x320] sm:$0xf]
  %v9568 = vld [vmem:[%s10 + $0x324] sm:$0xf]
  %v9569 = vld [vmem:[%s10 + $0x328] sm:$0xf]
  %v9570 = vld [vmem:[%s10 + $0x32c] sm:$0xf]
  %v9571 = vld [vmem:[%s10 + $0x330] sm:$0xf]
  %v9572 = vld [vmem:[%s10 + $0x334] sm:$0xf]
  %v9573 = vld [vmem:[%s10 + $0x338] sm:$0xf]
  %v9574 = vld [vmem:[%s10 + $0x33c] sm:$0xf]
  %v9575 = vld [vmem:[%s10 + $0x340] sm:$0xf]
  %v9576 = vld [vmem:[%s10 + $0x344] sm:$0xf]
  %v9577 = vld [vmem:[%s10 + $0x348] sm:$0xf]
  %v9578 = vld [vmem:[%s10 + $0x34c] sm:$0xf]
  %v9579 = vld [vmem:[%s10 + $0x350] sm:$0xf]
  %v9580 = vld [vmem:[%s10 + $0x354] sm:$0xf]
  %v9581 = vld [vmem:[%s10 + $0x358] sm:$0xf]
  %v9582 = vld [vmem:[%s10 + $0x35c] sm:$0xf]
  %v9583 = vld [vmem:[%s10 + $0x360] sm:$0xf]
  %v9584 = vld [vmem:[%s10 + $0x364] sm:$0xf]
  %v9585 = vld [vmem:[%s10 + $0x368] sm:$0xf]
  %v9586 = vld [vmem:[%s10 + $0x36c] sm:$0xf]
  %v9587 = vld [vmem:[%s10 + $0x370] sm:$0xf]
  %v9588 = vld [vmem:[%s10 + $0x374] sm:$0xf]
  %v9589 = vld [vmem:[%s10 + $0x378] sm:$0xf]
  %v9590 = vld [vmem:[%s10 + $0x37c] sm:$0xf]
  %v9591 = vld [vmem:[%s10 + $0x380] sm:$0xf]
  %v9592 = vld [vmem:[%s10 + $0x384] sm:$0xf]
  %v9593 = vld [vmem:[%s10 + $0x388] sm:$0xf]
  %v9594 = vld [vmem:[%s10 + $0x38c] sm:$0xf]
  %v9595 = vld [vmem:[%s10 + $0x390] sm:$0xf]
  %v9596 = vld [vmem:[%s10 + $0x394] sm:$0xf]
  %v9597 = vld [vmem:[%s10 + $0x398] sm:$0xf]
  %v9598 = vld [vmem:[%s10 + $0x39c] sm:$0xf]
  %v9599 = vld [vmem:[%s10 + $0x3a0] sm:$0xf]
  %v9600 = vld [vmem:[%s10 + $0x3a4] sm:$0xf]
  %v9601 = vld [vmem:[%s10 + $0x3a8] sm:$0xf]
  %v9602 = vld [vmem:[%s10 + $0x3ac] sm:$0xf]
  %v9603 = vld [vmem:[%s10 + $0x3b0] sm:$0xf]
  %v9604 = vld [vmem:[%s10 + $0x3b4] sm:$0xf]
  %v9605 = vld [vmem:[%s10 + $0x3b8] sm:$0xf]
  %v9606 = vld [vmem:[%s10 + $0x3bc] sm:$0xf]
  %v9607 = vld [vmem:[%s10 + $0x3c0] sm:$0xf]
  %v9608 = vld [vmem:[%s10 + $0x3c4] sm:$0xf]
  %v9609 = vld [vmem:[%s10 + $0x3c8] sm:$0xf]
  %v9610 = vld [vmem:[%s10 + $0x3cc] sm:$0xf]
  %v9611 = vld [vmem:[%s10 + $0x3d0] sm:$0xf]
  %v9612 = vld [vmem:[%s10 + $0x3d4] sm:$0xf]
  %v9613 = vld [vmem:[%s10 + $0x3d8] sm:$0xf]
  %v9614 = vld [vmem:[%s10 + $0x3dc] sm:$0xf]
  %v9615 = vld [vmem:[%s10 + $0x3e0] sm:$0xf]
  %v9616 = vld [vmem:[%s10 + $0x3e4] sm:$0xf]
  %v9617 = vld [vmem:[%s11] sm:$0x1]
  %v9619 = vlaneseq
  %v9620 = vshrl.u32 %v9619, 7
  %v9621 = vsub.s32 0, %v9620
  %v9622 = vrot.slane %v9617, %v9621
  %v9874 = vunpack.c.l.b16 %v9367
  %v9875 = vunpack.c.l.b16 %v9368
  %v9876 = vunpack.c.l.b16 %v9369
  %v9877 = vunpack.c.l.b16 %v9370
  %v9878 = vunpack.c.l.b16 %v9371
  %v9879 = vunpack.c.l.b16 %v9372
  %v9880 = vunpack.c.l.b16 %v9373
  %v9881 = vunpack.c.l.b16 %v9374
  %v9882 = vunpack.c.l.b16 %v9375
  %v9883 = vunpack.c.l.b16 %v9376
  %v9884 = vunpack.c.l.b16 %v9377
  %v9885 = vunpack.c.l.b16 %v9378
  %v9886 = vunpack.c.l.b16 %v9379
  %v9887 = vunpack.c.l.b16 %v9380
  %v9888 = vunpack.c.l.b16 %v9381
  %v9889 = vunpack.c.l.b16 %v9382
  %v9890 = vunpack.c.l.b16 %v9383
  %v9891 = vunpack.c.l.b16 %v9384
  %v9892 = vunpack.c.l.b16 %v9385
  %v9893 = vunpack.c.l.b16 %v9386
  %v9894 = vunpack.c.l.b16 %v9387
  %v9895 = vunpack.c.l.b16 %v9388
  %v9896 = vunpack.c.l.b16 %v9389
  %v9897 = vunpack.c.l.b16 %v9390
  %v9898 = vunpack.c.l.b16 %v9391
  %v9899 = vunpack.c.l.b16 %v9392
  %v9900 = vunpack.c.l.b16 %v9393
  %v9901 = vunpack.c.l.b16 %v9394
  %v9902 = vunpack.c.l.b16 %v9395
  %v9903 = vunpack.c.l.b16 %v9396
  %v9904 = vunpack.c.l.b16 %v9397
  %v9905 = vunpack.c.l.b16 %v9398
  %v9906 = vunpack.c.l.b16 %v9399
  %v9907 = vunpack.c.l.b16 %v9400
  %v9908 = vunpack.c.l.b16 %v9401
  %v9909 = vunpack.c.l.b16 %v9402
  %v9910 = vunpack.c.l.b16 %v9403
  %v9911 = vunpack.c.l.b16 %v9404
  %v9912 = vunpack.c.l.b16 %v9405
  %v9913 = vunpack.c.l.b16 %v9406
  %v9914 = vunpack.c.l.b16 %v9407
  %v9915 = vunpack.c.l.b16 %v9408
  %v9916 = vunpack.c.l.b16 %v9409
  %v9917 = vunpack.c.l.b16 %v9410
  %v9918 = vunpack.c.l.b16 %v9411
  %v9919 = vunpack.c.l.b16 %v9412
  %v9920 = vunpack.c.l.b16 %v9413
  %v9921 = vunpack.c.l.b16 %v9414
  %v9922 = vunpack.c.l.b16 %v9415
  %v9923 = vunpack.c.l.b16 %v9416
  %v9924 = vunpack.c.l.b16 %v9417
  %v9925 = vunpack.c.l.b16 %v9418
  %v9926 = vunpack.c.l.b16 %v9419
  %v9927 = vunpack.c.l.b16 %v9420
  %v9928 = vunpack.c.l.b16 %v9421
  %v9929 = vunpack.c.l.b16 %v9422
  %v9930 = vunpack.c.l.b16 %v9423
  %v9931 = vunpack.c.l.b16 %v9424
  %v9932 = vunpack.c.l.b16 %v9425
  %v9933 = vunpack.c.l.b16 %v9426
  %v9934 = vunpack.c.l.b16 %v9427
  %v9935 = vunpack.c.l.b16 %v9428
  %v9936 = vunpack.c.l.b16 %v9429
  %v9937 = vunpack.c.l.b16 %v9430
  %v9938 = vunpack.c.l.b16 %v9431
  %v9939 = vunpack.c.l.b16 %v9432
  %v9940 = vunpack.c.l.b16 %v9433
  %v9941 = vunpack.c.l.b16 %v9434
  %v9942 = vunpack.c.l.b16 %v9435
  %v9943 = vunpack.c.l.b16 %v9436
  %v9944 = vunpack.c.l.b16 %v9437
  %v9945 = vunpack.c.l.b16 %v9438
  %v9946 = vunpack.c.l.b16 %v9439
  %v9947 = vunpack.c.l.b16 %v9440
  %v9948 = vunpack.c.l.b16 %v9441
  %v9949 = vunpack.c.l.b16 %v9442
  %v9950 = vunpack.c.l.b16 %v9443
  %v9951 = vunpack.c.l.b16 %v9444
  %v9952 = vunpack.c.l.b16 %v9445
  %v9953 = vunpack.c.l.b16 %v9446
  %v9954 = vunpack.c.l.b16 %v9447
  %v9955 = vunpack.c.l.b16 %v9448
  %v9956 = vunpack.c.l.b16 %v9449
  %v9957 = vunpack.c.l.b16 %v9450
  %v9958 = vunpack.c.l.b16 %v9451
  %v9959 = vunpack.c.l.b16 %v9452
  %v9960 = vunpack.c.l.b16 %v9453
  %v9961 = vunpack.c.l.b16 %v9454
  %v9962 = vunpack.c.l.b16 %v9455
  %v9963 = vunpack.c.l.b16 %v9456
  %v9964 = vunpack.c.l.b16 %v9457
  %v9965 = vunpack.c.l.b16 %v9458
  %v9966 = vunpack.c.l.b16 %v9459
  %v9967 = vunpack.c.l.b16 %v9460
  %v9968 = vunpack.c.l.b16 %v9461
  %v9969 = vunpack.c.l.b16 %v9462
  %v9970 = vunpack.c.l.b16 %v9463
  %v9971 = vunpack.c.l.b16 %v9464
  %v9972 = vunpack.c.l.b16 %v9465
  %v9973 = vunpack.c.l.b16 %v9466
  %v9974 = vunpack.c.l.b16 %v9467
  %v9975 = vunpack.c.l.b16 %v9468
  %v9976 = vunpack.c.l.b16 %v9469
  %v9977 = vunpack.c.l.b16 %v9470
  %v9978 = vunpack.c.l.b16 %v9471
  %v9979 = vunpack.c.l.b16 %v9472
  %v9980 = vunpack.c.l.b16 %v9473
  %v9981 = vunpack.c.l.b16 %v9474
  %v9982 = vunpack.c.l.b16 %v9475
  %v9983 = vunpack.c.l.b16 %v9476
  %v9984 = vunpack.c.l.b16 %v9477
  %v9985 = vunpack.c.l.b16 %v9478
  %v9986 = vunpack.c.l.b16 %v9479
  %v9987 = vunpack.c.l.b16 %v9480
  %v9988 = vunpack.c.l.b16 %v9481
  %v9989 = vunpack.c.l.b16 %v9482
  %v9990 = vunpack.c.l.b16 %v9483
  %v9991 = vunpack.c.l.b16 %v9484
  %v9992 = vunpack.c.l.b16 %v9485
  %v9993 = vunpack.c.l.b16 %v9486
  %v9994 = vunpack.c.l.b16 %v9487
  %v9995 = vunpack.c.l.b16 %v9488
  %v9996 = vunpack.c.l.b16 %v9489
  %v9997 = vunpack.c.l.b16 %v9490
  %v9998 = vunpack.c.l.b16 %v9491
  %v9999 = vunpack.c.l.b16 %v9492
  %v10000 = vunpack.c.l.b16 %v9493
  %v10001 = vunpack.c.l.b16 %v9494
  %v10002 = vunpack.c.l.b16 %v9495
  %v10003 = vunpack.c.l.b16 %v9496
  %v10004 = vunpack.c.l.b16 %v9497
  %v10005 = vunpack.c.l.b16 %v9498
  %v10006 = vunpack.c.l.b16 %v9499
  %v10007 = vunpack.c.l.b16 %v9500
  %v10008 = vunpack.c.l.b16 %v9501
  %v10009 = vunpack.c.l.b16 %v9502
  %v10010 = vunpack.c.l.b16 %v9503
  %v10011 = vunpack.c.l.b16 %v9504
  %v10012 = vunpack.c.l.b16 %v9505
  %v10013 = vunpack.c.l.b16 %v9506
  %v10014 = vunpack.c.l.b16 %v9507
  %v10015 = vunpack.c.l.b16 %v9508
  %v10016 = vunpack.c.l.b16 %v9509
  %v10017 = vunpack.c.l.b16 %v9510
  %v10018 = vunpack.c.l.b16 %v9511
  %v10019 = vunpack.c.l.b16 %v9512
  %v10020 = vunpack.c.l.b16 %v9513
  %v10021 = vunpack.c.l.b16 %v9514
  %v10022 = vunpack.c.l.b16 %v9515
  %v10023 = vunpack.c.l.b16 %v9516
  %v10024 = vunpack.c.l.b16 %v9517
  %v10025 = vunpack.c.l.b16 %v9518
  %v10026 = vunpack.c.l.b16 %v9519
  %v10027 = vunpack.c.l.b16 %v9520
  %v10028 = vunpack.c.l.b16 %v9521
  %v10029 = vunpack.c.l.b16 %v9522
  %v10030 = vunpack.c.l.b16 %v9523
  %v10031 = vunpack.c.l.b16 %v9524
  %v10032 = vunpack.c.l.b16 %v9525
  %v10033 = vunpack.c.l.b16 %v9526
  %v10034 = vunpack.c.l.b16 %v9527
  %v10035 = vunpack.c.l.b16 %v9528
  %v10036 = vunpack.c.l.b16 %v9529
  %v10037 = vunpack.c.l.b16 %v9530
  %v10038 = vunpack.c.l.b16 %v9531
  %v10039 = vunpack.c.l.b16 %v9532
  %v10040 = vunpack.c.l.b16 %v9533
  %v10041 = vunpack.c.l.b16 %v9534
  %v10042 = vunpack.c.l.b16 %v9535
  %v10043 = vunpack.c.l.b16 %v9536
  %v10044 = vunpack.c.l.b16 %v9537
  %v10045 = vunpack.c.l.b16 %v9538
  %v10046 = vunpack.c.l.b16 %v9539
  %v10047 = vunpack.c.l.b16 %v9540
  %v10048 = vunpack.c.l.b16 %v9541
  %v10049 = vunpack.c.l.b16 %v9542
  %v10050 = vunpack.c.l.b16 %v9543
  %v10051 = vunpack.c.l.b16 %v9544
  %v10052 = vunpack.c.l.b16 %v9545
  %v10053 = vunpack.c.l.b16 %v9546
  %v10054 = vunpack.c.l.b16 %v9547
  %v10055 = vunpack.c.l.b16 %v9548
  %v10056 = vunpack.c.l.b16 %v9549
  %v10057 = vunpack.c.l.b16 %v9550
  %v10058 = vunpack.c.l.b16 %v9551
  %v10059 = vunpack.c.l.b16 %v9552
  %v10060 = vunpack.c.l.b16 %v9553
  %v10061 = vunpack.c.l.b16 %v9554
  %v10062 = vunpack.c.l.b16 %v9555
  %v10063 = vunpack.c.l.b16 %v9556
  %v10064 = vunpack.c.l.b16 %v9557
  %v10065 = vunpack.c.l.b16 %v9558
  %v10066 = vunpack.c.l.b16 %v9559
  %v10067 = vunpack.c.l.b16 %v9560
  %v10068 = vunpack.c.l.b16 %v9561
  %v10069 = vunpack.c.l.b16 %v9562
  %v10070 = vunpack.c.l.b16 %v9563
  %v10071 = vunpack.c.l.b16 %v9564
  %v10072 = vunpack.c.l.b16 %v9565
  %v10073 = vunpack.c.l.b16 %v9566
  %v10074 = vunpack.c.l.b16 %v9567
  %v10075 = vunpack.c.l.b16 %v9568
  %v10076 = vunpack.c.l.b16 %v9569
  %v10077 = vunpack.c.l.b16 %v9570
  %v10078 = vunpack.c.l.b16 %v9571
  %v10079 = vunpack.c.l.b16 %v9572
  %v10080 = vunpack.c.l.b16 %v9573
  %v10081 = vunpack.c.l.b16 %v9574
  %v10082 = vunpack.c.l.b16 %v9575
  %v10083 = vunpack.c.l.b16 %v9576
  %v10084 = vunpack.c.l.b16 %v9577
  %v10085 = vunpack.c.l.b16 %v9578
  %v10086 = vunpack.c.l.b16 %v9579
  %v10087 = vunpack.c.l.b16 %v9580
  %v10088 = vunpack.c.l.b16 %v9581
  %v10089 = vunpack.c.l.b16 %v9582
  %v10090 = vunpack.c.l.b16 %v9583
  %v10091 = vunpack.c.l.b16 %v9584
  %v10092 = vunpack.c.l.b16 %v9585
  %v10093 = vunpack.c.l.b16 %v9586
  %v10094 = vunpack.c.l.b16 %v9587
  %v10095 = vunpack.c.l.b16 %v9588
  %v10096 = vunpack.c.l.b16 %v9589
  %v10097 = vunpack.c.l.b16 %v9590
  %v10098 = vunpack.c.l.b16 %v9591
  %v10099 = vunpack.c.l.b16 %v9592
  %v10100 = vunpack.c.l.b16 %v9593
  %v10101 = vunpack.c.l.b16 %v9594
  %v10102 = vunpack.c.l.b16 %v9595
  %v10103 = vunpack.c.l.b16 %v9596
  %v10104 = vunpack.c.l.b16 %v9597
  %v10105 = vunpack.c.l.b16 %v9598
  %v10106 = vunpack.c.l.b16 %v9599
  %v10107 = vunpack.c.l.b16 %v9600
  %v10108 = vunpack.c.l.b16 %v9601
  %v10109 = vunpack.c.l.b16 %v9602
  %v10110 = vunpack.c.l.b16 %v9603
  %v10111 = vunpack.c.l.b16 %v9604
  %v10112 = vunpack.c.l.b16 %v9605
  %v10113 = vunpack.c.l.b16 %v9606
  %v10114 = vunpack.c.l.b16 %v9607
  %v10115 = vunpack.c.l.b16 %v9608
  %v10116 = vunpack.c.l.b16 %v9609
  %v10117 = vunpack.c.l.b16 %v9610
  %v10118 = vunpack.c.l.b16 %v9611
  %v10119 = vunpack.c.l.b16 %v9612
  %v10120 = vunpack.c.l.b16 %v9613
  %v10121 = vunpack.c.l.b16 %v9614
  %v10122 = vunpack.c.l.b16 %v9615
  %v10123 = vunpack.c.l.b16 %v9616
  %v10124 = vpack.c.b16 %v9875, %v9874
  %v10125 = vpack.c.b16 %v9877, %v9876
  %v10126 = vpack.c.b16 %v9879, %v9878
  %v10127 = vpack.c.b16 %v9881, %v9880
  %v10128 = vpack.c.b16 %v9883, %v9882
  %v10129 = vpack.c.b16 %v9885, %v9884
  %v10130 = vpack.c.b16 %v9887, %v9886
  %v10131 = vpack.c.b16 %v9889, %v9888
  %v10132 = vpack.c.b16 %v9891, %v9890
  %v10133 = vpack.c.b16 %v9893, %v9892
  %v10134 = vpack.c.b16 %v9895, %v9894
  %v10135 = vpack.c.b16 %v9897, %v9896
  %v10136 = vpack.c.b16 %v9899, %v9898
  %v10137 = vpack.c.b16 %v9901, %v9900
  %v10138 = vpack.c.b16 %v9903, %v9902
  %v10139 = vpack.c.b16 %v9905, %v9904
  %v10140 = vpack.c.b16 %v9907, %v9906
  %v10141 = vpack.c.b16 %v9909, %v9908
  %v10142 = vpack.c.b16 %v9911, %v9910
  %v10143 = vpack.c.b16 %v9913, %v9912
  %v10144 = vpack.c.b16 %v9915, %v9914
  %v10145 = vpack.c.b16 %v9917, %v9916
  %v10146 = vpack.c.b16 %v9919, %v9918
  %v10147 = vpack.c.b16 %v9921, %v9920
  %v10148 = vpack.c.b16 %v9923, %v9922
  %v10149 = vpack.c.b16 %v9925, %v9924
  %v10150 = vpack.c.b16 %v9927, %v9926
  %v10151 = vpack.c.b16 %v9929, %v9928
  %v10152 = vpack.c.b16 %v9931, %v9930
  %v10153 = vpack.c.b16 %v9933, %v9932
  %v10154 = vpack.c.b16 %v9935, %v9934
  %v10155 = vpack.c.b16 %v9937, %v9936
  %v10156 = vpack.c.b16 %v9939, %v9938
  %v10157 = vpack.c.b16 %v9941, %v9940
  %v10158 = vpack.c.b16 %v9943, %v9942
  %v10159 = vpack.c.b16 %v9945, %v9944
  %v10160 = vpack.c.b16 %v9947, %v9946
  %v10161 = vpack.c.b16 %v9949, %v9948
  %v10162 = vpack.c.b16 %v9951, %v9950
  %v10163 = vpack.c.b16 %v9953, %v9952
  %v10164 = vpack.c.b16 %v9955, %v9954
  %v10165 = vpack.c.b16 %v9957, %v9956
  %v10166 = vpack.c.b16 %v9959, %v9958
  %v10167 = vpack.c.b16 %v9961, %v9960
  %v10168 = vpack.c.b16 %v9963, %v9962
  %v10169 = vpack.c.b16 %v9965, %v9964
  %v10170 = vpack.c.b16 %v9967, %v9966
  %v10171 = vpack.c.b16 %v9969, %v9968
  %v10172 = vpack.c.b16 %v9971, %v9970
  %v10173 = vpack.c.b16 %v9973, %v9972
  %v10174 = vpack.c.b16 %v9975, %v9974
  %v10175 = vpack.c.b16 %v9977, %v9976
  %v10176 = vpack.c.b16 %v9979, %v9978
  %v10177 = vpack.c.b16 %v9981, %v9980
  %v10178 = vpack.c.b16 %v9983, %v9982
  %v10179 = vpack.c.b16 %v9985, %v9984
  %v10180 = vpack.c.b16 %v9987, %v9986
  %v10181 = vpack.c.b16 %v9989, %v9988
  %v10182 = vpack.c.b16 %v9991, %v9990
  %v10183 = vpack.c.b16 %v9993, %v9992
  %v10184 = vpack.c.b16 %v9995, %v9994
  %v10185 = vpack.c.b16 %v9997, %v9996
  %v10186 = vpack.c.b16 %v9999, %v9998
  %v10187 = vpack.c.b16 %v10001, %v10000
  %v10188 = vpack.c.b16 %v10003, %v10002
  %v10189 = vpack.c.b16 %v10005, %v10004
  %v10190 = vpack.c.b16 %v10007, %v10006
  %v10191 = vpack.c.b16 %v10009, %v10008
  %v10192 = vpack.c.b16 %v10011, %v10010
  %v10193 = vpack.c.b16 %v10013, %v10012
  %v10194 = vpack.c.b16 %v10015, %v10014
  %v10195 = vpack.c.b16 %v10017, %v10016
  %v10196 = vpack.c.b16 %v10019, %v10018
  %v10197 = vpack.c.b16 %v10021, %v10020
  %v10198 = vpack.c.b16 %v10023, %v10022
  %v10199 = vpack.c.b16 %v10025, %v10024
  %v10200 = vpack.c.b16 %v10027, %v10026
  %v10201 = vpack.c.b16 %v10029, %v10028
  %v10202 = vpack.c.b16 %v10031, %v10030
  %v10203 = vpack.c.b16 %v10033, %v10032
  %v10204 = vpack.c.b16 %v10035, %v10034
  %v10205 = vpack.c.b16 %v10037, %v10036
  %v10206 = vpack.c.b16 %v10039, %v10038
  %v10207 = vpack.c.b16 %v10041, %v10040
  %v10208 = vpack.c.b16 %v10043, %v10042
  %v10209 = vpack.c.b16 %v10045, %v10044
  %v10210 = vpack.c.b16 %v10047, %v10046
  %v10211 = vpack.c.b16 %v10049, %v10048
  %v10212 = vpack.c.b16 %v10051, %v10050
  %v10213 = vpack.c.b16 %v10053, %v10052
  %v10214 = vpack.c.b16 %v10055, %v10054
  %v10215 = vpack.c.b16 %v10057, %v10056
  %v10216 = vpack.c.b16 %v10059, %v10058
  %v10217 = vpack.c.b16 %v10061, %v10060
  %v10218 = vpack.c.b16 %v10063, %v10062
  %v10219 = vpack.c.b16 %v10065, %v10064
  %v10220 = vpack.c.b16 %v10067, %v10066
  %v10221 = vpack.c.b16 %v10069, %v10068
  %v10222 = vpack.c.b16 %v10071, %v10070
  %v10223 = vpack.c.b16 %v10073, %v10072
  %v10224 = vpack.c.b16 %v10075, %v10074
  %v10225 = vpack.c.b16 %v10077, %v10076
  %v10226 = vpack.c.b16 %v10079, %v10078
  %v10227 = vpack.c.b16 %v10081, %v10080
  %v10228 = vpack.c.b16 %v10083, %v10082
  %v10229 = vpack.c.b16 %v10085, %v10084
  %v10230 = vpack.c.b16 %v10087, %v10086
  %v10231 = vpack.c.b16 %v10089, %v10088
  %v10232 = vpack.c.b16 %v10091, %v10090
  %v10233 = vpack.c.b16 %v10093, %v10092
  %v10234 = vpack.c.b16 %v10095, %v10094
  %v10235 = vpack.c.b16 %v10097, %v10096
  %v10236 = vpack.c.b16 %v10099, %v10098
  %v10237 = vpack.c.b16 %v10101, %v10100
  %v10238 = vpack.c.b16 %v10103, %v10102
  %v10239 = vpack.c.b16 %v10105, %v10104
  %v10240 = vpack.c.b16 %v10107, %v10106
  %v10241 = vpack.c.b16 %v10109, %v10108
  %v10242 = vpack.c.b16 %v10111, %v10110
  %v10243 = vpack.c.b16 %v10113, %v10112
  %v10244 = vpack.c.b16 %v10115, %v10114
  %v10245 = vpack.c.b16 %v10117, %v10116
  %v10246 = vpack.c.b16 %v10119, %v10118
  %v10247 = vpack.c.b16 %v10121, %v10120
  %v10248 = vpack.c.b16 %v10123, %v10122
  %vm10374 = vcmask 654336
  %v10376 = vsel %vm10374, %v9366, 0
  %10378 = vmatprep.subr.bf16.mxu0 0
  %10379 = vmatpush1.bf16.msra.mxu0 %v10131
  %10380 = vmatprep.subr.bf16.mxu0 0
  %10381 = vmatpush1.bf16.msra.mxu0 %v10130
  %10382 = vmatprep.subr.bf16.mxu0 0
  %10383 = vmatpush1.bf16.msra.mxu0 %v10129
  %10384 = vmatprep.subr.bf16.mxu0 0
  %10385 = vmatpush1.bf16.msra.mxu0 %v10128
  %10386 = vmatprep.subr.bf16.mxu0 0
  %10387 = vmatpush1.bf16.msra.mxu0 %v10127
  %10388 = vmatprep.subr.bf16.mxu0 0
  %10389 = vmatpush1.bf16.msra.mxu0 %v10126
  %10390 = vmatprep.subr.bf16.mxu0 0
  %10391 = vmatpush1.bf16.msra.mxu0 %v10125
  %10392 = vmatprep.subr.bf16.mxu0 0
  %10393 = vmatpush1.bf16.msra.mxu0 %v10124
  %10394 = vmatprep.subr.bf16.mxu0 0
  %10395 = vmatpush2.bf16.msra.mxu0 %v10139
  %10396 = vmatprep.subr.bf16.mxu0 0
  %10397 = vmatpush2.bf16.msra.mxu0 %v10138
  %10398 = vmatprep.subr.bf16.mxu0 0
  %10399 = vmatpush2.bf16.msra.mxu0 %v10137
  %10400 = vmatprep.subr.bf16.mxu0 0
  %10401 = vmatpush2.bf16.msra.mxu0 %v10136
  %10402 = vmatprep.subr.bf16.mxu0 0
  %10403 = vmatpush2.bf16.msra.mxu0 %v10135
  %10404 = vmatprep.subr.bf16.mxu0 0
  %10405 = vmatpush2.bf16.msra.mxu0 %v10134
  %10406 = vmatprep.subr.bf16.mxu0 0
  %10407 = vmatpush2.bf16.msra.mxu0 %v10133
  %10408 = vmatprep.subr.bf16.mxu0 0
  %10409 = vmatpush2.bf16.msra.mxu0 %v10132
  %10410 = vmatprep.mubr.bf16.mxu0 %v9352
  %10411 = vmatmul.mubr.bf16.gmra.mxu0 %v9351
  %v10412 = vpop.f32.mrf.mxu0
  %v10413 = vadd.f32 %v9622, %v10412
  %v10414 = vpop.f32.mrf.mxu0
  %v10415 = vpop.f32.mrf.mxu0
  %v10416 = vpop.f32.mrf.mxu0
  %10417 = vdwg.mxu0
  %10418 = vmatprep.subr.bf16.mxu0 0
  %10419 = vmatpush1.bf16.msra.mxu0 %v10147
  %10420 = vmatprep.subr.bf16.mxu0 0
  %10421 = vmatpush1.bf16.msra.mxu0 %v10146
  %10422 = vmatprep.subr.bf16.mxu0 0
  %10423 = vmatpush1.bf16.msra.mxu0 %v10145
  %10424 = vmatprep.subr.bf16.mxu0 0
  %10425 = vmatpush1.bf16.msra.mxu0 %v10144
  %10426 = vmatprep.subr.bf16.mxu0 0
  %10427 = vmatpush1.bf16.msra.mxu0 %v10143
  %10428 = vmatprep.subr.bf16.mxu0 0
  %10429 = vmatpush1.bf16.msra.mxu0 %v10142
  %10430 = vmatprep.subr.bf16.mxu0 0
  %10431 = vmatpush1.bf16.msra.mxu0 %v10141
  %10432 = vmatprep.subr.bf16.mxu0 0
  %10433 = vmatpush1.bf16.msra.mxu0 %v10140
  %10434 = vmatprep.subr.bf16.mxu0 0
  %10435 = vmatpush2.bf16.msra.mxu0 %v10155
  %10436 = vmatprep.subr.bf16.mxu0 0
  %10437 = vmatpush2.bf16.msra.mxu0 %v10154
  %10438 = vmatprep.subr.bf16.mxu0 0
  %10439 = vmatpush2.bf16.msra.mxu0 %v10153
  %10440 = vmatprep.subr.bf16.mxu0 0
  %10441 = vmatpush2.bf16.msra.mxu0 %v10152
  %10442 = vmatprep.subr.bf16.mxu0 0
  %10443 = vmatpush2.bf16.msra.mxu0 %v10151
  %10444 = vmatprep.subr.bf16.mxu0 0
  %10445 = vmatpush2.bf16.msra.mxu0 %v10150
  %10446 = vmatprep.subr.bf16.mxu0 0
  %10447 = vmatpush2.bf16.msra.mxu0 %v10149
  %10448 = vmatprep.subr.bf16.mxu0 0
  %10449 = vmatpush2.bf16.msra.mxu0 %v10148
  %10450 = vmatprep.mubr.bf16.mxu0 %v9354
  %10451 = vmatmul.mubr.bf16.gmra.mxu0 %v9353
  %v10452 = vpop.f32.mrf.mxu0
  %v10453 = vadd.f32 %v10413, %v10452
  %v10454 = vpop.f32.mrf.mxu0
  %v10455 = vpop.f32.mrf.mxu0
  %v10456 = vpop.f32.mrf.mxu0
  %10457 = vdwg.mxu0
  %10458 = vmatprep.subr.bf16.mxu0 0
  %10459 = vmatpush1.bf16.msra.mxu0 %v10163
  %10460 = vmatprep.subr.bf16.mxu0 0
  %10461 = vmatpush1.bf16.msra.mxu0 %v10162
  %10462 = vmatprep.subr.bf16.mxu0 0
  %10463 = vmatpush1.bf16.msra.mxu0 %v10161
  %10464 = vmatprep.subr.bf16.mxu0 0
  %10465 = vmatpush1.bf16.msra.mxu0 %v10160
  %10466 = vmatprep.subr.bf16.mxu0 0
  %10467 = vmatpush1.bf16.msra.mxu0 %v10159
  %10468 = vmatprep.subr.bf16.mxu0 0
  %10469 = vmatpush1.bf16.msra.mxu0 %v10158
  %10470 = vmatprep.subr.bf16.mxu0 0
  %10471 = vmatpush1.bf16.msra.mxu0 %v10157
  %10472 = vmatprep.subr.bf16.mxu0 0
  %10473 = vmatpush1.bf16.msra.mxu0 %v10156
  %10474 = vmatprep.subr.bf16.mxu0 0
  %10475 = vmatpush2.bf16.msra.mxu0 %v10171
  %10476 = vmatprep.subr.bf16.mxu0 0
  %10477 = vmatpush2.bf16.msra.mxu0 %v10170
  %10478 = vmatprep.subr.bf16.mxu0 0
  %10479 = vmatpush2.bf16.msra.mxu0 %v10169
  %10480 = vmatprep.subr.bf16.mxu0 0
  %10481 = vmatpush2.bf16.msra.mxu0 %v10168
  %10482 = vmatprep.subr.bf16.mxu0 0
  %10483 = vmatpush2.bf16.msra.mxu0 %v10167
  %10484 = vmatprep.subr.bf16.mxu0 0
  %10485 = vmatpush2.bf16.msra.mxu0 %v10166
  %10486 = vmatprep.subr.bf16.mxu0 0
  %10487 = vmatpush2.bf16.msra.mxu0 %v10165
  %10488 = vmatprep.subr.bf16.mxu0 0
  %10489 = vmatpush2.bf16.msra.mxu0 %v10164
  %10490 = vmatprep.mubr.bf16.mxu0 %v9356
  %10491 = vmatmul.mubr.bf16.gmra.mxu0 %v9355
  %v10492 = vpop.f32.mrf.mxu0
  %v10493 = vadd.f32 %v10453, %v10492
  %v10494 = vpop.f32.mrf.mxu0
  %v10495 = vpop.f32.mrf.mxu0
  %v10496 = vpop.f32.mrf.mxu0
  %10497 = vdwg.mxu0
  %10498 = vmatprep.subr.bf16.mxu0 0
  %10499 = vmatpush1.bf16.msra.mxu0 %v10179
  %10500 = vmatprep.subr.bf16.mxu0 0
  %10501 = vmatpush1.bf16.msra.mxu0 %v10178
  %10502 = vmatprep.subr.bf16.mxu0 0
  %10503 = vmatpush1.bf16.msra.mxu0 %v10177
  %10504 = vmatprep.subr.bf16.mxu0 0
  %10505 = vmatpush1.bf16.msra.mxu0 %v10176
  %10506 = vmatprep.subr.bf16.mxu0 0
  %10507 = vmatpush1.bf16.msra.mxu0 %v10175
  %10508 = vmatprep.subr.bf16.mxu0 0
  %10509 = vmatpush1.bf16.msra.mxu0 %v10174
  %10510 = vmatprep.subr.bf16.mxu0 0
  %10511 = vmatpush1.bf16.msra.mxu0 %v10173
  %10512 = vmatprep.subr.bf16.mxu0 0
  %10513 = vmatpush1.bf16.msra.mxu0 %v10172
  %10514 = vmatprep.subr.bf16.mxu0 0
  %10515 = vmatpush2.bf16.msra.mxu0 %v10187
  %10516 = vmatprep.subr.bf16.mxu0 0
  %10517 = vmatpush2.bf16.msra.mxu0 %v10186
  %10518 = vmatprep.subr.bf16.mxu0 0
  %10519 = vmatpush2.bf16.msra.mxu0 %v10185
  %10520 = vmatprep.subr.bf16.mxu0 0
  %10521 = vmatpush2.bf16.msra.mxu0 %v10184
  %10522 = vmatprep.subr.bf16.mxu0 0
  %10523 = vmatpush2.bf16.msra.mxu0 %v10183
  %10524 = vmatprep.subr.bf16.mxu0 0
  %10525 = vmatpush2.bf16.msra.mxu0 %v10182
  %10526 = vmatprep.subr.bf16.mxu0 0
  %10527 = vmatpush2.bf16.msra.mxu0 %v10181
  %10528 = vmatprep.subr.bf16.mxu0 0
  %10529 = vmatpush2.bf16.msra.mxu0 %v10180
  %10530 = vmatprep.mubr.bf16.mxu0 %v9358
  %10531 = vmatmul.mubr.bf16.gmra.mxu0 %v9357
  %v10532 = vpop.f32.mrf.mxu0
  %v10533 = vadd.f32 %v10493, %v10532
  %v10534 = vpop.f32.mrf.mxu0
  %v10535 = vpop.f32.mrf.mxu0
  %v10536 = vpop.f32.mrf.mxu0
  %10537 = vdwg.mxu0
  %10538 = vmatprep.subr.bf16.mxu0 0
  %10539 = vmatpush1.bf16.msra.mxu0 %v10195
  %10540 = vmatprep.subr.bf16.mxu0 0
  %10541 = vmatpush1.bf16.msra.mxu0 %v10194
  %10542 = vmatprep.subr.bf16.mxu0 0
  %10543 = vmatpush1.bf16.msra.mxu0 %v10193
  %10544 = vmatprep.subr.bf16.mxu0 0
  %10545 = vmatpush1.bf16.msra.mxu0 %v10192
  %10546 = vmatprep.subr.bf16.mxu0 0
  %10547 = vmatpush1.bf16.msra.mxu0 %v10191
  %10548 = vmatprep.subr.bf16.mxu0 0
  %10549 = vmatpush1.bf16.msra.mxu0 %v10190
  %10550 = vmatprep.subr.bf16.mxu0 0
  %10551 = vmatpush1.bf16.msra.mxu0 %v10189
  %10552 = vmatprep.subr.bf16.mxu0 0
  %10553 = vmatpush1.bf16.msra.mxu0 %v10188
  %10554 = vmatprep.subr.bf16.mxu0 0
  %10555 = vmatpush2.bf16.msra.mxu0 %v10203
  %10556 = vmatprep.subr.bf16.mxu0 0
  %10557 = vmatpush2.bf16.msra.mxu0 %v10202
  %10558 = vmatprep.subr.bf16.mxu0 0
  %10559 = vmatpush2.bf16.msra.mxu0 %v10201
  %10560 = vmatprep.subr.bf16.mxu0 0
  %10561 = vmatpush2.bf16.msra.mxu0 %v10200
  %10562 = vmatprep.subr.bf16.mxu0 0
  %10563 = vmatpush2.bf16.msra.mxu0 %v10199
  %10564 = vmatprep.subr.bf16.mxu0 0
  %10565 = vmatpush2.bf16.msra.mxu0 %v10198
  %10566 = vmatprep.subr.bf16.mxu0 0
  %10567 = vmatpush2.bf16.msra.mxu0 %v10197
  %10568 = vmatprep.subr.bf16.mxu0 0
  %10569 = vmatpush2.bf16.msra.mxu0 %v10196
  %10570 = vmatprep.mubr.bf16.mxu0 %v9360
  %10571 = vmatmul.mubr.bf16.gmra.mxu0 %v9359
  %v10572 = vpop.f32.mrf.mxu0
  %v10573 = vadd.f32 %v10533, %v10572
  %v10574 = vpop.f32.mrf.mxu0
  %v10575 = vpop.f32.mrf.mxu0
  %v10576 = vpop.f32.mrf.mxu0
  %10577 = vdwg.mxu0
  %10578 = vmatprep.subr.bf16.mxu0 0
  %10579 = vmatpush1.bf16.msra.mxu0 %v10211
  %10580 = vmatprep.subr.bf16.mxu0 0
  %10581 = vmatpush1.bf16.msra.mxu0 %v10210
  %10582 = vmatprep.subr.bf16.mxu0 0
  %10583 = vmatpush1.bf16.msra.mxu0 %v10209
  %10584 = vmatprep.subr.bf16.mxu0 0
  %10585 = vmatpush1.bf16.msra.mxu0 %v10208
  %10586 = vmatprep.subr.bf16.mxu0 0
  %10587 = vmatpush1.bf16.msra.mxu0 %v10207
  %10588 = vmatprep.subr.bf16.mxu0 0
  %10589 = vmatpush1.bf16.msra.mxu0 %v10206
  %10590 = vmatprep.subr.bf16.mxu0 0
  %10591 = vmatpush1.bf16.msra.mxu0 %v10205
  %10592 = vmatprep.subr.bf16.mxu0 0
  %10593 = vmatpush1.bf16.msra.mxu0 %v10204
  %10594 = vmatprep.subr.bf16.mxu0 0
  %10595 = vmatpush2.bf16.msra.mxu0 %v10219
  %10596 = vmatprep.subr.bf16.mxu0 0
  %10597 = vmatpush2.bf16.msra.mxu0 %v10218
  %10598 = vmatprep.subr.bf16.mxu0 0
  %10599 = vmatpush2.bf16.msra.mxu0 %v10217
  %10600 = vmatprep.subr.bf16.mxu0 0
  %10601 = vmatpush2.bf16.msra.mxu0 %v10216
  %10602 = vmatprep.subr.bf16.mxu0 0
  %10603 = vmatpush2.bf16.msra.mxu0 %v10215
  %10604 = vmatprep.subr.bf16.mxu0 0
  %10605 = vmatpush2.bf16.msra.mxu0 %v10214
  %10606 = vmatprep.subr.bf16.mxu0 0
  %10607 = vmatpush2.bf16.msra.mxu0 %v10213
  %10608 = vmatprep.subr.bf16.mxu0 0
  %10609 = vmatpush2.bf16.msra.mxu0 %v10212
  %10610 = vmatprep.mubr.bf16.mxu0 %v9362
  %10611 = vmatmul.mubr.bf16.gmra.mxu0 %v9361
  %v10612 = vpop.f32.mrf.mxu0
  %v10613 = vadd.f32 %v10573, %v10612
  %v10614 = vpop.f32.mrf.mxu0
  %v10615 = vpop.f32.mrf.mxu0
  %v10616 = vpop.f32.mrf.mxu0
  %10617 = vdwg.mxu0
  %10618 = vmatprep.subr.bf16.mxu0 0
  %10619 = vmatpush1.bf16.msra.mxu0 %v10227
  %10620 = vmatprep.subr.bf16.mxu0 0
  %10621 = vmatpush1.bf16.msra.mxu0 %v10226
  %10622 = vmatprep.subr.bf16.mxu0 0
  %10623 = vmatpush1.bf16.msra.mxu0 %v10225
  %10624 = vmatprep.subr.bf16.mxu0 0
  %10625 = vmatpush1.bf16.msra.mxu0 %v10224
  %10626 = vmatprep.subr.bf16.mxu0 0
  %10627 = vmatpush1.bf16.msra.mxu0 %v10223
  %10628 = vmatprep.subr.bf16.mxu0 0
  %10629 = vmatpush1.bf16.msra.mxu0 %v10222
  %10630 = vmatprep.subr.bf16.mxu0 0
  %10631 = vmatpush1.bf16.msra.mxu0 %v10221
  %10632 = vmatprep.subr.bf16.mxu0 0
  %10633 = vmatpush1.bf16.msra.mxu0 %v10220
  %10634 = vmatprep.subr.bf16.mxu0 0
  %10635 = vmatpush2.bf16.msra.mxu0 %v10235
  %10636 = vmatprep.subr.bf16.mxu0 0
  %10637 = vmatpush2.bf16.msra.mxu0 %v10234
  %10638 = vmatprep.subr.bf16.mxu0 0
  %10639 = vmatpush2.bf16.msra.mxu0 %v10233
  %10640 = vmatprep.subr.bf16.mxu0 0
  %10641 = vmatpush2.bf16.msra.mxu0 %v10232
  %10642 = vmatprep.subr.bf16.mxu0 0
  %10643 = vmatpush2.bf16.msra.mxu0 %v10231
  %10644 = vmatprep.subr.bf16.mxu0 0
  %10645 = vmatpush2.bf16.msra.mxu0 %v10230
  %10646 = vmatprep.subr.bf16.mxu0 0
  %10647 = vmatpush2.bf16.msra.mxu0 %v10229
  %10648 = vmatprep.subr.bf16.mxu0 0
  %10649 = vmatpush2.bf16.msra.mxu0 %v10228
  %10650 = vmatprep.mubr.bf16.mxu0 %v9364
  %10651 = vmatmul.mubr.bf16.gmra.mxu0 %v9363
  %v10652 = vpop.f32.mrf.mxu0
  %v10653 = vadd.f32 %v10613, %v10652
  %v10654 = vpop.f32.mrf.mxu0
  %v10655 = vpop.f32.mrf.mxu0
  %v10656 = vpop.f32.mrf.mxu0
  %10657 = vdwg.mxu0
  %10658 = vmatprep.subr.bf16.mxu0 0
  %10659 = vmatpush1.bf16.msra.mxu0 %v10243
  %10660 = vmatprep.subr.bf16.mxu0 0
  %10661 = vmatpush1.bf16.msra.mxu0 %v10242
  %10662 = vmatprep.subr.bf16.mxu0 0
  %10663 = vmatpush1.bf16.msra.mxu0 %v10241
  %10664 = vmatprep.subr.bf16.mxu0 0
  %10665 = vmatpush1.bf16.msra.mxu0 %v10240
  %10666 = vmatprep.subr.bf16.mxu0 0
  %10667 = vmatpush1.bf16.msra.mxu0 %v10239
  %10668 = vmatprep.subr.bf16.mxu0 0
  %10669 = vmatpush1.bf16.msra.mxu0 %v10238
  %10670 = vmatprep.subr.bf16.mxu0 0
  %10671 = vmatpush1.bf16.msra.mxu0 %v10237
  %10672 = vmatprep.subr.bf16.mxu0 0
  %10673 = vmatpush1.bf16.msra.mxu0 %v10236
  %10674 = vmatprep.subr.bf16.mxu0 0
  %10675 = vmatpush2.bf16.msra.mxu0 0
  %10676 = vmatprep.subr.bf16.mxu0 0
  %10677 = vmatpush2.bf16.msra.mxu0 0
  %10678 = vmatprep.subr.bf16.mxu0 0
  %10679 = vmatpush2.bf16.msra.mxu0 0
  %10680 = vmatprep.subr.bf16.mxu0 0
  %10681 = vmatpush2.bf16.msra.mxu0 %v10248
  %10682 = vmatprep.subr.bf16.mxu0 0
  %10683 = vmatpush2.bf16.msra.mxu0 %v10247
  %10684 = vmatprep.subr.bf16.mxu0 0
  %10685 = vmatpush2.bf16.msra.mxu0 %v10246
  %10686 = vmatprep.subr.bf16.mxu0 0
  %10687 = vmatpush2.bf16.msra.mxu0 %v10245
  %10688 = vmatprep.subr.bf16.mxu0 0
  %10689 = vmatpush2.bf16.msra.mxu0 %v10244
  %10690 = vmatprep.mubr.bf16.mxu0 %v10376
  %10691 = vmatmul.mubr.bf16.gmra.mxu0 %v9365
  %v10692 = vpop.f32.mrf.mxu0
  %v10693 = vadd.f32 %v10653, %v10692
  %v10694 = vpop.f32.mrf.mxu0
  %v10695 = vpop.f32.mrf.mxu0
  %v10696 = vpop.f32.mrf.mxu0
  %10697 = vdwg.mxu0
  %vm10698 = vcmask 56320
  %v10699 = vsel %vm10698, %v10693, -inf
  %10700 = vmax.xlane.f32.xlu0 %v10699
  %v10701 = vpop.xlane.xlu0 %10700
  %v10702 = vsub.f32 %v10693, %v10701
  %v10703 = vmul.f32 %v10702, 1.442695
  %v10704 = vpow.pop %v10703
  %v10705 = vsel %vm10698, %v10704, 0.0
  %10706 = vadd.xlane.f32.xlu0 %v10705
  %v10707 = vpop.xlane.xlu0 %10706
  %v10708 = vlog2.pop %v10707
  %v10709 = vmul.f32 %v10708, 0.6931472
  %v10710 = vsub.f32 %v10702, %v10709
  %10711 = vst.msk [vmem:[%s12] sm:$0xff] %vm10698, %v10710
  // Predicated region
  $region50: #{armband_forward.1} parent=0 // pred_check
    _
  $region51: #{armband_forward.1} parent=0 // pred_check_branch
    %10713 = sbr.rel (0) target = $region53
  $region52: #{armband_forward.1} parent=0 // pred_region
    _
  $region53: #{armband_forward.1} parent=0 // pred_fallthru
    _
  // Predicated region
  $region54: #{armband_forward.1} parent=0 // pred_check
    _
  $region55: #{armband_forward.1} parent=0 // pred_check_branch
    %10715 = sbr.rel (0) target = $region57
  $region56: #{armband_forward.1} parent=0 // pred_region
    _
  $region57: #{armband_forward.1} parent=0 // pred_fallthru
    _

</llo_original>
